<compile_context>
chip_gen: v6e
topology: v6e:2x2x1
jax: 0.10.0
libtpu: 0.0.40
codegen_flags: <defaults>
</compile_context>

<pallas_src>
import functools

import jax
import jax.numpy as jnp
from jax.experimental import pallas as pl
from jax.experimental.pallas import tpu as pltpu


_SMEM = pltpu.MemorySpace.SMEM
_LANES = 128
_CONV_W_DTYPE = jnp.float32   # jnp.bfloat16 on v5e if weight rounding is acceptable


def _round_up(x, m):
    return ((x + m - 1) // m) * m


def _pick_s_blk(t):
    for cand in (8, 4, 2, 1):
        if cand <= t and t % cand == 0:
            return cand
    return 1


# --------------------------------------------------------------------------
# Pallas kernels
# --------------------------------------------------------------------------

def _lif_dir_kernel(params_ref, x_ref, spk_ref):
    """Full-sequence snn.Leaky (reset_mechanism='subtract') for ONE direction.

    grid=(2,) "parallel": program_id(0)==0 -> forward time, ==1 -> reverse.
    The whole (T, R, 128) input block is VMEM-resident; the recurrence is an
    unrolled fori_loop with the membrane as a register carry.  Matches
    snntorch:
        reset   = H(mem_prev - threshold)      (reset is NOT graded)
        mem_new = beta*mem_prev + x - reset*threshold
        spk01   = H(mem_new - threshold)       (graded factor folded into conv)
    Spikes are written as bf16 (exact for {0, 1}).
    """
    d = pl.program_id(0)
    beta = params_ref[0]
    th = params_ref[1]
    t_steps, r, l = x_ref.shape

    def step(i, mem):
        t = jnp.where(d == 0, i, t_steps - 1 - i)
        x = x_ref[t]
        reset = (mem > th).astype(jnp.float32)
        mem_new = beta * mem + x - reset * th
        spk_ref[t] = (mem_new > th).astype(spk_ref.dtype)
        return mem_new

    mem0 = jnp.zeros((r, l), jnp.float32)
    jax.lax.fori_loop(0, t_steps, step, mem0, unroll=True)


def _conv_act_bn_kernel(p_ref, w_ref, g_ref, o_ref, *, act_name, act_pos):
    """Fused (depthwise+pointwise folded) conv -> activation / per-step BN,
    batched over S_blk time steps and both time directions, with the
    0.5*(fwd+rev) average folded in.

    p_ref: (ndir, S_blk, Kp, N)  patches (bias ones-row included), bf16/f32
    w_ref: (Cout, Kp)            fused dense conv matrix (bias column included)
    g_ref: (S_blk, Cout, N)      per-step BatchNormTT2d gamma, lane-broadcast
    o_ref: (S_blk, Cout, N)      lane-dense output tile (f32)
    """
    ndir, s_blk, kp, n = p_ref.shape
    w = w_ref[...]

    if act_name == "silu":
        act = lambda v: v * jax.nn.sigmoid(v)
    else:  # relu6
        act = lambda v: jnp.clip(v, 0.0, 6.0)

    inv_dir = 1.0 / ndir
    for s in range(s_blk):
        g = g_ref[s]                                   # (Cout, N)
        acc = None
        for d in range(ndir):
            p = p_ref[d, s].astype(w.dtype)            # (Kp, N)
            y = jnp.dot(w, p, preferred_element_type=jnp.float32)  # (Cout, N)
            if act_pos == "pre_bn":
                y = act(y)
            # BatchNorm2d training-mode stats over N = B*Ho*Wo per channel,
            # per (direction, time step).  Two-pass variance kept for
            # numerical safety (single-pass E[y^2]-E[y]^2 is a large-N
            # micro-opt only).
            mean = jnp.mean(y, axis=1, keepdims=True)
            var = jnp.mean(jnp.square(y - mean), axis=1, keepdims=True)
            y = (y - mean) * jax.lax.rsqrt(var + 1e-5) * g
            if act_pos == "post_bn":
                y = act(y)
            acc = y if acc is None else acc + y
        o_ref[s] = acc * inv_dir


# --------------------------------------------------------------------------
# Kernel wrappers
# --------------------------------------------------------------------------

def lif_all_steps(x_tcbhw, lif_params):
    """Run the LIF recurrence over all T steps for both time directions.
    Returns binary spikes (2, T, C, B, H, W) in bf16, time-indexed for both
    directions (spk[1, t] is the reverse-direction spike for input x[t])."""
    T, C, B, H, W = x_tcbhw.shape
    M = C * B * H * W
    R = pl.cdiv(M, _LANES)
    Mpad = R * _LANES
    xf = x_tcbhw.reshape(T, M)
    if Mpad != M:
        xf = jnp.pad(xf, ((0, 0), (0, Mpad - M)))
    x3 = xf.reshape(T, R, _LANES)

    spk = pl.pallas_call(
        _lif_dir_kernel,
        out_shape=jax.ShapeDtypeStruct((2, T, R, _LANES), jnp.bfloat16),
        grid=(2,),
        in_specs=[
            pl.BlockSpec(memory_space=_SMEM),                    # beta, th
            pl.BlockSpec((T, R, _LANES), lambda d: (0, 0, 0)),   # full sequence
        ],
        out_specs=pl.BlockSpec((None, T, R, _LANES), lambda d: (d, 0, 0, 0)),
        compiler_params=pltpu.CompilerParams(
            dimension_semantics=("parallel",)),
    )(lif_params[:2], x3)

    spk = spk.reshape(2, T, Mpad)
    if Mpad != M:
        spk = spk[:, :, :M]
    return spk.reshape(2, T, C, B, H, W)


def _fused_conv_matrix(conv_p, cin, k):
    """Fold depthwise (Cin,k,k)+bias and pointwise (Cout,Cin)+bias into one
    dense W (Cout, k*k*Cin) and bias b (Cout,), patch K-index = kk*Cin + c."""
    w_dw = conv_p["w_dw"]                                         # (Cin, k, k)
    wdw_kkc = jnp.transpose(w_dw, (1, 2, 0)).reshape(k * k, cin)  # [kk, c]
    w_pw = conv_p["w_pw"]                                         # (Cout, Cin)
    cout = w_pw.shape[0]
    w_fused = (w_pw[:, None, :] * wdw_kkc[None, :, :]).reshape(cout, k * k * cin)
    b_fused = w_pw @ conv_p["b_dw"] + conv_p["b_pw"]
    return w_fused, b_fused


def _im2col(x_scbhw, k, stride, padding):
    """(S, C, B, H, W) -> patches (S, k*k*C, B*Ho*Wo), K-index = kk*C + c.

    TODO(synk): host-side im2col inflates HBM by ~k^2; move patch formation
    into the conv kernel for production spatial sizes."""
    S, C, B, H, W = x_scbhw.shape
    xp = x_scbhw
    if padding:
        xp = jnp.pad(xp, ((0, 0), (0, 0), (0, 0),
                          (padding, padding), (padding, padding)))
    Ho = (H + 2 * padding - k) // stride + 1
    Wo = (W + 2 * padding - k) // stride + 1
    taps = []
    for dy in range(k):
        for dx in range(k):
            taps.append(jax.lax.slice(
                xp, (0, 0, 0, dy, dx),
                (S, C, B, dy + stride * (Ho - 1) + 1, dx + stride * (Wo - 1) + 1),
                (1, 1, 1, stride, stride)))
    pat = jnp.stack(taps, axis=1)                     # (S, KK, C, B, Ho, Wo)
    return pat.reshape(S, k * k * C, B * Ho * Wo), Ho, Wo


def _pad_patches(patches, kp):
    """(S, Kdim, N) -> (S, Kp, N): append a ones-row (bias tap) + zero rows."""
    S, kdim, N = patches.shape
    parts = [patches, jnp.ones((S, 1, N), patches.dtype)]
    if kp > kdim + 1:
        parts.append(jnp.zeros((S, kp - kdim - 1, N), patches.dtype))
    return jnp.concatenate(parts, axis=1)


def _pad_weights(w_fused, b_fused, kp):
    """(Cout, Kdim) + (Cout,) -> (Cout, Kp) with the bias in column Kdim."""
    cout, kdim = w_fused.shape
    w_pad = jnp.zeros((cout, kp), jnp.float32)
    w_pad = w_pad.at[:, :kdim].set(w_fused)
    w_pad = w_pad.at[:, kdim].set(b_fused)
    return w_pad


def conv_act_bn(patches, w_pad, gamma_b, act_name, act_pos, s_blk):
    """Single pallas_call per layer: grid over time-blocks ("parallel"); each
    grid step covers S_blk time steps and all directions; per-step BN stats
    and gamma; direction average folded in."""
    ndir, T, Kp, N = patches.shape
    Cout = w_pad.shape[0]
    num_tb = T // s_blk
    kern = functools.partial(_conv_act_bn_kernel,
                             act_name=act_name, act_pos=act_pos)
    # TODO(synk): for production-size N, add a second grid axis tiling N
    # (>=512 lanes on v5e/v6e, ~half that on v7x; set vmem_limit_bytes) and
    # switch BN to partial-sum accumulation across N-tiles.
    return pl.pallas_call(
        kern,
        out_shape=jax.ShapeDtypeStruct((T, Cout, N), jnp.float32),
        grid=(num_tb,),
        in_specs=[
            pl.BlockSpec((ndir, s_blk, Kp, N), lambda tb: (0, tb, 0, 0)),
            pl.BlockSpec((Cout, Kp), lambda tb: (0, 0)),
            pl.BlockSpec((s_blk, Cout, N), lambda tb: (tb, 0, 0)),
        ],
        out_specs=pl.BlockSpec((s_blk, Cout, N), lambda tb: (tb, 0, 0)),
        compiler_params=pltpu.CompilerParams(
            dimension_semantics=("parallel",)),
    )(patches, w_pad, gamma_b)


# --------------------------------------------------------------------------
# Module forwards (glue orchestration in plain JAX, layout (T, C, B, H, W))
# --------------------------------------------------------------------------

def lcbv2_forward(p, x_tcbhw, k, stride, padding):
    """LCBV2: LIF (fwd & rev) -> shared DS conv -> SiLU -> BatchNormTT2d[t],
    0.5 * (fwd + rev) per time index (average folded into the conv kernel)."""
    T, C, B, H, W = x_tcbhw.shape
    spk = lif_all_steps(x_tcbhw, p["lif"])                   # (2, T, C, B, H, W) bf16
    patches, Ho, Wo = _im2col(spk.reshape(2 * T, C, B, H, W), k, stride, padding)
    kdim = k * k * C
    kp = _round_up(kdim + 1, 16)                             # bf16 tile alignment
    N = B * Ho * Wo
    patches = _pad_patches(patches, kp).reshape(2, T, kp, N)

    w_fused, b_fused = _fused_conv_matrix(p["conv"], C, k)
    w_fused = w_fused * p["lif"][2]     # fold graded_spikes_factor (exact; bias NOT scaled)
    w_pad = _pad_weights(w_fused, b_fused, kp).astype(_CONV_W_DTYPE)
    Cout = w_fused.shape[0]

    gamma_b = jnp.broadcast_to(
        p["bn_gamma"].astype(jnp.float32)[:, :, None], (T, Cout, N))
    out = conv_act_bn(patches, w_pad, gamma_b, "silu", "pre_bn", _pick_s_blk(T))
    return out.reshape(T, Cout, B, Ho, Wo)


def tcnnbase_forward(p, x_tcbhw, stride):
    """TCnnbase (kernel_size=1): conv -> BatchNormTT2d[t] -> ReLU6."""
    T, C, B, H, W = x_tcbhw.shape
    patches, Ho, Wo = _im2col(x_tcbhw, 1, stride, 0)         # (T, C, N) f32
    kp = _round_up(C + 1, 16)
    N = B * Ho * Wo
    patches = _pad_patches(patches, kp)[None]                # (1, T, Kp, N)

    w_fused, b_fused = _fused_conv_matrix(p["conv"], C, 1)
    w_pad = _pad_weights(w_fused, b_fused, kp).astype(_CONV_W_DTYPE)
    Cout = w_fused.shape[0]

    gamma_b = jnp.broadcast_to(
        p["bn_gamma"].astype(jnp.float32)[:, :, None], (T, Cout, N))
    out = conv_act_bn(patches, w_pad, gamma_b, "relu6", "post_bn", _pick_s_blk(T))
    return out.reshape(T, Cout, B, Ho, Wo)


def ms_forward(p, x, k, padding):
    xo = x
    x = lcbv2_forward(p["LCB1"], x, k, 1, padding)
    x = lcbv2_forward(p["LCB2"], x, k, 1, padding)
    return x + xo


def msm2_forward(p, x_btchw, k, stride, padding):
    x = jnp.transpose(x_btchw, (1, 2, 0, 3, 4))              # (T, C, B, H, W)
    xl = lcbv2_forward(p["L0"], x, k, stride, padding)
    xl = lcbv2_forward(p["L1"], xl, k, 1, padding)
    xr = tcnnbase_forward(p["RLCB"], x, stride)
    y = xl + xr
    y = ms_forward(p["Ms"], y, k, padding)
    return jnp.transpose(y, (2, 0, 1, 3, 4))                 # (B, T, C, H, W)


# --------------------------------------------------------------------------
# Deterministic parameter init (synthetic; shapes follow the PyTorch __init__)
# --------------------------------------------------------------------------

def init_dsconv(key, cin, cout, k):
    k1, k2, k3, k4 = jax.random.split(key, 4)
    return dict(
        w_dw=0.3 * jax.random.normal(k1, (cin, k, k), jnp.float32),  # (C,1,k,k) squeezed
        b_dw=0.1 * jax.random.normal(k2, (cin,), jnp.float32),
        w_pw=0.3 * jax.random.normal(k3, (cout, cin), jnp.float32),  # (Cout,Cin,1,1) squeezed
        b_pw=0.1 * jax.random.normal(k4, (cout,), jnp.float32),
    )


def init_lcbv2(key, cin, cout, k, time_steps):
    ks = jax.random.split(key, 3)
    # TODO(synk): LCBV2.convM and LCBV2.res are created in __init__ but never used in forward; omitted.
    return dict(
        lif=jax.random.uniform(ks[0], (3,), jnp.float32),            # beta, threshold, graded factor
        conv=init_dsconv(ks[1], cin, cout, k),
        bn_gamma=1.0 + 0.05 * jax.random.normal(ks[2], (time_steps, cout), jnp.float32),
    )


def init_tcnnbase(key, cin, cout, time_steps):
    ks = jax.random.split(key, 2)
    return dict(
        conv=init_dsconv(ks[0], cin, cout, 1),
        bn_gamma=1.0 + 0.05 * jax.random.normal(ks[1], (time_steps, cout), jnp.float32),
    )


def init_msm2(key, cin, cout, k, time_steps):
    assert cin < cout
    ks = jax.random.split(key, 5)
    return dict(
        L0=init_lcbv2(ks[0], cin, cout // 2, k, time_steps),
        L1=init_lcbv2(ks[1], cout // 2, cout, k, time_steps),
        RLCB=init_tcnnbase(ks[2], cin, cout, time_steps),
        Ms=dict(
            LCB1=init_lcbv2(ks[3], cout, cout // 2, k, time_steps),
            LCB2=init_lcbv2(ks[4], cout // 2, cout, k, time_steps),
        ),
        # TODO(synk): MSM2.mp (Tmaxpool) is constructed but unused in forward; omitted.
    )


# --------------------------------------------------------------------------

if __name__ == "__main__":
    key = jax.random.PRNGKey(0)
    kp_, kx = jax.random.split(key)

    B, T, Cin, H, W = 2, 4, 4, 16, 16
    Cout, K, STRIDE, PAD = 8, 3, 2, 1    # requires Cin < Cout (assert in MSM2)

    params = init_msm2(kp_, Cin, Cout, K, T)
    x = jax.random.normal(kx, (B, T, Cin, H, W), jnp.float32)

    fwd = jax.jit(lambda p, xi: msm2_forward(p, xi, K, STRIDE, PAD))
    out = jax.block_until_ready(fwd(params, x))

    assert out.shape == (B, T, Cout, H // STRIDE, W // STRIDE), out.shape
    assert jnp.isfinite(out).all()
    print("KERNEL_OK")
</pallas_src>

<mosaic_0001>
module attributes {stable_mosaic.version = 11 : i64} {
  func.func @_lif_dir_kernel(%arg0: i32, %arg1: memref<2xf32, #tpu.memory_space<smem>>, %arg2: memref<4x16x128xf32, #tpu.memory_space<vmem>>, %arg3: memref<1x4x16x128xbf16, #tpu.memory_space<vmem>>) attributes {dimension_semantics = [#tpu.dimension_semantics<parallel>], iteration_bounds = array<i64: 2>, scalar_prefetch = 0 : i64, scratch_operands = 0 : i64, tpu.core_type = #tpu.core_type<tc>, window_params = [{transform_indices = @transform_0, window_bounds = array<i64: 2>}, {pipeline_mode = #tpu.pipeline_mode<synchronous>, transform_indices = @transform_1, window_bounds = array<i64: 4, 16, 128>}, {transform_indices = @transform_2, window_bounds = array<i64: 1, 4, 16, 128>}]} {
    %c0 = arith.constant 0 : index
    %0 = memref.load %arg1[%c0] : memref<2xf32, #tpu.memory_space<smem>>
    %c1 = arith.constant 1 : index
    %1 = memref.load %arg1[%c1] : memref<2xf32, #tpu.memory_space<smem>>
    %cst = arith.constant 0.000000e+00 : f32
    %2 = vector.broadcast %cst : f32 to vector<16x128xf32>
    %c0_i32 = arith.constant 0 : i32
    %c0_i32_0 = arith.constant 0 : i32
    %3 = arith.cmpi eq, %arg0, %c0_i32_0 : i32
    %c3_i32 = arith.constant 3 : i32
    %4 = arith.subi %c3_i32, %c0_i32 : i32
    %5 = arith.select %3, %c0_i32, %4 : i32
    %6 = arith.index_cast %5 : i32 to index
    %c0_1 = arith.constant 0 : index
    %c0_2 = arith.constant 0 : index
    %7 = vector.load %arg2[%6, %c0_1, %c0_2] : memref<4x16x128xf32, #tpu.memory_space<vmem>>, vector<1x16x128xf32>
    %8 = vector.shape_cast %7 : vector<1x16x128xf32> to vector<16x128xf32>
    %9 = vector.broadcast %1 : f32 to vector<16x128xf32>
    %10 = arith.cmpf ogt, %2, %9 : vector<16x128xf32>
    %11 = arith.extui %10 : vector<16x128xi1> to vector<16x128xi32>
    %12 = arith.sitofp %11 : vector<16x128xi32> to vector<16x128xf32>
    %13 = vector.broadcast %0 : f32 to vector<16x128xf32>
    %14 = arith.mulf %13, %2 : vector<16x128xf32>
    %15 = arith.addf %14, %8 : vector<16x128xf32>
    %16 = vector.broadcast %1 : f32 to vector<16x128xf32>
    %17 = arith.mulf %12, %16 : vector<16x128xf32>
    %18 = arith.subf %15, %17 : vector<16x128xf32>
    %19 = vector.broadcast %1 : f32 to vector<16x128xf32>
    %20 = arith.cmpf ogt, %18, %19 : vector<16x128xf32>
    %21 = arith.extui %20 : vector<16x128xi1> to vector<16x128xi32>
    %22 = arith.sitofp %21 : vector<16x128xi32> to vector<16x128xf32>
    %23 = arith.truncf %22 : vector<16x128xf32> to vector<16x128xbf16>
    %c0_3 = arith.constant 0 : index
    %24 = arith.index_cast %5 : i32 to index
    %c0_4 = arith.constant 0 : index
    %c0_5 = arith.constant 0 : index
    %25 = vector.load %arg3[%c0_3, %24, %c0_4, %c0_5] : memref<1x4x16x128xbf16, #tpu.memory_space<vmem>>, vector<1x1x16x128xbf16>
    %26 = vector.shape_cast %25 : vector<1x1x16x128xbf16> to vector<16x128xbf16>
    %27 = vector.shape_cast %23 : vector<16x128xbf16> to vector<1x1x16x128xbf16>
    tpu.vector_store %arg3[%c0_3, %24, %c0_4, %c0_5], %27 {strides = array<i32>} : memref<1x4x16x128xbf16, #tpu.memory_space<vmem>>, vector<1x1x16x128xbf16>,
    %c1_i32 = arith.constant 1 : i32
    %c0_i32_6 = arith.constant 0 : i32
    %28 = arith.cmpi eq, %arg0, %c0_i32_6 : i32
    %c3_i32_7 = arith.constant 3 : i32
    %29 = arith.subi %c3_i32_7, %c1_i32 : i32
    %30 = arith.select %28, %c1_i32, %29 : i32
    %31 = arith.index_cast %30 : i32 to index
    %c0_8 = arith.constant 0 : index
    %c0_9 = arith.constant 0 : index
    %32 = vector.load %arg2[%31, %c0_8, %c0_9] : memref<4x16x128xf32, #tpu.memory_space<vmem>>, vector<1x16x128xf32>
    %33 = vector.shape_cast %32 : vector<1x16x128xf32> to vector<16x128xf32>
    %34 = vector.broadcast %1 : f32 to vector<16x128xf32>
    %35 = arith.cmpf ogt, %18, %34 : vector<16x128xf32>
    %36 = arith.extui %35 : vector<16x128xi1> to vector<16x128xi32>
    %37 = arith.sitofp %36 : vector<16x128xi32> to vector<16x128xf32>
    %38 = vector.broadcast %0 : f32 to vector<16x128xf32>
    %39 = arith.mulf %38, %18 : vector<16x128xf32>
    %40 = arith.addf %39, %33 : vector<16x128xf32>
    %41 = vector.broadcast %1 : f32 to vector<16x128xf32>
    %42 = arith.mulf %37, %41 : vector<16x128xf32>
    %43 = arith.subf %40, %42 : vector<16x128xf32>
    %44 = vector.broadcast %1 : f32 to vector<16x128xf32>
    %45 = arith.cmpf ogt, %43, %44 : vector<16x128xf32>
    %46 = arith.extui %45 : vector<16x128xi1> to vector<16x128xi32>
    %47 = arith.sitofp %46 : vector<16x128xi32> to vector<16x128xf32>
    %48 = arith.truncf %47 : vector<16x128xf32> to vector<16x128xbf16>
    %c0_10 = arith.constant 0 : index
    %49 = arith.index_cast %30 : i32 to index
    %c0_11 = arith.constant 0 : index
    %c0_12 = arith.constant 0 : index
    %50 = vector.load %arg3[%c0_10, %49, %c0_11, %c0_12] : memref<1x4x16x128xbf16, #tpu.memory_space<vmem>>, vector<1x1x16x128xbf16>
    %51 = vector.shape_cast %50 : vector<1x1x16x128xbf16> to vector<16x128xbf16>
    %52 = vector.shape_cast %48 : vector<16x128xbf16> to vector<1x1x16x128xbf16>
    tpu.vector_store %arg3[%c0_10, %49, %c0_11, %c0_12], %52 {strides = array<i32>} : memref<1x4x16x128xbf16, #tpu.memory_space<vmem>>, vector<1x1x16x128xbf16>,
    %c2_i32 = arith.constant 2 : i32
    %c0_i32_13 = arith.constant 0 : i32
    %53 = arith.cmpi eq, %arg0, %c0_i32_13 : i32
    %c3_i32_14 = arith.constant 3 : i32
    %54 = arith.subi %c3_i32_14, %c2_i32 : i32
    %55 = arith.select %53, %c2_i32, %54 : i32
    %56 = arith.index_cast %55 : i32 to index
    %c0_15 = arith.constant 0 : index
    %c0_16 = arith.constant 0 : index
    %57 = vector.load %arg2[%56, %c0_15, %c0_16] : memref<4x16x128xf32, #tpu.memory_space<vmem>>, vector<1x16x128xf32>
    %58 = vector.shape_cast %57 : vector<1x16x128xf32> to vector<16x128xf32>
    %59 = vector.broadcast %1 : f32 to vector<16x128xf32>
    %60 = arith.cmpf ogt, %43, %59 : vector<16x128xf32>
    %61 = arith.extui %60 : vector<16x128xi1> to vector<16x128xi32>
    %62 = arith.sitofp %61 : vector<16x128xi32> to vector<16x128xf32>
    %63 = vector.broadcast %0 : f32 to vector<16x128xf32>
    %64 = arith.mulf %63, %43 : vector<16x128xf32>
    %65 = arith.addf %64, %58 : vector<16x128xf32>
    %66 = vector.broadcast %1 : f32 to vector<16x128xf32>
    %67 = arith.mulf %62, %66 : vector<16x128xf32>
    %68 = arith.subf %65, %67 : vector<16x128xf32>
    %69 = vector.broadcast %1 : f32 to vector<16x128xf32>
    %70 = arith.cmpf ogt, %68, %69 : vector<16x128xf32>
    %71 = arith.extui %70 : vector<16x128xi1> to vector<16x128xi32>
    %72 = arith.sitofp %71 : vector<16x128xi32> to vector<16x128xf32>
    %73 = arith.truncf %72 : vector<16x128xf32> to vector<16x128xbf16>
    %c0_17 = arith.constant 0 : index
    %74 = arith.index_cast %55 : i32 to index
    %c0_18 = arith.constant 0 : index
    %c0_19 = arith.constant 0 : index
    %75 = vector.load %arg3[%c0_17, %74, %c0_18, %c0_19] : memref<1x4x16x128xbf16, #tpu.memory_space<vmem>>, vector<1x1x16x128xbf16>
    %76 = vector.shape_cast %75 : vector<1x1x16x128xbf16> to vector<16x128xbf16>
    %77 = vector.shape_cast %73 : vector<16x128xbf16> to vector<1x1x16x128xbf16>
    tpu.vector_store %arg3[%c0_17, %74, %c0_18, %c0_19], %77 {strides = array<i32>} : memref<1x4x16x128xbf16, #tpu.memory_space<vmem>>, vector<1x1x16x128xbf16>,
    %c3_i32_20 = arith.constant 3 : i32
    %c0_i32_21 = arith.constant 0 : i32
    %78 = arith.cmpi eq, %arg0, %c0_i32_21 : i32
    %c3_i32_22 = arith.constant 3 : i32
    %79 = arith.subi %c3_i32_22, %c3_i32_20 : i32
    %80 = arith.select %78, %c3_i32_20, %79 : i32
    %81 = arith.index_cast %80 : i32 to index
    %c0_23 = arith.constant 0 : index
    %c0_24 = arith.constant 0 : index
    %82 = vector.load %arg2[%81, %c0_23, %c0_24] : memref<4x16x128xf32, #tpu.memory_space<vmem>>, vector<1x16x128xf32>
    %83 = vector.shape_cast %82 : vector<1x16x128xf32> to vector<16x128xf32>
    %84 = vector.broadcast %1 : f32 to vector<16x128xf32>
    %85 = arith.cmpf ogt, %68, %84 : vector<16x128xf32>
    %86 = arith.extui %85 : vector<16x128xi1> to vector<16x128xi32>
    %87 = arith.sitofp %86 : vector<16x128xi32> to vector<16x128xf32>
    %88 = vector.broadcast %0 : f32 to vector<16x128xf32>
    %89 = arith.mulf %88, %68 : vector<16x128xf32>
    %90 = arith.addf %89, %83 : vector<16x128xf32>
    %91 = vector.broadcast %1 : f32 to vector<16x128xf32>
    %92 = arith.mulf %87, %91 : vector<16x128xf32>
    %93 = arith.subf %90, %92 : vector<16x128xf32>
    %94 = vector.broadcast %1 : f32 to vector<16x128xf32>
    %95 = arith.cmpf ogt, %93, %94 : vector<16x128xf32>
    %96 = arith.extui %95 : vector<16x128xi1> to vector<16x128xi32>
    %97 = arith.sitofp %96 : vector<16x128xi32> to vector<16x128xf32>
    %98 = arith.truncf %97 : vector<16x128xf32> to vector<16x128xbf16>
    %c0_25 = arith.constant 0 : index
    %99 = arith.index_cast %80 : i32 to index
    %c0_26 = arith.constant 0 : index
    %c0_27 = arith.constant 0 : index
    %100 = vector.load %arg3[%c0_25, %99, %c0_26, %c0_27] : memref<1x4x16x128xbf16, #tpu.memory_space<vmem>>, vector<1x1x16x128xbf16>
    %101 = vector.shape_cast %100 : vector<1x1x16x128xbf16> to vector<16x128xbf16>
    %102 = vector.shape_cast %98 : vector<16x128xbf16> to vector<1x1x16x128xbf16>
    tpu.vector_store %arg3[%c0_25, %99, %c0_26, %c0_27], %102 {strides = array<i32>} : memref<1x4x16x128xbf16, #tpu.memory_space<vmem>>, vector<1x1x16x128xbf16>,
    %c4_i32 = arith.constant 4 : i32
    return
  }
  func.func @transform_0(%arg0: i32) -> i32 {
    %c0_i32 = arith.constant 0 : i32
    %c0_i32_0 = arith.constant 0 : i32
    return %c0_i32 : i32
  }
  func.func @transform_1(%arg0: i32) -> (i32, i32, i32) {
    %c0_i32 = arith.constant 0 : i32
    %c0_i32_0 = arith.constant 0 : i32
    %c0_i32_1 = arith.constant 0 : i32
    %c0_i32_2 = arith.constant 0 : i32
    return %c0_i32, %c0_i32_0, %c0_i32_1 : i32, i32, i32
  }
  func.func @transform_2(%arg0: i32) -> (i32, i32, i32, i32) {
    %c0_i32 = arith.constant 0 : i32
    %c0_i32_0 = arith.constant 0 : i32
    %c0_i32_1 = arith.constant 0 : i32
    %c0_i32_2 = arith.constant 0 : i32
    return %arg0, %c0_i32, %c0_i32_0, %c0_i32_1 : i32, i32, i32, i32
  }
}

module attributes {stable_mosaic.version = 11 : i64} {
  func.func @_lif_dir_kernel(%arg0: i32, %arg1: memref<2xf32, #tpu.memory_space<smem>>, %arg2: memref<4x4x128xf32, #tpu.memory_space<vmem>>, %arg3: memref<1x4x4x128xbf16, #tpu.memory_space<vmem>>) attributes {dimension_semantics = [#tpu.dimension_semantics<parallel>], iteration_bounds = array<i64: 2>, scalar_prefetch = 0 : i64, scratch_operands = 0 : i64, tpu.core_type = #tpu.core_type<tc>, window_params = [{transform_indices = @transform_0, window_bounds = array<i64: 2>}, {pipeline_mode = #tpu.pipeline_mode<synchronous>, transform_indices = @transform_1, window_bounds = array<i64: 4, 4, 128>}, {transform_indices = @transform_2, window_bounds = array<i64: 1, 4, 4, 128>}]} {
    %c0 = arith.constant 0 : index
    %0 = memref.load %arg1[%c0] : memref<2xf32, #tpu.memory_space<smem>>
    %c1 = arith.constant 1 : index
    %1 = memref.load %arg1[%c1] : memref<2xf32, #tpu.memory_space<smem>>
    %cst = arith.constant 0.000000e+00 : f32
    %2 = vector.broadcast %cst : f32 to vector<4x128xf32>
    %c0_i32 = arith.constant 0 : i32
    %c0_i32_0 = arith.constant 0 : i32
    %3 = arith.cmpi eq, %arg0, %c0_i32_0 : i32
    %c3_i32 = arith.constant 3 : i32
    %4 = arith.subi %c3_i32, %c0_i32 : i32
    %5 = arith.select %3, %c0_i32, %4 : i32
    %6 = arith.index_cast %5 : i32 to index
    %c0_1 = arith.constant 0 : index
    %c0_2 = arith.constant 0 : index
    %7 = vector.load %arg2[%6, %c0_1, %c0_2] : memref<4x4x128xf32, #tpu.memory_space<vmem>>, vector<1x4x128xf32>
    %8 = vector.shape_cast %7 : vector<1x4x128xf32> to vector<4x128xf32>
    %9 = vector.broadcast %1 : f32 to vector<4x128xf32>
    %10 = arith.cmpf ogt, %2, %9 : vector<4x128xf32>
    %11 = arith.extui %10 : vector<4x128xi1> to vector<4x128xi32>
    %12 = arith.sitofp %11 : vector<4x128xi32> to vector<4x128xf32>
    %13 = vector.broadcast %0 : f32 to vector<4x128xf32>
    %14 = arith.mulf %13, %2 : vector<4x128xf32>
    %15 = arith.addf %14, %8 : vector<4x128xf32>
    %16 = vector.broadcast %1 : f32 to vector<4x128xf32>
    %17 = arith.mulf %12, %16 : vector<4x128xf32>
    %18 = arith.subf %15, %17 : vector<4x128xf32>
    %19 = vector.broadcast %1 : f32 to vector<4x128xf32>
    %20 = arith.cmpf ogt, %18, %19 : vector<4x128xf32>
    %21 = arith.extui %20 : vector<4x128xi1> to vector<4x128xi32>
    %22 = arith.sitofp %21 : vector<4x128xi32> to vector<4x128xf32>
    %23 = arith.truncf %22 : vector<4x128xf32> to vector<4x128xbf16>
    %c0_3 = arith.constant 0 : index
    %24 = arith.index_cast %5 : i32 to index
    %c0_4 = arith.constant 0 : index
    %c0_5 = arith.constant 0 : index
    %25 = vector.load %arg3[%c0_3, %24, %c0_4, %c0_5] : memref<1x4x4x128xbf16, #tpu.memory_space<vmem>>, vector<1x1x4x128xbf16>
    %26 = vector.shape_cast %25 : vector<1x1x4x128xbf16> to vector<4x128xbf16>
    %27 = vector.shape_cast %23 : vector<4x128xbf16> to vector<1x1x4x128xbf16>
    tpu.vector_store %arg3[%c0_3, %24, %c0_4, %c0_5], %27 {strides = array<i32>} : memref<1x4x4x128xbf16, #tpu.memory_space<vmem>>, vector<1x1x4x128xbf16>,
    %c1_i32 = arith.constant 1 : i32
    %c0_i32_6 = arith.constant 0 : i32
    %28 = arith.cmpi eq, %arg0, %c0_i32_6 : i32
    %c3_i32_7 = arith.constant 3 : i32
    %29 = arith.subi %c3_i32_7, %c1_i32 : i32
    %30 = arith.select %28, %c1_i32, %29 : i32
    %31 = arith.index_cast %30 : i32 to index
    %c0_8 = arith.constant 0 : index
    %c0_9 = arith.constant 0 : index
    %32 = vector.load %arg2[%31, %c0_8, %c0_9] : memref<4x4x128xf32, #tpu.memory_space<vmem>>, vector<1x4x128xf32>
    %33 = vector.shape_cast %32 : vector<1x4x128xf32> to vector<4x128xf32>
    %34 = vector.broadcast %1 : f32 to vector<4x128xf32>
    %35 = arith.cmpf ogt, %18, %34 : vector<4x128xf32>
    %36 = arith.extui %35 : vector<4x128xi1> to vector<4x128xi32>
    %37 = arith.sitofp %36 : vector<4x128xi32> to vector<4x128xf32>
    %38 = vector.broadcast %0 : f32 to vector<4x128xf32>
    %39 = arith.mulf %38, %18 : vector<4x128xf32>
    %40 = arith.addf %39, %33 : vector<4x128xf32>
    %41 = vector.broadcast %1 : f32 to vector<4x128xf32>
    %42 = arith.mulf %37, %41 : vector<4x128xf32>
    %43 = arith.subf %40, %42 : vector<4x128xf32>
    %44 = vector.broadcast %1 : f32 to vector<4x128xf32>
    %45 = arith.cmpf ogt, %43, %44 : vector<4x128xf32>
    %46 = arith.extui %45 : vector<4x128xi1> to vector<4x128xi32>
    %47 = arith.sitofp %46 : vector<4x128xi32> to vector<4x128xf32>
    %48 = arith.truncf %47 : vector<4x128xf32> to vector<4x128xbf16>
    %c0_10 = arith.constant 0 : index
    %49 = arith.index_cast %30 : i32 to index
    %c0_11 = arith.constant 0 : index
    %c0_12 = arith.constant 0 : index
    %50 = vector.load %arg3[%c0_10, %49, %c0_11, %c0_12] : memref<1x4x4x128xbf16, #tpu.memory_space<vmem>>, vector<1x1x4x128xbf16>
    %51 = vector.shape_cast %50 : vector<1x1x4x128xbf16> to vector<4x128xbf16>
    %52 = vector.shape_cast %48 : vector<4x128xbf16> to vector<1x1x4x128xbf16>
    tpu.vector_store %arg3[%c0_10, %49, %c0_11, %c0_12], %52 {strides = array<i32>} : memref<1x4x4x128xbf16, #tpu.memory_space<vmem>>, vector<1x1x4x128xbf16>,
    %c2_i32 = arith.constant 2 : i32
    %c0_i32_13 = arith.constant 0 : i32
    %53 = arith.cmpi eq, %arg0, %c0_i32_13 : i32
    %c3_i32_14 = arith.constant 3 : i32
    %54 = arith.subi %c3_i32_14, %c2_i32 : i32
    %55 = arith.select %53, %c2_i32, %54 : i32
    %56 = arith.index_cast %55 : i32 to index
    %c0_15 = arith.constant 0 : index
    %c0_16 = arith.constant 0 : index
    %57 = vector.load %arg2[%56, %c0_15, %c0_16] : memref<4x4x128xf32, #tpu.memory_space<vmem>>, vector<1x4x128xf32>
    %58 = vector.shape_cast %57 : vector<1x4x128xf32> to vector<4x128xf32>
    %59 = vector.broadcast %1 : f32 to vector<4x128xf32>
    %60 = arith.cmpf ogt, %43, %59 : vector<4x128xf32>
    %61 = arith.extui %60 : vector<4x128xi1> to vector<4x128xi32>
    %62 = arith.sitofp %61 : vector<4x128xi32> to vector<4x128xf32>
    %63 = vector.broadcast %0 : f32 to vector<4x128xf32>
    %64 = arith.mulf %63, %43 : vector<4x128xf32>
    %65 = arith.addf %64, %58 : vector<4x128xf32>
    %66 = vector.broadcast %1 : f32 to vector<4x128xf32>
    %67 = arith.mulf %62, %66 : vector<4x128xf32>
    %68 = arith.subf %65, %67 : vector<4x128xf32>
    %69 = vector.broadcast %1 : f32 to vector<4x128xf32>
    %70 = arith.cmpf ogt, %68, %69 : vector<4x128xf32>
    %71 = arith.extui %70 : vector<4x128xi1> to vector<4x128xi32>
    %72 = arith.sitofp %71 : vector<4x128xi32> to vector<4x128xf32>
    %73 = arith.truncf %72 : vector<4x128xf32> to vector<4x128xbf16>
    %c0_17 = arith.constant 0 : index
    %74 = arith.index_cast %55 : i32 to index
    %c0_18 = arith.constant 0 : index
    %c0_19 = arith.constant 0 : index
    %75 = vector.load %arg3[%c0_17, %74, %c0_18, %c0_19] : memref<1x4x4x128xbf16, #tpu.memory_space<vmem>>, vector<1x1x4x128xbf16>
    %76 = vector.shape_cast %75 : vector<1x1x4x128xbf16> to vector<4x128xbf16>
    %77 = vector.shape_cast %73 : vector<4x128xbf16> to vector<1x1x4x128xbf16>
    tpu.vector_store %arg3[%c0_17, %74, %c0_18, %c0_19], %77 {strides = array<i32>} : memref<1x4x4x128xbf16, #tpu.memory_space<vmem>>, vector<1x1x4x128xbf16>,
    %c3_i32_20 = arith.constant 3 : i32
    %c0_i32_21 = arith.constant 0 : i32
    %78 = arith.cmpi eq, %arg0, %c0_i32_21 : i32
    %c3_i32_22 = arith.constant 3 : i32
    %79 = arith.subi %c3_i32_22, %c3_i32_20 : i32
    %80 = arith.select %78, %c3_i32_20, %79 : i32
    %81 = arith.index_cast %80 : i32 to index
    %c0_23 = arith.constant 0 : index
    %c0_24 = arith.constant 0 : index
    %82 = vector.load %arg2[%81, %c0_23, %c0_24] : memref<4x4x128xf32, #tpu.memory_space<vmem>>, vector<1x4x128xf32>
    %83 = vector.shape_cast %82 : vector<1x4x128xf32> to vector<4x128xf32>
    %84 = vector.broadcast %1 : f32 to vector<4x128xf32>
    %85 = arith.cmpf ogt, %68, %84 : vector<4x128xf32>
    %86 = arith.extui %85 : vector<4x128xi1> to vector<4x128xi32>
    %87 = arith.sitofp %86 : vector<4x128xi32> to vector<4x128xf32>
    %88 = vector.broadcast %0 : f32 to vector<4x128xf32>
    %89 = arith.mulf %88, %68 : vector<4x128xf32>
    %90 = arith.addf %89, %83 : vector<4x128xf32>
    %91 = vector.broadcast %1 : f32 to vector<4x128xf32>
    %92 = arith.mulf %87, %91 : vector<4x128xf32>
    %93 = arith.subf %90, %92 : vector<4x128xf32>
    %94 = vector.broadcast %1 : f32 to vector<4x128xf32>
    %95 = arith.cmpf ogt, %93, %94 : vector<4x128xf32>
    %96 = arith.extui %95 : vector<4x128xi1> to vector<4x128xi32>
    %97 = arith.sitofp %96 : vector<4x128xi32> to vector<4x128xf32>
    %98 = arith.truncf %97 : vector<4x128xf32> to vector<4x128xbf16>
    %c0_25 = arith.constant 0 : index
    %99 = arith.index_cast %80 : i32 to index
    %c0_26 = arith.constant 0 : index
    %c0_27 = arith.constant 0 : index
    %100 = vector.load %arg3[%c0_25, %99, %c0_26, %c0_27] : memref<1x4x4x128xbf16, #tpu.memory_space<vmem>>, vector<1x1x4x128xbf16>
    %101 = vector.shape_cast %100 : vector<1x1x4x128xbf16> to vector<4x128xbf16>
    %102 = vector.shape_cast %98 : vector<4x128xbf16> to vector<1x1x4x128xbf16>
    tpu.vector_store %arg3[%c0_25, %99, %c0_26, %c0_27], %102 {strides = array<i32>} : memref<1x4x4x128xbf16, #tpu.memory_space<vmem>>, vector<1x1x4x128xbf16>,
    %c4_i32 = arith.constant 4 : i32
    return
  }
  func.func @transform_0(%arg0: i32) -> i32 {
    %c0_i32 = arith.constant 0 : i32
    %c0_i32_0 = arith.constant 0 : i32
    return %c0_i32 : i32
  }
  func.func @transform_1(%arg0: i32) -> (i32, i32, i32) {
    %c0_i32 = arith.constant 0 : i32
    %c0_i32_0 = arith.constant 0 : i32
    %c0_i32_1 = arith.constant 0 : i32
    %c0_i32_2 = arith.constant 0 : i32
    return %c0_i32, %c0_i32_0, %c0_i32_1 : i32, i32, i32
  }
  func.func @transform_2(%arg0: i32) -> (i32, i32, i32, i32) {
    %c0_i32 = arith.constant 0 : i32
    %c0_i32_0 = arith.constant 0 : i32
    %c0_i32_1 = arith.constant 0 : i32
    %c0_i32_2 = arith.constant 0 : i32
    return %arg0, %c0_i32, %c0_i32_0, %c0_i32_1 : i32, i32, i32, i32
  }
}

module attributes {stable_mosaic.version = 11 : i64} {
  func.func @_conv_act_bn_kernel(%arg0: i32, %arg1: memref<2x4x48x128xbf16, #tpu.memory_space<vmem>>, %arg2: memref<4x48xf32, #tpu.memory_space<vmem>>, %arg3: memref<4x4x128xf32, #tpu.memory_space<vmem>>, %arg4: memref<4x4x128xf32, #tpu.memory_space<vmem>>) attributes {dimension_semantics = [#tpu.dimension_semantics<parallel>], iteration_bounds = array<i64: 1>, scalar_prefetch = 0 : i64, scratch_operands = 0 : i64, tpu.core_type = #tpu.core_type<tc>, window_params = [{transform_indices = @transform_0, window_bounds = array<i64: 2, 4, 48, 128>}, {pipeline_mode = #tpu.pipeline_mode<synchronous>, transform_indices = @transform_1, window_bounds = array<i64: 4, 48>}, {transform_indices = @transform_2, window_bounds = array<i64: 4, 4, 128>}, {transform_indices = @transform_3, window_bounds = array<i64: 4, 4, 128>}]} {
    %c0 = arith.constant 0 : index
    %c0_0 = arith.constant 0 : index
    %0 = vector.load %arg2[%c0, %c0_0] : memref<4x48xf32, #tpu.memory_space<vmem>>, vector<4x48xf32>
    %c0_1 = arith.constant 0 : index
    %c0_2 = arith.constant 0 : index
    %c0_3 = arith.constant 0 : index
    %1 = vector.load %arg3[%c0_1, %c0_2, %c0_3] : memref<4x4x128xf32, #tpu.memory_space<vmem>>, vector<1x4x128xf32>
    %2 = vector.shape_cast %1 : vector<1x4x128xf32> to vector<4x128xf32>
    %c0_4 = arith.constant 0 : index
    %c0_5 = arith.constant 0 : index
    %c0_6 = arith.constant 0 : index
    %c0_7 = arith.constant 0 : index
    %3 = vector.load %arg1[%c0_4, %c0_5, %c0_6, %c0_7] : memref<2x4x48x128xbf16, #tpu.memory_space<vmem>>, vector<1x1x48x128xbf16>
    %4 = vector.shape_cast %3 : vector<1x1x48x128xbf16> to vector<48x128xbf16>
    %5 = arith.extf %4 : vector<48x128xbf16> to vector<48x128xf32>
    %cst = arith.constant dense<0.000000e+00> : vector<4x128xf32>
    %6 = tpu.matmul %0, %5, %cst {dimension_numbers = #tpu.dot_dimension_numbers<[1], [0], [0], [1], [0, 0, 1, 1], [], []>} : vector<4x48xf32>, vector<48x128xf32>, vector<4x128xf32> -> vector<4x128xf32>
    %7 = arith.negf %6 : vector<4x128xf32>
    %8 = math.exp %7 : vector<4x128xf32>
    %cst_8 = arith.constant 1.000000e+00 : f32
    %9 = vector.broadcast %cst_8 : f32 to vector<4x128xf32>
    %10 = arith.addf %9, %8 : vector<4x128xf32>
    %11 = arith.divf %9, %10 : vector<4x128xf32>
    %12 = arith.mulf %6, %11 : vector<4x128xf32>
    %cst_9 = arith.constant dense<0.000000e+00> : vector<4xf32>
    %13 = vector.multi_reduction <add>, %12, %cst_9 [1] : vector<4x128xf32> to vector<4xf32>
    %14 = vector.shape_cast %13 : vector<4xf32> to vector<4x1xf32>
    %cst_10 = arith.constant 1.280000e+02 : f32
    %15 = vector.broadcast %cst_10 : f32 to vector<4x1xf32>
    %16 = arith.divf %14, %15 : vector<4x1xf32>
    %17 = vector.broadcast %16 : vector<4x1xf32> to vector<4x128xf32>
    %18 = arith.subf %12, %17 : vector<4x128xf32>
    %19 = arith.mulf %18, %18 : vector<4x128xf32>
    %cst_11 = arith.constant dense<0.000000e+00> : vector<4xf32>
    %20 = vector.multi_reduction <add>, %19, %cst_11 [1] : vector<4x128xf32> to vector<4xf32>
    %21 = vector.shape_cast %20 : vector<4xf32> to vector<4x1xf32>
    %cst_12 = arith.constant 1.280000e+02 : f32
    %22 = vector.broadcast %cst_12 : f32 to vector<4x1xf32>
    %23 = arith.divf %21, %22 : vector<4x1xf32>
    %24 = vector.broadcast %16 : vector<4x1xf32> to vector<4x128xf32>
    %25 = arith.subf %12, %24 : vector<4x128xf32>
    %cst_13 = arith.constant 9.99999974E-6 : f32
    %26 = vector.broadcast %cst_13 : f32 to vector<4x1xf32>
    %27 = arith.addf %23, %26 : vector<4x1xf32>
    %28 = math.rsqrt %27 : vector<4x1xf32>
    %29 = vector.broadcast %28 : vector<4x1xf32> to vector<4x128xf32>
    %30 = arith.mulf %25, %29 : vector<4x128xf32>
    %31 = arith.mulf %30, %2 : vector<4x128xf32>
    %c1 = arith.constant 1 : index
    %c0_14 = arith.constant 0 : index
    %c0_15 = arith.constant 0 : index
    %c0_16 = arith.constant 0 : index
    %32 = vector.load %arg1[%c1, %c0_14, %c0_15, %c0_16] : memref<2x4x48x128xbf16, #tpu.memory_space<vmem>>, vector<1x1x48x128xbf16>
    %33 = vector.shape_cast %32 : vector<1x1x48x128xbf16> to vector<48x128xbf16>
    %34 = arith.extf %33 : vector<48x128xbf16> to vector<48x128xf32>
    %cst_17 = arith.constant dense<0.000000e+00> : vector<4x128xf32>
    %35 = tpu.matmul %0, %34, %cst_17 {dimension_numbers = #tpu.dot_dimension_numbers<[1], [0], [0], [1], [0, 0, 1, 1], [], []>} : vector<4x48xf32>, vector<48x128xf32>, vector<4x128xf32> -> vector<4x128xf32>
    %36 = arith.negf %35 : vector<4x128xf32>
    %37 = math.exp %36 : vector<4x128xf32>
    %cst_18 = arith.constant 1.000000e+00 : f32
    %38 = vector.broadcast %cst_18 : f32 to vector<4x128xf32>
    %39 = arith.addf %38, %37 : vector<4x128xf32>
    %40 = arith.divf %38, %39 : vector<4x128xf32>
    %41 = arith.mulf %35, %40 : vector<4x128xf32>
    %cst_19 = arith.constant dense<0.000000e+00> : vector<4xf32>
    %42 = vector.multi_reduction <add>, %41, %cst_19 [1] : vector<4x128xf32> to vector<4xf32>
    %43 = vector.shape_cast %42 : vector<4xf32> to vector<4x1xf32>
    %cst_20 = arith.constant 1.280000e+02 : f32
    %44 = vector.broadcast %cst_20 : f32 to vector<4x1xf32>
    %45 = arith.divf %43, %44 : vector<4x1xf32>
    %46 = vector.broadcast %45 : vector<4x1xf32> to vector<4x128xf32>
    %47 = arith.subf %41, %46 : vector<4x128xf32>
    %48 = arith.mulf %47, %47 : vector<4x128xf32>
    %cst_21 = arith.constant dense<0.000000e+00> : vector<4xf32>
    %49 = vector.multi_reduction <add>, %48, %cst_21 [1] : vector<4x128xf32> to vector<4xf32>
    %50 = vector.shape_cast %49 : vector<4xf32> to vector<4x1xf32>
    %cst_22 = arith.constant 1.280000e+02 : f32
    %51 = vector.broadcast %cst_22 : f32 to vector<4x1xf32>
    %52 = arith.divf %50, %51 : vector<4x1xf32>
    %53 = vector.broadcast %45 : vector<4x1xf32> to vector<4x128xf32>
    %54 = arith.subf %41, %53 : vector<4x128xf32>
    %cst_23 = arith.constant 9.99999974E-6 : f32
    %55 = vector.broadcast %cst_23 : f32 to vector<4x1xf32>
    %56 = arith.addf %52, %55 : vector<4x1xf32>
    %57 = math.rsqrt %56 : vector<4x1xf32>
    %58 = vector.broadcast %57 : vector<4x1xf32> to vector<4x128xf32>
    %59 = arith.mulf %54, %58 : vector<4x128xf32>
    %60 = arith.mulf %59, %2 : vector<4x128xf32>
    %61 = arith.addf %31, %60 : vector<4x128xf32>
    %cst_24 = arith.constant 5.000000e-01 : f32
    %62 = vector.broadcast %cst_24 : f32 to vector<4x128xf32>
    %63 = arith.mulf %61, %62 : vector<4x128xf32>
    %c0_25 = arith.constant 0 : index
    %c0_26 = arith.constant 0 : index
    %c0_27 = arith.constant 0 : index
    %64 = vector.load %arg4[%c0_25, %c0_26, %c0_27] : memref<4x4x128xf32, #tpu.memory_space<vmem>>, vector<1x4x128xf32>
    %65 = vector.shape_cast %64 : vector<1x4x128xf32> to vector<4x128xf32>
    %66 = vector.shape_cast %63 : vector<4x128xf32> to vector<1x4x128xf32>
    tpu.vector_store %arg4[%c0_25, %c0_26, %c0_27], %66 {strides = array<i32>} : memref<4x4x128xf32, #tpu.memory_space<vmem>>, vector<1x4x128xf32>,
    %c1_28 = arith.constant 1 : index
    %c0_29 = arith.constant 0 : index
    %c0_30 = arith.constant 0 : index
    %67 = vector.load %arg3[%c1_28, %c0_29, %c0_30] : memref<4x4x128xf32, #tpu.memory_space<vmem>>, vector<1x4x128xf32>
    %68 = vector.shape_cast %67 : vector<1x4x128xf32> to vector<4x128xf32>
    %c0_31 = arith.constant 0 : index
    %c1_32 = arith.constant 1 : index
    %c0_33 = arith.constant 0 : index
    %c0_34 = arith.constant 0 : index
    %69 = vector.load %arg1[%c0_31, %c1_32, %c0_33, %c0_34] : memref<2x4x48x128xbf16, #tpu.memory_space<vmem>>, vector<1x1x48x128xbf16>
    %70 = vector.shape_cast %69 : vector<1x1x48x128xbf16> to vector<48x128xbf16>
    %71 = arith.extf %70 : vector<48x128xbf16> to vector<48x128xf32>
    %cst_35 = arith.constant dense<0.000000e+00> : vector<4x128xf32>
    %72 = tpu.matmul %0, %71, %cst_35 {dimension_numbers = #tpu.dot_dimension_numbers<[1], [0], [0], [1], [0, 0, 1, 1], [], []>} : vector<4x48xf32>, vector<48x128xf32>, vector<4x128xf32> -> vector<4x128xf32>
    %73 = arith.negf %72 : vector<4x128xf32>
    %74 = math.exp %73 : vector<4x128xf32>
    %cst_36 = arith.constant 1.000000e+00 : f32
    %75 = vector.broadcast %cst_36 : f32 to vector<4x128xf32>
    %76 = arith.addf %75, %74 : vector<4x128xf32>
    %77 = arith.divf %75, %76 : vector<4x128xf32>
    %78 = arith.mulf %72, %77 : vector<4x128xf32>
    %cst_37 = arith.constant dense<0.000000e+00> : vector<4xf32>
    %79 = vector.multi_reduction <add>, %78, %cst_37 [1] : vector<4x128xf32> to vector<4xf32>
    %80 = vector.shape_cast %79 : vector<4xf32> to vector<4x1xf32>
    %cst_38 = arith.constant 1.280000e+02 : f32
    %81 = vector.broadcast %cst_38 : f32 to vector<4x1xf32>
    %82 = arith.divf %80, %81 : vector<4x1xf32>
    %83 = vector.broadcast %82 : vector<4x1xf32> to vector<4x128xf32>
    %84 = arith.subf %78, %83 : vector<4x128xf32>
    %85 = arith.mulf %84, %84 : vector<4x128xf32>
    %cst_39 = arith.constant dense<0.000000e+00> : vector<4xf32>
    %86 = vector.multi_reduction <add>, %85, %cst_39 [1] : vector<4x128xf32> to vector<4xf32>
    %87 = vector.shape_cast %86 : vector<4xf32> to vector<4x1xf32>
    %cst_40 = arith.constant 1.280000e+02 : f32
    %88 = vector.broadcast %cst_40 : f32 to vector<4x1xf32>
    %89 = arith.divf %87, %88 : vector<4x1xf32>
    %90 = vector.broadcast %82 : vector<4x1xf32> to vector<4x128xf32>
    %91 = arith.subf %78, %90 : vector<4x128xf32>
    %cst_41 = arith.constant 9.99999974E-6 : f32
    %92 = vector.broadcast %cst_41 : f32 to vector<4x1xf32>
    %93 = arith.addf %89, %92 : vector<4x1xf32>
    %94 = math.rsqrt %93 : vector<4x1xf32>
    %95 = vector.broadcast %94 : vector<4x1xf32> to vector<4x128xf32>
    %96 = arith.mulf %91, %95 : vector<4x128xf32>
    %97 = arith.mulf %96, %68 : vector<4x128xf32>
    %c1_42 = arith.constant 1 : index
    %c1_43 = arith.constant 1 : index
    %c0_44 = arith.constant 0 : index
    %c0_45 = arith.constant 0 : index
    %98 = vector.load %arg1[%c1_42, %c1_43, %c0_44, %c0_45] : memref<2x4x48x128xbf16, #tpu.memory_space<vmem>>, vector<1x1x48x128xbf16>
    %99 = vector.shape_cast %98 : vector<1x1x48x128xbf16> to vector<48x128xbf16>
    %100 = arith.extf %99 : vector<48x128xbf16> to vector<48x128xf32>
    %cst_46 = arith.constant dense<0.000000e+00> : vector<4x128xf32>
    %101 = tpu.matmul %0, %100, %cst_46 {dimension_numbers = #tpu.dot_dimension_numbers<[1], [0], [0], [1], [0, 0, 1, 1], [], []>} : vector<4x48xf32>, vector<48x128xf32>, vector<4x128xf32> -> vector<4x128xf32>
    %102 = arith.negf %101 : vector<4x128xf32>
    %103 = math.exp %102 : vector<4x128xf32>
    %cst_47 = arith.constant 1.000000e+00 : f32
    %104 = vector.broadcast %cst_47 : f32 to vector<4x128xf32>
    %105 = arith.addf %104, %103 : vector<4x128xf32>
    %106 = arith.divf %104, %105 : vector<4x128xf32>
    %107 = arith.mulf %101, %106 : vector<4x128xf32>
    %cst_48 = arith.constant dense<0.000000e+00> : vector<4xf32>
    %108 = vector.multi_reduction <add>, %107, %cst_48 [1] : vector<4x128xf32> to vector<4xf32>
    %109 = vector.shape_cast %108 : vector<4xf32> to vector<4x1xf32>
    %cst_49 = arith.constant 1.280000e+02 : f32
    %110 = vector.broadcast %cst_49 : f32 to vector<4x1xf32>
    %111 = arith.divf %109, %110 : vector<4x1xf32>
    %112 = vector.broadcast %111 : vector<4x1xf32> to vector<4x128xf32>
    %113 = arith.subf %107, %112 : vector<4x128xf32>
    %114 = arith.mulf %113, %113 : vector<4x128xf32>
    %cst_50 = arith.constant dense<0.000000e+00> : vector<4xf32>
    %115 = vector.multi_reduction <add>, %114, %cst_50 [1] : vector<4x128xf32> to vector<4xf32>
    %116 = vector.shape_cast %115 : vector<4xf32> to vector<4x1xf32>
    %cst_51 = arith.constant 1.280000e+02 : f32
    %117 = vector.broadcast %cst_51 : f32 to vector<4x1xf32>
    %118 = arith.divf %116, %117 : vector<4x1xf32>
    %119 = vector.broadcast %111 : vector<4x1xf32> to vector<4x128xf32>
    %120 = arith.subf %107, %119 : vector<4x128xf32>
    %cst_52 = arith.constant 9.99999974E-6 : f32
    %121 = vector.broadcast %cst_52 : f32 to vector<4x1xf32>
    %122 = arith.addf %118, %121 : vector<4x1xf32>
    %123 = math.rsqrt %122 : vector<4x1xf32>
    %124 = vector.broadcast %123 : vector<4x1xf32> to vector<4x128xf32>
    %125 = arith.mulf %120, %124 : vector<4x128xf32>
    %126 = arith.mulf %125, %68 : vector<4x128xf32>
    %127 = arith.addf %97, %126 : vector<4x128xf32>
    %cst_53 = arith.constant 5.000000e-01 : f32
    %128 = vector.broadcast %cst_53 : f32 to vector<4x128xf32>
    %129 = arith.mulf %127, %128 : vector<4x128xf32>
    %c1_54 = arith.constant 1 : index
    %c0_55 = arith.constant 0 : index
    %c0_56 = arith.constant 0 : index
    %130 = vector.load %arg4[%c1_54, %c0_55, %c0_56] : memref<4x4x128xf32, #tpu.memory_space<vmem>>, vector<1x4x128xf32>
    %131 = vector.shape_cast %130 : vector<1x4x128xf32> to vector<4x128xf32>
    %132 = vector.shape_cast %129 : vector<4x128xf32> to vector<1x4x128xf32>
    tpu.vector_store %arg4[%c1_54, %c0_55, %c0_56], %132 {strides = array<i32>} : memref<4x4x128xf32, #tpu.memory_space<vmem>>, vector<1x4x128xf32>,
    %c2 = arith.constant 2 : index
    %c0_57 = arith.constant 0 : index
    %c0_58 = arith.constant 0 : index
    %133 = vector.load %arg3[%c2, %c0_57, %c0_58] : memref<4x4x128xf32, #tpu.memory_space<vmem>>, vector<1x4x128xf32>
    %134 = vector.shape_cast %133 : vector<1x4x128xf32> to vector<4x128xf32>
    %c0_59 = arith.constant 0 : index
    %c2_60 = arith.constant 2 : index
    %c0_61 = arith.constant 0 : index
    %c0_62 = arith.constant 0 : index
    %135 = vector.load %arg1[%c0_59, %c2_60, %c0_61, %c0_62] : memref<2x4x48x128xbf16, #tpu.memory_space<vmem>>, vector<1x1x48x128xbf16>
    %136 = vector.shape_cast %135 : vector<1x1x48x128xbf16> to vector<48x128xbf16>
    %137 = arith.extf %136 : vector<48x128xbf16> to vector<48x128xf32>
    %cst_63 = arith.constant dense<0.000000e+00> : vector<4x128xf32>
    %138 = tpu.matmul %0, %137, %cst_63 {dimension_numbers = #tpu.dot_dimension_numbers<[1], [0], [0], [1], [0, 0, 1, 1], [], []>} : vector<4x48xf32>, vector<48x128xf32>, vector<4x128xf32> -> vector<4x128xf32>
    %139 = arith.negf %138 : vector<4x128xf32>
    %140 = math.exp %139 : vector<4x128xf32>
    %cst_64 = arith.constant 1.000000e+00 : f32
    %141 = vector.broadcast %cst_64 : f32 to vector<4x128xf32>
    %142 = arith.addf %141, %140 : vector<4x128xf32>
    %143 = arith.divf %141, %142 : vector<4x128xf32>
    %144 = arith.mulf %138, %143 : vector<4x128xf32>
    %cst_65 = arith.constant dense<0.000000e+00> : vector<4xf32>
    %145 = vector.multi_reduction <add>, %144, %cst_65 [1] : vector<4x128xf32> to vector<4xf32>
    %146 = vector.shape_cast %145 : vector<4xf32> to vector<4x1xf32>
    %cst_66 = arith.constant 1.280000e+02 : f32
    %147 = vector.broadcast %cst_66 : f32 to vector<4x1xf32>
    %148 = arith.divf %146, %147 : vector<4x1xf32>
    %149 = vector.broadcast %148 : vector<4x1xf32> to vector<4x128xf32>
    %150 = arith.subf %144, %149 : vector<4x128xf32>
    %151 = arith.mulf %150, %150 : vector<4x128xf32>
    %cst_67 = arith.constant dense<0.000000e+00> : vector<4xf32>
    %152 = vector.multi_reduction <add>, %151, %cst_67 [1] : vector<4x128xf32> to vector<4xf32>
    %153 = vector.shape_cast %152 : vector<4xf32> to vector<4x1xf32>
    %cst_68 = arith.constant 1.280000e+02 : f32
    %154 = vector.broadcast %cst_68 : f32 to vector<4x1xf32>
    %155 = arith.divf %153, %154 : vector<4x1xf32>
    %156 = vector.broadcast %148 : vector<4x1xf32> to vector<4x128xf32>
    %157 = arith.subf %144, %156 : vector<4x128xf32>
    %cst_69 = arith.constant 9.99999974E-6 : f32
    %158 = vector.broadcast %cst_69 : f32 to vector<4x1xf32>
    %159 = arith.addf %155, %158 : vector<4x1xf32>
    %160 = math.rsqrt %159 : vector<4x1xf32>
    %161 = vector.broadcast %160 : vector<4x1xf32> to vector<4x128xf32>
    %162 = arith.mulf %157, %161 : vector<4x128xf32>
    %163 = arith.mulf %162, %134 : vector<4x128xf32>
    %c1_70 = arith.constant 1 : index
    %c2_71 = arith.constant 2 : index
    %c0_72 = arith.constant 0 : index
    %c0_73 = arith.constant 0 : index
    %164 = vector.load %arg1[%c1_70, %c2_71, %c0_72, %c0_73] : memref<2x4x48x128xbf16, #tpu.memory_space<vmem>>, vector<1x1x48x128xbf16>
    %165 = vector.shape_cast %164 : vector<1x1x48x128xbf16> to vector<48x128xbf16>
    %166 = arith.extf %165 : vector<48x128xbf16> to vector<48x128xf32>
    %cst_74 = arith.constant dense<0.000000e+00> : vector<4x128xf32>
    %167 = tpu.matmul %0, %166, %cst_74 {dimension_numbers = #tpu.dot_dimension_numbers<[1], [0], [0], [1], [0, 0, 1, 1], [], []>} : vector<4x48xf32>, vector<48x128xf32>, vector<4x128xf32> -> vector<4x128xf32>
    %168 = arith.negf %167 : vector<4x128xf32>
    %169 = math.exp %168 : vector<4x128xf32>
    %cst_75 = arith.constant 1.000000e+00 : f32
    %170 = vector.broadcast %cst_75 : f32 to vector<4x128xf32>
    %171 = arith.addf %170, %169 : vector<4x128xf32>
    %172 = arith.divf %170, %171 : vector<4x128xf32>
    %173 = arith.mulf %167, %172 : vector<4x128xf32>
    %cst_76 = arith.constant dense<0.000000e+00> : vector<4xf32>
    %174 = vector.multi_reduction <add>, %173, %cst_76 [1] : vector<4x128xf32> to vector<4xf32>
    %175 = vector.shape_cast %174 : vector<4xf32> to vector<4x1xf32>
    %cst_77 = arith.constant 1.280000e+02 : f32
    %176 = vector.broadcast %cst_77 : f32 to vector<4x1xf32>
    %177 = arith.divf %175, %176 : vector<4x1xf32>
    %178 = vector.broadcast %177 : vector<4x1xf32> to vector<4x128xf32>
    %179 = arith.subf %173, %178 : vector<4x128xf32>
    %180 = arith.mulf %179, %179 : vector<4x128xf32>
    %cst_78 = arith.constant dense<0.000000e+00> : vector<4xf32>
    %181 = vector.multi_reduction <add>, %180, %cst_78 [1] : vector<4x128xf32> to vector<4xf32>
    %182 = vector.shape_cast %181 : vector<4xf32> to vector<4x1xf32>
    %cst_79 = arith.constant 1.280000e+02 : f32
    %183 = vector.broadcast %cst_79 : f32 to vector<4x1xf32>
    %184 = arith.divf %182, %183 : vector<4x1xf32>
    %185 = vector.broadcast %177 : vector<4x1xf32> to vector<4x128xf32>
    %186 = arith.subf %173, %185 : vector<4x128xf32>
    %cst_80 = arith.constant 9.99999974E-6 : f32
    %187 = vector.broadcast %cst_80 : f32 to vector<4x1xf32>
    %188 = arith.addf %184, %187 : vector<4x1xf32>
    %189 = math.rsqrt %188 : vector<4x1xf32>
    %190 = vector.broadcast %189 : vector<4x1xf32> to vector<4x128xf32>
    %191 = arith.mulf %186, %190 : vector<4x128xf32>
    %192 = arith.mulf %191, %134 : vector<4x128xf32>
    %193 = arith.addf %163, %192 : vector<4x128xf32>
    %cst_81 = arith.constant 5.000000e-01 : f32
    %194 = vector.broadcast %cst_81 : f32 to vector<4x128xf32>
    %195 = arith.mulf %193, %194 : vector<4x128xf32>
    %c2_82 = arith.constant 2 : index
    %c0_83 = arith.constant 0 : index
    %c0_84 = arith.constant 0 : index
    %196 = vector.load %arg4[%c2_82, %c0_83, %c0_84] : memref<4x4x128xf32, #tpu.memory_space<vmem>>, vector<1x4x128xf32>
    %197 = vector.shape_cast %196 : vector<1x4x128xf32> to vector<4x128xf32>
    %198 = vector.shape_cast %195 : vector<4x128xf32> to vector<1x4x128xf32>
    tpu.vector_store %arg4[%c2_82, %c0_83, %c0_84], %198 {strides = array<i32>} : memref<4x4x128xf32, #tpu.memory_space<vmem>>, vector<1x4x128xf32>,
    %c3 = arith.constant 3 : index
    %c0_85 = arith.constant 0 : index
    %c0_86 = arith.constant 0 : index
    %199 = vector.load %arg3[%c3, %c0_85, %c0_86] : memref<4x4x128xf32, #tpu.memory_space<vmem>>, vector<1x4x128xf32>
    %200 = vector.shape_cast %199 : vector<1x4x128xf32> to vector<4x128xf32>
    %c0_87 = arith.constant 0 : index
    %c3_88 = arith.constant 3 : index
    %c0_89 = arith.constant 0 : index
    %c0_90 = arith.constant 0 : index
    %201 = vector.load %arg1[%c0_87, %c3_88, %c0_89, %c0_90] : memref<2x4x48x128xbf16, #tpu.memory_space<vmem>>, vector<1x1x48x128xbf16>
    %202 = vector.shape_cast %201 : vector<1x1x48x128xbf16> to vector<48x128xbf16>
    %203 = arith.extf %202 : vector<48x128xbf16> to vector<48x128xf32>
    %cst_91 = arith.constant dense<0.000000e+00> : vector<4x128xf32>
    %204 = tpu.matmul %0, %203, %cst_91 {dimension_numbers = #tpu.dot_dimension_numbers<[1], [0], [0], [1], [0, 0, 1, 1], [], []>} : vector<4x48xf32>, vector<48x128xf32>, vector<4x128xf32> -> vector<4x128xf32>
    %205 = arith.negf %204 : vector<4x128xf32>
    %206 = math.exp %205 : vector<4x128xf32>
    %cst_92 = arith.constant 1.000000e+00 : f32
    %207 = vector.broadcast %cst_92 : f32 to vector<4x128xf32>
    %208 = arith.addf %207, %206 : vector<4x128xf32>
    %209 = arith.divf %207, %208 : vector<4x128xf32>
    %210 = arith.mulf %204, %209 : vector<4x128xf32>
    %cst_93 = arith.constant dense<0.000000e+00> : vector<4xf32>
    %211 = vector.multi_reduction <add>, %210, %cst_93 [1] : vector<4x128xf32> to vector<4xf32>
    %212 = vector.shape_cast %211 : vector<4xf32> to vector<4x1xf32>
    %cst_94 = arith.constant 1.280000e+02 : f32
    %213 = vector.broadcast %cst_94 : f32 to vector<4x1xf32>
    %214 = arith.divf %212, %213 : vector<4x1xf32>
    %215 = vector.broadcast %214 : vector<4x1xf32> to vector<4x128xf32>
    %216 = arith.subf %210, %215 : vector<4x128xf32>
    %217 = arith.mulf %216, %216 : vector<4x128xf32>
    %cst_95 = arith.constant dense<0.000000e+00> : vector<4xf32>
    %218 = vector.multi_reduction <add>, %217, %cst_95 [1] : vector<4x128xf32> to vector<4xf32>
    %219 = vector.shape_cast %218 : vector<4xf32> to vector<4x1xf32>
    %cst_96 = arith.constant 1.280000e+02 : f32
    %220 = vector.broadcast %cst_96 : f32 to vector<4x1xf32>
    %221 = arith.divf %219, %220 : vector<4x1xf32>
    %222 = vector.broadcast %214 : vector<4x1xf32> to vector<4x128xf32>
    %223 = arith.subf %210, %222 : vector<4x128xf32>
    %cst_97 = arith.constant 9.99999974E-6 : f32
    %224 = vector.broadcast %cst_97 : f32 to vector<4x1xf32>
    %225 = arith.addf %221, %224 : vector<4x1xf32>
    %226 = math.rsqrt %225 : vector<4x1xf32>
    %227 = vector.broadcast %226 : vector<4x1xf32> to vector<4x128xf32>
    %228 = arith.mulf %223, %227 : vector<4x128xf32>
    %229 = arith.mulf %228, %200 : vector<4x128xf32>
    %c1_98 = arith.constant 1 : index
    %c3_99 = arith.constant 3 : index
    %c0_100 = arith.constant 0 : index
    %c0_101 = arith.constant 0 : index
    %230 = vector.load %arg1[%c1_98, %c3_99, %c0_100, %c0_101] : memref<2x4x48x128xbf16, #tpu.memory_space<vmem>>, vector<1x1x48x128xbf16>
    %231 = vector.shape_cast %230 : vector<1x1x48x128xbf16> to vector<48x128xbf16>
    %232 = arith.extf %231 : vector<48x128xbf16> to vector<48x128xf32>
    %cst_102 = arith.constant dense<0.000000e+00> : vector<4x128xf32>
    %233 = tpu.matmul %0, %232, %cst_102 {dimension_numbers = #tpu.dot_dimension_numbers<[1], [0], [0], [1], [0, 0, 1, 1], [], []>} : vector<4x48xf32>, vector<48x128xf32>, vector<4x128xf32> -> vector<4x128xf32>
    %234 = arith.negf %233 : vector<4x128xf32>
    %235 = math.exp %234 : vector<4x128xf32>
    %cst_103 = arith.constant 1.000000e+00 : f32
    %236 = vector.broadcast %cst_103 : f32 to vector<4x128xf32>
    %237 = arith.addf %236, %235 : vector<4x128xf32>
    %238 = arith.divf %236, %237 : vector<4x128xf32>
    %239 = arith.mulf %233, %238 : vector<4x128xf32>
    %cst_104 = arith.constant dense<0.000000e+00> : vector<4xf32>
    %240 = vector.multi_reduction <add>, %239, %cst_104 [1] : vector<4x128xf32> to vector<4xf32>
    %241 = vector.shape_cast %240 : vector<4xf32> to vector<4x1xf32>
    %cst_105 = arith.constant 1.280000e+02 : f32
    %242 = vector.broadcast %cst_105 : f32 to vector<4x1xf32>
    %243 = arith.divf %241, %242 : vector<4x1xf32>
    %244 = vector.broadcast %243 : vector<4x1xf32> to vector<4x128xf32>
    %245 = arith.subf %239, %244 : vector<4x128xf32>
    %246 = arith.mulf %245, %245 : vector<4x128xf32>
    %cst_106 = arith.constant dense<0.000000e+00> : vector<4xf32>
    %247 = vector.multi_reduction <add>, %246, %cst_106 [1] : vector<4x128xf32> to vector<4xf32>
    %248 = vector.shape_cast %247 : vector<4xf32> to vector<4x1xf32>
    %cst_107 = arith.constant 1.280000e+02 : f32
    %249 = vector.broadcast %cst_107 : f32 to vector<4x1xf32>
    %250 = arith.divf %248, %249 : vector<4x1xf32>
    %251 = vector.broadcast %243 : vector<4x1xf32> to vector<4x128xf32>
    %252 = arith.subf %239, %251 : vector<4x128xf32>
    %cst_108 = arith.constant 9.99999974E-6 : f32
    %253 = vector.broadcast %cst_108 : f32 to vector<4x1xf32>
    %254 = arith.addf %250, %253 : vector<4x1xf32>
    %255 = math.rsqrt %254 : vector<4x1xf32>
    %256 = vector.broadcast %255 : vector<4x1xf32> to vector<4x128xf32>
    %257 = arith.mulf %252, %256 : vector<4x128xf32>
    %258 = arith.mulf %257, %200 : vector<4x128xf32>
    %259 = arith.addf %229, %258 : vector<4x128xf32>
    %cst_109 = arith.constant 5.000000e-01 : f32
    %260 = vector.broadcast %cst_109 : f32 to vector<4x128xf32>
    %261 = arith.mulf %259, %260 : vector<4x128xf32>
    %c3_110 = arith.constant 3 : index
    %c0_111 = arith.constant 0 : index
    %c0_112 = arith.constant 0 : index
    %262 = vector.load %arg4[%c3_110, %c0_111, %c0_112] : memref<4x4x128xf32, #tpu.memory_space<vmem>>, vector<1x4x128xf32>
    %263 = vector.shape_cast %262 : vector<1x4x128xf32> to vector<4x128xf32>
    %264 = vector.shape_cast %261 : vector<4x128xf32> to vector<1x4x128xf32>
    tpu.vector_store %arg4[%c3_110, %c0_111, %c0_112], %264 {strides = array<i32>} : memref<4x4x128xf32, #tpu.memory_space<vmem>>, vector<1x4x128xf32>,
    return
  }
  func.func @transform_0(%arg0: i32) -> (i32, i32, i32, i32) {
    %c0_i32 = arith.constant 0 : i32
    %c0_i32_0 = arith.constant 0 : i32
    %c0_i32_1 = arith.constant 0 : i32
    %c0_i32_2 = arith.constant 0 : i32
    return %c0_i32, %arg0, %c0_i32_0, %c0_i32_1 : i32, i32, i32, i32
  }
  func.func @transform_1(%arg0: i32) -> (i32, i32) {
    %c0_i32 = arith.constant 0 : i32
    %c0_i32_0 = arith.constant 0 : i32
    %c0_i32_1 = arith.constant 0 : i32
    return %c0_i32, %c0_i32_0 : i32, i32
  }
  func.func @transform_2(%arg0: i32) -> (i32, i32, i32) {
    %c0_i32 = arith.constant 0 : i32
    %c0_i32_0 = arith.constant 0 : i32
    %c0_i32_1 = arith.constant 0 : i32
    return %arg0, %c0_i32, %c0_i32_0 : i32, i32, i32
  }
  func.func @transform_3(%arg0: i32) -> (i32, i32, i32) {
    %c0_i32 = arith.constant 0 : i32
    %c0_i32_0 = arith.constant 0 : i32
    %c0_i32_1 = arith.constant 0 : i32
    return %arg0, %c0_i32, %c0_i32_0 : i32, i32, i32
  }
}

module attributes {stable_mosaic.version = 11 : i64} {
  func.func @_conv_act_bn_kernel(%arg0: i32, %arg1: memref<2x4x48x128xbf16, #tpu.memory_space<vmem>>, %arg2: memref<8x48xf32, #tpu.memory_space<vmem>>, %arg3: memref<4x8x128xf32, #tpu.memory_space<vmem>>, %arg4: memref<4x8x128xf32, #tpu.memory_space<vmem>>) attributes {dimension_semantics = [#tpu.dimension_semantics<parallel>], iteration_bounds = array<i64: 1>, scalar_prefetch = 0 : i64, scratch_operands = 0 : i64, tpu.core_type = #tpu.core_type<tc>, window_params = [{transform_indices = @transform_0, window_bounds = array<i64: 2, 4, 48, 128>}, {pipeline_mode = #tpu.pipeline_mode<synchronous>, transform_indices = @transform_1, window_bounds = array<i64: 8, 48>}, {transform_indices = @transform_2, window_bounds = array<i64: 4, 8, 128>}, {transform_indices = @transform_3, window_bounds = array<i64: 4, 8, 128>}]} {
    %c0 = arith.constant 0 : index
    %c0_0 = arith.constant 0 : index
    %0 = vector.load %arg2[%c0, %c0_0] : memref<8x48xf32, #tpu.memory_space<vmem>>, vector<8x48xf32>
    %c0_1 = arith.constant 0 : index
    %c0_2 = arith.constant 0 : index
    %c0_3 = arith.constant 0 : index
    %1 = vector.load %arg3[%c0_1, %c0_2, %c0_3] : memref<4x8x128xf32, #tpu.memory_space<vmem>>, vector<1x8x128xf32>
    %2 = vector.shape_cast %1 : vector<1x8x128xf32> to vector<8x128xf32>
    %c0_4 = arith.constant 0 : index
    %c0_5 = arith.constant 0 : index
    %c0_6 = arith.constant 0 : index
    %c0_7 = arith.constant 0 : index
    %3 = vector.load %arg1[%c0_4, %c0_5, %c0_6, %c0_7] : memref<2x4x48x128xbf16, #tpu.memory_space<vmem>>, vector<1x1x48x128xbf16>
    %4 = vector.shape_cast %3 : vector<1x1x48x128xbf16> to vector<48x128xbf16>
    %5 = arith.extf %4 : vector<48x128xbf16> to vector<48x128xf32>
    %cst = arith.constant dense<0.000000e+00> : vector<8x128xf32>
    %6 = tpu.matmul %0, %5, %cst {dimension_numbers = #tpu.dot_dimension_numbers<[1], [0], [0], [1], [0, 0, 1, 1], [], []>} : vector<8x48xf32>, vector<48x128xf32>, vector<8x128xf32> -> vector<8x128xf32>
    %7 = arith.negf %6 : vector<8x128xf32>
    %8 = math.exp %7 : vector<8x128xf32>
    %cst_8 = arith.constant 1.000000e+00 : f32
    %9 = vector.broadcast %cst_8 : f32 to vector<8x128xf32>
    %10 = arith.addf %9, %8 : vector<8x128xf32>
    %11 = arith.divf %9, %10 : vector<8x128xf32>
    %12 = arith.mulf %6, %11 : vector<8x128xf32>
    %cst_9 = arith.constant dense<0.000000e+00> : vector<8xf32>
    %13 = vector.multi_reduction <add>, %12, %cst_9 [1] : vector<8x128xf32> to vector<8xf32>
    %14 = vector.shape_cast %13 : vector<8xf32> to vector<8x1xf32>
    %cst_10 = arith.constant 1.280000e+02 : f32
    %15 = vector.broadcast %cst_10 : f32 to vector<8x1xf32>
    %16 = arith.divf %14, %15 : vector<8x1xf32>
    %17 = vector.broadcast %16 : vector<8x1xf32> to vector<8x128xf32>
    %18 = arith.subf %12, %17 : vector<8x128xf32>
    %19 = arith.mulf %18, %18 : vector<8x128xf32>
    %cst_11 = arith.constant dense<0.000000e+00> : vector<8xf32>
    %20 = vector.multi_reduction <add>, %19, %cst_11 [1] : vector<8x128xf32> to vector<8xf32>
    %21 = vector.shape_cast %20 : vector<8xf32> to vector<8x1xf32>
    %cst_12 = arith.constant 1.280000e+02 : f32
    %22 = vector.broadcast %cst_12 : f32 to vector<8x1xf32>
    %23 = arith.divf %21, %22 : vector<8x1xf32>
    %24 = vector.broadcast %16 : vector<8x1xf32> to vector<8x128xf32>
    %25 = arith.subf %12, %24 : vector<8x128xf32>
    %cst_13 = arith.constant 9.99999974E-6 : f32
    %26 = vector.broadcast %cst_13 : f32 to vector<8x1xf32>
    %27 = arith.addf %23, %26 : vector<8x1xf32>
    %28 = math.rsqrt %27 : vector<8x1xf32>
    %29 = vector.broadcast %28 : vector<8x1xf32> to vector<8x128xf32>
    %30 = arith.mulf %25, %29 : vector<8x128xf32>
    %31 = arith.mulf %30, %2 : vector<8x128xf32>
    %c1 = arith.constant 1 : index
    %c0_14 = arith.constant 0 : index
    %c0_15 = arith.constant 0 : index
    %c0_16 = arith.constant 0 : index
    %32 = vector.load %arg1[%c1, %c0_14, %c0_15, %c0_16] : memref<2x4x48x128xbf16, #tpu.memory_space<vmem>>, vector<1x1x48x128xbf16>
    %33 = vector.shape_cast %32 : vector<1x1x48x128xbf16> to vector<48x128xbf16>
    %34 = arith.extf %33 : vector<48x128xbf16> to vector<48x128xf32>
    %cst_17 = arith.constant dense<0.000000e+00> : vector<8x128xf32>
    %35 = tpu.matmul %0, %34, %cst_17 {dimension_numbers = #tpu.dot_dimension_numbers<[1], [0], [0], [1], [0, 0, 1, 1], [], []>} : vector<8x48xf32>, vector<48x128xf32>, vector<8x128xf32> -> vector<8x128xf32>
    %36 = arith.negf %35 : vector<8x128xf32>
    %37 = math.exp %36 : vector<8x128xf32>
    %cst_18 = arith.constant 1.000000e+00 : f32
    %38 = vector.broadcast %cst_18 : f32 to vector<8x128xf32>
    %39 = arith.addf %38, %37 : vector<8x128xf32>
    %40 = arith.divf %38, %39 : vector<8x128xf32>
    %41 = arith.mulf %35, %40 : vector<8x128xf32>
    %cst_19 = arith.constant dense<0.000000e+00> : vector<8xf32>
    %42 = vector.multi_reduction <add>, %41, %cst_19 [1] : vector<8x128xf32> to vector<8xf32>
    %43 = vector.shape_cast %42 : vector<8xf32> to vector<8x1xf32>
    %cst_20 = arith.constant 1.280000e+02 : f32
    %44 = vector.broadcast %cst_20 : f32 to vector<8x1xf32>
    %45 = arith.divf %43, %44 : vector<8x1xf32>
    %46 = vector.broadcast %45 : vector<8x1xf32> to vector<8x128xf32>
    %47 = arith.subf %41, %46 : vector<8x128xf32>
    %48 = arith.mulf %47, %47 : vector<8x128xf32>
    %cst_21 = arith.constant dense<0.000000e+00> : vector<8xf32>
    %49 = vector.multi_reduction <add>, %48, %cst_21 [1] : vector<8x128xf32> to vector<8xf32>
    %50 = vector.shape_cast %49 : vector<8xf32> to vector<8x1xf32>
    %cst_22 = arith.constant 1.280000e+02 : f32
    %51 = vector.broadcast %cst_22 : f32 to vector<8x1xf32>
    %52 = arith.divf %50, %51 : vector<8x1xf32>
    %53 = vector.broadcast %45 : vector<8x1xf32> to vector<8x128xf32>
    %54 = arith.subf %41, %53 : vector<8x128xf32>
    %cst_23 = arith.constant 9.99999974E-6 : f32
    %55 = vector.broadcast %cst_23 : f32 to vector<8x1xf32>
    %56 = arith.addf %52, %55 : vector<8x1xf32>
    %57 = math.rsqrt %56 : vector<8x1xf32>
    %58 = vector.broadcast %57 : vector<8x1xf32> to vector<8x128xf32>
    %59 = arith.mulf %54, %58 : vector<8x128xf32>
    %60 = arith.mulf %59, %2 : vector<8x128xf32>
    %61 = arith.addf %31, %60 : vector<8x128xf32>
    %cst_24 = arith.constant 5.000000e-01 : f32
    %62 = vector.broadcast %cst_24 : f32 to vector<8x128xf32>
    %63 = arith.mulf %61, %62 : vector<8x128xf32>
    %c0_25 = arith.constant 0 : index
    %c0_26 = arith.constant 0 : index
    %c0_27 = arith.constant 0 : index
    %64 = vector.load %arg4[%c0_25, %c0_26, %c0_27] : memref<4x8x128xf32, #tpu.memory_space<vmem>>, vector<1x8x128xf32>
    %65 = vector.shape_cast %64 : vector<1x8x128xf32> to vector<8x128xf32>
    %66 = vector.shape_cast %63 : vector<8x128xf32> to vector<1x8x128xf32>
    tpu.vector_store %arg4[%c0_25, %c0_26, %c0_27], %66 {strides = array<i32>} : memref<4x8x128xf32, #tpu.memory_space<vmem>>, vector<1x8x128xf32>,
    %c1_28 = arith.constant 1 : index
    %c0_29 = arith.constant 0 : index
    %c0_30 = arith.constant 0 : index
    %67 = vector.load %arg3[%c1_28, %c0_29, %c0_30] : memref<4x8x128xf32, #tpu.memory_space<vmem>>, vector<1x8x128xf32>
    %68 = vector.shape_cast %67 : vector<1x8x128xf32> to vector<8x128xf32>
    %c0_31 = arith.constant 0 : index
    %c1_32 = arith.constant 1 : index
    %c0_33 = arith.constant 0 : index
    %c0_34 = arith.constant 0 : index
    %69 = vector.load %arg1[%c0_31, %c1_32, %c0_33, %c0_34] : memref<2x4x48x128xbf16, #tpu.memory_space<vmem>>, vector<1x1x48x128xbf16>
    %70 = vector.shape_cast %69 : vector<1x1x48x128xbf16> to vector<48x128xbf16>
    %71 = arith.extf %70 : vector<48x128xbf16> to vector<48x128xf32>
    %cst_35 = arith.constant dense<0.000000e+00> : vector<8x128xf32>
    %72 = tpu.matmul %0, %71, %cst_35 {dimension_numbers = #tpu.dot_dimension_numbers<[1], [0], [0], [1], [0, 0, 1, 1], [], []>} : vector<8x48xf32>, vector<48x128xf32>, vector<8x128xf32> -> vector<8x128xf32>
    %73 = arith.negf %72 : vector<8x128xf32>
    %74 = math.exp %73 : vector<8x128xf32>
    %cst_36 = arith.constant 1.000000e+00 : f32
    %75 = vector.broadcast %cst_36 : f32 to vector<8x128xf32>
    %76 = arith.addf %75, %74 : vector<8x128xf32>
    %77 = arith.divf %75, %76 : vector<8x128xf32>
    %78 = arith.mulf %72, %77 : vector<8x128xf32>
    %cst_37 = arith.constant dense<0.000000e+00> : vector<8xf32>
    %79 = vector.multi_reduction <add>, %78, %cst_37 [1] : vector<8x128xf32> to vector<8xf32>
    %80 = vector.shape_cast %79 : vector<8xf32> to vector<8x1xf32>
    %cst_38 = arith.constant 1.280000e+02 : f32
    %81 = vector.broadcast %cst_38 : f32 to vector<8x1xf32>
    %82 = arith.divf %80, %81 : vector<8x1xf32>
    %83 = vector.broadcast %82 : vector<8x1xf32> to vector<8x128xf32>
    %84 = arith.subf %78, %83 : vector<8x128xf32>
    %85 = arith.mulf %84, %84 : vector<8x128xf32>
    %cst_39 = arith.constant dense<0.000000e+00> : vector<8xf32>
    %86 = vector.multi_reduction <add>, %85, %cst_39 [1] : vector<8x128xf32> to vector<8xf32>
    %87 = vector.shape_cast %86 : vector<8xf32> to vector<8x1xf32>
    %cst_40 = arith.constant 1.280000e+02 : f32
    %88 = vector.broadcast %cst_40 : f32 to vector<8x1xf32>
    %89 = arith.divf %87, %88 : vector<8x1xf32>
    %90 = vector.broadcast %82 : vector<8x1xf32> to vector<8x128xf32>
    %91 = arith.subf %78, %90 : vector<8x128xf32>
    %cst_41 = arith.constant 9.99999974E-6 : f32
    %92 = vector.broadcast %cst_41 : f32 to vector<8x1xf32>
    %93 = arith.addf %89, %92 : vector<8x1xf32>
    %94 = math.rsqrt %93 : vector<8x1xf32>
    %95 = vector.broadcast %94 : vector<8x1xf32> to vector<8x128xf32>
    %96 = arith.mulf %91, %95 : vector<8x128xf32>
    %97 = arith.mulf %96, %68 : vector<8x128xf32>
    %c1_42 = arith.constant 1 : index
    %c1_43 = arith.constant 1 : index
    %c0_44 = arith.constant 0 : index
    %c0_45 = arith.constant 0 : index
    %98 = vector.load %arg1[%c1_42, %c1_43, %c0_44, %c0_45] : memref<2x4x48x128xbf16, #tpu.memory_space<vmem>>, vector<1x1x48x128xbf16>
    %99 = vector.shape_cast %98 : vector<1x1x48x128xbf16> to vector<48x128xbf16>
    %100 = arith.extf %99 : vector<48x128xbf16> to vector<48x128xf32>
    %cst_46 = arith.constant dense<0.000000e+00> : vector<8x128xf32>
    %101 = tpu.matmul %0, %100, %cst_46 {dimension_numbers = #tpu.dot_dimension_numbers<[1], [0], [0], [1], [0, 0, 1, 1], [], []>} : vector<8x48xf32>, vector<48x128xf32>, vector<8x128xf32> -> vector<8x128xf32>
    %102 = arith.negf %101 : vector<8x128xf32>
    %103 = math.exp %102 : vector<8x128xf32>
    %cst_47 = arith.constant 1.000000e+00 : f32
    %104 = vector.broadcast %cst_47 : f32 to vector<8x128xf32>
    %105 = arith.addf %104, %103 : vector<8x128xf32>
    %106 = arith.divf %104, %105 : vector<8x128xf32>
    %107 = arith.mulf %101, %106 : vector<8x128xf32>
    %cst_48 = arith.constant dense<0.000000e+00> : vector<8xf32>
    %108 = vector.multi_reduction <add>, %107, %cst_48 [1] : vector<8x128xf32> to vector<8xf32>
    %109 = vector.shape_cast %108 : vector<8xf32> to vector<8x1xf32>
    %cst_49 = arith.constant 1.280000e+02 : f32
    %110 = vector.broadcast %cst_49 : f32 to vector<8x1xf32>
    %111 = arith.divf %109, %110 : vector<8x1xf32>
    %112 = vector.broadcast %111 : vector<8x1xf32> to vector<8x128xf32>
    %113 = arith.subf %107, %112 : vector<8x128xf32>
    %114 = arith.mulf %113, %113 : vector<8x128xf32>
    %cst_50 = arith.constant dense<0.000000e+00> : vector<8xf32>
    %115 = vector.multi_reduction <add>, %114, %cst_50 [1] : vector<8x128xf32> to vector<8xf32>
    %116 = vector.shape_cast %115 : vector<8xf32> to vector<8x1xf32>
    %cst_51 = arith.constant 1.280000e+02 : f32
    %117 = vector.broadcast %cst_51 : f32 to vector<8x1xf32>
    %118 = arith.divf %116, %117 : vector<8x1xf32>
    %119 = vector.broadcast %111 : vector<8x1xf32> to vector<8x128xf32>
    %120 = arith.subf %107, %119 : vector<8x128xf32>
    %cst_52 = arith.constant 9.99999974E-6 : f32
    %121 = vector.broadcast %cst_52 : f32 to vector<8x1xf32>
    %122 = arith.addf %118, %121 : vector<8x1xf32>
    %123 = math.rsqrt %122 : vector<8x1xf32>
    %124 = vector.broadcast %123 : vector<8x1xf32> to vector<8x128xf32>
    %125 = arith.mulf %120, %124 : vector<8x128xf32>
    %126 = arith.mulf %125, %68 : vector<8x128xf32>
    %127 = arith.addf %97, %126 : vector<8x128xf32>
    %cst_53 = arith.constant 5.000000e-01 : f32
    %128 = vector.broadcast %cst_53 : f32 to vector<8x128xf32>
    %129 = arith.mulf %127, %128 : vector<8x128xf32>
    %c1_54 = arith.constant 1 : index
    %c0_55 = arith.constant 0 : index
    %c0_56 = arith.constant 0 : index
    %130 = vector.load %arg4[%c1_54, %c0_55, %c0_56] : memref<4x8x128xf32, #tpu.memory_space<vmem>>, vector<1x8x128xf32>
    %131 = vector.shape_cast %130 : vector<1x8x128xf32> to vector<8x128xf32>
    %132 = vector.shape_cast %129 : vector<8x128xf32> to vector<1x8x128xf32>
    tpu.vector_store %arg4[%c1_54, %c0_55, %c0_56], %132 {strides = array<i32>} : memref<4x8x128xf32, #tpu.memory_space<vmem>>, vector<1x8x128xf32>,
    %c2 = arith.constant 2 : index
    %c0_57 = arith.constant 0 : index
    %c0_58 = arith.constant 0 : index
    %133 = vector.load %arg3[%c2, %c0_57, %c0_58] : memref<4x8x128xf32, #tpu.memory_space<vmem>>, vector<1x8x128xf32>
    %134 = vector.shape_cast %133 : vector<1x8x128xf32> to vector<8x128xf32>
    %c0_59 = arith.constant 0 : index
    %c2_60 = arith.constant 2 : index
    %c0_61 = arith.constant 0 : index
    %c0_62 = arith.constant 0 : index
    %135 = vector.load %arg1[%c0_59, %c2_60, %c0_61, %c0_62] : memref<2x4x48x128xbf16, #tpu.memory_space<vmem>>, vector<1x1x48x128xbf16>
    %136 = vector.shape_cast %135 : vector<1x1x48x128xbf16> to vector<48x128xbf16>
    %137 = arith.extf %136 : vector<48x128xbf16> to vector<48x128xf32>
    %cst_63 = arith.constant dense<0.000000e+00> : vector<8x128xf32>
    %138 = tpu.matmul %0, %137, %cst_63 {dimension_numbers = #tpu.dot_dimension_numbers<[1], [0], [0], [1], [0, 0, 1, 1], [], []>} : vector<8x48xf32>, vector<48x128xf32>, vector<8x128xf32> -> vector<8x128xf32>
    %139 = arith.negf %138 : vector<8x128xf32>
    %140 = math.exp %139 : vector<8x128xf32>
    %cst_64 = arith.constant 1.000000e+00 : f32
    %141 = vector.broadcast %cst_64 : f32 to vector<8x128xf32>
    %142 = arith.addf %141, %140 : vector<8x128xf32>
    %143 = arith.divf %141, %142 : vector<8x128xf32>
    %144 = arith.mulf %138, %143 : vector<8x128xf32>
    %cst_65 = arith.constant dense<0.000000e+00> : vector<8xf32>
    %145 = vector.multi_reduction <add>, %144, %cst_65 [1] : vector<8x128xf32> to vector<8xf32>
    %146 = vector.shape_cast %145 : vector<8xf32> to vector<8x1xf32>
    %cst_66 = arith.constant 1.280000e+02 : f32
    %147 = vector.broadcast %cst_66 : f32 to vector<8x1xf32>
    %148 = arith.divf %146, %147 : vector<8x1xf32>
    %149 = vector.broadcast %148 : vector<8x1xf32> to vector<8x128xf32>
    %150 = arith.subf %144, %149 : vector<8x128xf32>
    %151 = arith.mulf %150, %150 : vector<8x128xf32>
    %cst_67 = arith.constant dense<0.000000e+00> : vector<8xf32>
    %152 = vector.multi_reduction <add>, %151, %cst_67 [1] : vector<8x128xf32> to vector<8xf32>
    %153 = vector.shape_cast %152 : vector<8xf32> to vector<8x1xf32>
    %cst_68 = arith.constant 1.280000e+02 : f32
    %154 = vector.broadcast %cst_68 : f32 to vector<8x1xf32>
    %155 = arith.divf %153, %154 : vector<8x1xf32>
    %156 = vector.broadcast %148 : vector<8x1xf32> to vector<8x128xf32>
    %157 = arith.subf %144, %156 : vector<8x128xf32>
    %cst_69 = arith.constant 9.99999974E-6 : f32
    %158 = vector.broadcast %cst_69 : f32 to vector<8x1xf32>
    %159 = arith.addf %155, %158 : vector<8x1xf32>
    %160 = math.rsqrt %159 : vector<8x1xf32>
    %161 = vector.broadcast %160 : vector<8x1xf32> to vector<8x128xf32>
    %162 = arith.mulf %157, %161 : vector<8x128xf32>
    %163 = arith.mulf %162, %134 : vector<8x128xf32>
    %c1_70 = arith.constant 1 : index
    %c2_71 = arith.constant 2 : index
    %c0_72 = arith.constant 0 : index
    %c0_73 = arith.constant 0 : index
    %164 = vector.load %arg1[%c1_70, %c2_71, %c0_72, %c0_73] : memref<2x4x48x128xbf16, #tpu.memory_space<vmem>>, vector<1x1x48x128xbf16>
    %165 = vector.shape_cast %164 : vector<1x1x48x128xbf16> to vector<48x128xbf16>
    %166 = arith.extf %165 : vector<48x128xbf16> to vector<48x128xf32>
    %cst_74 = arith.constant dense<0.000000e+00> : vector<8x128xf32>
    %167 = tpu.matmul %0, %166, %cst_74 {dimension_numbers = #tpu.dot_dimension_numbers<[1], [0], [0], [1], [0, 0, 1, 1], [], []>} : vector<8x48xf32>, vector<48x128xf32>, vector<8x128xf32> -> vector<8x128xf32>
    %168 = arith.negf %167 : vector<8x128xf32>
    %169 = math.exp %168 : vector<8x128xf32>
    %cst_75 = arith.constant 1.000000e+00 : f32
    %170 = vector.broadcast %cst_75 : f32 to vector<8x128xf32>
    %171 = arith.addf %170, %169 : vector<8x128xf32>
    %172 = arith.divf %170, %171 : vector<8x128xf32>
    %173 = arith.mulf %167, %172 : vector<8x128xf32>
    %cst_76 = arith.constant dense<0.000000e+00> : vector<8xf32>
    %174 = vector.multi_reduction <add>, %173, %cst_76 [1] : vector<8x128xf32> to vector<8xf32>
    %175 = vector.shape_cast %174 : vector<8xf32> to vector<8x1xf32>
    %cst_77 = arith.constant 1.280000e+02 : f32
    %176 = vector.broadcast %cst_77 : f32 to vector<8x1xf32>
    %177 = arith.divf %175, %176 : vector<8x1xf32>
    %178 = vector.broadcast %177 : vector<8x1xf32> to vector<8x128xf32>
    %179 = arith.subf %173, %178 : vector<8x128xf32>
    %180 = arith.mulf %179, %179 : vector<8x128xf32>
    %cst_78 = arith.constant dense<0.000000e+00> : vector<8xf32>
    %181 = vector.multi_reduction <add>, %180, %cst_78 [1] : vector<8x128xf32> to vector<8xf32>
    %182 = vector.shape_cast %181 : vector<8xf32> to vector<8x1xf32>
    %cst_79 = arith.constant 1.280000e+02 : f32
    %183 = vector.broadcast %cst_79 : f32 to vector<8x1xf32>
    %184 = arith.divf %182, %183 : vector<8x1xf32>
    %185 = vector.broadcast %177 : vector<8x1xf32> to vector<8x128xf32>
    %186 = arith.subf %173, %185 : vector<8x128xf32>
    %cst_80 = arith.constant 9.99999974E-6 : f32
    %187 = vector.broadcast %cst_80 : f32 to vector<8x1xf32>
    %188 = arith.addf %184, %187 : vector<8x1xf32>
    %189 = math.rsqrt %188 : vector<8x1xf32>
    %190 = vector.broadcast %189 : vector<8x1xf32> to vector<8x128xf32>
    %191 = arith.mulf %186, %190 : vector<8x128xf32>
    %192 = arith.mulf %191, %134 : vector<8x128xf32>
    %193 = arith.addf %163, %192 : vector<8x128xf32>
    %cst_81 = arith.constant 5.000000e-01 : f32
    %194 = vector.broadcast %cst_81 : f32 to vector<8x128xf32>
    %195 = arith.mulf %193, %194 : vector<8x128xf32>
    %c2_82 = arith.constant 2 : index
    %c0_83 = arith.constant 0 : index
    %c0_84 = arith.constant 0 : index
    %196 = vector.load %arg4[%c2_82, %c0_83, %c0_84] : memref<4x8x128xf32, #tpu.memory_space<vmem>>, vector<1x8x128xf32>
    %197 = vector.shape_cast %196 : vector<1x8x128xf32> to vector<8x128xf32>
    %198 = vector.shape_cast %195 : vector<8x128xf32> to vector<1x8x128xf32>
    tpu.vector_store %arg4[%c2_82, %c0_83, %c0_84], %198 {strides = array<i32>} : memref<4x8x128xf32, #tpu.memory_space<vmem>>, vector<1x8x128xf32>,
    %c3 = arith.constant 3 : index
    %c0_85 = arith.constant 0 : index
    %c0_86 = arith.constant 0 : index
    %199 = vector.load %arg3[%c3, %c0_85, %c0_86] : memref<4x8x128xf32, #tpu.memory_space<vmem>>, vector<1x8x128xf32>
    %200 = vector.shape_cast %199 : vector<1x8x128xf32> to vector<8x128xf32>
    %c0_87 = arith.constant 0 : index
    %c3_88 = arith.constant 3 : index
    %c0_89 = arith.constant 0 : index
    %c0_90 = arith.constant 0 : index
    %201 = vector.load %arg1[%c0_87, %c3_88, %c0_89, %c0_90] : memref<2x4x48x128xbf16, #tpu.memory_space<vmem>>, vector<1x1x48x128xbf16>
    %202 = vector.shape_cast %201 : vector<1x1x48x128xbf16> to vector<48x128xbf16>
    %203 = arith.extf %202 : vector<48x128xbf16> to vector<48x128xf32>
    %cst_91 = arith.constant dense<0.000000e+00> : vector<8x128xf32>
    %204 = tpu.matmul %0, %203, %cst_91 {dimension_numbers = #tpu.dot_dimension_numbers<[1], [0], [0], [1], [0, 0, 1, 1], [], []>} : vector<8x48xf32>, vector<48x128xf32>, vector<8x128xf32> -> vector<8x128xf32>
    %205 = arith.negf %204 : vector<8x128xf32>
    %206 = math.exp %205 : vector<8x128xf32>
    %cst_92 = arith.constant 1.000000e+00 : f32
    %207 = vector.broadcast %cst_92 : f32 to vector<8x128xf32>
    %208 = arith.addf %207, %206 : vector<8x128xf32>
    %209 = arith.divf %207, %208 : vector<8x128xf32>
    %210 = arith.mulf %204, %209 : vector<8x128xf32>
    %cst_93 = arith.constant dense<0.000000e+00> : vector<8xf32>
    %211 = vector.multi_reduction <add>, %210, %cst_93 [1] : vector<8x128xf32> to vector<8xf32>
    %212 = vector.shape_cast %211 : vector<8xf32> to vector<8x1xf32>
    %cst_94 = arith.constant 1.280000e+02 : f32
    %213 = vector.broadcast %cst_94 : f32 to vector<8x1xf32>
    %214 = arith.divf %212, %213 : vector<8x1xf32>
    %215 = vector.broadcast %214 : vector<8x1xf32> to vector<8x128xf32>
    %216 = arith.subf %210, %215 : vector<8x128xf32>
    %217 = arith.mulf %216, %216 : vector<8x128xf32>
    %cst_95 = arith.constant dense<0.000000e+00> : vector<8xf32>
    %218 = vector.multi_reduction <add>, %217, %cst_95 [1] : vector<8x128xf32> to vector<8xf32>
    %219 = vector.shape_cast %218 : vector<8xf32> to vector<8x1xf32>
    %cst_96 = arith.constant 1.280000e+02 : f32
    %220 = vector.broadcast %cst_96 : f32 to vector<8x1xf32>
    %221 = arith.divf %219, %220 : vector<8x1xf32>
    %222 = vector.broadcast %214 : vector<8x1xf32> to vector<8x128xf32>
    %223 = arith.subf %210, %222 : vector<8x128xf32>
    %cst_97 = arith.constant 9.99999974E-6 : f32
    %224 = vector.broadcast %cst_97 : f32 to vector<8x1xf32>
    %225 = arith.addf %221, %224 : vector<8x1xf32>
    %226 = math.rsqrt %225 : vector<8x1xf32>
    %227 = vector.broadcast %226 : vector<8x1xf32> to vector<8x128xf32>
    %228 = arith.mulf %223, %227 : vector<8x128xf32>
    %229 = arith.mulf %228, %200 : vector<8x128xf32>
    %c1_98 = arith.constant 1 : index
    %c3_99 = arith.constant 3 : index
    %c0_100 = arith.constant 0 : index
    %c0_101 = arith.constant 0 : index
    %230 = vector.load %arg1[%c1_98, %c3_99, %c0_100, %c0_101] : memref<2x4x48x128xbf16, #tpu.memory_space<vmem>>, vector<1x1x48x128xbf16>
    %231 = vector.shape_cast %230 : vector<1x1x48x128xbf16> to vector<48x128xbf16>
    %232 = arith.extf %231 : vector<48x128xbf16> to vector<48x128xf32>
    %cst_102 = arith.constant dense<0.000000e+00> : vector<8x128xf32>
    %233 = tpu.matmul %0, %232, %cst_102 {dimension_numbers = #tpu.dot_dimension_numbers<[1], [0], [0], [1], [0, 0, 1, 1], [], []>} : vector<8x48xf32>, vector<48x128xf32>, vector<8x128xf32> -> vector<8x128xf32>
    %234 = arith.negf %233 : vector<8x128xf32>
    %235 = math.exp %234 : vector<8x128xf32>
    %cst_103 = arith.constant 1.000000e+00 : f32
    %236 = vector.broadcast %cst_103 : f32 to vector<8x128xf32>
    %237 = arith.addf %236, %235 : vector<8x128xf32>
    %238 = arith.divf %236, %237 : vector<8x128xf32>
    %239 = arith.mulf %233, %238 : vector<8x128xf32>
    %cst_104 = arith.constant dense<0.000000e+00> : vector<8xf32>
    %240 = vector.multi_reduction <add>, %239, %cst_104 [1] : vector<8x128xf32> to vector<8xf32>
    %241 = vector.shape_cast %240 : vector<8xf32> to vector<8x1xf32>
    %cst_105 = arith.constant 1.280000e+02 : f32
    %242 = vector.broadcast %cst_105 : f32 to vector<8x1xf32>
    %243 = arith.divf %241, %242 : vector<8x1xf32>
    %244 = vector.broadcast %243 : vector<8x1xf32> to vector<8x128xf32>
    %245 = arith.subf %239, %244 : vector<8x128xf32>
    %246 = arith.mulf %245, %245 : vector<8x128xf32>
    %cst_106 = arith.constant dense<0.000000e+00> : vector<8xf32>
    %247 = vector.multi_reduction <add>, %246, %cst_106 [1] : vector<8x128xf32> to vector<8xf32>
    %248 = vector.shape_cast %247 : vector<8xf32> to vector<8x1xf32>
    %cst_107 = arith.constant 1.280000e+02 : f32
    %249 = vector.broadcast %cst_107 : f32 to vector<8x1xf32>
    %250 = arith.divf %248, %249 : vector<8x1xf32>
    %251 = vector.broadcast %243 : vector<8x1xf32> to vector<8x128xf32>
    %252 = arith.subf %239, %251 : vector<8x128xf32>
    %cst_108 = arith.constant 9.99999974E-6 : f32
    %253 = vector.broadcast %cst_108 : f32 to vector<8x1xf32>
    %254 = arith.addf %250, %253 : vector<8x1xf32>
    %255 = math.rsqrt %254 : vector<8x1xf32>
    %256 = vector.broadcast %255 : vector<8x1xf32> to vector<8x128xf32>
    %257 = arith.mulf %252, %256 : vector<8x128xf32>
    %258 = arith.mulf %257, %200 : vector<8x128xf32>
    %259 = arith.addf %229, %258 : vector<8x128xf32>
    %cst_109 = arith.constant 5.000000e-01 : f32
    %260 = vector.broadcast %cst_109 : f32 to vector<8x128xf32>
    %261 = arith.mulf %259, %260 : vector<8x128xf32>
    %c3_110 = arith.constant 3 : index
    %c0_111 = arith.constant 0 : index
    %c0_112 = arith.constant 0 : index
    %262 = vector.load %arg4[%c3_110, %c0_111, %c0_112] : memref<4x8x128xf32, #tpu.memory_space<vmem>>, vector<1x8x128xf32>
    %263 = vector.shape_cast %262 : vector<1x8x128xf32> to vector<8x128xf32>
    %264 = vector.shape_cast %261 : vector<8x128xf32> to vector<1x8x128xf32>
    tpu.vector_store %arg4[%c3_110, %c0_111, %c0_112], %264 {strides = array<i32>} : memref<4x8x128xf32, #tpu.memory_space<vmem>>, vector<1x8x128xf32>,
    return
  }
  func.func @transform_0(%arg0: i32) -> (i32, i32, i32, i32) {
    %c0_i32 = arith.constant 0 : i32
    %c0_i32_0 = arith.constant 0 : i32
    %c0_i32_1 = arith.constant 0 : i32
    %c0_i32_2 = arith.constant 0 : i32
    return %c0_i32, %arg0, %c0_i32_0, %c0_i32_1 : i32, i32, i32, i32
  }
  func.func @transform_1(%arg0: i32) -> (i32, i32) {
    %c0_i32 = arith.constant 0 : i32
    %c0_i32_0 = arith.constant 0 : i32
    %c0_i32_1 = arith.constant 0 : i32
    return %c0_i32, %c0_i32_0 : i32, i32
  }
  func.func @transform_2(%arg0: i32) -> (i32, i32, i32) {
    %c0_i32 = arith.constant 0 : i32
    %c0_i32_0 = arith.constant 0 : i32
    %c0_i32_1 = arith.constant 0 : i32
    return %arg0, %c0_i32, %c0_i32_0 : i32, i32, i32
  }
  func.func @transform_3(%arg0: i32) -> (i32, i32, i32) {
    %c0_i32 = arith.constant 0 : i32
    %c0_i32_0 = arith.constant 0 : i32
    %c0_i32_1 = arith.constant 0 : i32
    return %arg0, %c0_i32, %c0_i32_0 : i32, i32, i32
  }
}

module attributes {stable_mosaic.version = 11 : i64} {
  func.func @_conv_act_bn_kernel(%arg0: i32, %arg1: memref<1x4x16x128xf32, #tpu.memory_space<vmem>>, %arg2: memref<8x16xf32, #tpu.memory_space<vmem>>, %arg3: memref<4x8x128xf32, #tpu.memory_space<vmem>>, %arg4: memref<4x8x128xf32, #tpu.memory_space<vmem>>) attributes {dimension_semantics = [#tpu.dimension_semantics<parallel>], iteration_bounds = array<i64: 1>, scalar_prefetch = 0 : i64, scratch_operands = 0 : i64, tpu.core_type = #tpu.core_type<tc>, window_params = [{transform_indices = @transform_0, window_bounds = array<i64: 1, 4, 16, 128>}, {pipeline_mode = #tpu.pipeline_mode<synchronous>, transform_indices = @transform_1, window_bounds = array<i64: 8, 16>}, {transform_indices = @transform_2, window_bounds = array<i64: 4, 8, 128>}, {transform_indices = @transform_3, window_bounds = array<i64: 4, 8, 128>}]} {
    %c0 = arith.constant 0 : index
    %c0_0 = arith.constant 0 : index
    %0 = vector.load %arg2[%c0, %c0_0] : memref<8x16xf32, #tpu.memory_space<vmem>>, vector<8x16xf32>
    %c0_1 = arith.constant 0 : index
    %c0_2 = arith.constant 0 : index
    %c0_3 = arith.constant 0 : index
    %1 = vector.load %arg3[%c0_1, %c0_2, %c0_3] : memref<4x8x128xf32, #tpu.memory_space<vmem>>, vector<1x8x128xf32>
    %2 = vector.shape_cast %1 : vector<1x8x128xf32> to vector<8x128xf32>
    %c0_4 = arith.constant 0 : index
    %c0_5 = arith.constant 0 : index
    %c0_6 = arith.constant 0 : index
    %c0_7 = arith.constant 0 : index
    %3 = vector.load %arg1[%c0_4, %c0_5, %c0_6, %c0_7] : memref<1x4x16x128xf32, #tpu.memory_space<vmem>>, vector<1x1x16x128xf32>
    %4 = vector.shape_cast %3 : vector<1x1x16x128xf32> to vector<16x128xf32>
    %cst = arith.constant dense<0.000000e+00> : vector<8x128xf32>
    %5 = tpu.matmul %0, %4, %cst {dimension_numbers = #tpu.dot_dimension_numbers<[1], [0], [0], [1], [0, 0, 1, 1], [], []>} : vector<8x16xf32>, vector<16x128xf32>, vector<8x128xf32> -> vector<8x128xf32>
    %cst_8 = arith.constant dense<0.000000e+00> : vector<8xf32>
    %6 = vector.multi_reduction <add>, %5, %cst_8 [1] : vector<8x128xf32> to vector<8xf32>
    %7 = vector.shape_cast %6 : vector<8xf32> to vector<8x1xf32>
    %cst_9 = arith.constant 1.280000e+02 : f32
    %8 = vector.broadcast %cst_9 : f32 to vector<8x1xf32>
    %9 = arith.divf %7, %8 : vector<8x1xf32>
    %10 = vector.broadcast %9 : vector<8x1xf32> to vector<8x128xf32>
    %11 = arith.subf %5, %10 : vector<8x128xf32>
    %12 = arith.mulf %11, %11 : vector<8x128xf32>
    %cst_10 = arith.constant dense<0.000000e+00> : vector<8xf32>
    %13 = vector.multi_reduction <add>, %12, %cst_10 [1] : vector<8x128xf32> to vector<8xf32>
    %14 = vector.shape_cast %13 : vector<8xf32> to vector<8x1xf32>
    %cst_11 = arith.constant 1.280000e+02 : f32
    %15 = vector.broadcast %cst_11 : f32 to vector<8x1xf32>
    %16 = arith.divf %14, %15 : vector<8x1xf32>
    %17 = vector.broadcast %9 : vector<8x1xf32> to vector<8x128xf32>
    %18 = arith.subf %5, %17 : vector<8x128xf32>
    %cst_12 = arith.constant 9.99999974E-6 : f32
    %19 = vector.broadcast %cst_12 : f32 to vector<8x1xf32>
    %20 = arith.addf %16, %19 : vector<8x1xf32>
    %21 = math.rsqrt %20 : vector<8x1xf32>
    %22 = vector.broadcast %21 : vector<8x1xf32> to vector<8x128xf32>
    %23 = arith.mulf %18, %22 : vector<8x128xf32>
    %24 = arith.mulf %23, %2 : vector<8x128xf32>
    %cst_13 = arith.constant 0.000000e+00 : f32
    %cst_14 = arith.constant 6.000000e+00 : f32
    %25 = vector.broadcast %cst_13 : f32 to vector<8x128xf32>
    %26 = arith.maximumf %25, %24 : vector<8x128xf32>
    %27 = vector.broadcast %cst_14 : f32 to vector<8x128xf32>
    %28 = arith.minimumf %27, %26 : vector<8x128xf32>
    %cst_15 = arith.constant 1.000000e+00 : f32
    %29 = vector.broadcast %cst_15 : f32 to vector<8x128xf32>
    %30 = arith.mulf %28, %29 : vector<8x128xf32>
    %c0_16 = arith.constant 0 : index
    %c0_17 = arith.constant 0 : index
    %c0_18 = arith.constant 0 : index
    %31 = vector.load %arg4[%c0_16, %c0_17, %c0_18] : memref<4x8x128xf32, #tpu.memory_space<vmem>>, vector<1x8x128xf32>
    %32 = vector.shape_cast %31 : vector<1x8x128xf32> to vector<8x128xf32>
    %33 = vector.shape_cast %30 : vector<8x128xf32> to vector<1x8x128xf32>
    tpu.vector_store %arg4[%c0_16, %c0_17, %c0_18], %33 {strides = array<i32>} : memref<4x8x128xf32, #tpu.memory_space<vmem>>, vector<1x8x128xf32>,
    %c1 = arith.constant 1 : index
    %c0_19 = arith.constant 0 : index
    %c0_20 = arith.constant 0 : index
    %34 = vector.load %arg3[%c1, %c0_19, %c0_20] : memref<4x8x128xf32, #tpu.memory_space<vmem>>, vector<1x8x128xf32>
    %35 = vector.shape_cast %34 : vector<1x8x128xf32> to vector<8x128xf32>
    %c0_21 = arith.constant 0 : index
    %c1_22 = arith.constant 1 : index
    %c0_23 = arith.constant 0 : index
    %c0_24 = arith.constant 0 : index
    %36 = vector.load %arg1[%c0_21, %c1_22, %c0_23, %c0_24] : memref<1x4x16x128xf32, #tpu.memory_space<vmem>>, vector<1x1x16x128xf32>
    %37 = vector.shape_cast %36 : vector<1x1x16x128xf32> to vector<16x128xf32>
    %cst_25 = arith.constant dense<0.000000e+00> : vector<8x128xf32>
    %38 = tpu.matmul %0, %37, %cst_25 {dimension_numbers = #tpu.dot_dimension_numbers<[1], [0], [0], [1], [0, 0, 1, 1], [], []>} : vector<8x16xf32>, vector<16x128xf32>, vector<8x128xf32> -> vector<8x128xf32>
    %cst_26 = arith.constant dense<0.000000e+00> : vector<8xf32>
    %39 = vector.multi_reduction <add>, %38, %cst_26 [1] : vector<8x128xf32> to vector<8xf32>
    %40 = vector.shape_cast %39 : vector<8xf32> to vector<8x1xf32>
    %cst_27 = arith.constant 1.280000e+02 : f32
    %41 = vector.broadcast %cst_27 : f32 to vector<8x1xf32>
    %42 = arith.divf %40, %41 : vector<8x1xf32>
    %43 = vector.broadcast %42 : vector<8x1xf32> to vector<8x128xf32>
    %44 = arith.subf %38, %43 : vector<8x128xf32>
    %45 = arith.mulf %44, %44 : vector<8x128xf32>
    %cst_28 = arith.constant dense<0.000000e+00> : vector<8xf32>
    %46 = vector.multi_reduction <add>, %45, %cst_28 [1] : vector<8x128xf32> to vector<8xf32>
    %47 = vector.shape_cast %46 : vector<8xf32> to vector<8x1xf32>
    %cst_29 = arith.constant 1.280000e+02 : f32
    %48 = vector.broadcast %cst_29 : f32 to vector<8x1xf32>
    %49 = arith.divf %47, %48 : vector<8x1xf32>
    %50 = vector.broadcast %42 : vector<8x1xf32> to vector<8x128xf32>
    %51 = arith.subf %38, %50 : vector<8x128xf32>
    %cst_30 = arith.constant 9.99999974E-6 : f32
    %52 = vector.broadcast %cst_30 : f32 to vector<8x1xf32>
    %53 = arith.addf %49, %52 : vector<8x1xf32>
    %54 = math.rsqrt %53 : vector<8x1xf32>
    %55 = vector.broadcast %54 : vector<8x1xf32> to vector<8x128xf32>
    %56 = arith.mulf %51, %55 : vector<8x128xf32>
    %57 = arith.mulf %56, %35 : vector<8x128xf32>
    %cst_31 = arith.constant 0.000000e+00 : f32
    %cst_32 = arith.constant 6.000000e+00 : f32
    %58 = vector.broadcast %cst_31 : f32 to vector<8x128xf32>
    %59 = arith.maximumf %58, %57 : vector<8x128xf32>
    %60 = vector.broadcast %cst_32 : f32 to vector<8x128xf32>
    %61 = arith.minimumf %60, %59 : vector<8x128xf32>
    %cst_33 = arith.constant 1.000000e+00 : f32
    %62 = vector.broadcast %cst_33 : f32 to vector<8x128xf32>
    %63 = arith.mulf %61, %62 : vector<8x128xf32>
    %c1_34 = arith.constant 1 : index
    %c0_35 = arith.constant 0 : index
    %c0_36 = arith.constant 0 : index
    %64 = vector.load %arg4[%c1_34, %c0_35, %c0_36] : memref<4x8x128xf32, #tpu.memory_space<vmem>>, vector<1x8x128xf32>
    %65 = vector.shape_cast %64 : vector<1x8x128xf32> to vector<8x128xf32>
    %66 = vector.shape_cast %63 : vector<8x128xf32> to vector<1x8x128xf32>
    tpu.vector_store %arg4[%c1_34, %c0_35, %c0_36], %66 {strides = array<i32>} : memref<4x8x128xf32, #tpu.memory_space<vmem>>, vector<1x8x128xf32>,
    %c2 = arith.constant 2 : index
    %c0_37 = arith.constant 0 : index
    %c0_38 = arith.constant 0 : index
    %67 = vector.load %arg3[%c2, %c0_37, %c0_38] : memref<4x8x128xf32, #tpu.memory_space<vmem>>, vector<1x8x128xf32>
    %68 = vector.shape_cast %67 : vector<1x8x128xf32> to vector<8x128xf32>
    %c0_39 = arith.constant 0 : index
    %c2_40 = arith.constant 2 : index
    %c0_41 = arith.constant 0 : index
    %c0_42 = arith.constant 0 : index
    %69 = vector.load %arg1[%c0_39, %c2_40, %c0_41, %c0_42] : memref<1x4x16x128xf32, #tpu.memory_space<vmem>>, vector<1x1x16x128xf32>
    %70 = vector.shape_cast %69 : vector<1x1x16x128xf32> to vector<16x128xf32>
    %cst_43 = arith.constant dense<0.000000e+00> : vector<8x128xf32>
    %71 = tpu.matmul %0, %70, %cst_43 {dimension_numbers = #tpu.dot_dimension_numbers<[1], [0], [0], [1], [0, 0, 1, 1], [], []>} : vector<8x16xf32>, vector<16x128xf32>, vector<8x128xf32> -> vector<8x128xf32>
    %cst_44 = arith.constant dense<0.000000e+00> : vector<8xf32>
    %72 = vector.multi_reduction <add>, %71, %cst_44 [1] : vector<8x128xf32> to vector<8xf32>
    %73 = vector.shape_cast %72 : vector<8xf32> to vector<8x1xf32>
    %cst_45 = arith.constant 1.280000e+02 : f32
    %74 = vector.broadcast %cst_45 : f32 to vector<8x1xf32>
    %75 = arith.divf %73, %74 : vector<8x1xf32>
    %76 = vector.broadcast %75 : vector<8x1xf32> to vector<8x128xf32>
    %77 = arith.subf %71, %76 : vector<8x128xf32>
    %78 = arith.mulf %77, %77 : vector<8x128xf32>
    %cst_46 = arith.constant dense<0.000000e+00> : vector<8xf32>
    %79 = vector.multi_reduction <add>, %78, %cst_46 [1] : vector<8x128xf32> to vector<8xf32>
    %80 = vector.shape_cast %79 : vector<8xf32> to vector<8x1xf32>
    %cst_47 = arith.constant 1.280000e+02 : f32
    %81 = vector.broadcast %cst_47 : f32 to vector<8x1xf32>
    %82 = arith.divf %80, %81 : vector<8x1xf32>
    %83 = vector.broadcast %75 : vector<8x1xf32> to vector<8x128xf32>
    %84 = arith.subf %71, %83 : vector<8x128xf32>
    %cst_48 = arith.constant 9.99999974E-6 : f32
    %85 = vector.broadcast %cst_48 : f32 to vector<8x1xf32>
    %86 = arith.addf %82, %85 : vector<8x1xf32>
    %87 = math.rsqrt %86 : vector<8x1xf32>
    %88 = vector.broadcast %87 : vector<8x1xf32> to vector<8x128xf32>
    %89 = arith.mulf %84, %88 : vector<8x128xf32>
    %90 = arith.mulf %89, %68 : vector<8x128xf32>
    %cst_49 = arith.constant 0.000000e+00 : f32
    %cst_50 = arith.constant 6.000000e+00 : f32
    %91 = vector.broadcast %cst_49 : f32 to vector<8x128xf32>
    %92 = arith.maximumf %91, %90 : vector<8x128xf32>
    %93 = vector.broadcast %cst_50 : f32 to vector<8x128xf32>
    %94 = arith.minimumf %93, %92 : vector<8x128xf32>
    %cst_51 = arith.constant 1.000000e+00 : f32
    %95 = vector.broadcast %cst_51 : f32 to vector<8x128xf32>
    %96 = arith.mulf %94, %95 : vector<8x128xf32>
    %c2_52 = arith.constant 2 : index
    %c0_53 = arith.constant 0 : index
    %c0_54 = arith.constant 0 : index
    %97 = vector.load %arg4[%c2_52, %c0_53, %c0_54] : memref<4x8x128xf32, #tpu.memory_space<vmem>>, vector<1x8x128xf32>
    %98 = vector.shape_cast %97 : vector<1x8x128xf32> to vector<8x128xf32>
    %99 = vector.shape_cast %96 : vector<8x128xf32> to vector<1x8x128xf32>
    tpu.vector_store %arg4[%c2_52, %c0_53, %c0_54], %99 {strides = array<i32>} : memref<4x8x128xf32, #tpu.memory_space<vmem>>, vector<1x8x128xf32>,
    %c3 = arith.constant 3 : index
    %c0_55 = arith.constant 0 : index
    %c0_56 = arith.constant 0 : index
    %100 = vector.load %arg3[%c3, %c0_55, %c0_56] : memref<4x8x128xf32, #tpu.memory_space<vmem>>, vector<1x8x128xf32>
    %101 = vector.shape_cast %100 : vector<1x8x128xf32> to vector<8x128xf32>
    %c0_57 = arith.constant 0 : index
    %c3_58 = arith.constant 3 : index
    %c0_59 = arith.constant 0 : index
    %c0_60 = arith.constant 0 : index
    %102 = vector.load %arg1[%c0_57, %c3_58, %c0_59, %c0_60] : memref<1x4x16x128xf32, #tpu.memory_space<vmem>>, vector<1x1x16x128xf32>
    %103 = vector.shape_cast %102 : vector<1x1x16x128xf32> to vector<16x128xf32>
    %cst_61 = arith.constant dense<0.000000e+00> : vector<8x128xf32>
    %104 = tpu.matmul %0, %103, %cst_61 {dimension_numbers = #tpu.dot_dimension_numbers<[1], [0], [0], [1], [0, 0, 1, 1], [], []>} : vector<8x16xf32>, vector<16x128xf32>, vector<8x128xf32> -> vector<8x128xf32>
    %cst_62 = arith.constant dense<0.000000e+00> : vector<8xf32>
    %105 = vector.multi_reduction <add>, %104, %cst_62 [1] : vector<8x128xf32> to vector<8xf32>
    %106 = vector.shape_cast %105 : vector<8xf32> to vector<8x1xf32>
    %cst_63 = arith.constant 1.280000e+02 : f32
    %107 = vector.broadcast %cst_63 : f32 to vector<8x1xf32>
    %108 = arith.divf %106, %107 : vector<8x1xf32>
    %109 = vector.broadcast %108 : vector<8x1xf32> to vector<8x128xf32>
    %110 = arith.subf %104, %109 : vector<8x128xf32>
    %111 = arith.mulf %110, %110 : vector<8x128xf32>
    %cst_64 = arith.constant dense<0.000000e+00> : vector<8xf32>
    %112 = vector.multi_reduction <add>, %111, %cst_64 [1] : vector<8x128xf32> to vector<8xf32>
    %113 = vector.shape_cast %112 : vector<8xf32> to vector<8x1xf32>
    %cst_65 = arith.constant 1.280000e+02 : f32
    %114 = vector.broadcast %cst_65 : f32 to vector<8x1xf32>
    %115 = arith.divf %113, %114 : vector<8x1xf32>
    %116 = vector.broadcast %108 : vector<8x1xf32> to vector<8x128xf32>
    %117 = arith.subf %104, %116 : vector<8x128xf32>
    %cst_66 = arith.constant 9.99999974E-6 : f32
    %118 = vector.broadcast %cst_66 : f32 to vector<8x1xf32>
    %119 = arith.addf %115, %118 : vector<8x1xf32>
    %120 = math.rsqrt %119 : vector<8x1xf32>
    %121 = vector.broadcast %120 : vector<8x1xf32> to vector<8x128xf32>
    %122 = arith.mulf %117, %121 : vector<8x128xf32>
    %123 = arith.mulf %122, %101 : vector<8x128xf32>
    %cst_67 = arith.constant 0.000000e+00 : f32
    %cst_68 = arith.constant 6.000000e+00 : f32
    %124 = vector.broadcast %cst_67 : f32 to vector<8x128xf32>
    %125 = arith.maximumf %124, %123 : vector<8x128xf32>
    %126 = vector.broadcast %cst_68 : f32 to vector<8x128xf32>
    %127 = arith.minimumf %126, %125 : vector<8x128xf32>
    %cst_69 = arith.constant 1.000000e+00 : f32
    %128 = vector.broadcast %cst_69 : f32 to vector<8x128xf32>
    %129 = arith.mulf %127, %128 : vector<8x128xf32>
    %c3_70 = arith.constant 3 : index
    %c0_71 = arith.constant 0 : index
    %c0_72 = arith.constant 0 : index
    %130 = vector.load %arg4[%c3_70, %c0_71, %c0_72] : memref<4x8x128xf32, #tpu.memory_space<vmem>>, vector<1x8x128xf32>
    %131 = vector.shape_cast %130 : vector<1x8x128xf32> to vector<8x128xf32>
    %132 = vector.shape_cast %129 : vector<8x128xf32> to vector<1x8x128xf32>
    tpu.vector_store %arg4[%c3_70, %c0_71, %c0_72], %132 {strides = array<i32>} : memref<4x8x128xf32, #tpu.memory_space<vmem>>, vector<1x8x128xf32>,
    return
  }
  func.func @transform_0(%arg0: i32) -> (i32, i32, i32, i32) {
    %c0_i32 = arith.constant 0 : i32
    %c0_i32_0 = arith.constant 0 : i32
    %c0_i32_1 = arith.constant 0 : i32
    %c0_i32_2 = arith.constant 0 : i32
    return %c0_i32, %arg0, %c0_i32_0, %c0_i32_1 : i32, i32, i32, i32
  }
  func.func @transform_1(%arg0: i32) -> (i32, i32) {
    %c0_i32 = arith.constant 0 : i32
    %c0_i32_0 = arith.constant 0 : i32
    %c0_i32_1 = arith.constant 0 : i32
    return %c0_i32, %c0_i32_0 : i32, i32
  }
  func.func @transform_2(%arg0: i32) -> (i32, i32, i32) {
    %c0_i32 = arith.constant 0 : i32
    %c0_i32_0 = arith.constant 0 : i32
    %c0_i32_1 = arith.constant 0 : i32
    return %arg0, %c0_i32, %c0_i32_0 : i32, i32, i32
  }
  func.func @transform_3(%arg0: i32) -> (i32, i32, i32) {
    %c0_i32 = arith.constant 0 : i32
    %c0_i32_0 = arith.constant 0 : i32
    %c0_i32_1 = arith.constant 0 : i32
    return %arg0, %c0_i32, %c0_i32_0 : i32, i32, i32
  }
}

module attributes {stable_mosaic.version = 11 : i64} {
  func.func @_lif_dir_kernel(%arg0: i32, %arg1: memref<2xf32, #tpu.memory_space<smem>>, %arg2: memref<4x8x128xf32, #tpu.memory_space<vmem>>, %arg3: memref<1x4x8x128xbf16, #tpu.memory_space<vmem>>) attributes {dimension_semantics = [#tpu.dimension_semantics<parallel>], iteration_bounds = array<i64: 2>, scalar_prefetch = 0 : i64, scratch_operands = 0 : i64, tpu.core_type = #tpu.core_type<tc>, window_params = [{transform_indices = @transform_0, window_bounds = array<i64: 2>}, {pipeline_mode = #tpu.pipeline_mode<synchronous>, transform_indices = @transform_1, window_bounds = array<i64: 4, 8, 128>}, {transform_indices = @transform_2, window_bounds = array<i64: 1, 4, 8, 128>}]} {
    %c0 = arith.constant 0 : index
    %0 = memref.load %arg1[%c0] : memref<2xf32, #tpu.memory_space<smem>>
    %c1 = arith.constant 1 : index
    %1 = memref.load %arg1[%c1] : memref<2xf32, #tpu.memory_space<smem>>
    %cst = arith.constant 0.000000e+00 : f32
    %2 = vector.broadcast %cst : f32 to vector<8x128xf32>
    %c0_i32 = arith.constant 0 : i32
    %c0_i32_0 = arith.constant 0 : i32
    %3 = arith.cmpi eq, %arg0, %c0_i32_0 : i32
    %c3_i32 = arith.constant 3 : i32
    %4 = arith.subi %c3_i32, %c0_i32 : i32
    %5 = arith.select %3, %c0_i32, %4 : i32
    %6 = arith.index_cast %5 : i32 to index
    %c0_1 = arith.constant 0 : index
    %c0_2 = arith.constant 0 : index
    %7 = vector.load %arg2[%6, %c0_1, %c0_2] : memref<4x8x128xf32, #tpu.memory_space<vmem>>, vector<1x8x128xf32>
    %8 = vector.shape_cast %7 : vector<1x8x128xf32> to vector<8x128xf32>
    %9 = vector.broadcast %1 : f32 to vector<8x128xf32>
    %10 = arith.cmpf ogt, %2, %9 : vector<8x128xf32>
    %11 = arith.extui %10 : vector<8x128xi1> to vector<8x128xi32>
    %12 = arith.sitofp %11 : vector<8x128xi32> to vector<8x128xf32>
    %13 = vector.broadcast %0 : f32 to vector<8x128xf32>
    %14 = arith.mulf %13, %2 : vector<8x128xf32>
    %15 = arith.addf %14, %8 : vector<8x128xf32>
    %16 = vector.broadcast %1 : f32 to vector<8x128xf32>
    %17 = arith.mulf %12, %16 : vector<8x128xf32>
    %18 = arith.subf %15, %17 : vector<8x128xf32>
    %19 = vector.broadcast %1 : f32 to vector<8x128xf32>
    %20 = arith.cmpf ogt, %18, %19 : vector<8x128xf32>
    %21 = arith.extui %20 : vector<8x128xi1> to vector<8x128xi32>
    %22 = arith.sitofp %21 : vector<8x128xi32> to vector<8x128xf32>
    %23 = arith.truncf %22 : vector<8x128xf32> to vector<8x128xbf16>
    %c0_3 = arith.constant 0 : index
    %24 = arith.index_cast %5 : i32 to index
    %c0_4 = arith.constant 0 : index
    %c0_5 = arith.constant 0 : index
    %25 = vector.load %arg3[%c0_3, %24, %c0_4, %c0_5] : memref<1x4x8x128xbf16, #tpu.memory_space<vmem>>, vector<1x1x8x128xbf16>
    %26 = vector.shape_cast %25 : vector<1x1x8x128xbf16> to vector<8x128xbf16>
    %27 = vector.shape_cast %23 : vector<8x128xbf16> to vector<1x1x8x128xbf16>
    tpu.vector_store %arg3[%c0_3, %24, %c0_4, %c0_5], %27 {strides = array<i32>} : memref<1x4x8x128xbf16, #tpu.memory_space<vmem>>, vector<1x1x8x128xbf16>,
    %c1_i32 = arith.constant 1 : i32
    %c0_i32_6 = arith.constant 0 : i32
    %28 = arith.cmpi eq, %arg0, %c0_i32_6 : i32
    %c3_i32_7 = arith.constant 3 : i32
    %29 = arith.subi %c3_i32_7, %c1_i32 : i32
    %30 = arith.select %28, %c1_i32, %29 : i32
    %31 = arith.index_cast %30 : i32 to index
    %c0_8 = arith.constant 0 : index
    %c0_9 = arith.constant 0 : index
    %32 = vector.load %arg2[%31, %c0_8, %c0_9] : memref<4x8x128xf32, #tpu.memory_space<vmem>>, vector<1x8x128xf32>
    %33 = vector.shape_cast %32 : vector<1x8x128xf32> to vector<8x128xf32>
    %34 = vector.broadcast %1 : f32 to vector<8x128xf32>
    %35 = arith.cmpf ogt, %18, %34 : vector<8x128xf32>
    %36 = arith.extui %35 : vector<8x128xi1> to vector<8x128xi32>
    %37 = arith.sitofp %36 : vector<8x128xi32> to vector<8x128xf32>
    %38 = vector.broadcast %0 : f32 to vector<8x128xf32>
    %39 = arith.mulf %38, %18 : vector<8x128xf32>
    %40 = arith.addf %39, %33 : vector<8x128xf32>
    %41 = vector.broadcast %1 : f32 to vector<8x128xf32>
    %42 = arith.mulf %37, %41 : vector<8x128xf32>
    %43 = arith.subf %40, %42 : vector<8x128xf32>
    %44 = vector.broadcast %1 : f32 to vector<8x128xf32>
    %45 = arith.cmpf ogt, %43, %44 : vector<8x128xf32>
    %46 = arith.extui %45 : vector<8x128xi1> to vector<8x128xi32>
    %47 = arith.sitofp %46 : vector<8x128xi32> to vector<8x128xf32>
    %48 = arith.truncf %47 : vector<8x128xf32> to vector<8x128xbf16>
    %c0_10 = arith.constant 0 : index
    %49 = arith.index_cast %30 : i32 to index
    %c0_11 = arith.constant 0 : index
    %c0_12 = arith.constant 0 : index
    %50 = vector.load %arg3[%c0_10, %49, %c0_11, %c0_12] : memref<1x4x8x128xbf16, #tpu.memory_space<vmem>>, vector<1x1x8x128xbf16>
    %51 = vector.shape_cast %50 : vector<1x1x8x128xbf16> to vector<8x128xbf16>
    %52 = vector.shape_cast %48 : vector<8x128xbf16> to vector<1x1x8x128xbf16>
    tpu.vector_store %arg3[%c0_10, %49, %c0_11, %c0_12], %52 {strides = array<i32>} : memref<1x4x8x128xbf16, #tpu.memory_space<vmem>>, vector<1x1x8x128xbf16>,
    %c2_i32 = arith.constant 2 : i32
    %c0_i32_13 = arith.constant 0 : i32
    %53 = arith.cmpi eq, %arg0, %c0_i32_13 : i32
    %c3_i32_14 = arith.constant 3 : i32
    %54 = arith.subi %c3_i32_14, %c2_i32 : i32
    %55 = arith.select %53, %c2_i32, %54 : i32
    %56 = arith.index_cast %55 : i32 to index
    %c0_15 = arith.constant 0 : index
    %c0_16 = arith.constant 0 : index
    %57 = vector.load %arg2[%56, %c0_15, %c0_16] : memref<4x8x128xf32, #tpu.memory_space<vmem>>, vector<1x8x128xf32>
    %58 = vector.shape_cast %57 : vector<1x8x128xf32> to vector<8x128xf32>
    %59 = vector.broadcast %1 : f32 to vector<8x128xf32>
    %60 = arith.cmpf ogt, %43, %59 : vector<8x128xf32>
    %61 = arith.extui %60 : vector<8x128xi1> to vector<8x128xi32>
    %62 = arith.sitofp %61 : vector<8x128xi32> to vector<8x128xf32>
    %63 = vector.broadcast %0 : f32 to vector<8x128xf32>
    %64 = arith.mulf %63, %43 : vector<8x128xf32>
    %65 = arith.addf %64, %58 : vector<8x128xf32>
    %66 = vector.broadcast %1 : f32 to vector<8x128xf32>
    %67 = arith.mulf %62, %66 : vector<8x128xf32>
    %68 = arith.subf %65, %67 : vector<8x128xf32>
    %69 = vector.broadcast %1 : f32 to vector<8x128xf32>
    %70 = arith.cmpf ogt, %68, %69 : vector<8x128xf32>
    %71 = arith.extui %70 : vector<8x128xi1> to vector<8x128xi32>
    %72 = arith.sitofp %71 : vector<8x128xi32> to vector<8x128xf32>
    %73 = arith.truncf %72 : vector<8x128xf32> to vector<8x128xbf16>
    %c0_17 = arith.constant 0 : index
    %74 = arith.index_cast %55 : i32 to index
    %c0_18 = arith.constant 0 : index
    %c0_19 = arith.constant 0 : index
    %75 = vector.load %arg3[%c0_17, %74, %c0_18, %c0_19] : memref<1x4x8x128xbf16, #tpu.memory_space<vmem>>, vector<1x1x8x128xbf16>
    %76 = vector.shape_cast %75 : vector<1x1x8x128xbf16> to vector<8x128xbf16>
    %77 = vector.shape_cast %73 : vector<8x128xbf16> to vector<1x1x8x128xbf16>
    tpu.vector_store %arg3[%c0_17, %74, %c0_18, %c0_19], %77 {strides = array<i32>} : memref<1x4x8x128xbf16, #tpu.memory_space<vmem>>, vector<1x1x8x128xbf16>,
    %c3_i32_20 = arith.constant 3 : i32
    %c0_i32_21 = arith.constant 0 : i32
    %78 = arith.cmpi eq, %arg0, %c0_i32_21 : i32
    %c3_i32_22 = arith.constant 3 : i32
    %79 = arith.subi %c3_i32_22, %c3_i32_20 : i32
    %80 = arith.select %78, %c3_i32_20, %79 : i32
    %81 = arith.index_cast %80 : i32 to index
    %c0_23 = arith.constant 0 : index
    %c0_24 = arith.constant 0 : index
    %82 = vector.load %arg2[%81, %c0_23, %c0_24] : memref<4x8x128xf32, #tpu.memory_space<vmem>>, vector<1x8x128xf32>
    %83 = vector.shape_cast %82 : vector<1x8x128xf32> to vector<8x128xf32>
    %84 = vector.broadcast %1 : f32 to vector<8x128xf32>
    %85 = arith.cmpf ogt, %68, %84 : vector<8x128xf32>
    %86 = arith.extui %85 : vector<8x128xi1> to vector<8x128xi32>
    %87 = arith.sitofp %86 : vector<8x128xi32> to vector<8x128xf32>
    %88 = vector.broadcast %0 : f32 to vector<8x128xf32>
    %89 = arith.mulf %88, %68 : vector<8x128xf32>
    %90 = arith.addf %89, %83 : vector<8x128xf32>
    %91 = vector.broadcast %1 : f32 to vector<8x128xf32>
    %92 = arith.mulf %87, %91 : vector<8x128xf32>
    %93 = arith.subf %90, %92 : vector<8x128xf32>
    %94 = vector.broadcast %1 : f32 to vector<8x128xf32>
    %95 = arith.cmpf ogt, %93, %94 : vector<8x128xf32>
    %96 = arith.extui %95 : vector<8x128xi1> to vector<8x128xi32>
    %97 = arith.sitofp %96 : vector<8x128xi32> to vector<8x128xf32>
    %98 = arith.truncf %97 : vector<8x128xf32> to vector<8x128xbf16>
    %c0_25 = arith.constant 0 : index
    %99 = arith.index_cast %80 : i32 to index
    %c0_26 = arith.constant 0 : index
    %c0_27 = arith.constant 0 : index
    %100 = vector.load %arg3[%c0_25, %99, %c0_26, %c0_27] : memref<1x4x8x128xbf16, #tpu.memory_space<vmem>>, vector<1x1x8x128xbf16>
    %101 = vector.shape_cast %100 : vector<1x1x8x128xbf16> to vector<8x128xbf16>
    %102 = vector.shape_cast %98 : vector<8x128xbf16> to vector<1x1x8x128xbf16>
    tpu.vector_store %arg3[%c0_25, %99, %c0_26, %c0_27], %102 {strides = array<i32>} : memref<1x4x8x128xbf16, #tpu.memory_space<vmem>>, vector<1x1x8x128xbf16>,
    %c4_i32 = arith.constant 4 : i32
    return
  }
  func.func @transform_0(%arg0: i32) -> i32 {
    %c0_i32 = arith.constant 0 : i32
    %c0_i32_0 = arith.constant 0 : i32
    return %c0_i32 : i32
  }
  func.func @transform_1(%arg0: i32) -> (i32, i32, i32) {
    %c0_i32 = arith.constant 0 : i32
    %c0_i32_0 = arith.constant 0 : i32
    %c0_i32_1 = arith.constant 0 : i32
    %c0_i32_2 = arith.constant 0 : i32
    return %c0_i32, %c0_i32_0, %c0_i32_1 : i32, i32, i32
  }
  func.func @transform_2(%arg0: i32) -> (i32, i32, i32, i32) {
    %c0_i32 = arith.constant 0 : i32
    %c0_i32_0 = arith.constant 0 : i32
    %c0_i32_1 = arith.constant 0 : i32
    %c0_i32_2 = arith.constant 0 : i32
    return %arg0, %c0_i32, %c0_i32_0, %c0_i32_1 : i32, i32, i32, i32
  }
}

module attributes {stable_mosaic.version = 11 : i64} {
  func.func @_conv_act_bn_kernel(%arg0: i32, %arg1: memref<2x4x80x128xbf16, #tpu.memory_space<vmem>>, %arg2: memref<4x80xf32, #tpu.memory_space<vmem>>, %arg3: memref<4x4x128xf32, #tpu.memory_space<vmem>>, %arg4: memref<4x4x128xf32, #tpu.memory_space<vmem>>) attributes {dimension_semantics = [#tpu.dimension_semantics<parallel>], iteration_bounds = array<i64: 1>, scalar_prefetch = 0 : i64, scratch_operands = 0 : i64, tpu.core_type = #tpu.core_type<tc>, window_params = [{transform_indices = @transform_0, window_bounds = array<i64: 2, 4, 80, 128>}, {pipeline_mode = #tpu.pipeline_mode<synchronous>, transform_indices = @transform_1, window_bounds = array<i64: 4, 80>}, {transform_indices = @transform_2, window_bounds = array<i64: 4, 4, 128>}, {transform_indices = @transform_3, window_bounds = array<i64: 4, 4, 128>}]} {
    %c0 = arith.constant 0 : index
    %c0_0 = arith.constant 0 : index
    %0 = vector.load %arg2[%c0, %c0_0] : memref<4x80xf32, #tpu.memory_space<vmem>>, vector<4x80xf32>
    %c0_1 = arith.constant 0 : index
    %c0_2 = arith.constant 0 : index
    %c0_3 = arith.constant 0 : index
    %1 = vector.load %arg3[%c0_1, %c0_2, %c0_3] : memref<4x4x128xf32, #tpu.memory_space<vmem>>, vector<1x4x128xf32>
    %2 = vector.shape_cast %1 : vector<1x4x128xf32> to vector<4x128xf32>
    %c0_4 = arith.constant 0 : index
    %c0_5 = arith.constant 0 : index
    %c0_6 = arith.constant 0 : index
    %c0_7 = arith.constant 0 : index
    %3 = vector.load %arg1[%c0_4, %c0_5, %c0_6, %c0_7] : memref<2x4x80x128xbf16, #tpu.memory_space<vmem>>, vector<1x1x80x128xbf16>
    %4 = vector.shape_cast %3 : vector<1x1x80x128xbf16> to vector<80x128xbf16>
    %5 = arith.extf %4 : vector<80x128xbf16> to vector<80x128xf32>
    %cst = arith.constant dense<0.000000e+00> : vector<4x128xf32>
    %6 = tpu.matmul %0, %5, %cst {dimension_numbers = #tpu.dot_dimension_numbers<[1], [0], [0], [1], [0, 0, 1, 1], [], []>} : vector<4x80xf32>, vector<80x128xf32>, vector<4x128xf32> -> vector<4x128xf32>
    %7 = arith.negf %6 : vector<4x128xf32>
    %8 = math.exp %7 : vector<4x128xf32>
    %cst_8 = arith.constant 1.000000e+00 : f32
    %9 = vector.broadcast %cst_8 : f32 to vector<4x128xf32>
    %10 = arith.addf %9, %8 : vector<4x128xf32>
    %11 = arith.divf %9, %10 : vector<4x128xf32>
    %12 = arith.mulf %6, %11 : vector<4x128xf32>
    %cst_9 = arith.constant dense<0.000000e+00> : vector<4xf32>
    %13 = vector.multi_reduction <add>, %12, %cst_9 [1] : vector<4x128xf32> to vector<4xf32>
    %14 = vector.shape_cast %13 : vector<4xf32> to vector<4x1xf32>
    %cst_10 = arith.constant 1.280000e+02 : f32
    %15 = vector.broadcast %cst_10 : f32 to vector<4x1xf32>
    %16 = arith.divf %14, %15 : vector<4x1xf32>
    %17 = vector.broadcast %16 : vector<4x1xf32> to vector<4x128xf32>
    %18 = arith.subf %12, %17 : vector<4x128xf32>
    %19 = arith.mulf %18, %18 : vector<4x128xf32>
    %cst_11 = arith.constant dense<0.000000e+00> : vector<4xf32>
    %20 = vector.multi_reduction <add>, %19, %cst_11 [1] : vector<4x128xf32> to vector<4xf32>
    %21 = vector.shape_cast %20 : vector<4xf32> to vector<4x1xf32>
    %cst_12 = arith.constant 1.280000e+02 : f32
    %22 = vector.broadcast %cst_12 : f32 to vector<4x1xf32>
    %23 = arith.divf %21, %22 : vector<4x1xf32>
    %24 = vector.broadcast %16 : vector<4x1xf32> to vector<4x128xf32>
    %25 = arith.subf %12, %24 : vector<4x128xf32>
    %cst_13 = arith.constant 9.99999974E-6 : f32
    %26 = vector.broadcast %cst_13 : f32 to vector<4x1xf32>
    %27 = arith.addf %23, %26 : vector<4x1xf32>
    %28 = math.rsqrt %27 : vector<4x1xf32>
    %29 = vector.broadcast %28 : vector<4x1xf32> to vector<4x128xf32>
    %30 = arith.mulf %25, %29 : vector<4x128xf32>
    %31 = arith.mulf %30, %2 : vector<4x128xf32>
    %c1 = arith.constant 1 : index
    %c0_14 = arith.constant 0 : index
    %c0_15 = arith.constant 0 : index
    %c0_16 = arith.constant 0 : index
    %32 = vector.load %arg1[%c1, %c0_14, %c0_15, %c0_16] : memref<2x4x80x128xbf16, #tpu.memory_space<vmem>>, vector<1x1x80x128xbf16>
    %33 = vector.shape_cast %32 : vector<1x1x80x128xbf16> to vector<80x128xbf16>
    %34 = arith.extf %33 : vector<80x128xbf16> to vector<80x128xf32>
    %cst_17 = arith.constant dense<0.000000e+00> : vector<4x128xf32>
    %35 = tpu.matmul %0, %34, %cst_17 {dimension_numbers = #tpu.dot_dimension_numbers<[1], [0], [0], [1], [0, 0, 1, 1], [], []>} : vector<4x80xf32>, vector<80x128xf32>, vector<4x128xf32> -> vector<4x128xf32>
    %36 = arith.negf %35 : vector<4x128xf32>
    %37 = math.exp %36 : vector<4x128xf32>
    %cst_18 = arith.constant 1.000000e+00 : f32
    %38 = vector.broadcast %cst_18 : f32 to vector<4x128xf32>
    %39 = arith.addf %38, %37 : vector<4x128xf32>
    %40 = arith.divf %38, %39 : vector<4x128xf32>
    %41 = arith.mulf %35, %40 : vector<4x128xf32>
    %cst_19 = arith.constant dense<0.000000e+00> : vector<4xf32>
    %42 = vector.multi_reduction <add>, %41, %cst_19 [1] : vector<4x128xf32> to vector<4xf32>
    %43 = vector.shape_cast %42 : vector<4xf32> to vector<4x1xf32>
    %cst_20 = arith.constant 1.280000e+02 : f32
    %44 = vector.broadcast %cst_20 : f32 to vector<4x1xf32>
    %45 = arith.divf %43, %44 : vector<4x1xf32>
    %46 = vector.broadcast %45 : vector<4x1xf32> to vector<4x128xf32>
    %47 = arith.subf %41, %46 : vector<4x128xf32>
    %48 = arith.mulf %47, %47 : vector<4x128xf32>
    %cst_21 = arith.constant dense<0.000000e+00> : vector<4xf32>
    %49 = vector.multi_reduction <add>, %48, %cst_21 [1] : vector<4x128xf32> to vector<4xf32>
    %50 = vector.shape_cast %49 : vector<4xf32> to vector<4x1xf32>
    %cst_22 = arith.constant 1.280000e+02 : f32
    %51 = vector.broadcast %cst_22 : f32 to vector<4x1xf32>
    %52 = arith.divf %50, %51 : vector<4x1xf32>
    %53 = vector.broadcast %45 : vector<4x1xf32> to vector<4x128xf32>
    %54 = arith.subf %41, %53 : vector<4x128xf32>
    %cst_23 = arith.constant 9.99999974E-6 : f32
    %55 = vector.broadcast %cst_23 : f32 to vector<4x1xf32>
    %56 = arith.addf %52, %55 : vector<4x1xf32>
    %57 = math.rsqrt %56 : vector<4x1xf32>
    %58 = vector.broadcast %57 : vector<4x1xf32> to vector<4x128xf32>
    %59 = arith.mulf %54, %58 : vector<4x128xf32>
    %60 = arith.mulf %59, %2 : vector<4x128xf32>
    %61 = arith.addf %31, %60 : vector<4x128xf32>
    %cst_24 = arith.constant 5.000000e-01 : f32
    %62 = vector.broadcast %cst_24 : f32 to vector<4x128xf32>
    %63 = arith.mulf %61, %62 : vector<4x128xf32>
    %c0_25 = arith.constant 0 : index
    %c0_26 = arith.constant 0 : index
    %c0_27 = arith.constant 0 : index
    %64 = vector.load %arg4[%c0_25, %c0_26, %c0_27] : memref<4x4x128xf32, #tpu.memory_space<vmem>>, vector<1x4x128xf32>
    %65 = vector.shape_cast %64 : vector<1x4x128xf32> to vector<4x128xf32>
    %66 = vector.shape_cast %63 : vector<4x128xf32> to vector<1x4x128xf32>
    tpu.vector_store %arg4[%c0_25, %c0_26, %c0_27], %66 {strides = array<i32>} : memref<4x4x128xf32, #tpu.memory_space<vmem>>, vector<1x4x128xf32>,
    %c1_28 = arith.constant 1 : index
    %c0_29 = arith.constant 0 : index
    %c0_30 = arith.constant 0 : index
    %67 = vector.load %arg3[%c1_28, %c0_29, %c0_30] : memref<4x4x128xf32, #tpu.memory_space<vmem>>, vector<1x4x128xf32>
    %68 = vector.shape_cast %67 : vector<1x4x128xf32> to vector<4x128xf32>
    %c0_31 = arith.constant 0 : index
    %c1_32 = arith.constant 1 : index
    %c0_33 = arith.constant 0 : index
    %c0_34 = arith.constant 0 : index
    %69 = vector.load %arg1[%c0_31, %c1_32, %c0_33, %c0_34] : memref<2x4x80x128xbf16, #tpu.memory_space<vmem>>, vector<1x1x80x128xbf16>
    %70 = vector.shape_cast %69 : vector<1x1x80x128xbf16> to vector<80x128xbf16>
    %71 = arith.extf %70 : vector<80x128xbf16> to vector<80x128xf32>
    %cst_35 = arith.constant dense<0.000000e+00> : vector<4x128xf32>
    %72 = tpu.matmul %0, %71, %cst_35 {dimension_numbers = #tpu.dot_dimension_numbers<[1], [0], [0], [1], [0, 0, 1, 1], [], []>} : vector<4x80xf32>, vector<80x128xf32>, vector<4x128xf32> -> vector<4x128xf32>
    %73 = arith.negf %72 : vector<4x128xf32>
    %74 = math.exp %73 : vector<4x128xf32>
    %cst_36 = arith.constant 1.000000e+00 : f32
    %75 = vector.broadcast %cst_36 : f32 to vector<4x128xf32>
    %76 = arith.addf %75, %74 : vector<4x128xf32>
    %77 = arith.divf %75, %76 : vector<4x128xf32>
    %78 = arith.mulf %72, %77 : vector<4x128xf32>
    %cst_37 = arith.constant dense<0.000000e+00> : vector<4xf32>
    %79 = vector.multi_reduction <add>, %78, %cst_37 [1] : vector<4x128xf32> to vector<4xf32>
    %80 = vector.shape_cast %79 : vector<4xf32> to vector<4x1xf32>
    %cst_38 = arith.constant 1.280000e+02 : f32
    %81 = vector.broadcast %cst_38 : f32 to vector<4x1xf32>
    %82 = arith.divf %80, %81 : vector<4x1xf32>
    %83 = vector.broadcast %82 : vector<4x1xf32> to vector<4x128xf32>
    %84 = arith.subf %78, %83 : vector<4x128xf32>
    %85 = arith.mulf %84, %84 : vector<4x128xf32>
    %cst_39 = arith.constant dense<0.000000e+00> : vector<4xf32>
    %86 = vector.multi_reduction <add>, %85, %cst_39 [1] : vector<4x128xf32> to vector<4xf32>
    %87 = vector.shape_cast %86 : vector<4xf32> to vector<4x1xf32>
    %cst_40 = arith.constant 1.280000e+02 : f32
    %88 = vector.broadcast %cst_40 : f32 to vector<4x1xf32>
    %89 = arith.divf %87, %88 : vector<4x1xf32>
    %90 = vector.broadcast %82 : vector<4x1xf32> to vector<4x128xf32>
    %91 = arith.subf %78, %90 : vector<4x128xf32>
    %cst_41 = arith.constant 9.99999974E-6 : f32
    %92 = vector.broadcast %cst_41 : f32 to vector<4x1xf32>
    %93 = arith.addf %89, %92 : vector<4x1xf32>
    %94 = math.rsqrt %93 : vector<4x1xf32>
    %95 = vector.broadcast %94 : vector<4x1xf32> to vector<4x128xf32>
    %96 = arith.mulf %91, %95 : vector<4x128xf32>
    %97 = arith.mulf %96, %68 : vector<4x128xf32>
    %c1_42 = arith.constant 1 : index
    %c1_43 = arith.constant 1 : index
    %c0_44 = arith.constant 0 : index
    %c0_45 = arith.constant 0 : index
    %98 = vector.load %arg1[%c1_42, %c1_43, %c0_44, %c0_45] : memref<2x4x80x128xbf16, #tpu.memory_space<vmem>>, vector<1x1x80x128xbf16>
    %99 = vector.shape_cast %98 : vector<1x1x80x128xbf16> to vector<80x128xbf16>
    %100 = arith.extf %99 : vector<80x128xbf16> to vector<80x128xf32>
    %cst_46 = arith.constant dense<0.000000e+00> : vector<4x128xf32>
    %101 = tpu.matmul %0, %100, %cst_46 {dimension_numbers = #tpu.dot_dimension_numbers<[1], [0], [0], [1], [0, 0, 1, 1], [], []>} : vector<4x80xf32>, vector<80x128xf32>, vector<4x128xf32> -> vector<4x128xf32>
    %102 = arith.negf %101 : vector<4x128xf32>
    %103 = math.exp %102 : vector<4x128xf32>
    %cst_47 = arith.constant 1.000000e+00 : f32
    %104 = vector.broadcast %cst_47 : f32 to vector<4x128xf32>
    %105 = arith.addf %104, %103 : vector<4x128xf32>
    %106 = arith.divf %104, %105 : vector<4x128xf32>
    %107 = arith.mulf %101, %106 : vector<4x128xf32>
    %cst_48 = arith.constant dense<0.000000e+00> : vector<4xf32>
    %108 = vector.multi_reduction <add>, %107, %cst_48 [1] : vector<4x128xf32> to vector<4xf32>
    %109 = vector.shape_cast %108 : vector<4xf32> to vector<4x1xf32>
    %cst_49 = arith.constant 1.280000e+02 : f32
    %110 = vector.broadcast %cst_49 : f32 to vector<4x1xf32>
    %111 = arith.divf %109, %110 : vector<4x1xf32>
    %112 = vector.broadcast %111 : vector<4x1xf32> to vector<4x128xf32>
    %113 = arith.subf %107, %112 : vector<4x128xf32>
    %114 = arith.mulf %113, %113 : vector<4x128xf32>
    %cst_50 = arith.constant dense<0.000000e+00> : vector<4xf32>
    %115 = vector.multi_reduction <add>, %114, %cst_50 [1] : vector<4x128xf32> to vector<4xf32>
    %116 = vector.shape_cast %115 : vector<4xf32> to vector<4x1xf32>
    %cst_51 = arith.constant 1.280000e+02 : f32
    %117 = vector.broadcast %cst_51 : f32 to vector<4x1xf32>
    %118 = arith.divf %116, %117 : vector<4x1xf32>
    %119 = vector.broadcast %111 : vector<4x1xf32> to vector<4x128xf32>
    %120 = arith.subf %107, %119 : vector<4x128xf32>
    %cst_52 = arith.constant 9.99999974E-6 : f32
    %121 = vector.broadcast %cst_52 : f32 to vector<4x1xf32>
    %122 = arith.addf %118, %121 : vector<4x1xf32>
    %123 = math.rsqrt %122 : vector<4x1xf32>
    %124 = vector.broadcast %123 : vector<4x1xf32> to vector<4x128xf32>
    %125 = arith.mulf %120, %124 : vector<4x128xf32>
    %126 = arith.mulf %125, %68 : vector<4x128xf32>
    %127 = arith.addf %97, %126 : vector<4x128xf32>
    %cst_53 = arith.constant 5.000000e-01 : f32
    %128 = vector.broadcast %cst_53 : f32 to vector<4x128xf32>
    %129 = arith.mulf %127, %128 : vector<4x128xf32>
    %c1_54 = arith.constant 1 : index
    %c0_55 = arith.constant 0 : index
    %c0_56 = arith.constant 0 : index
    %130 = vector.load %arg4[%c1_54, %c0_55, %c0_56] : memref<4x4x128xf32, #tpu.memory_space<vmem>>, vector<1x4x128xf32>
    %131 = vector.shape_cast %130 : vector<1x4x128xf32> to vector<4x128xf32>
    %132 = vector.shape_cast %129 : vector<4x128xf32> to vector<1x4x128xf32>
    tpu.vector_store %arg4[%c1_54, %c0_55, %c0_56], %132 {strides = array<i32>} : memref<4x4x128xf32, #tpu.memory_space<vmem>>, vector<1x4x128xf32>,
    %c2 = arith.constant 2 : index
    %c0_57 = arith.constant 0 : index
    %c0_58 = arith.constant 0 : index
    %133 = vector.load %arg3[%c2, %c0_57, %c0_58] : memref<4x4x128xf32, #tpu.memory_space<vmem>>, vector<1x4x128xf32>
    %134 = vector.shape_cast %133 : vector<1x4x128xf32> to vector<4x128xf32>
    %c0_59 = arith.constant 0 : index
    %c2_60 = arith.constant 2 : index
    %c0_61 = arith.constant 0 : index
    %c0_62 = arith.constant 0 : index
    %135 = vector.load %arg1[%c0_59, %c2_60, %c0_61, %c0_62] : memref<2x4x80x128xbf16, #tpu.memory_space<vmem>>, vector<1x1x80x128xbf16>
    %136 = vector.shape_cast %135 : vector<1x1x80x128xbf16> to vector<80x128xbf16>
    %137 = arith.extf %136 : vector<80x128xbf16> to vector<80x128xf32>
    %cst_63 = arith.constant dense<0.000000e+00> : vector<4x128xf32>
    %138 = tpu.matmul %0, %137, %cst_63 {dimension_numbers = #tpu.dot_dimension_numbers<[1], [0], [0], [1], [0, 0, 1, 1], [], []>} : vector<4x80xf32>, vector<80x128xf32>, vector<4x128xf32> -> vector<4x128xf32>
    %139 = arith.negf %138 : vector<4x128xf32>
    %140 = math.exp %139 : vector<4x128xf32>
    %cst_64 = arith.constant 1.000000e+00 : f32
    %141 = vector.broadcast %cst_64 : f32 to vector<4x128xf32>
    %142 = arith.addf %141, %140 : vector<4x128xf32>
    %143 = arith.divf %141, %142 : vector<4x128xf32>
    %144 = arith.mulf %138, %143 : vector<4x128xf32>
    %cst_65 = arith.constant dense<0.000000e+00> : vector<4xf32>
    %145 = vector.multi_reduction <add>, %144, %cst_65 [1] : vector<4x128xf32> to vector<4xf32>
    %146 = vector.shape_cast %145 : vector<4xf32> to vector<4x1xf32>
    %cst_66 = arith.constant 1.280000e+02 : f32
    %147 = vector.broadcast %cst_66 : f32 to vector<4x1xf32>
    %148 = arith.divf %146, %147 : vector<4x1xf32>
    %149 = vector.broadcast %148 : vector<4x1xf32> to vector<4x128xf32>
    %150 = arith.subf %144, %149 : vector<4x128xf32>
    %151 = arith.mulf %150, %150 : vector<4x128xf32>
    %cst_67 = arith.constant dense<0.000000e+00> : vector<4xf32>
    %152 = vector.multi_reduction <add>, %151, %cst_67 [1] : vector<4x128xf32> to vector<4xf32>
    %153 = vector.shape_cast %152 : vector<4xf32> to vector<4x1xf32>
    %cst_68 = arith.constant 1.280000e+02 : f32
    %154 = vector.broadcast %cst_68 : f32 to vector<4x1xf32>
    %155 = arith.divf %153, %154 : vector<4x1xf32>
    %156 = vector.broadcast %148 : vector<4x1xf32> to vector<4x128xf32>
    %157 = arith.subf %144, %156 : vector<4x128xf32>
    %cst_69 = arith.constant 9.99999974E-6 : f32
    %158 = vector.broadcast %cst_69 : f32 to vector<4x1xf32>
    %159 = arith.addf %155, %158 : vector<4x1xf32>
    %160 = math.rsqrt %159 : vector<4x1xf32>
    %161 = vector.broadcast %160 : vector<4x1xf32> to vector<4x128xf32>
    %162 = arith.mulf %157, %161 : vector<4x128xf32>
    %163 = arith.mulf %162, %134 : vector<4x128xf32>
    %c1_70 = arith.constant 1 : index
    %c2_71 = arith.constant 2 : index
    %c0_72 = arith.constant 0 : index
    %c0_73 = arith.constant 0 : index
    %164 = vector.load %arg1[%c1_70, %c2_71, %c0_72, %c0_73] : memref<2x4x80x128xbf16, #tpu.memory_space<vmem>>, vector<1x1x80x128xbf16>
    %165 = vector.shape_cast %164 : vector<1x1x80x128xbf16> to vector<80x128xbf16>
    %166 = arith.extf %165 : vector<80x128xbf16> to vector<80x128xf32>
    %cst_74 = arith.constant dense<0.000000e+00> : vector<4x128xf32>
    %167 = tpu.matmul %0, %166, %cst_74 {dimension_numbers = #tpu.dot_dimension_numbers<[1], [0], [0], [1], [0, 0, 1, 1], [], []>} : vector<4x80xf32>, vector<80x128xf32>, vector<4x128xf32> -> vector<4x128xf32>
    %168 = arith.negf %167 : vector<4x128xf32>
    %169 = math.exp %168 : vector<4x128xf32>
    %cst_75 = arith.constant 1.000000e+00 : f32
    %170 = vector.broadcast %cst_75 : f32 to vector<4x128xf32>
    %171 = arith.addf %170, %169 : vector<4x128xf32>
    %172 = arith.divf %170, %171 : vector<4x128xf32>
    %173 = arith.mulf %167, %172 : vector<4x128xf32>
    %cst_76 = arith.constant dense<0.000000e+00> : vector<4xf32>
    %174 = vector.multi_reduction <add>, %173, %cst_76 [1] : vector<4x128xf32> to vector<4xf32>
    %175 = vector.shape_cast %174 : vector<4xf32> to vector<4x1xf32>
    %cst_77 = arith.constant 1.280000e+02 : f32
    %176 = vector.broadcast %cst_77 : f32 to vector<4x1xf32>
    %177 = arith.divf %175, %176 : vector<4x1xf32>
    %178 = vector.broadcast %177 : vector<4x1xf32> to vector<4x128xf32>
    %179 = arith.subf %173, %178 : vector<4x128xf32>
    %180 = arith.mulf %179, %179 : vector<4x128xf32>
    %cst_78 = arith.constant dense<0.000000e+00> : vector<4xf32>
    %181 = vector.multi_reduction <add>, %180, %cst_78 [1] : vector<4x128xf32> to vector<4xf32>
    %182 = vector.shape_cast %181 : vector<4xf32> to vector<4x1xf32>
    %cst_79 = arith.constant 1.280000e+02 : f32
    %183 = vector.broadcast %cst_79 : f32 to vector<4x1xf32>
    %184 = arith.divf %182, %183 : vector<4x1xf32>
    %185 = vector.broadcast %177 : vector<4x1xf32> to vector<4x128xf32>
    %186 = arith.subf %173, %185 : vector<4x128xf32>
    %cst_80 = arith.constant 9.99999974E-6 : f32
    %187 = vector.broadcast %cst_80 : f32 to vector<4x1xf32>
    %188 = arith.addf %184, %187 : vector<4x1xf32>
    %189 = math.rsqrt %188 : vector<4x1xf32>
    %190 = vector.broadcast %189 : vector<4x1xf32> to vector<4x128xf32>
    %191 = arith.mulf %186, %190 : vector<4x128xf32>
    %192 = arith.mulf %191, %134 : vector<4x128xf32>
    %193 = arith.addf %163, %192 : vector<4x128xf32>
    %cst_81 = arith.constant 5.000000e-01 : f32
    %194 = vector.broadcast %cst_81 : f32 to vector<4x128xf32>
    %195 = arith.mulf %193, %194 : vector<4x128xf32>
    %c2_82 = arith.constant 2 : index
    %c0_83 = arith.constant 0 : index
    %c0_84 = arith.constant 0 : index
    %196 = vector.load %arg4[%c2_82, %c0_83, %c0_84] : memref<4x4x128xf32, #tpu.memory_space<vmem>>, vector<1x4x128xf32>
    %197 = vector.shape_cast %196 : vector<1x4x128xf32> to vector<4x128xf32>
    %198 = vector.shape_cast %195 : vector<4x128xf32> to vector<1x4x128xf32>
    tpu.vector_store %arg4[%c2_82, %c0_83, %c0_84], %198 {strides = array<i32>} : memref<4x4x128xf32, #tpu.memory_space<vmem>>, vector<1x4x128xf32>,
    %c3 = arith.constant 3 : index
    %c0_85 = arith.constant 0 : index
    %c0_86 = arith.constant 0 : index
    %199 = vector.load %arg3[%c3, %c0_85, %c0_86] : memref<4x4x128xf32, #tpu.memory_space<vmem>>, vector<1x4x128xf32>
    %200 = vector.shape_cast %199 : vector<1x4x128xf32> to vector<4x128xf32>
    %c0_87 = arith.constant 0 : index
    %c3_88 = arith.constant 3 : index
    %c0_89 = arith.constant 0 : index
    %c0_90 = arith.constant 0 : index
    %201 = vector.load %arg1[%c0_87, %c3_88, %c0_89, %c0_90] : memref<2x4x80x128xbf16, #tpu.memory_space<vmem>>, vector<1x1x80x128xbf16>
    %202 = vector.shape_cast %201 : vector<1x1x80x128xbf16> to vector<80x128xbf16>
    %203 = arith.extf %202 : vector<80x128xbf16> to vector<80x128xf32>
    %cst_91 = arith.constant dense<0.000000e+00> : vector<4x128xf32>
    %204 = tpu.matmul %0, %203, %cst_91 {dimension_numbers = #tpu.dot_dimension_numbers<[1], [0], [0], [1], [0, 0, 1, 1], [], []>} : vector<4x80xf32>, vector<80x128xf32>, vector<4x128xf32> -> vector<4x128xf32>
    %205 = arith.negf %204 : vector<4x128xf32>
    %206 = math.exp %205 : vector<4x128xf32>
    %cst_92 = arith.constant 1.000000e+00 : f32
    %207 = vector.broadcast %cst_92 : f32 to vector<4x128xf32>
    %208 = arith.addf %207, %206 : vector<4x128xf32>
    %209 = arith.divf %207, %208 : vector<4x128xf32>
    %210 = arith.mulf %204, %209 : vector<4x128xf32>
    %cst_93 = arith.constant dense<0.000000e+00> : vector<4xf32>
    %211 = vector.multi_reduction <add>, %210, %cst_93 [1] : vector<4x128xf32> to vector<4xf32>
    %212 = vector.shape_cast %211 : vector<4xf32> to vector<4x1xf32>
    %cst_94 = arith.constant 1.280000e+02 : f32
    %213 = vector.broadcast %cst_94 : f32 to vector<4x1xf32>
    %214 = arith.divf %212, %213 : vector<4x1xf32>
    %215 = vector.broadcast %214 : vector<4x1xf32> to vector<4x128xf32>
    %216 = arith.subf %210, %215 : vector<4x128xf32>
    %217 = arith.mulf %216, %216 : vector<4x128xf32>
    %cst_95 = arith.constant dense<0.000000e+00> : vector<4xf32>
    %218 = vector.multi_reduction <add>, %217, %cst_95 [1] : vector<4x128xf32> to vector<4xf32>
    %219 = vector.shape_cast %218 : vector<4xf32> to vector<4x1xf32>
    %cst_96 = arith.constant 1.280000e+02 : f32
    %220 = vector.broadcast %cst_96 : f32 to vector<4x1xf32>
    %221 = arith.divf %219, %220 : vector<4x1xf32>
    %222 = vector.broadcast %214 : vector<4x1xf32> to vector<4x128xf32>
    %223 = arith.subf %210, %222 : vector<4x128xf32>
    %cst_97 = arith.constant 9.99999974E-6 : f32
    %224 = vector.broadcast %cst_97 : f32 to vector<4x1xf32>
    %225 = arith.addf %221, %224 : vector<4x1xf32>
    %226 = math.rsqrt %225 : vector<4x1xf32>
    %227 = vector.broadcast %226 : vector<4x1xf32> to vector<4x128xf32>
    %228 = arith.mulf %223, %227 : vector<4x128xf32>
    %229 = arith.mulf %228, %200 : vector<4x128xf32>
    %c1_98 = arith.constant 1 : index
    %c3_99 = arith.constant 3 : index
    %c0_100 = arith.constant 0 : index
    %c0_101 = arith.constant 0 : index
    %230 = vector.load %arg1[%c1_98, %c3_99, %c0_100, %c0_101] : memref<2x4x80x128xbf16, #tpu.memory_space<vmem>>, vector<1x1x80x128xbf16>
    %231 = vector.shape_cast %230 : vector<1x1x80x128xbf16> to vector<80x128xbf16>
    %232 = arith.extf %231 : vector<80x128xbf16> to vector<80x128xf32>
    %cst_102 = arith.constant dense<0.000000e+00> : vector<4x128xf32>
    %233 = tpu.matmul %0, %232, %cst_102 {dimension_numbers = #tpu.dot_dimension_numbers<[1], [0], [0], [1], [0, 0, 1, 1], [], []>} : vector<4x80xf32>, vector<80x128xf32>, vector<4x128xf32> -> vector<4x128xf32>
    %234 = arith.negf %233 : vector<4x128xf32>
    %235 = math.exp %234 : vector<4x128xf32>
    %cst_103 = arith.constant 1.000000e+00 : f32
    %236 = vector.broadcast %cst_103 : f32 to vector<4x128xf32>
    %237 = arith.addf %236, %235 : vector<4x128xf32>
    %238 = arith.divf %236, %237 : vector<4x128xf32>
    %239 = arith.mulf %233, %238 : vector<4x128xf32>
    %cst_104 = arith.constant dense<0.000000e+00> : vector<4xf32>
    %240 = vector.multi_reduction <add>, %239, %cst_104 [1] : vector<4x128xf32> to vector<4xf32>
    %241 = vector.shape_cast %240 : vector<4xf32> to vector<4x1xf32>
    %cst_105 = arith.constant 1.280000e+02 : f32
    %242 = vector.broadcast %cst_105 : f32 to vector<4x1xf32>
    %243 = arith.divf %241, %242 : vector<4x1xf32>
    %244 = vector.broadcast %243 : vector<4x1xf32> to vector<4x128xf32>
    %245 = arith.subf %239, %244 : vector<4x128xf32>
    %246 = arith.mulf %245, %245 : vector<4x128xf32>
    %cst_106 = arith.constant dense<0.000000e+00> : vector<4xf32>
    %247 = vector.multi_reduction <add>, %246, %cst_106 [1] : vector<4x128xf32> to vector<4xf32>
    %248 = vector.shape_cast %247 : vector<4xf32> to vector<4x1xf32>
    %cst_107 = arith.constant 1.280000e+02 : f32
    %249 = vector.broadcast %cst_107 : f32 to vector<4x1xf32>
    %250 = arith.divf %248, %249 : vector<4x1xf32>
    %251 = vector.broadcast %243 : vector<4x1xf32> to vector<4x128xf32>
    %252 = arith.subf %239, %251 : vector<4x128xf32>
    %cst_108 = arith.constant 9.99999974E-6 : f32
    %253 = vector.broadcast %cst_108 : f32 to vector<4x1xf32>
    %254 = arith.addf %250, %253 : vector<4x1xf32>
    %255 = math.rsqrt %254 : vector<4x1xf32>
    %256 = vector.broadcast %255 : vector<4x1xf32> to vector<4x128xf32>
    %257 = arith.mulf %252, %256 : vector<4x128xf32>
    %258 = arith.mulf %257, %200 : vector<4x128xf32>
    %259 = arith.addf %229, %258 : vector<4x128xf32>
    %cst_109 = arith.constant 5.000000e-01 : f32
    %260 = vector.broadcast %cst_109 : f32 to vector<4x128xf32>
    %261 = arith.mulf %259, %260 : vector<4x128xf32>
    %c3_110 = arith.constant 3 : index
    %c0_111 = arith.constant 0 : index
    %c0_112 = arith.constant 0 : index
    %262 = vector.load %arg4[%c3_110, %c0_111, %c0_112] : memref<4x4x128xf32, #tpu.memory_space<vmem>>, vector<1x4x128xf32>
    %263 = vector.shape_cast %262 : vector<1x4x128xf32> to vector<4x128xf32>
    %264 = vector.shape_cast %261 : vector<4x128xf32> to vector<1x4x128xf32>
    tpu.vector_store %arg4[%c3_110, %c0_111, %c0_112], %264 {strides = array<i32>} : memref<4x4x128xf32, #tpu.memory_space<vmem>>, vector<1x4x128xf32>,
    return
  }
  func.func @transform_0(%arg0: i32) -> (i32, i32, i32, i32) {
    %c0_i32 = arith.constant 0 : i32
    %c0_i32_0 = arith.constant 0 : i32
    %c0_i32_1 = arith.constant 0 : i32
    %c0_i32_2 = arith.constant 0 : i32
    return %c0_i32, %arg0, %c0_i32_0, %c0_i32_1 : i32, i32, i32, i32
  }
  func.func @transform_1(%arg0: i32) -> (i32, i32) {
    %c0_i32 = arith.constant 0 : i32
    %c0_i32_0 = arith.constant 0 : i32
    %c0_i32_1 = arith.constant 0 : i32
    return %c0_i32, %c0_i32_0 : i32, i32
  }
  func.func @transform_2(%arg0: i32) -> (i32, i32, i32) {
    %c0_i32 = arith.constant 0 : i32
    %c0_i32_0 = arith.constant 0 : i32
    %c0_i32_1 = arith.constant 0 : i32
    return %arg0, %c0_i32, %c0_i32_0 : i32, i32, i32
  }
  func.func @transform_3(%arg0: i32) -> (i32, i32, i32) {
    %c0_i32 = arith.constant 0 : i32
    %c0_i32_0 = arith.constant 0 : i32
    %c0_i32_1 = arith.constant 0 : i32
    return %arg0, %c0_i32, %c0_i32_0 : i32, i32, i32
  }
}

</mosaic_0001>

<llo_original>
// kernel: _lambda_.9
$region0: #{_lambda_.9}
  #allocation0 [shape = 'u32[]', space=smem, size = 0x4, offset = 0x4, fixed_abs, tag = 'smem constant byte address 0x4 - core index']
  #allocation1 [shape = 'u32[144,128]{1,0:T(1,128)}', space=vmem, size = 0x12000, scoped, tag = 'internal scratch']
  %s0 = inlined_call_operand.hbm [shape: f32[2], index: 0, kind: input, shape index: {}]
  %s1 = inlined_call_operand.vmem [shape: f32[4,16,128], index: 1, kind: input, shape index: {}]
  %s2 = inlined_call_operand.vmem [shape: bf16[2,4,16,128], index: 2, kind: output, shape index: {}]
  %s3 = sld [smem:[#allocation0]]
  $region45: #{_lambda_.9} parent=0
    _
  %s5 = ssub.s32 1, %s3
  %s6 = scalar_select 0, %s5, %s3
  $region1: #{_lambda_.9} parent=0
    #allocation2 [shape = 'u8[512]{0}', space=smem, size = 0x200, scoped, tag = 'input window, operand 0, single buffered']
    #allocation3 [shape = 's32[2]{0}', space=sflag, size = 0x8, scoped, tag = 'scoped memory for _lambda_.9']
    %7 = vsyncpa [#allocation3], 0
    loop: start=0, step=1, limit=4
    $region2: #{_lambda_.9} parent=1 // loop_pre_header
      _
    $region3: #{_lambda_.9} parent=1 // loop_header
      %s9 = sphi 0, %s13
      %p10 = scmp.ge.s32.totalorder %s9, 4
      %s17 = sphi 0, %s17
      %s19 = sphi 0, %s17
      %s20 = sphi 0, %s19
      %s34 = sphi 0, %s20
      %s38 = sphi 0, %s38
      %s40 = sphi 0, %s38
      %s41 = sphi 0, %s40
      %s55 = sphi 0, %s41
      %s61 = sphi 0, %s63
      %s64 = sphi 0, %s61
      %s65 = sphi 0, %s64
      %s81 = sphi 0, %s65
    $region4: #{_lambda_.9} parent=1 // loop_header_branch
      %12 = sbr.rel (%p10) target = $region8
    $region5: #{_lambda_.9} parent=1 // loop_body
      %s14 = ssub.s32 %s9, 1
      %s15 = ssub.s32 %s9, 2
      %s16 = sadd.s32 %s9, 1
      %s18 = sadd.s32 %s17, 1
      %p21 = scmp.eq.s32.totalorder %s9, 1
      %p22 = scmp.ne.s32.totalorder %s17, %s19
      %p23 = scmp.eq.s32.totalorder %s9, 0
      %p24 = por %p22, %p23
      %p25 = scmp.ne.s32.totalorder %s17, %s19
      %p26 = scmp.eq.s32.totalorder %s14, 1
      %p27 = por %p25, %p26
      %p28 = scmp.ne.s32.totalorder %s19, %s20
      %p29 = scmp.eq.s32.totalorder %s14, 0
      %p30 = por %p28, %p29
      %p31 = scmp.ne.s32.totalorder %s19, %s20
      %p32 = scmp.eq.s32.totalorder %s15, 1
      %p33 = por %p31, %p32
      %p35 = scmp.ne.s32.totalorder %s20, %s34
      %p36 = scmp.eq.s32.totalorder %s15, 0
      %p37 = por %p35, %p36
      %s39 = sadd.s32 %s38, 1
      %p42 = scmp.eq.s32.totalorder %s9, 1
      %p43 = scmp.ne.s32.totalorder %s38, %s40
      %p44 = scmp.eq.s32.totalorder %s9, 0
      %p45 = por %p43, %p44
      %p46 = scmp.ne.s32.totalorder %s38, %s40
      %p47 = scmp.eq.s32.totalorder %s14, 1
      %p48 = por %p46, %p47
      %p49 = scmp.ne.s32.totalorder %s40, %s41
      %p50 = scmp.eq.s32.totalorder %s14, 0
      %p51 = por %p49, %p50
      %p52 = scmp.ne.s32.totalorder %s40, %s41
      %p53 = scmp.eq.s32.totalorder %s15, 1
      %p54 = por %p52, %p53
      %p56 = scmp.ne.s32.totalorder %s41, %s55
      %p57 = scmp.eq.s32.totalorder %s15, 0
      %p58 = por %p56, %p57
      %s59 = ssub.s32 %s9, %s16
      %p60 = scmp.eq.s32.totalorder %s59, 0
      %s62 = sadd.s32 %s61, 1
      %s63 = scalar_select %p60, %s61, %s62
      %p66 = pneg %p60
      %p67 = scmp.eq.s32.totalorder %s9, 1
      %p68 = por %p66, %p67
      %p69 = scmp.ne.s32.totalorder %s61, %s64
      %p70 = scmp.eq.s32.totalorder %s9, 0
      %p71 = por %p69, %p70
      %p72 = scmp.ne.s32.totalorder %s61, %s64
      %p73 = scmp.eq.s32.totalorder %s14, 1
      %p74 = por %p72, %p73
      %p75 = scmp.ne.s32.totalorder %s64, %s65
      %p76 = scmp.eq.s32.totalorder %s14, 0
      %p77 = por %p75, %p76
      %p78 = scmp.ne.s32.totalorder %s64, %s65
      %p79 = scmp.eq.s32.totalorder %s15, 1
      %p80 = por %p78, %p79
      %p82 = scmp.ne.s32.totalorder %s65, %s81
      %p83 = scmp.eq.s32.totalorder %s15, 0
      %p84 = por %p82, %p83
      %p85 = scmp.le.s32.totalorder 1, %s9
      %p86 = scmp.lt.s32.totalorder %s9, 3
      %p87 = pnand %p85, %p86
      %p88 = pneg %p87
      // Predicated region
      $region9: #{_lambda_.9} parent=5 // pred_check
        _
      $region10: #{_lambda_.9} parent=5 // pred_check_branch
        %90 = sbr.rel (%p87) target = $region12
      $region11: #{_lambda_.9} parent=5 // pred_region
        %s91 = ssub.s32 %s9, 1
        // Predicated region
        $region13: #{_lambda_.9} parent=11 // pred_check
          %p92 = pneg %p30
        $region14: #{_lambda_.9} parent=11 // pred_check_branch
          %94 = sbr.rel (%p92) target = $region16
        $region15: #{_lambda_.9} parent=11 // pred_region
          %s96 = ssub.s32 16, 16
          %97 = vsyncadd [#allocation3], %s96
          %100 = dma.hbm_to_smem %s0, 16, [#allocation2], [#allocation3]
        $region16: #{_lambda_.9} parent=11 // pred_fallthru
          _
        // Predicated region
        $region17: #{_lambda_.9} parent=11 // pred_check
          %p101 = pneg %p51
        $region18: #{_lambda_.9} parent=11 // pred_check_branch
          %103 = sbr.rel (%p101) target = $region20
        $region19: #{_lambda_.9} parent=11 // pred_region
          _
        $region20: #{_lambda_.9} parent=11 // pred_fallthru
          _
      $region12: #{_lambda_.9} parent=5 // pred_fallthru
        _
      %p104 = scmp.lt.s32.totalorder %s9, 2
      // Predicated region
      $region21: #{_lambda_.9} parent=5 // pred_check
        %p105 = pneg %p104
      $region22: #{_lambda_.9} parent=5 // pred_check_branch
        %107 = sbr.rel (%p105) target = $region24
      $region23: #{_lambda_.9} parent=5 // pred_region
        _
      $region24: #{_lambda_.9} parent=5 // pred_fallthru
        _
      %p108 = scmp.le.s32.totalorder 1, %s9
      %p109 = scmp.lt.s32.totalorder %s9, 3
      %p110 = pnand %p108, %p109
      %p111 = pneg %p110
      // Predicated region
      $region25: #{_lambda_.9} parent=5 // pred_check
        _
      $region26: #{_lambda_.9} parent=5 // pred_check_branch
        %113 = sbr.rel (%p110) target = $region28
      $region27: #{_lambda_.9} parent=5 // pred_region
        %s114 = ssub.s32 %s9, 1
        // Predicated region
        $region29: #{_lambda_.9} parent=27 // pred_check
          %p115 = pneg %p30
        $region30: #{_lambda_.9} parent=27 // pred_check_branch
          %117 = sbr.rel (%p115) target = $region32
        $region31: #{_lambda_.9} parent=27 // pred_region
          %118 = dma.done [#allocation3], 16
        $region32: #{_lambda_.9} parent=27 // pred_fallthru
          _
        %119 = sfence
        %p120 = pneg %p30
        %p121 = pneg %p27
        %p122 = pneg %p51
        %p123 = pneg %p48
        %p124 = pneg %p77
        %p125 = pneg %p74
        %p126 = scmp.lt.s32.totalorder %s14, 1
        %s127 = scalar_select %p126, %s14, 1
        %s128 = smul.addr %s127, 8
        %s129 = smul.addr %s128, 4
        %s130 = scalar_lea.vmem %s2, %s129
        %p131 = scmp.lt.s32.totalorder %s14, 1
        %s132 = scalar_select %p131, %s14, 1
        %s133 = smul.addr %s132, 8
        %s134 = smul.addr %s133, 4
        %s135 = scalar_lea.vmem %s2, %s134
        %s136 = sld [smem:[#allocation2]]
        %s137 = sld [smem:[#allocation2 + $0x1]]
        %p138 = scmp.eq.s32.totalorder %s14, 0
        %s139 = scalar_select %p138, 0, 3
        %s140 = smul.u32 %s139, 16
        %s141 = scalar_lea.vmem %s1, %s140
        %v142 = vld [vmem:[%s141] sm:$0xff]
        %v143 = vld [vmem:[%s141 + $0x8] sm:$0xff]
        %v144 = vstv %s137
        %vm145 = vcmp.gt.f32.partialorder 0.0, %v144
        %v146 = vsel %vm145, 1, 0
        %v147 = vcvt.s32.f32 %v146
        %v148 = vstv %s136
        %v149 = vmul.f32 %v148, 0.0
        %v150 = vadd.f32 %v149, %v142
        %v151 = vadd.f32 %v149, %v143
        %v152 = vmul.f32 %v147, %v144
        %v153 = vsub.f32 %v150, %v152
        %v154 = vsub.f32 %v151, %v152
        %vm155 = vcmp.gt.f32.partialorder %v153, %v144
        %vm156 = vcmp.gt.f32.partialorder %v154, %v144
        %v157 = vsel %vm155, 1, 0
        %v158 = vsel %vm156, 1, 0
        %v159 = vcvt.s32.f32 %v157
        %v160 = vcvt.s32.f32 %v158
        %v161 = vpack.c.bf16 %v160, %v159
        %v163 = vunpack.c.l.b16 %v161
        %v164 = vunpack.c.h.b16 %v161
        %v165 = vpack.c.b16 %v163, %v163
        %v166 = vpack.c.b16 %v164, %v164
        %s169 = smul.u32 %s139, 2
        %s170 = smul.addr %s169, 4
        %s171 = scalar_lea.vmem %s135, %s170
        %172 = vst [vmem:[%s171] sm:$0xf] %v165
        %173 = vst [vmem:[%s171 + $0x4] sm:$0xf] %v166
        %s174 = scalar_select %p138, 1, 2
        %s175 = smul.u32 %s174, 16
        %s176 = scalar_lea.vmem %s1, %s175
        %v177 = vld [vmem:[%s176] sm:$0xff]
        %v178 = vld [vmem:[%s176 + $0x8] sm:$0xff]
        %v179 = vmul.f32 %v148, %v153
        %v180 = vmul.f32 %v148, %v154
        %v181 = vadd.f32 %v179, %v177
        %v182 = vadd.f32 %v180, %v178
        %v183 = vmul.f32 %v159, %v144
        %v184 = vmul.f32 %v160, %v144
        %v185 = vsub.f32 %v181, %v183
        %v186 = vsub.f32 %v182, %v184
        %vm187 = vcmp.gt.f32.partialorder %v185, %v144
        %vm188 = vcmp.gt.f32.partialorder %v186, %v144
        %v189 = vsel %vm187, 1, 0
        %v190 = vsel %vm188, 1, 0
        %v191 = vcvt.s32.f32 %v189
        %v192 = vcvt.s32.f32 %v190
        %v193 = vpack.c.bf16 %v192, %v191
        %v195 = vunpack.c.l.b16 %v193
        %v196 = vunpack.c.h.b16 %v193
        %v197 = vpack.c.b16 %v195, %v195
        %v198 = vpack.c.b16 %v196, %v196
        %s201 = smul.u32 %s174, 2
        %s202 = smul.addr %s201, 4
        %s203 = scalar_lea.vmem %s135, %s202
        %204 = vst [vmem:[%s203] sm:$0xf] %v197
        %205 = vst [vmem:[%s203 + $0x4] sm:$0xf] %v198
        %s206 = scalar_select %p138, 2, 1
        %s207 = smul.u32 %s206, 16
        %s208 = scalar_lea.vmem %s1, %s207
        %v209 = vld [vmem:[%s208] sm:$0xff]
        %v210 = vld [vmem:[%s208 + $0x8] sm:$0xff]
        %v211 = vmul.f32 %v148, %v185
        %v212 = vmul.f32 %v148, %v186
        %v213 = vadd.f32 %v211, %v209
        %v214 = vadd.f32 %v212, %v210
        %v215 = vmul.f32 %v191, %v144
        %v216 = vmul.f32 %v192, %v144
        %v217 = vsub.f32 %v213, %v215
        %v218 = vsub.f32 %v214, %v216
        %vm219 = vcmp.gt.f32.partialorder %v217, %v144
        %vm220 = vcmp.gt.f32.partialorder %v218, %v144
        %v221 = vsel %vm219, 1, 0
        %v222 = vsel %vm220, 1, 0
        %v223 = vcvt.s32.f32 %v221
        %v224 = vcvt.s32.f32 %v222
        %v225 = vpack.c.bf16 %v224, %v223
        %v227 = vunpack.c.l.b16 %v225
        %v228 = vunpack.c.h.b16 %v225
        %v229 = vpack.c.b16 %v227, %v227
        %v230 = vpack.c.b16 %v228, %v228
        %s233 = smul.u32 %s206, 2
        %s234 = smul.addr %s233, 4
        %s235 = scalar_lea.vmem %s135, %s234
        %236 = vst [vmem:[%s235] sm:$0xf] %v229
        %237 = vst [vmem:[%s235 + $0x4] sm:$0xf] %v230
        %s238 = scalar_select %p138, 3, 0
        %s239 = smul.u32 %s238, 16
        %s240 = scalar_lea.vmem %s1, %s239
        %v241 = vld [vmem:[%s240] sm:$0xff]
        %v242 = vld [vmem:[%s240 + $0x8] sm:$0xff]
        %v243 = vmul.f32 %v148, %v217
        %v244 = vmul.f32 %v148, %v218
        %v245 = vadd.f32 %v243, %v241
        %v246 = vadd.f32 %v244, %v242
        %v247 = vmul.f32 %v223, %v144
        %v248 = vmul.f32 %v224, %v144
        %v249 = vsub.f32 %v245, %v247
        %v250 = vsub.f32 %v246, %v248
        %vm251 = vcmp.gt.f32.partialorder %v249, %v144
        %vm252 = vcmp.gt.f32.partialorder %v250, %v144
        %v253 = vsel %vm251, 1, 0
        %v254 = vsel %vm252, 1, 0
        %v255 = vcvt.s32.f32 %v253
        %v256 = vcvt.s32.f32 %v254
        %v257 = vpack.c.bf16 %v256, %v255
        %v259 = vunpack.c.l.b16 %v257
        %v260 = vunpack.c.h.b16 %v257
        %v261 = vpack.c.b16 %v259, %v259
        %v262 = vpack.c.b16 %v260, %v260
        %s265 = smul.u32 %s238, 2
        %s266 = smul.addr %s265, 4
        %s267 = scalar_lea.vmem %s135, %s266
        %268 = vst [vmem:[%s267] sm:$0xf] %v261
        %269 = vst [vmem:[%s267 + $0x4] sm:$0xf] %v262
        %p270 = scmp.lt.s32.totalorder %s14, 1
        %s271 = scalar_select %p270, %s14, 1
        %s272 = smul.addr %s271, 8
        %s273 = smul.addr %s272, 4
        %s274 = scalar_lea.vmem %s2, %s273
        // Predicated region
        $region33: #{_lambda_.9} parent=27 // pred_check
          %p275 = pneg %p74
        $region34: #{_lambda_.9} parent=27 // pred_check_branch
          %277 = sbr.rel (%p275) target = $region36
        $region35: #{_lambda_.9} parent=27 // pred_region
          _
        $region36: #{_lambda_.9} parent=27 // pred_fallthru
          _
      $region28: #{_lambda_.9} parent=5 // pred_fallthru
        _
      %p278 = scmp.le.s32.totalorder 2, %s9
      // Predicated region
      $region37: #{_lambda_.9} parent=5 // pred_check
        %p279 = pneg %p278
      $region38: #{_lambda_.9} parent=5 // pred_check_branch
        %281 = sbr.rel (%p279) target = $region40
      $region39: #{_lambda_.9} parent=5 // pred_region
        %s282 = ssub.s32 %s9, 2
        // Predicated region
        $region41: #{_lambda_.9} parent=39 // pred_check
          %p283 = pneg %p80
        $region42: #{_lambda_.9} parent=39 // pred_check_branch
          %285 = sbr.rel (%p283) target = $region44
        $region43: #{_lambda_.9} parent=39 // pred_region
          %p286 = scmp.lt.s32.totalorder %s15, 1
          %s287 = scalar_select %p286, %s15, 1
          %s288 = smul.addr %s287, 8
          %s289 = smul.addr %s288, 4
          %s290 = scalar_lea.vmem %s2, %s289
        $region44: #{_lambda_.9} parent=39 // pred_fallthru
          _
      $region40: #{_lambda_.9} parent=5 // pred_fallthru
        _
    $region6: #{_lambda_.9} parent=1 // loop_footer
      %s13 = sadd.s32 1, %s9
    $region7: #{_lambda_.9} parent=1 // loop_footer_branch
      %8 = sbr.rel target = $region3
    $region8: #{_lambda_.9} parent=1 // loop_exit
      _
    %291 = vsyncpa [#allocation3], 1
    %s292 = scalar_lea.sflag [#allocation3], 1
    %293 = vsyncpa %s292, 1

// kernel: _lambda_.11
$region0: #{_lambda_.11}
  #allocation0 [shape = 'u32[]', space=smem, size = 0x4, offset = 0x4, fixed_abs, tag = 'smem constant byte address 0x4 - core index']
  #allocation1 [shape = 'u32[144,128]{1,0:T(1,128)}', space=vmem, size = 0x12000, scoped, tag = 'internal scratch']
  %s0 = inlined_call_operand.vmem [shape: f32[2], index: 0, kind: input, shape index: {}]
  %s1 = inlined_call_operand.vmem [shape: f32[4,4,128], index: 1, kind: input, shape index: {}]
  %s2 = inlined_call_operand.vmem [shape: bf16[2,4,4,128], index: 2, kind: output, shape index: {}]
  %s3 = sld [smem:[#allocation0]]
  $region45: #{_lambda_.11} parent=0
    _
  %s5 = ssub.s32 1, %s3
  %s6 = scalar_select 0, %s5, %s3
  $region1: #{_lambda_.11} parent=0
    #allocation2 [shape = 'u8[512]{0}', space=smem, size = 0x200, scoped, tag = 'input window, operand 0, single buffered']
    #allocation3 [shape = 's32[2]{0}', space=sflag, size = 0x8, scoped, tag = 'scoped memory for _lambda_.11']
    %7 = vsyncpa [#allocation3], 0
    loop: start=0, step=1, limit=4
    $region2: #{_lambda_.11} parent=1 // loop_pre_header
      _
    $region3: #{_lambda_.11} parent=1 // loop_header
      %s9 = sphi 0, %s13
      %p10 = scmp.ge.s32.totalorder %s9, 4
      %s17 = sphi 0, %s17
      %s19 = sphi 0, %s17
      %s20 = sphi 0, %s19
      %s34 = sphi 0, %s20
      %s38 = sphi 0, %s38
      %s40 = sphi 0, %s38
      %s41 = sphi 0, %s40
      %s55 = sphi 0, %s41
      %s61 = sphi 0, %s63
      %s64 = sphi 0, %s61
      %s65 = sphi 0, %s64
      %s81 = sphi 0, %s65
    $region4: #{_lambda_.11} parent=1 // loop_header_branch
      %12 = sbr.rel (%p10) target = $region8
    $region5: #{_lambda_.11} parent=1 // loop_body
      %s14 = ssub.s32 %s9, 1
      %s15 = ssub.s32 %s9, 2
      %s16 = sadd.s32 %s9, 1
      %s18 = sadd.s32 %s17, 1
      %p21 = scmp.eq.s32.totalorder %s9, 1
      %p22 = scmp.ne.s32.totalorder %s17, %s19
      %p23 = scmp.eq.s32.totalorder %s9, 0
      %p24 = por %p22, %p23
      %p25 = scmp.ne.s32.totalorder %s17, %s19
      %p26 = scmp.eq.s32.totalorder %s14, 1
      %p27 = por %p25, %p26
      %p28 = scmp.ne.s32.totalorder %s19, %s20
      %p29 = scmp.eq.s32.totalorder %s14, 0
      %p30 = por %p28, %p29
      %p31 = scmp.ne.s32.totalorder %s19, %s20
      %p32 = scmp.eq.s32.totalorder %s15, 1
      %p33 = por %p31, %p32
      %p35 = scmp.ne.s32.totalorder %s20, %s34
      %p36 = scmp.eq.s32.totalorder %s15, 0
      %p37 = por %p35, %p36
      %s39 = sadd.s32 %s38, 1
      %p42 = scmp.eq.s32.totalorder %s9, 1
      %p43 = scmp.ne.s32.totalorder %s38, %s40
      %p44 = scmp.eq.s32.totalorder %s9, 0
      %p45 = por %p43, %p44
      %p46 = scmp.ne.s32.totalorder %s38, %s40
      %p47 = scmp.eq.s32.totalorder %s14, 1
      %p48 = por %p46, %p47
      %p49 = scmp.ne.s32.totalorder %s40, %s41
      %p50 = scmp.eq.s32.totalorder %s14, 0
      %p51 = por %p49, %p50
      %p52 = scmp.ne.s32.totalorder %s40, %s41
      %p53 = scmp.eq.s32.totalorder %s15, 1
      %p54 = por %p52, %p53
      %p56 = scmp.ne.s32.totalorder %s41, %s55
      %p57 = scmp.eq.s32.totalorder %s15, 0
      %p58 = por %p56, %p57
      %s59 = ssub.s32 %s9, %s16
      %p60 = scmp.eq.s32.totalorder %s59, 0
      %s62 = sadd.s32 %s61, 1
      %s63 = scalar_select %p60, %s61, %s62
      %p66 = pneg %p60
      %p67 = scmp.eq.s32.totalorder %s9, 1
      %p68 = por %p66, %p67
      %p69 = scmp.ne.s32.totalorder %s61, %s64
      %p70 = scmp.eq.s32.totalorder %s9, 0
      %p71 = por %p69, %p70
      %p72 = scmp.ne.s32.totalorder %s61, %s64
      %p73 = scmp.eq.s32.totalorder %s14, 1
      %p74 = por %p72, %p73
      %p75 = scmp.ne.s32.totalorder %s64, %s65
      %p76 = scmp.eq.s32.totalorder %s14, 0
      %p77 = por %p75, %p76
      %p78 = scmp.ne.s32.totalorder %s64, %s65
      %p79 = scmp.eq.s32.totalorder %s15, 1
      %p80 = por %p78, %p79
      %p82 = scmp.ne.s32.totalorder %s65, %s81
      %p83 = scmp.eq.s32.totalorder %s15, 0
      %p84 = por %p82, %p83
      %p85 = scmp.le.s32.totalorder 1, %s9
      %p86 = scmp.lt.s32.totalorder %s9, 3
      %p87 = pnand %p85, %p86
      %p88 = pneg %p87
      // Predicated region
      $region9: #{_lambda_.11} parent=5 // pred_check
        _
      $region10: #{_lambda_.11} parent=5 // pred_check_branch
        %90 = sbr.rel (%p87) target = $region12
      $region11: #{_lambda_.11} parent=5 // pred_region
        %s91 = ssub.s32 %s9, 1
        // Predicated region
        $region13: #{_lambda_.11} parent=11 // pred_check
          %p92 = pneg %p30
        $region14: #{_lambda_.11} parent=11 // pred_check_branch
          %94 = sbr.rel (%p92) target = $region16
        $region15: #{_lambda_.11} parent=11 // pred_region
          %s96 = ssub.s32 16, 16
          %97 = vsyncadd [#allocation3], %s96
          %s99 = sshll.u32 %s0, 4
          %s100 = int_to_ptr.vmem [resolvable:$true] %s99
          %102 = dma.vmem_to_smem %s100, 16, [#allocation2], [#allocation3]
        $region16: #{_lambda_.11} parent=11 // pred_fallthru
          _
        // Predicated region
        $region17: #{_lambda_.11} parent=11 // pred_check
          %p103 = pneg %p51
        $region18: #{_lambda_.11} parent=11 // pred_check_branch
          %105 = sbr.rel (%p103) target = $region20
        $region19: #{_lambda_.11} parent=11 // pred_region
          _
        $region20: #{_lambda_.11} parent=11 // pred_fallthru
          _
      $region12: #{_lambda_.11} parent=5 // pred_fallthru
        _
      %p106 = scmp.lt.s32.totalorder %s9, 2
      // Predicated region
      $region21: #{_lambda_.11} parent=5 // pred_check
        %p107 = pneg %p106
      $region22: #{_lambda_.11} parent=5 // pred_check_branch
        %109 = sbr.rel (%p107) target = $region24
      $region23: #{_lambda_.11} parent=5 // pred_region
        _
      $region24: #{_lambda_.11} parent=5 // pred_fallthru
        _
      %p110 = scmp.le.s32.totalorder 1, %s9
      %p111 = scmp.lt.s32.totalorder %s9, 3
      %p112 = pnand %p110, %p111
      %p113 = pneg %p112
      // Predicated region
      $region25: #{_lambda_.11} parent=5 // pred_check
        _
      $region26: #{_lambda_.11} parent=5 // pred_check_branch
        %115 = sbr.rel (%p112) target = $region28
      $region27: #{_lambda_.11} parent=5 // pred_region
        %s116 = ssub.s32 %s9, 1
        // Predicated region
        $region29: #{_lambda_.11} parent=27 // pred_check
          %p117 = pneg %p30
        $region30: #{_lambda_.11} parent=27 // pred_check_branch
          %119 = sbr.rel (%p117) target = $region32
        $region31: #{_lambda_.11} parent=27 // pred_region
          %120 = dma.done [#allocation3], 16
        $region32: #{_lambda_.11} parent=27 // pred_fallthru
          _
        %121 = sfence
        %p122 = pneg %p30
        %p123 = pneg %p27
        %p124 = pneg %p51
        %p125 = pneg %p48
        %p126 = pneg %p77
        %p127 = pneg %p74
        %p128 = scmp.lt.s32.totalorder %s14, 1
        %s129 = scalar_select %p128, %s14, 1
        %s130 = smul.addr %s129, 4
        %s131 = smul.addr %s130, 2
        %s132 = scalar_lea.vmem %s2, %s131
        %p133 = scmp.lt.s32.totalorder %s14, 1
        %s134 = scalar_select %p133, %s14, 1
        %s135 = smul.addr %s134, 4
        %s136 = smul.addr %s135, 2
        %s137 = scalar_lea.vmem %s2, %s136
        %s138 = sld [smem:[#allocation2]]
        %s139 = sld [smem:[#allocation2 + $0x1]]
        %p140 = scmp.eq.s32.totalorder %s14, 0
        %s141 = scalar_select %p140, 0, 3
        %s142 = smul.u32 %s141, 4
        %s143 = scalar_lea.vmem %s1, %s142
        %v144 = vld [vmem:[%s143] sm:$0xf]
        %v145 = vstv %s139
        %vm146 = vcmp.gt.f32.partialorder 0.0, %v145
        %v147 = vsel %vm146, 1, 0
        %v148 = vcvt.s32.f32 %v147
        %v149 = vstv %s138
        %v150 = vmul.f32 %v149, 0.0
        %v151 = vadd.f32 %v150, %v144
        %v152 = vmul.f32 %v148, %v145
        %v153 = vsub.f32 %v151, %v152
        %vm154 = vcmp.gt.f32.partialorder %v153, %v145
        %v155 = vsel %vm154, 1, 0
        %v156 = vcvt.s32.f32 %v155
        %v157 = vpack.c.bf16 %v156, %v156
        %s158 = smul.addr %s141, 2
        %s159 = scalar_lea.vmem %s137, %s158
        %160 = vst [vmem:[%s159] sm:$0x3] %v157
        %s161 = scalar_select %p140, 1, 2
        %s162 = smul.u32 %s161, 4
        %s163 = scalar_lea.vmem %s1, %s162
        %v164 = vld [vmem:[%s163] sm:$0xf]
        %v165 = vmul.f32 %v149, %v153
        %v166 = vadd.f32 %v165, %v164
        %v167 = vmul.f32 %v156, %v145
        %v168 = vsub.f32 %v166, %v167
        %vm169 = vcmp.gt.f32.partialorder %v168, %v145
        %v170 = vsel %vm169, 1, 0
        %v171 = vcvt.s32.f32 %v170
        %v172 = vpack.c.bf16 %v171, %v171
        %s173 = smul.addr %s161, 2
        %s174 = scalar_lea.vmem %s137, %s173
        %175 = vst [vmem:[%s174] sm:$0x3] %v172
        %s176 = scalar_select %p140, 2, 1
        %s177 = smul.u32 %s176, 4
        %s178 = scalar_lea.vmem %s1, %s177
        %v179 = vld [vmem:[%s178] sm:$0xf]
        %v180 = vmul.f32 %v149, %v168
        %v181 = vadd.f32 %v180, %v179
        %v182 = vmul.f32 %v171, %v145
        %v183 = vsub.f32 %v181, %v182
        %vm184 = vcmp.gt.f32.partialorder %v183, %v145
        %v185 = vsel %vm184, 1, 0
        %v186 = vcvt.s32.f32 %v185
        %v187 = vpack.c.bf16 %v186, %v186
        %s188 = smul.addr %s176, 2
        %s189 = scalar_lea.vmem %s137, %s188
        %190 = vst [vmem:[%s189] sm:$0x3] %v187
        %s191 = scalar_select %p140, 3, 0
        %s192 = smul.u32 %s191, 4
        %s193 = scalar_lea.vmem %s1, %s192
        %v194 = vld [vmem:[%s193] sm:$0xf]
        %v195 = vmul.f32 %v149, %v183
        %v196 = vadd.f32 %v195, %v194
        %v197 = vmul.f32 %v186, %v145
        %v198 = vsub.f32 %v196, %v197
        %vm199 = vcmp.gt.f32.partialorder %v198, %v145
        %v200 = vsel %vm199, 1, 0
        %v201 = vcvt.s32.f32 %v200
        %v202 = vpack.c.bf16 %v201, %v201
        %s203 = smul.addr %s191, 2
        %s204 = scalar_lea.vmem %s137, %s203
        %205 = vst [vmem:[%s204] sm:$0x3] %v202
        %p206 = scmp.lt.s32.totalorder %s14, 1
        %s207 = scalar_select %p206, %s14, 1
        %s208 = smul.addr %s207, 4
        %s209 = smul.addr %s208, 2
        %s210 = scalar_lea.vmem %s2, %s209
        // Predicated region
        $region33: #{_lambda_.11} parent=27 // pred_check
          %p211 = pneg %p74
        $region34: #{_lambda_.11} parent=27 // pred_check_branch
          %213 = sbr.rel (%p211) target = $region36
        $region35: #{_lambda_.11} parent=27 // pred_region
          _
        $region36: #{_lambda_.11} parent=27 // pred_fallthru
          _
      $region28: #{_lambda_.11} parent=5 // pred_fallthru
        _
      %p214 = scmp.le.s32.totalorder 2, %s9
      // Predicated region
      $region37: #{_lambda_.11} parent=5 // pred_check
        %p215 = pneg %p214
      $region38: #{_lambda_.11} parent=5 // pred_check_branch
        %217 = sbr.rel (%p215) target = $region40
      $region39: #{_lambda_.11} parent=5 // pred_region
        %s218 = ssub.s32 %s9, 2
        // Predicated region
        $region41: #{_lambda_.11} parent=39 // pred_check
          %p219 = pneg %p80
        $region42: #{_lambda_.11} parent=39 // pred_check_branch
          %221 = sbr.rel (%p219) target = $region44
        $region43: #{_lambda_.11} parent=39 // pred_region
          %p222 = scmp.lt.s32.totalorder %s15, 1
          %s223 = scalar_select %p222, %s15, 1
          %s224 = smul.addr %s223, 4
          %s225 = smul.addr %s224, 2
          %s226 = scalar_lea.vmem %s2, %s225
        $region44: #{_lambda_.11} parent=39 // pred_fallthru
          _
      $region40: #{_lambda_.11} parent=5 // pred_fallthru
        _
    $region6: #{_lambda_.11} parent=1 // loop_footer
      %s13 = sadd.s32 1, %s9
    $region7: #{_lambda_.11} parent=1 // loop_footer_branch
      %8 = sbr.rel target = $region3
    $region8: #{_lambda_.11} parent=1 // loop_exit
      _
    %227 = vsyncpa [#allocation3], 1
    %s228 = scalar_lea.sflag [#allocation3], 1
    %229 = vsyncpa %s228, 1

// kernel: _lambda_.10
$region0: #{_lambda_.10}
  #allocation0 [shape = 'u32[]', space=smem, size = 0x4, offset = 0x4, fixed_abs, tag = 'smem constant byte address 0x4 - core index']
  #allocation1 [shape = 'u32[144,128]{1,0:T(1,128)}', space=vmem, size = 0x12000, scoped, tag = 'internal scratch']
  %s0 = inlined_call_operand.vmem [shape: bf16[2,4,48,128], index: 0, kind: input, shape index: {}]
  %s1 = inlined_call_operand.vmem [shape: f32[4,48], index: 1, kind: input, shape index: {}]
  %s2 = inlined_call_operand.vmem [shape: f32[4,4,128], index: 2, kind: input, shape index: {}]
  %s3 = inlined_call_operand.vmem [shape: f32[4,4,128], index: 3, kind: output, shape index: {}]
  %s4 = sld [smem:[#allocation0]]
  $region22: #{_lambda_.10} parent=0
    _
  %s6 = ssub.s32 1, %s4
  %s7 = scalar_select 0, %s6, %s4
  // Predicated region
  $region2: #{_lambda_.10} parent=0 // pred_check
    _
  $region3: #{_lambda_.10} parent=0 // pred_check_branch
    %9 = sbr.rel (0) target = $region5
  $region4: #{_lambda_.10} parent=0 // pred_region
    _
  $region5: #{_lambda_.10} parent=0 // pred_fallthru
    _
  // Predicated region
  $region6: #{_lambda_.10} parent=0 // pred_check
    _
  $region7: #{_lambda_.10} parent=0 // pred_check_branch
    %11 = sbr.rel (0) target = $region9
  $region8: #{_lambda_.10} parent=0 // pred_region
    _
  $region9: #{_lambda_.10} parent=0 // pred_fallthru
    _
  // Predicated region
  $region10: #{_lambda_.10} parent=0 // pred_check
    _
  $region11: #{_lambda_.10} parent=0 // pred_check_branch
    %13 = sbr.rel (0) target = $region13
  $region12: #{_lambda_.10} parent=0 // pred_region
    _
  $region13: #{_lambda_.10} parent=0 // pred_fallthru
    _
  %v14 = vld [vmem:[%s1] sm:$0xf]
  %v15 = vld [vmem:[%s2] sm:$0xf]
  %v16 = vld [vmem:[%s0] sm:$0xf]
  %v17 = vld [vmem:[%s0 + $0x4] sm:$0xf]
  %v18 = vld [vmem:[%s0 + $0x8] sm:$0xf]
  %v19 = vld [vmem:[%s0 + $0xc] sm:$0xf]
  %v20 = vld [vmem:[%s0 + $0x10] sm:$0xf]
  %v21 = vld [vmem:[%s0 + $0x14] sm:$0xf]
  %v22 = vunpack.c.l.bf16 %v16
  %v23 = vunpack.c.l.bf16 %v17
  %v24 = vunpack.c.l.bf16 %v18
  %v25 = vunpack.c.l.bf16 %v19
  %v26 = vunpack.c.l.bf16 %v20
  %v27 = vunpack.c.l.bf16 %v21
  %vm28 = vcmask 392192
  %v30 = vsel %vm28, %v14, 0
  %32 = vmatprep.subr.mxu0 0.0
  %33 = vmatpush1.msra.mxu0 0.0
  %34 = vmatprep.subr.mxu0 0.0
  %35 = vmatpush1.msra.mxu0 0.0
  %36 = vmatprep.subr.mxu0 0.0
  %37 = vmatpush1.msra.mxu0 0.0
  %38 = vmatprep.subr.mxu0 0.0
  %39 = vmatpush1.msra.mxu0 0.0
  %40 = vmatprep.subr.mxu0 0.0
  %41 = vmatpush1.msra.mxu0 0.0
  %42 = vmatprep.subr.mxu0 0.0
  %43 = vmatpush1.msra.mxu0 0.0
  %44 = vmatprep.subr.mxu0 0.0
  %45 = vmatpush1.msra.mxu0 0.0
  %46 = vmatprep.subr.mxu0 0.0
  %47 = vmatpush1.msra.mxu0 0.0
  %48 = vmatprep.subr.mxu0 0.0
  %49 = vmatpush1.msra.mxu0 0.0
  %50 = vmatprep.subr.mxu0 0.0
  %51 = vmatpush1.msra.mxu0 0.0
  %52 = vmatprep.subr.mxu0 0.0
  %53 = vmatpush1.msra.mxu0 %v27
  %54 = vmatprep.subr.mxu0 0.0
  %55 = vmatpush1.msra.mxu0 %v26
  %56 = vmatprep.subr.mxu0 0.0
  %57 = vmatpush1.msra.mxu0 %v25
  %58 = vmatprep.subr.mxu0 0.0
  %59 = vmatpush1.msra.mxu0 %v24
  %60 = vmatprep.subr.mxu0 0.0
  %61 = vmatpush1.msra.mxu0 %v23
  %62 = vmatprep.subr.mxu0 0.0
  %63 = vmatpush1.msra.mxu0 %v22
  %64 = vmatprep.subr.mxu0 0.0
  %65 = vmatpush2.msra.mxu0 0.0
  %66 = vmatprep.subr.mxu0 0.0
  %67 = vmatpush2.msra.mxu0 0.0
  %68 = vmatprep.subr.mxu0 0.0
  %69 = vmatpush2.msra.mxu0 0.0
  %70 = vmatprep.subr.mxu0 0.0
  %71 = vmatpush2.msra.mxu0 0.0
  %72 = vmatprep.subr.mxu0 0.0
  %73 = vmatpush2.msra.mxu0 0.0
  %74 = vmatprep.subr.mxu0 0.0
  %75 = vmatpush2.msra.mxu0 0.0
  %76 = vmatprep.subr.mxu0 0.0
  %77 = vmatpush2.msra.mxu0 0.0
  %78 = vmatprep.subr.mxu0 0.0
  %79 = vmatpush2.msra.mxu0 0.0
  %80 = vmatprep.subr.mxu0 0.0
  %81 = vmatpush2.msra.mxu0 0.0
  %82 = vmatprep.subr.mxu0 0.0
  %83 = vmatpush2.msra.mxu0 0.0
  %84 = vmatprep.subr.mxu0 0.0
  %85 = vmatpush2.msra.mxu0 0.0
  %86 = vmatprep.subr.mxu0 0.0
  %87 = vmatpush2.msra.mxu0 0.0
  %88 = vmatprep.subr.mxu0 0.0
  %89 = vmatpush2.msra.mxu0 0.0
  %90 = vmatprep.subr.mxu0 0.0
  %91 = vmatpush2.msra.mxu0 0.0
  %92 = vmatprep.subr.mxu0 0.0
  %93 = vmatpush2.msra.mxu0 0.0
  %94 = vmatprep.subr.mxu0 0.0
  %95 = vmatpush2.msra.mxu0 0.0
  %96 = vmatprep.mubr.f32.mxu0 0.0
  %97 = vmatmul.mubr.f32.gmra.mxu0 %v30
  %v98 = vpop.f32.mrf.mxu0
  %v99 = vadd.f32 0.0, %v98
  %v100 = vpop.f32.mrf.mxu0
  %101 = vdwg.mxu0
  %v102 = vxor.u32 %v99, 2147483648
  %v103 = vmul.f32 %v102, 1.442695
  %v104 = vpow.pop %v103
  %v105 = vadd.f32 %v104, 1.0
  %v106 = vrcp.pop %v105
  %v107 = vmul.f32 1.0, %v106
  %v108 = vmul.f32 %v99, %v107
  %vm109 = vcmask 1043456
  %v110 = vsel %vm109, %v108, 0.0
  %111 = vadd.xlane.f32.xlu0 %v110
  %v112 = vpop.xlane.xlu0 %111
  %v113 = vrcp.pop 128.0
  %v114 = vmul.f32 %v112, %v113
  %v115 = vsub.f32 %v108, %v114
  %v116 = vmul.f32 %v115, %v115
  %v117 = vsel %vm109, %v116, 0.0
  %118 = vadd.xlane.f32.xlu0 %v117
  %v119 = vpop.xlane.xlu0 %118
  %v120 = vmul.f32 %v119, %v113
  %v121 = vadd.f32 %v120, 1e-05
  %v122 = vrsqrt.pop %v121
  %v123 = vmul.f32 %v115, %v122
  %v124 = vmul.f32 %v123, %v15
  %s125 = scalar_lea.vmem %s0, 96
  %v126 = vld [vmem:[%s125] sm:$0xf]
  %v127 = vld [vmem:[%s125 + $0x4] sm:$0xf]
  %v128 = vld [vmem:[%s125 + $0x8] sm:$0xf]
  %v129 = vld [vmem:[%s125 + $0xc] sm:$0xf]
  %v130 = vld [vmem:[%s125 + $0x10] sm:$0xf]
  %v131 = vld [vmem:[%s125 + $0x14] sm:$0xf]
  %v132 = vunpack.c.l.bf16 %v126
  %v133 = vunpack.c.l.bf16 %v127
  %v134 = vunpack.c.l.bf16 %v128
  %v135 = vunpack.c.l.bf16 %v129
  %v136 = vunpack.c.l.bf16 %v130
  %v137 = vunpack.c.l.bf16 %v131
  %138 = vmatprep.subr.mxu0 0.0
  %139 = vmatpush1.msra.mxu0 0.0
  %140 = vmatprep.subr.mxu0 0.0
  %141 = vmatpush1.msra.mxu0 0.0
  %142 = vmatprep.subr.mxu0 0.0
  %143 = vmatpush1.msra.mxu0 0.0
  %144 = vmatprep.subr.mxu0 0.0
  %145 = vmatpush1.msra.mxu0 0.0
  %146 = vmatprep.subr.mxu0 0.0
  %147 = vmatpush1.msra.mxu0 0.0
  %148 = vmatprep.subr.mxu0 0.0
  %149 = vmatpush1.msra.mxu0 0.0
  %150 = vmatprep.subr.mxu0 0.0
  %151 = vmatpush1.msra.mxu0 0.0
  %152 = vmatprep.subr.mxu0 0.0
  %153 = vmatpush1.msra.mxu0 0.0
  %154 = vmatprep.subr.mxu0 0.0
  %155 = vmatpush1.msra.mxu0 0.0
  %156 = vmatprep.subr.mxu0 0.0
  %157 = vmatpush1.msra.mxu0 0.0
  %158 = vmatprep.subr.mxu0 0.0
  %159 = vmatpush1.msra.mxu0 %v137
  %160 = vmatprep.subr.mxu0 0.0
  %161 = vmatpush1.msra.mxu0 %v136
  %162 = vmatprep.subr.mxu0 0.0
  %163 = vmatpush1.msra.mxu0 %v135
  %164 = vmatprep.subr.mxu0 0.0
  %165 = vmatpush1.msra.mxu0 %v134
  %166 = vmatprep.subr.mxu0 0.0
  %167 = vmatpush1.msra.mxu0 %v133
  %168 = vmatprep.subr.mxu0 0.0
  %169 = vmatpush1.msra.mxu0 %v132
  %170 = vmatprep.subr.mxu0 0.0
  %171 = vmatpush2.msra.mxu0 0.0
  %172 = vmatprep.subr.mxu0 0.0
  %173 = vmatpush2.msra.mxu0 0.0
  %174 = vmatprep.subr.mxu0 0.0
  %175 = vmatpush2.msra.mxu0 0.0
  %176 = vmatprep.subr.mxu0 0.0
  %177 = vmatpush2.msra.mxu0 0.0
  %178 = vmatprep.subr.mxu0 0.0
  %179 = vmatpush2.msra.mxu0 0.0
  %180 = vmatprep.subr.mxu0 0.0
  %181 = vmatpush2.msra.mxu0 0.0
  %182 = vmatprep.subr.mxu0 0.0
  %183 = vmatpush2.msra.mxu0 0.0
  %184 = vmatprep.subr.mxu0 0.0
  %185 = vmatpush2.msra.mxu0 0.0
  %186 = vmatprep.subr.mxu0 0.0
  %187 = vmatpush2.msra.mxu0 0.0
  %188 = vmatprep.subr.mxu0 0.0
  %189 = vmatpush2.msra.mxu0 0.0
  %190 = vmatprep.subr.mxu0 0.0
  %191 = vmatpush2.msra.mxu0 0.0
  %192 = vmatprep.subr.mxu0 0.0
  %193 = vmatpush2.msra.mxu0 0.0
  %194 = vmatprep.subr.mxu0 0.0
  %195 = vmatpush2.msra.mxu0 0.0
  %196 = vmatprep.subr.mxu0 0.0
  %197 = vmatpush2.msra.mxu0 0.0
  %198 = vmatprep.subr.mxu0 0.0
  %199 = vmatpush2.msra.mxu0 0.0
  %200 = vmatprep.subr.mxu0 0.0
  %201 = vmatpush2.msra.mxu0 0.0
  %202 = vmatprep.mubr.f32.mxu0 0.0
  %203 = vmatmul.mubr.f32.gmra.mxu0 %v30
  %v204 = vpop.f32.mrf.mxu0
  %v205 = vadd.f32 0.0, %v204
  %v206 = vpop.f32.mrf.mxu0
  %207 = vdwg.mxu0
  %v208 = vxor.u32 %v205, 2147483648
  %v209 = vmul.f32 %v208, 1.442695
  %v210 = vpow.pop %v209
  %v211 = vadd.f32 %v210, 1.0
  %v212 = vrcp.pop %v211
  %v213 = vmul.f32 1.0, %v212
  %v214 = vmul.f32 %v205, %v213
  %v215 = vsel %vm109, %v214, 0.0
  %216 = vadd.xlane.f32.xlu0 %v215
  %v217 = vpop.xlane.xlu0 %216
  %v218 = vmul.f32 %v217, %v113
  %v219 = vsub.f32 %v214, %v218
  %v220 = vmul.f32 %v219, %v219
  %v221 = vsel %vm109, %v220, 0.0
  %222 = vadd.xlane.f32.xlu0 %v221
  %v223 = vpop.xlane.xlu0 %222
  %v224 = vmul.f32 %v223, %v113
  %v225 = vadd.f32 %v224, 1e-05
  %v226 = vrsqrt.pop %v225
  %v227 = vmul.f32 %v219, %v226
  %v228 = vmul.f32 %v227, %v15
  %v229 = vadd.f32 %v124, %v228
  %v230 = vmul.f32 %v229, 0.5
  %231 = vst [vmem:[%s3] sm:$0xf] %v230
  %s232 = scalar_lea.vmem %s2, 4
  %v233 = vld [vmem:[%s232] sm:$0xf]
  %s234 = scalar_lea.vmem %s0, 24
  %v235 = vld [vmem:[%s234] sm:$0xf]
  %v236 = vld [vmem:[%s234 + $0x4] sm:$0xf]
  %v237 = vld [vmem:[%s234 + $0x8] sm:$0xf]
  %v238 = vld [vmem:[%s234 + $0xc] sm:$0xf]
  %v239 = vld [vmem:[%s234 + $0x10] sm:$0xf]
  %v240 = vld [vmem:[%s234 + $0x14] sm:$0xf]
  %v241 = vunpack.c.l.bf16 %v235
  %v242 = vunpack.c.l.bf16 %v236
  %v243 = vunpack.c.l.bf16 %v237
  %v244 = vunpack.c.l.bf16 %v238
  %v245 = vunpack.c.l.bf16 %v239
  %v246 = vunpack.c.l.bf16 %v240
  %247 = vmatprep.subr.mxu0 0.0
  %248 = vmatpush1.msra.mxu0 0.0
  %249 = vmatprep.subr.mxu0 0.0
  %250 = vmatpush1.msra.mxu0 0.0
  %251 = vmatprep.subr.mxu0 0.0
  %252 = vmatpush1.msra.mxu0 0.0
  %253 = vmatprep.subr.mxu0 0.0
  %254 = vmatpush1.msra.mxu0 0.0
  %255 = vmatprep.subr.mxu0 0.0
  %256 = vmatpush1.msra.mxu0 0.0
  %257 = vmatprep.subr.mxu0 0.0
  %258 = vmatpush1.msra.mxu0 0.0
  %259 = vmatprep.subr.mxu0 0.0
  %260 = vmatpush1.msra.mxu0 0.0
  %261 = vmatprep.subr.mxu0 0.0
  %262 = vmatpush1.msra.mxu0 0.0
  %263 = vmatprep.subr.mxu0 0.0
  %264 = vmatpush1.msra.mxu0 0.0
  %265 = vmatprep.subr.mxu0 0.0
  %266 = vmatpush1.msra.mxu0 0.0
  %267 = vmatprep.subr.mxu0 0.0
  %268 = vmatpush1.msra.mxu0 %v246
  %269 = vmatprep.subr.mxu0 0.0
  %270 = vmatpush1.msra.mxu0 %v245
  %271 = vmatprep.subr.mxu0 0.0
  %272 = vmatpush1.msra.mxu0 %v244
  %273 = vmatprep.subr.mxu0 0.0
  %274 = vmatpush1.msra.mxu0 %v243
  %275 = vmatprep.subr.mxu0 0.0
  %276 = vmatpush1.msra.mxu0 %v242
  %277 = vmatprep.subr.mxu0 0.0
  %278 = vmatpush1.msra.mxu0 %v241
  %279 = vmatprep.subr.mxu0 0.0
  %280 = vmatpush2.msra.mxu0 0.0
  %281 = vmatprep.subr.mxu0 0.0
  %282 = vmatpush2.msra.mxu0 0.0
  %283 = vmatprep.subr.mxu0 0.0
  %284 = vmatpush2.msra.mxu0 0.0
  %285 = vmatprep.subr.mxu0 0.0
  %286 = vmatpush2.msra.mxu0 0.0
  %287 = vmatprep.subr.mxu0 0.0
  %288 = vmatpush2.msra.mxu0 0.0
  %289 = vmatprep.subr.mxu0 0.0
  %290 = vmatpush2.msra.mxu0 0.0
  %291 = vmatprep.subr.mxu0 0.0
  %292 = vmatpush2.msra.mxu0 0.0
  %293 = vmatprep.subr.mxu0 0.0
  %294 = vmatpush2.msra.mxu0 0.0
  %295 = vmatprep.subr.mxu0 0.0
  %296 = vmatpush2.msra.mxu0 0.0
  %297 = vmatprep.subr.mxu0 0.0
  %298 = vmatpush2.msra.mxu0 0.0
  %299 = vmatprep.subr.mxu0 0.0
  %300 = vmatpush2.msra.mxu0 0.0
  %301 = vmatprep.subr.mxu0 0.0
  %302 = vmatpush2.msra.mxu0 0.0
  %303 = vmatprep.subr.mxu0 0.0
  %304 = vmatpush2.msra.mxu0 0.0
  %305 = vmatprep.subr.mxu0 0.0
  %306 = vmatpush2.msra.mxu0 0.0
  %307 = vmatprep.subr.mxu0 0.0
  %308 = vmatpush2.msra.mxu0 0.0
  %309 = vmatprep.subr.mxu0 0.0
  %310 = vmatpush2.msra.mxu0 0.0
  %311 = vmatprep.mubr.f32.mxu0 0.0
  %312 = vmatmul.mubr.f32.gmra.mxu0 %v30
  %v313 = vpop.f32.mrf.mxu0
  %v314 = vadd.f32 0.0, %v313
  %v315 = vpop.f32.mrf.mxu0
  %316 = vdwg.mxu0
  %v317 = vxor.u32 %v314, 2147483648
  %v318 = vmul.f32 %v317, 1.442695
  %v319 = vpow.pop %v318
  %v320 = vadd.f32 %v319, 1.0
  %v321 = vrcp.pop %v320
  %v322 = vmul.f32 1.0, %v321
  %v323 = vmul.f32 %v314, %v322
  %v324 = vsel %vm109, %v323, 0.0
  %325 = vadd.xlane.f32.xlu0 %v324
  %v326 = vpop.xlane.xlu0 %325
  %v327 = vmul.f32 %v326, %v113
  %v328 = vsub.f32 %v323, %v327
  %v329 = vmul.f32 %v328, %v328
  %v330 = vsel %vm109, %v329, 0.0
  %331 = vadd.xlane.f32.xlu0 %v330
  %v332 = vpop.xlane.xlu0 %331
  %v333 = vmul.f32 %v332, %v113
  %v334 = vadd.f32 %v333, 1e-05
  %v335 = vrsqrt.pop %v334
  %v336 = vmul.f32 %v328, %v335
  %v337 = vmul.f32 %v336, %v233
  %s338 = scalar_lea.vmem %s0, 120
  %v339 = vld [vmem:[%s338] sm:$0xf]
  %v340 = vld [vmem:[%s338 + $0x4] sm:$0xf]
  %v341 = vld [vmem:[%s338 + $0x8] sm:$0xf]
  %v342 = vld [vmem:[%s338 + $0xc] sm:$0xf]
  %v343 = vld [vmem:[%s338 + $0x10] sm:$0xf]
  %v344 = vld [vmem:[%s338 + $0x14] sm:$0xf]
  %v345 = vunpack.c.l.bf16 %v339
  %v346 = vunpack.c.l.bf16 %v340
  %v347 = vunpack.c.l.bf16 %v341
  %v348 = vunpack.c.l.bf16 %v342
  %v349 = vunpack.c.l.bf16 %v343
  %v350 = vunpack.c.l.bf16 %v344
  %351 = vmatprep.subr.mxu0 0.0
  %352 = vmatpush1.msra.mxu0 0.0
  %353 = vmatprep.subr.mxu0 0.0
  %354 = vmatpush1.msra.mxu0 0.0
  %355 = vmatprep.subr.mxu0 0.0
  %356 = vmatpush1.msra.mxu0 0.0
  %357 = vmatprep.subr.mxu0 0.0
  %358 = vmatpush1.msra.mxu0 0.0
  %359 = vmatprep.subr.mxu0 0.0
  %360 = vmatpush1.msra.mxu0 0.0
  %361 = vmatprep.subr.mxu0 0.0
  %362 = vmatpush1.msra.mxu0 0.0
  %363 = vmatprep.subr.mxu0 0.0
  %364 = vmatpush1.msra.mxu0 0.0
  %365 = vmatprep.subr.mxu0 0.0
  %366 = vmatpush1.msra.mxu0 0.0
  %367 = vmatprep.subr.mxu0 0.0
  %368 = vmatpush1.msra.mxu0 0.0
  %369 = vmatprep.subr.mxu0 0.0
  %370 = vmatpush1.msra.mxu0 0.0
  %371 = vmatprep.subr.mxu0 0.0
  %372 = vmatpush1.msra.mxu0 %v350
  %373 = vmatprep.subr.mxu0 0.0
  %374 = vmatpush1.msra.mxu0 %v349
  %375 = vmatprep.subr.mxu0 0.0
  %376 = vmatpush1.msra.mxu0 %v348
  %377 = vmatprep.subr.mxu0 0.0
  %378 = vmatpush1.msra.mxu0 %v347
  %379 = vmatprep.subr.mxu0 0.0
  %380 = vmatpush1.msra.mxu0 %v346
  %381 = vmatprep.subr.mxu0 0.0
  %382 = vmatpush1.msra.mxu0 %v345
  %383 = vmatprep.subr.mxu0 0.0
  %384 = vmatpush2.msra.mxu0 0.0
  %385 = vmatprep.subr.mxu0 0.0
  %386 = vmatpush2.msra.mxu0 0.0
  %387 = vmatprep.subr.mxu0 0.0
  %388 = vmatpush2.msra.mxu0 0.0
  %389 = vmatprep.subr.mxu0 0.0
  %390 = vmatpush2.msra.mxu0 0.0
  %391 = vmatprep.subr.mxu0 0.0
  %392 = vmatpush2.msra.mxu0 0.0
  %393 = vmatprep.subr.mxu0 0.0
  %394 = vmatpush2.msra.mxu0 0.0
  %395 = vmatprep.subr.mxu0 0.0
  %396 = vmatpush2.msra.mxu0 0.0
  %397 = vmatprep.subr.mxu0 0.0
  %398 = vmatpush2.msra.mxu0 0.0
  %399 = vmatprep.subr.mxu0 0.0
  %400 = vmatpush2.msra.mxu0 0.0
  %401 = vmatprep.subr.mxu0 0.0
  %402 = vmatpush2.msra.mxu0 0.0
  %403 = vmatprep.subr.mxu0 0.0
  %404 = vmatpush2.msra.mxu0 0.0
  %405 = vmatprep.subr.mxu0 0.0
  %406 = vmatpush2.msra.mxu0 0.0
  %407 = vmatprep.subr.mxu0 0.0
  %408 = vmatpush2.msra.mxu0 0.0
  %409 = vmatprep.subr.mxu0 0.0
  %410 = vmatpush2.msra.mxu0 0.0
  %411 = vmatprep.subr.mxu0 0.0
  %412 = vmatpush2.msra.mxu0 0.0
  %413 = vmatprep.subr.mxu0 0.0
  %414 = vmatpush2.msra.mxu0 0.0
  %415 = vmatprep.mubr.f32.mxu0 0.0
  %416 = vmatmul.mubr.f32.gmra.mxu0 %v30
  %v417 = vpop.f32.mrf.mxu0
  %v418 = vadd.f32 0.0, %v417
  %v419 = vpop.f32.mrf.mxu0
  %420 = vdwg.mxu0
  %v421 = vxor.u32 %v418, 2147483648
  %v422 = vmul.f32 %v421, 1.442695
  %v423 = vpow.pop %v422
  %v424 = vadd.f32 %v423, 1.0
  %v425 = vrcp.pop %v424
  %v426 = vmul.f32 1.0, %v425
  %v427 = vmul.f32 %v418, %v426
  %v428 = vsel %vm109, %v427, 0.0
  %429 = vadd.xlane.f32.xlu0 %v428
  %v430 = vpop.xlane.xlu0 %429
  %v431 = vmul.f32 %v430, %v113
  %v432 = vsub.f32 %v427, %v431
  %v433 = vmul.f32 %v432, %v432
  %v434 = vsel %vm109, %v433, 0.0
  %435 = vadd.xlane.f32.xlu0 %v434
  %v436 = vpop.xlane.xlu0 %435
  %v437 = vmul.f32 %v436, %v113
  %v438 = vadd.f32 %v437, 1e-05
  %v439 = vrsqrt.pop %v438
  %v440 = vmul.f32 %v432, %v439
  %v441 = vmul.f32 %v440, %v233
  %v442 = vadd.f32 %v337, %v441
  %v443 = vmul.f32 %v442, 0.5
  %s444 = scalar_lea.vmem %s3, 4
  %445 = vst [vmem:[%s444] sm:$0xf] %v443
  %s446 = scalar_lea.vmem %s2, 8
  %v447 = vld [vmem:[%s446] sm:$0xf]
  %s448 = scalar_lea.vmem %s0, 48
  %v449 = vld [vmem:[%s448] sm:$0xf]
  %v450 = vld [vmem:[%s448 + $0x4] sm:$0xf]
  %v451 = vld [vmem:[%s448 + $0x8] sm:$0xf]
  %v452 = vld [vmem:[%s448 + $0xc] sm:$0xf]
  %v453 = vld [vmem:[%s448 + $0x10] sm:$0xf]
  %v454 = vld [vmem:[%s448 + $0x14] sm:$0xf]
  %v455 = vunpack.c.l.bf16 %v449
  %v456 = vunpack.c.l.bf16 %v450
  %v457 = vunpack.c.l.bf16 %v451
  %v458 = vunpack.c.l.bf16 %v452
  %v459 = vunpack.c.l.bf16 %v453
  %v460 = vunpack.c.l.bf16 %v454
  %461 = vmatprep.subr.mxu0 0.0
  %462 = vmatpush1.msra.mxu0 0.0
  %463 = vmatprep.subr.mxu0 0.0
  %464 = vmatpush1.msra.mxu0 0.0
  %465 = vmatprep.subr.mxu0 0.0
  %466 = vmatpush1.msra.mxu0 0.0
  %467 = vmatprep.subr.mxu0 0.0
  %468 = vmatpush1.msra.mxu0 0.0
  %469 = vmatprep.subr.mxu0 0.0
  %470 = vmatpush1.msra.mxu0 0.0
  %471 = vmatprep.subr.mxu0 0.0
  %472 = vmatpush1.msra.mxu0 0.0
  %473 = vmatprep.subr.mxu0 0.0
  %474 = vmatpush1.msra.mxu0 0.0
  %475 = vmatprep.subr.mxu0 0.0
  %476 = vmatpush1.msra.mxu0 0.0
  %477 = vmatprep.subr.mxu0 0.0
  %478 = vmatpush1.msra.mxu0 0.0
  %479 = vmatprep.subr.mxu0 0.0
  %480 = vmatpush1.msra.mxu0 0.0
  %481 = vmatprep.subr.mxu0 0.0
  %482 = vmatpush1.msra.mxu0 %v460
  %483 = vmatprep.subr.mxu0 0.0
  %484 = vmatpush1.msra.mxu0 %v459
  %485 = vmatprep.subr.mxu0 0.0
  %486 = vmatpush1.msra.mxu0 %v458
  %487 = vmatprep.subr.mxu0 0.0
  %488 = vmatpush1.msra.mxu0 %v457
  %489 = vmatprep.subr.mxu0 0.0
  %490 = vmatpush1.msra.mxu0 %v456
  %491 = vmatprep.subr.mxu0 0.0
  %492 = vmatpush1.msra.mxu0 %v455
  %493 = vmatprep.subr.mxu0 0.0
  %494 = vmatpush2.msra.mxu0 0.0
  %495 = vmatprep.subr.mxu0 0.0
  %496 = vmatpush2.msra.mxu0 0.0
  %497 = vmatprep.subr.mxu0 0.0
  %498 = vmatpush2.msra.mxu0 0.0
  %499 = vmatprep.subr.mxu0 0.0
  %500 = vmatpush2.msra.mxu0 0.0
  %501 = vmatprep.subr.mxu0 0.0
  %502 = vmatpush2.msra.mxu0 0.0
  %503 = vmatprep.subr.mxu0 0.0
  %504 = vmatpush2.msra.mxu0 0.0
  %505 = vmatprep.subr.mxu0 0.0
  %506 = vmatpush2.msra.mxu0 0.0
  %507 = vmatprep.subr.mxu0 0.0
  %508 = vmatpush2.msra.mxu0 0.0
  %509 = vmatprep.subr.mxu0 0.0
  %510 = vmatpush2.msra.mxu0 0.0
  %511 = vmatprep.subr.mxu0 0.0
  %512 = vmatpush2.msra.mxu0 0.0
  %513 = vmatprep.subr.mxu0 0.0
  %514 = vmatpush2.msra.mxu0 0.0
  %515 = vmatprep.subr.mxu0 0.0
  %516 = vmatpush2.msra.mxu0 0.0
  %517 = vmatprep.subr.mxu0 0.0
  %518 = vmatpush2.msra.mxu0 0.0
  %519 = vmatprep.subr.mxu0 0.0
  %520 = vmatpush2.msra.mxu0 0.0
  %521 = vmatprep.subr.mxu0 0.0
  %522 = vmatpush2.msra.mxu0 0.0
  %523 = vmatprep.subr.mxu0 0.0
  %524 = vmatpush2.msra.mxu0 0.0
  %525 = vmatprep.mubr.f32.mxu0 0.0
  %526 = vmatmul.mubr.f32.gmra.mxu0 %v30
  %v527 = vpop.f32.mrf.mxu0
  %v528 = vadd.f32 0.0, %v527
  %v529 = vpop.f32.mrf.mxu0
  %530 = vdwg.mxu0
  %v531 = vxor.u32 %v528, 2147483648
  %v532 = vmul.f32 %v531, 1.442695
  %v533 = vpow.pop %v532
  %v534 = vadd.f32 %v533, 1.0
  %v535 = vrcp.pop %v534
  %v536 = vmul.f32 1.0, %v535
  %v537 = vmul.f32 %v528, %v536
  %v538 = vsel %vm109, %v537, 0.0
  %539 = vadd.xlane.f32.xlu0 %v538
  %v540 = vpop.xlane.xlu0 %539
  %v541 = vmul.f32 %v540, %v113
  %v542 = vsub.f32 %v537, %v541
  %v543 = vmul.f32 %v542, %v542
  %v544 = vsel %vm109, %v543, 0.0
  %545 = vadd.xlane.f32.xlu0 %v544
  %v546 = vpop.xlane.xlu0 %545
  %v547 = vmul.f32 %v546, %v113
  %v548 = vadd.f32 %v547, 1e-05
  %v549 = vrsqrt.pop %v548
  %v550 = vmul.f32 %v542, %v549
  %v551 = vmul.f32 %v550, %v447
  %s552 = scalar_lea.vmem %s0, 144
  %v553 = vld [vmem:[%s552] sm:$0xf]
  %v554 = vld [vmem:[%s552 + $0x4] sm:$0xf]
  %v555 = vld [vmem:[%s552 + $0x8] sm:$0xf]
  %v556 = vld [vmem:[%s552 + $0xc] sm:$0xf]
  %v557 = vld [vmem:[%s552 + $0x10] sm:$0xf]
  %v558 = vld [vmem:[%s552 + $0x14] sm:$0xf]
  %v559 = vunpack.c.l.bf16 %v553
  %v560 = vunpack.c.l.bf16 %v554
  %v561 = vunpack.c.l.bf16 %v555
  %v562 = vunpack.c.l.bf16 %v556
  %v563 = vunpack.c.l.bf16 %v557
  %v564 = vunpack.c.l.bf16 %v558
  %565 = vmatprep.subr.mxu0 0.0
  %566 = vmatpush1.msra.mxu0 0.0
  %567 = vmatprep.subr.mxu0 0.0
  %568 = vmatpush1.msra.mxu0 0.0
  %569 = vmatprep.subr.mxu0 0.0
  %570 = vmatpush1.msra.mxu0 0.0
  %571 = vmatprep.subr.mxu0 0.0
  %572 = vmatpush1.msra.mxu0 0.0
  %573 = vmatprep.subr.mxu0 0.0
  %574 = vmatpush1.msra.mxu0 0.0
  %575 = vmatprep.subr.mxu0 0.0
  %576 = vmatpush1.msra.mxu0 0.0
  %577 = vmatprep.subr.mxu0 0.0
  %578 = vmatpush1.msra.mxu0 0.0
  %579 = vmatprep.subr.mxu0 0.0
  %580 = vmatpush1.msra.mxu0 0.0
  %581 = vmatprep.subr.mxu0 0.0
  %582 = vmatpush1.msra.mxu0 0.0
  %583 = vmatprep.subr.mxu0 0.0
  %584 = vmatpush1.msra.mxu0 0.0
  %585 = vmatprep.subr.mxu0 0.0
  %586 = vmatpush1.msra.mxu0 %v564
  %587 = vmatprep.subr.mxu0 0.0
  %588 = vmatpush1.msra.mxu0 %v563
  %589 = vmatprep.subr.mxu0 0.0
  %590 = vmatpush1.msra.mxu0 %v562
  %591 = vmatprep.subr.mxu0 0.0
  %592 = vmatpush1.msra.mxu0 %v561
  %593 = vmatprep.subr.mxu0 0.0
  %594 = vmatpush1.msra.mxu0 %v560
  %595 = vmatprep.subr.mxu0 0.0
  %596 = vmatpush1.msra.mxu0 %v559
  %597 = vmatprep.subr.mxu0 0.0
  %598 = vmatpush2.msra.mxu0 0.0
  %599 = vmatprep.subr.mxu0 0.0
  %600 = vmatpush2.msra.mxu0 0.0
  %601 = vmatprep.subr.mxu0 0.0
  %602 = vmatpush2.msra.mxu0 0.0
  %603 = vmatprep.subr.mxu0 0.0
  %604 = vmatpush2.msra.mxu0 0.0
  %605 = vmatprep.subr.mxu0 0.0
  %606 = vmatpush2.msra.mxu0 0.0
  %607 = vmatprep.subr.mxu0 0.0
  %608 = vmatpush2.msra.mxu0 0.0
  %609 = vmatprep.subr.mxu0 0.0
  %610 = vmatpush2.msra.mxu0 0.0
  %611 = vmatprep.subr.mxu0 0.0
  %612 = vmatpush2.msra.mxu0 0.0
  %613 = vmatprep.subr.mxu0 0.0
  %614 = vmatpush2.msra.mxu0 0.0
  %615 = vmatprep.subr.mxu0 0.0
  %616 = vmatpush2.msra.mxu0 0.0
  %617 = vmatprep.subr.mxu0 0.0
  %618 = vmatpush2.msra.mxu0 0.0
  %619 = vmatprep.subr.mxu0 0.0
  %620 = vmatpush2.msra.mxu0 0.0
  %621 = vmatprep.subr.mxu0 0.0
  %622 = vmatpush2.msra.mxu0 0.0
  %623 = vmatprep.subr.mxu0 0.0
  %624 = vmatpush2.msra.mxu0 0.0
  %625 = vmatprep.subr.mxu0 0.0
  %626 = vmatpush2.msra.mxu0 0.0
  %627 = vmatprep.subr.mxu0 0.0
  %628 = vmatpush2.msra.mxu0 0.0
  %629 = vmatprep.mubr.f32.mxu0 0.0
  %630 = vmatmul.mubr.f32.gmra.mxu0 %v30
  %v631 = vpop.f32.mrf.mxu0
  %v632 = vadd.f32 0.0, %v631
  %v633 = vpop.f32.mrf.mxu0
  %634 = vdwg.mxu0
  %v635 = vxor.u32 %v632, 2147483648
  %v636 = vmul.f32 %v635, 1.442695
  %v637 = vpow.pop %v636
  %v638 = vadd.f32 %v637, 1.0
  %v639 = vrcp.pop %v638
  %v640 = vmul.f32 1.0, %v639
  %v641 = vmul.f32 %v632, %v640
  %v642 = vsel %vm109, %v641, 0.0
  %643 = vadd.xlane.f32.xlu0 %v642
  %v644 = vpop.xlane.xlu0 %643
  %v645 = vmul.f32 %v644, %v113
  %v646 = vsub.f32 %v641, %v645
  %v647 = vmul.f32 %v646, %v646
  %v648 = vsel %vm109, %v647, 0.0
  %649 = vadd.xlane.f32.xlu0 %v648
  %v650 = vpop.xlane.xlu0 %649
  %v651 = vmul.f32 %v650, %v113
  %v652 = vadd.f32 %v651, 1e-05
  %v653 = vrsqrt.pop %v652
  %v654 = vmul.f32 %v646, %v653
  %v655 = vmul.f32 %v654, %v447
  %v656 = vadd.f32 %v551, %v655
  %v657 = vmul.f32 %v656, 0.5
  %s658 = scalar_lea.vmem %s3, 8
  %659 = vst [vmem:[%s658] sm:$0xf] %v657
  %s660 = scalar_lea.vmem %s2, 12
  %v661 = vld [vmem:[%s660] sm:$0xf]
  %s662 = scalar_lea.vmem %s0, 72
  %v663 = vld [vmem:[%s662] sm:$0xf]
  %v664 = vld [vmem:[%s662 + $0x4] sm:$0xf]
  %v665 = vld [vmem:[%s662 + $0x8] sm:$0xf]
  %v666 = vld [vmem:[%s662 + $0xc] sm:$0xf]
  %v667 = vld [vmem:[%s662 + $0x10] sm:$0xf]
  %v668 = vld [vmem:[%s662 + $0x14] sm:$0xf]
  %v669 = vunpack.c.l.bf16 %v663
  %v670 = vunpack.c.l.bf16 %v664
  %v671 = vunpack.c.l.bf16 %v665
  %v672 = vunpack.c.l.bf16 %v666
  %v673 = vunpack.c.l.bf16 %v667
  %v674 = vunpack.c.l.bf16 %v668
  %675 = vmatprep.subr.mxu0 0.0
  %676 = vmatpush1.msra.mxu0 0.0
  %677 = vmatprep.subr.mxu0 0.0
  %678 = vmatpush1.msra.mxu0 0.0
  %679 = vmatprep.subr.mxu0 0.0
  %680 = vmatpush1.msra.mxu0 0.0
  %681 = vmatprep.subr.mxu0 0.0
  %682 = vmatpush1.msra.mxu0 0.0
  %683 = vmatprep.subr.mxu0 0.0
  %684 = vmatpush1.msra.mxu0 0.0
  %685 = vmatprep.subr.mxu0 0.0
  %686 = vmatpush1.msra.mxu0 0.0
  %687 = vmatprep.subr.mxu0 0.0
  %688 = vmatpush1.msra.mxu0 0.0
  %689 = vmatprep.subr.mxu0 0.0
  %690 = vmatpush1.msra.mxu0 0.0
  %691 = vmatprep.subr.mxu0 0.0
  %692 = vmatpush1.msra.mxu0 0.0
  %693 = vmatprep.subr.mxu0 0.0
  %694 = vmatpush1.msra.mxu0 0.0
  %695 = vmatprep.subr.mxu0 0.0
  %696 = vmatpush1.msra.mxu0 %v674
  %697 = vmatprep.subr.mxu0 0.0
  %698 = vmatpush1.msra.mxu0 %v673
  %699 = vmatprep.subr.mxu0 0.0
  %700 = vmatpush1.msra.mxu0 %v672
  %701 = vmatprep.subr.mxu0 0.0
  %702 = vmatpush1.msra.mxu0 %v671
  %703 = vmatprep.subr.mxu0 0.0
  %704 = vmatpush1.msra.mxu0 %v670
  %705 = vmatprep.subr.mxu0 0.0
  %706 = vmatpush1.msra.mxu0 %v669
  %707 = vmatprep.subr.mxu0 0.0
  %708 = vmatpush2.msra.mxu0 0.0
  %709 = vmatprep.subr.mxu0 0.0
  %710 = vmatpush2.msra.mxu0 0.0
  %711 = vmatprep.subr.mxu0 0.0
  %712 = vmatpush2.msra.mxu0 0.0
  %713 = vmatprep.subr.mxu0 0.0
  %714 = vmatpush2.msra.mxu0 0.0
  %715 = vmatprep.subr.mxu0 0.0
  %716 = vmatpush2.msra.mxu0 0.0
  %717 = vmatprep.subr.mxu0 0.0
  %718 = vmatpush2.msra.mxu0 0.0
  %719 = vmatprep.subr.mxu0 0.0
  %720 = vmatpush2.msra.mxu0 0.0
  %721 = vmatprep.subr.mxu0 0.0
  %722 = vmatpush2.msra.mxu0 0.0
  %723 = vmatprep.subr.mxu0 0.0
  %724 = vmatpush2.msra.mxu0 0.0
  %725 = vmatprep.subr.mxu0 0.0
  %726 = vmatpush2.msra.mxu0 0.0
  %727 = vmatprep.subr.mxu0 0.0
  %728 = vmatpush2.msra.mxu0 0.0
  %729 = vmatprep.subr.mxu0 0.0
  %730 = vmatpush2.msra.mxu0 0.0
  %731 = vmatprep.subr.mxu0 0.0
  %732 = vmatpush2.msra.mxu0 0.0
  %733 = vmatprep.subr.mxu0 0.0
  %734 = vmatpush2.msra.mxu0 0.0
  %735 = vmatprep.subr.mxu0 0.0
  %736 = vmatpush2.msra.mxu0 0.0
  %737 = vmatprep.subr.mxu0 0.0
  %738 = vmatpush2.msra.mxu0 0.0
  %739 = vmatprep.mubr.f32.mxu0 0.0
  %740 = vmatmul.mubr.f32.gmra.mxu0 %v30
  %v741 = vpop.f32.mrf.mxu0
  %v742 = vadd.f32 0.0, %v741
  %v743 = vpop.f32.mrf.mxu0
  %744 = vdwg.mxu0
  %v745 = vxor.u32 %v742, 2147483648
  %v746 = vmul.f32 %v745, 1.442695
  %v747 = vpow.pop %v746
  %v748 = vadd.f32 %v747, 1.0
  %v749 = vrcp.pop %v748
  %v750 = vmul.f32 1.0, %v749
  %v751 = vmul.f32 %v742, %v750
  %v752 = vsel %vm109, %v751, 0.0
  %753 = vadd.xlane.f32.xlu0 %v752
  %v754 = vpop.xlane.xlu0 %753
  %v755 = vmul.f32 %v754, %v113
  %v756 = vsub.f32 %v751, %v755
  %v757 = vmul.f32 %v756, %v756
  %v758 = vsel %vm109, %v757, 0.0
  %759 = vadd.xlane.f32.xlu0 %v758
  %v760 = vpop.xlane.xlu0 %759
  %v761 = vmul.f32 %v760, %v113
  %v762 = vadd.f32 %v761, 1e-05
  %v763 = vrsqrt.pop %v762
  %v764 = vmul.f32 %v756, %v763
  %v765 = vmul.f32 %v764, %v661
  %s766 = scalar_lea.vmem %s0, 168
  %v767 = vld [vmem:[%s766] sm:$0xf]
  %v768 = vld [vmem:[%s766 + $0x4] sm:$0xf]
  %v769 = vld [vmem:[%s766 + $0x8] sm:$0xf]
  %v770 = vld [vmem:[%s766 + $0xc] sm:$0xf]
  %v771 = vld [vmem:[%s766 + $0x10] sm:$0xf]
  %v772 = vld [vmem:[%s766 + $0x14] sm:$0xf]
  %v773 = vunpack.c.l.bf16 %v767
  %v774 = vunpack.c.l.bf16 %v768
  %v775 = vunpack.c.l.bf16 %v769
  %v776 = vunpack.c.l.bf16 %v770
  %v777 = vunpack.c.l.bf16 %v771
  %v778 = vunpack.c.l.bf16 %v772
  %779 = vmatprep.subr.mxu0 0.0
  %780 = vmatpush1.msra.mxu0 0.0
  %781 = vmatprep.subr.mxu0 0.0
  %782 = vmatpush1.msra.mxu0 0.0
  %783 = vmatprep.subr.mxu0 0.0
  %784 = vmatpush1.msra.mxu0 0.0
  %785 = vmatprep.subr.mxu0 0.0
  %786 = vmatpush1.msra.mxu0 0.0
  %787 = vmatprep.subr.mxu0 0.0
  %788 = vmatpush1.msra.mxu0 0.0
  %789 = vmatprep.subr.mxu0 0.0
  %790 = vmatpush1.msra.mxu0 0.0
  %791 = vmatprep.subr.mxu0 0.0
  %792 = vmatpush1.msra.mxu0 0.0
  %793 = vmatprep.subr.mxu0 0.0
  %794 = vmatpush1.msra.mxu0 0.0
  %795 = vmatprep.subr.mxu0 0.0
  %796 = vmatpush1.msra.mxu0 0.0
  %797 = vmatprep.subr.mxu0 0.0
  %798 = vmatpush1.msra.mxu0 0.0
  %799 = vmatprep.subr.mxu0 0.0
  %800 = vmatpush1.msra.mxu0 %v778
  %801 = vmatprep.subr.mxu0 0.0
  %802 = vmatpush1.msra.mxu0 %v777
  %803 = vmatprep.subr.mxu0 0.0
  %804 = vmatpush1.msra.mxu0 %v776
  %805 = vmatprep.subr.mxu0 0.0
  %806 = vmatpush1.msra.mxu0 %v775
  %807 = vmatprep.subr.mxu0 0.0
  %808 = vmatpush1.msra.mxu0 %v774
  %809 = vmatprep.subr.mxu0 0.0
  %810 = vmatpush1.msra.mxu0 %v773
  %811 = vmatprep.subr.mxu0 0.0
  %812 = vmatpush2.msra.mxu0 0.0
  %813 = vmatprep.subr.mxu0 0.0
  %814 = vmatpush2.msra.mxu0 0.0
  %815 = vmatprep.subr.mxu0 0.0
  %816 = vmatpush2.msra.mxu0 0.0
  %817 = vmatprep.subr.mxu0 0.0
  %818 = vmatpush2.msra.mxu0 0.0
  %819 = vmatprep.subr.mxu0 0.0
  %820 = vmatpush2.msra.mxu0 0.0
  %821 = vmatprep.subr.mxu0 0.0
  %822 = vmatpush2.msra.mxu0 0.0
  %823 = vmatprep.subr.mxu0 0.0
  %824 = vmatpush2.msra.mxu0 0.0
  %825 = vmatprep.subr.mxu0 0.0
  %826 = vmatpush2.msra.mxu0 0.0
  %827 = vmatprep.subr.mxu0 0.0
  %828 = vmatpush2.msra.mxu0 0.0
  %829 = vmatprep.subr.mxu0 0.0
  %830 = vmatpush2.msra.mxu0 0.0
  %831 = vmatprep.subr.mxu0 0.0
  %832 = vmatpush2.msra.mxu0 0.0
  %833 = vmatprep.subr.mxu0 0.0
  %834 = vmatpush2.msra.mxu0 0.0
  %835 = vmatprep.subr.mxu0 0.0
  %836 = vmatpush2.msra.mxu0 0.0
  %837 = vmatprep.subr.mxu0 0.0
  %838 = vmatpush2.msra.mxu0 0.0
  %839 = vmatprep.subr.mxu0 0.0
  %840 = vmatpush2.msra.mxu0 0.0
  %841 = vmatprep.subr.mxu0 0.0
  %842 = vmatpush2.msra.mxu0 0.0
  %843 = vmatprep.mubr.f32.mxu0 0.0
  %844 = vmatmul.mubr.f32.gmra.mxu0 %v30
  %v845 = vpop.f32.mrf.mxu0
  %v846 = vadd.f32 0.0, %v845
  %v847 = vpop.f32.mrf.mxu0
  %848 = vdwg.mxu0
  %v849 = vxor.u32 %v846, 2147483648
  %v850 = vmul.f32 %v849, 1.442695
  %v851 = vpow.pop %v850
  %v852 = vadd.f32 %v851, 1.0
  %v853 = vrcp.pop %v852
  %v854 = vmul.f32 1.0, %v853
  %v855 = vmul.f32 %v846, %v854
  %v856 = vsel %vm109, %v855, 0.0
  %857 = vadd.xlane.f32.xlu0 %v856
  %v858 = vpop.xlane.xlu0 %857
  %v859 = vmul.f32 %v858, %v113
  %v860 = vsub.f32 %v855, %v859
  %v861 = vmul.f32 %v860, %v860
  %v862 = vsel %vm109, %v861, 0.0
  %863 = vadd.xlane.f32.xlu0 %v862
  %v864 = vpop.xlane.xlu0 %863
  %v865 = vmul.f32 %v864, %v113
  %v866 = vadd.f32 %v865, 1e-05
  %v867 = vrsqrt.pop %v866
  %v868 = vmul.f32 %v860, %v867
  %v869 = vmul.f32 %v868, %v661
  %v870 = vadd.f32 %v765, %v869
  %v871 = vmul.f32 %v870, 0.5
  %s872 = scalar_lea.vmem %s3, 12
  %873 = vst [vmem:[%s872] sm:$0xf] %v871
  // Predicated region
  $region14: #{_lambda_.10} parent=0 // pred_check
    _
  $region15: #{_lambda_.10} parent=0 // pred_check_branch
    %875 = sbr.rel (0) target = $region17
  $region16: #{_lambda_.10} parent=0 // pred_region
    _
  $region17: #{_lambda_.10} parent=0 // pred_fallthru
    _
  // Predicated region
  $region18: #{_lambda_.10} parent=0 // pred_check
    _
  $region19: #{_lambda_.10} parent=0 // pred_check_branch
    %877 = sbr.rel (0) target = $region21
  $region20: #{_lambda_.10} parent=0 // pred_region
    _
  $region21: #{_lambda_.10} parent=0 // pred_fallthru
    _

// kernel: _lambda_.12
$region0: #{_lambda_.12}
  #allocation0 [shape = 'u32[]', space=smem, size = 0x4, offset = 0x4, fixed_abs, tag = 'smem constant byte address 0x4 - core index']
  #allocation1 [shape = 'u32[144,128]{1,0:T(1,128)}', space=vmem, size = 0x12000, scoped, tag = 'internal scratch']
  %s0 = inlined_call_operand.vmem [shape: bf16[2,4,48,128], index: 0, kind: input, shape index: {}]
  %s1 = inlined_call_operand.vmem [shape: f32[8,48], index: 1, kind: input, shape index: {}]
  %s2 = inlined_call_operand.vmem [shape: f32[4,8,128], index: 2, kind: input, shape index: {}]
  %s3 = inlined_call_operand.vmem [shape: f32[4,8,128], index: 3, kind: output, shape index: {}]
  %s4 = sld [smem:[#allocation0]]
  $region22: #{_lambda_.12} parent=0
    _
  %s6 = ssub.s32 1, %s4
  %s7 = scalar_select 0, %s6, %s4
  // Predicated region
  $region2: #{_lambda_.12} parent=0 // pred_check
    _
  $region3: #{_lambda_.12} parent=0 // pred_check_branch
    %9 = sbr.rel (0) target = $region5
  $region4: #{_lambda_.12} parent=0 // pred_region
    _
  $region5: #{_lambda_.12} parent=0 // pred_fallthru
    _
  // Predicated region
  $region6: #{_lambda_.12} parent=0 // pred_check
    _
  $region7: #{_lambda_.12} parent=0 // pred_check_branch
    %11 = sbr.rel (0) target = $region9
  $region8: #{_lambda_.12} parent=0 // pred_region
    _
  $region9: #{_lambda_.12} parent=0 // pred_fallthru
    _
  // Predicated region
  $region10: #{_lambda_.12} parent=0 // pred_check
    _
  $region11: #{_lambda_.12} parent=0 // pred_check_branch
    %13 = sbr.rel (0) target = $region13
  $region12: #{_lambda_.12} parent=0 // pred_region
    _
  $region13: #{_lambda_.12} parent=0 // pred_fallthru
    _
  %v14 = vld [vmem:[%s1] sm:$0xff]
  %v15 = vld [vmem:[%s2] sm:$0xff]
  %v16 = vld [vmem:[%s0] sm:$0xf]
  %v17 = vld [vmem:[%s0 + $0x4] sm:$0xf]
  %v18 = vld [vmem:[%s0 + $0x8] sm:$0xf]
  %v19 = vld [vmem:[%s0 + $0xc] sm:$0xf]
  %v20 = vld [vmem:[%s0 + $0x10] sm:$0xf]
  %v21 = vld [vmem:[%s0 + $0x14] sm:$0xf]
  %v22 = vunpack.c.l.bf16 %v16
  %v23 = vunpack.c.l.bf16 %v17
  %v24 = vunpack.c.l.bf16 %v18
  %v25 = vunpack.c.l.bf16 %v19
  %v26 = vunpack.c.l.bf16 %v20
  %v27 = vunpack.c.l.bf16 %v21
  %vm28 = vcmask 392192
  %v30 = vsel %vm28, %v14, 0
  %32 = vmatprep.subr.mxu0 0.0
  %33 = vmatpush1.msra.mxu0 0.0
  %34 = vmatprep.subr.mxu0 0.0
  %35 = vmatpush1.msra.mxu0 0.0
  %36 = vmatprep.subr.mxu0 0.0
  %37 = vmatpush1.msra.mxu0 0.0
  %38 = vmatprep.subr.mxu0 0.0
  %39 = vmatpush1.msra.mxu0 0.0
  %40 = vmatprep.subr.mxu0 0.0
  %41 = vmatpush1.msra.mxu0 0.0
  %42 = vmatprep.subr.mxu0 0.0
  %43 = vmatpush1.msra.mxu0 0.0
  %44 = vmatprep.subr.mxu0 0.0
  %45 = vmatpush1.msra.mxu0 0.0
  %46 = vmatprep.subr.mxu0 0.0
  %47 = vmatpush1.msra.mxu0 0.0
  %48 = vmatprep.subr.mxu0 0.0
  %49 = vmatpush1.msra.mxu0 0.0
  %50 = vmatprep.subr.mxu0 0.0
  %51 = vmatpush1.msra.mxu0 0.0
  %52 = vmatprep.subr.mxu0 0.0
  %53 = vmatpush1.msra.mxu0 %v27
  %54 = vmatprep.subr.mxu0 0.0
  %55 = vmatpush1.msra.mxu0 %v26
  %56 = vmatprep.subr.mxu0 0.0
  %57 = vmatpush1.msra.mxu0 %v25
  %58 = vmatprep.subr.mxu0 0.0
  %59 = vmatpush1.msra.mxu0 %v24
  %60 = vmatprep.subr.mxu0 0.0
  %61 = vmatpush1.msra.mxu0 %v23
  %62 = vmatprep.subr.mxu0 0.0
  %63 = vmatpush1.msra.mxu0 %v22
  %64 = vmatprep.subr.mxu0 0.0
  %65 = vmatpush2.msra.mxu0 0.0
  %66 = vmatprep.subr.mxu0 0.0
  %67 = vmatpush2.msra.mxu0 0.0
  %68 = vmatprep.subr.mxu0 0.0
  %69 = vmatpush2.msra.mxu0 0.0
  %70 = vmatprep.subr.mxu0 0.0
  %71 = vmatpush2.msra.mxu0 0.0
  %72 = vmatprep.subr.mxu0 0.0
  %73 = vmatpush2.msra.mxu0 0.0
  %74 = vmatprep.subr.mxu0 0.0
  %75 = vmatpush2.msra.mxu0 0.0
  %76 = vmatprep.subr.mxu0 0.0
  %77 = vmatpush2.msra.mxu0 0.0
  %78 = vmatprep.subr.mxu0 0.0
  %79 = vmatpush2.msra.mxu0 0.0
  %80 = vmatprep.subr.mxu0 0.0
  %81 = vmatpush2.msra.mxu0 0.0
  %82 = vmatprep.subr.mxu0 0.0
  %83 = vmatpush2.msra.mxu0 0.0
  %84 = vmatprep.subr.mxu0 0.0
  %85 = vmatpush2.msra.mxu0 0.0
  %86 = vmatprep.subr.mxu0 0.0
  %87 = vmatpush2.msra.mxu0 0.0
  %88 = vmatprep.subr.mxu0 0.0
  %89 = vmatpush2.msra.mxu0 0.0
  %90 = vmatprep.subr.mxu0 0.0
  %91 = vmatpush2.msra.mxu0 0.0
  %92 = vmatprep.subr.mxu0 0.0
  %93 = vmatpush2.msra.mxu0 0.0
  %94 = vmatprep.subr.mxu0 0.0
  %95 = vmatpush2.msra.mxu0 0.0
  %96 = vmatprep.mubr.f32.mxu0 0.0
  %97 = vmatmul.mubr.f32.gmra.mxu0 %v30
  %v98 = vpop.f32.mrf.mxu0
  %v99 = vadd.f32 0.0, %v98
  %v100 = vpop.f32.mrf.mxu0
  %101 = vdwg.mxu0
  %v102 = vxor.u32 %v99, 2147483648
  %v103 = vmul.f32 %v102, 1.442695
  %v104 = vpow.pop %v103
  %v105 = vadd.f32 %v104, 1.0
  %v106 = vrcp.pop %v105
  %v107 = vmul.f32 1.0, %v106
  %v108 = vmul.f32 %v99, %v107
  %109 = vadd.xlane.f32.xlu0 %v108
  %v110 = vpop.xlane.xlu0 %109
  %v111 = vrcp.pop 128.0
  %v112 = vmul.f32 %v110, %v111
  %v113 = vsub.f32 %v108, %v112
  %v114 = vmul.f32 %v113, %v113
  %115 = vadd.xlane.f32.xlu0 %v114
  %v116 = vpop.xlane.xlu0 %115
  %v117 = vmul.f32 %v116, %v111
  %v118 = vadd.f32 %v117, 1e-05
  %v119 = vrsqrt.pop %v118
  %v120 = vmul.f32 %v113, %v119
  %v121 = vmul.f32 %v120, %v15
  %s122 = scalar_lea.vmem %s0, 96
  %v123 = vld [vmem:[%s122] sm:$0xf]
  %v124 = vld [vmem:[%s122 + $0x4] sm:$0xf]
  %v125 = vld [vmem:[%s122 + $0x8] sm:$0xf]
  %v126 = vld [vmem:[%s122 + $0xc] sm:$0xf]
  %v127 = vld [vmem:[%s122 + $0x10] sm:$0xf]
  %v128 = vld [vmem:[%s122 + $0x14] sm:$0xf]
  %v129 = vunpack.c.l.bf16 %v123
  %v130 = vunpack.c.l.bf16 %v124
  %v131 = vunpack.c.l.bf16 %v125
  %v132 = vunpack.c.l.bf16 %v126
  %v133 = vunpack.c.l.bf16 %v127
  %v134 = vunpack.c.l.bf16 %v128
  %135 = vmatprep.subr.mxu0 0.0
  %136 = vmatpush1.msra.mxu0 0.0
  %137 = vmatprep.subr.mxu0 0.0
  %138 = vmatpush1.msra.mxu0 0.0
  %139 = vmatprep.subr.mxu0 0.0
  %140 = vmatpush1.msra.mxu0 0.0
  %141 = vmatprep.subr.mxu0 0.0
  %142 = vmatpush1.msra.mxu0 0.0
  %143 = vmatprep.subr.mxu0 0.0
  %144 = vmatpush1.msra.mxu0 0.0
  %145 = vmatprep.subr.mxu0 0.0
  %146 = vmatpush1.msra.mxu0 0.0
  %147 = vmatprep.subr.mxu0 0.0
  %148 = vmatpush1.msra.mxu0 0.0
  %149 = vmatprep.subr.mxu0 0.0
  %150 = vmatpush1.msra.mxu0 0.0
  %151 = vmatprep.subr.mxu0 0.0
  %152 = vmatpush1.msra.mxu0 0.0
  %153 = vmatprep.subr.mxu0 0.0
  %154 = vmatpush1.msra.mxu0 0.0
  %155 = vmatprep.subr.mxu0 0.0
  %156 = vmatpush1.msra.mxu0 %v134
  %157 = vmatprep.subr.mxu0 0.0
  %158 = vmatpush1.msra.mxu0 %v133
  %159 = vmatprep.subr.mxu0 0.0
  %160 = vmatpush1.msra.mxu0 %v132
  %161 = vmatprep.subr.mxu0 0.0
  %162 = vmatpush1.msra.mxu0 %v131
  %163 = vmatprep.subr.mxu0 0.0
  %164 = vmatpush1.msra.mxu0 %v130
  %165 = vmatprep.subr.mxu0 0.0
  %166 = vmatpush1.msra.mxu0 %v129
  %167 = vmatprep.subr.mxu0 0.0
  %168 = vmatpush2.msra.mxu0 0.0
  %169 = vmatprep.subr.mxu0 0.0
  %170 = vmatpush2.msra.mxu0 0.0
  %171 = vmatprep.subr.mxu0 0.0
  %172 = vmatpush2.msra.mxu0 0.0
  %173 = vmatprep.subr.mxu0 0.0
  %174 = vmatpush2.msra.mxu0 0.0
  %175 = vmatprep.subr.mxu0 0.0
  %176 = vmatpush2.msra.mxu0 0.0
  %177 = vmatprep.subr.mxu0 0.0
  %178 = vmatpush2.msra.mxu0 0.0
  %179 = vmatprep.subr.mxu0 0.0
  %180 = vmatpush2.msra.mxu0 0.0
  %181 = vmatprep.subr.mxu0 0.0
  %182 = vmatpush2.msra.mxu0 0.0
  %183 = vmatprep.subr.mxu0 0.0
  %184 = vmatpush2.msra.mxu0 0.0
  %185 = vmatprep.subr.mxu0 0.0
  %186 = vmatpush2.msra.mxu0 0.0
  %187 = vmatprep.subr.mxu0 0.0
  %188 = vmatpush2.msra.mxu0 0.0
  %189 = vmatprep.subr.mxu0 0.0
  %190 = vmatpush2.msra.mxu0 0.0
  %191 = vmatprep.subr.mxu0 0.0
  %192 = vmatpush2.msra.mxu0 0.0
  %193 = vmatprep.subr.mxu0 0.0
  %194 = vmatpush2.msra.mxu0 0.0
  %195 = vmatprep.subr.mxu0 0.0
  %196 = vmatpush2.msra.mxu0 0.0
  %197 = vmatprep.subr.mxu0 0.0
  %198 = vmatpush2.msra.mxu0 0.0
  %199 = vmatprep.mubr.f32.mxu0 0.0
  %200 = vmatmul.mubr.f32.gmra.mxu0 %v30
  %v201 = vpop.f32.mrf.mxu0
  %v202 = vadd.f32 0.0, %v201
  %v203 = vpop.f32.mrf.mxu0
  %204 = vdwg.mxu0
  %v205 = vxor.u32 %v202, 2147483648
  %v206 = vmul.f32 %v205, 1.442695
  %v207 = vpow.pop %v206
  %v208 = vadd.f32 %v207, 1.0
  %v209 = vrcp.pop %v208
  %v210 = vmul.f32 1.0, %v209
  %v211 = vmul.f32 %v202, %v210
  %212 = vadd.xlane.f32.xlu0 %v211
  %v213 = vpop.xlane.xlu0 %212
  %v214 = vmul.f32 %v213, %v111
  %v215 = vsub.f32 %v211, %v214
  %v216 = vmul.f32 %v215, %v215
  %217 = vadd.xlane.f32.xlu0 %v216
  %v218 = vpop.xlane.xlu0 %217
  %v219 = vmul.f32 %v218, %v111
  %v220 = vadd.f32 %v219, 1e-05
  %v221 = vrsqrt.pop %v220
  %v222 = vmul.f32 %v215, %v221
  %v223 = vmul.f32 %v222, %v15
  %v224 = vadd.f32 %v121, %v223
  %v225 = vmul.f32 %v224, 0.5
  %226 = vst [vmem:[%s3] sm:$0xff] %v225
  %s227 = scalar_lea.vmem %s2, 8
  %v228 = vld [vmem:[%s227] sm:$0xff]
  %s229 = scalar_lea.vmem %s0, 24
  %v230 = vld [vmem:[%s229] sm:$0xf]
  %v231 = vld [vmem:[%s229 + $0x4] sm:$0xf]
  %v232 = vld [vmem:[%s229 + $0x8] sm:$0xf]
  %v233 = vld [vmem:[%s229 + $0xc] sm:$0xf]
  %v234 = vld [vmem:[%s229 + $0x10] sm:$0xf]
  %v235 = vld [vmem:[%s229 + $0x14] sm:$0xf]
  %v236 = vunpack.c.l.bf16 %v230
  %v237 = vunpack.c.l.bf16 %v231
  %v238 = vunpack.c.l.bf16 %v232
  %v239 = vunpack.c.l.bf16 %v233
  %v240 = vunpack.c.l.bf16 %v234
  %v241 = vunpack.c.l.bf16 %v235
  %242 = vmatprep.subr.mxu0 0.0
  %243 = vmatpush1.msra.mxu0 0.0
  %244 = vmatprep.subr.mxu0 0.0
  %245 = vmatpush1.msra.mxu0 0.0
  %246 = vmatprep.subr.mxu0 0.0
  %247 = vmatpush1.msra.mxu0 0.0
  %248 = vmatprep.subr.mxu0 0.0
  %249 = vmatpush1.msra.mxu0 0.0
  %250 = vmatprep.subr.mxu0 0.0
  %251 = vmatpush1.msra.mxu0 0.0
  %252 = vmatprep.subr.mxu0 0.0
  %253 = vmatpush1.msra.mxu0 0.0
  %254 = vmatprep.subr.mxu0 0.0
  %255 = vmatpush1.msra.mxu0 0.0
  %256 = vmatprep.subr.mxu0 0.0
  %257 = vmatpush1.msra.mxu0 0.0
  %258 = vmatprep.subr.mxu0 0.0
  %259 = vmatpush1.msra.mxu0 0.0
  %260 = vmatprep.subr.mxu0 0.0
  %261 = vmatpush1.msra.mxu0 0.0
  %262 = vmatprep.subr.mxu0 0.0
  %263 = vmatpush1.msra.mxu0 %v241
  %264 = vmatprep.subr.mxu0 0.0
  %265 = vmatpush1.msra.mxu0 %v240
  %266 = vmatprep.subr.mxu0 0.0
  %267 = vmatpush1.msra.mxu0 %v239
  %268 = vmatprep.subr.mxu0 0.0
  %269 = vmatpush1.msra.mxu0 %v238
  %270 = vmatprep.subr.mxu0 0.0
  %271 = vmatpush1.msra.mxu0 %v237
  %272 = vmatprep.subr.mxu0 0.0
  %273 = vmatpush1.msra.mxu0 %v236
  %274 = vmatprep.subr.mxu0 0.0
  %275 = vmatpush2.msra.mxu0 0.0
  %276 = vmatprep.subr.mxu0 0.0
  %277 = vmatpush2.msra.mxu0 0.0
  %278 = vmatprep.subr.mxu0 0.0
  %279 = vmatpush2.msra.mxu0 0.0
  %280 = vmatprep.subr.mxu0 0.0
  %281 = vmatpush2.msra.mxu0 0.0
  %282 = vmatprep.subr.mxu0 0.0
  %283 = vmatpush2.msra.mxu0 0.0
  %284 = vmatprep.subr.mxu0 0.0
  %285 = vmatpush2.msra.mxu0 0.0
  %286 = vmatprep.subr.mxu0 0.0
  %287 = vmatpush2.msra.mxu0 0.0
  %288 = vmatprep.subr.mxu0 0.0
  %289 = vmatpush2.msra.mxu0 0.0
  %290 = vmatprep.subr.mxu0 0.0
  %291 = vmatpush2.msra.mxu0 0.0
  %292 = vmatprep.subr.mxu0 0.0
  %293 = vmatpush2.msra.mxu0 0.0
  %294 = vmatprep.subr.mxu0 0.0
  %295 = vmatpush2.msra.mxu0 0.0
  %296 = vmatprep.subr.mxu0 0.0
  %297 = vmatpush2.msra.mxu0 0.0
  %298 = vmatprep.subr.mxu0 0.0
  %299 = vmatpush2.msra.mxu0 0.0
  %300 = vmatprep.subr.mxu0 0.0
  %301 = vmatpush2.msra.mxu0 0.0
  %302 = vmatprep.subr.mxu0 0.0
  %303 = vmatpush2.msra.mxu0 0.0
  %304 = vmatprep.subr.mxu0 0.0
  %305 = vmatpush2.msra.mxu0 0.0
  %306 = vmatprep.mubr.f32.mxu0 0.0
  %307 = vmatmul.mubr.f32.gmra.mxu0 %v30
  %v308 = vpop.f32.mrf.mxu0
  %v309 = vadd.f32 0.0, %v308
  %v310 = vpop.f32.mrf.mxu0
  %311 = vdwg.mxu0
  %v312 = vxor.u32 %v309, 2147483648
  %v313 = vmul.f32 %v312, 1.442695
  %v314 = vpow.pop %v313
  %v315 = vadd.f32 %v314, 1.0
  %v316 = vrcp.pop %v315
  %v317 = vmul.f32 1.0, %v316
  %v318 = vmul.f32 %v309, %v317
  %319 = vadd.xlane.f32.xlu0 %v318
  %v320 = vpop.xlane.xlu0 %319
  %v321 = vmul.f32 %v320, %v111
  %v322 = vsub.f32 %v318, %v321
  %v323 = vmul.f32 %v322, %v322
  %324 = vadd.xlane.f32.xlu0 %v323
  %v325 = vpop.xlane.xlu0 %324
  %v326 = vmul.f32 %v325, %v111
  %v327 = vadd.f32 %v326, 1e-05
  %v328 = vrsqrt.pop %v327
  %v329 = vmul.f32 %v322, %v328
  %v330 = vmul.f32 %v329, %v228
  %s331 = scalar_lea.vmem %s0, 120
  %v332 = vld [vmem:[%s331] sm:$0xf]
  %v333 = vld [vmem:[%s331 + $0x4] sm:$0xf]
  %v334 = vld [vmem:[%s331 + $0x8] sm:$0xf]
  %v335 = vld [vmem:[%s331 + $0xc] sm:$0xf]
  %v336 = vld [vmem:[%s331 + $0x10] sm:$0xf]
  %v337 = vld [vmem:[%s331 + $0x14] sm:$0xf]
  %v338 = vunpack.c.l.bf16 %v332
  %v339 = vunpack.c.l.bf16 %v333
  %v340 = vunpack.c.l.bf16 %v334
  %v341 = vunpack.c.l.bf16 %v335
  %v342 = vunpack.c.l.bf16 %v336
  %v343 = vunpack.c.l.bf16 %v337
  %344 = vmatprep.subr.mxu0 0.0
  %345 = vmatpush1.msra.mxu0 0.0
  %346 = vmatprep.subr.mxu0 0.0
  %347 = vmatpush1.msra.mxu0 0.0
  %348 = vmatprep.subr.mxu0 0.0
  %349 = vmatpush1.msra.mxu0 0.0
  %350 = vmatprep.subr.mxu0 0.0
  %351 = vmatpush1.msra.mxu0 0.0
  %352 = vmatprep.subr.mxu0 0.0
  %353 = vmatpush1.msra.mxu0 0.0
  %354 = vmatprep.subr.mxu0 0.0
  %355 = vmatpush1.msra.mxu0 0.0
  %356 = vmatprep.subr.mxu0 0.0
  %357 = vmatpush1.msra.mxu0 0.0
  %358 = vmatprep.subr.mxu0 0.0
  %359 = vmatpush1.msra.mxu0 0.0
  %360 = vmatprep.subr.mxu0 0.0
  %361 = vmatpush1.msra.mxu0 0.0
  %362 = vmatprep.subr.mxu0 0.0
  %363 = vmatpush1.msra.mxu0 0.0
  %364 = vmatprep.subr.mxu0 0.0
  %365 = vmatpush1.msra.mxu0 %v343
  %366 = vmatprep.subr.mxu0 0.0
  %367 = vmatpush1.msra.mxu0 %v342
  %368 = vmatprep.subr.mxu0 0.0
  %369 = vmatpush1.msra.mxu0 %v341
  %370 = vmatprep.subr.mxu0 0.0
  %371 = vmatpush1.msra.mxu0 %v340
  %372 = vmatprep.subr.mxu0 0.0
  %373 = vmatpush1.msra.mxu0 %v339
  %374 = vmatprep.subr.mxu0 0.0
  %375 = vmatpush1.msra.mxu0 %v338
  %376 = vmatprep.subr.mxu0 0.0
  %377 = vmatpush2.msra.mxu0 0.0
  %378 = vmatprep.subr.mxu0 0.0
  %379 = vmatpush2.msra.mxu0 0.0
  %380 = vmatprep.subr.mxu0 0.0
  %381 = vmatpush2.msra.mxu0 0.0
  %382 = vmatprep.subr.mxu0 0.0
  %383 = vmatpush2.msra.mxu0 0.0
  %384 = vmatprep.subr.mxu0 0.0
  %385 = vmatpush2.msra.mxu0 0.0
  %386 = vmatprep.subr.mxu0 0.0
  %387 = vmatpush2.msra.mxu0 0.0
  %388 = vmatprep.subr.mxu0 0.0
  %389 = vmatpush2.msra.mxu0 0.0
  %390 = vmatprep.subr.mxu0 0.0
  %391 = vmatpush2.msra.mxu0 0.0
  %392 = vmatprep.subr.mxu0 0.0
  %393 = vmatpush2.msra.mxu0 0.0
  %394 = vmatprep.subr.mxu0 0.0
  %395 = vmatpush2.msra.mxu0 0.0
  %396 = vmatprep.subr.mxu0 0.0
  %397 = vmatpush2.msra.mxu0 0.0
  %398 = vmatprep.subr.mxu0 0.0
  %399 = vmatpush2.msra.mxu0 0.0
  %400 = vmatprep.subr.mxu0 0.0
  %401 = vmatpush2.msra.mxu0 0.0
  %402 = vmatprep.subr.mxu0 0.0
  %403 = vmatpush2.msra.mxu0 0.0
  %404 = vmatprep.subr.mxu0 0.0
  %405 = vmatpush2.msra.mxu0 0.0
  %406 = vmatprep.subr.mxu0 0.0
  %407 = vmatpush2.msra.mxu0 0.0
  %408 = vmatprep.mubr.f32.mxu0 0.0
  %409 = vmatmul.mubr.f32.gmra.mxu0 %v30
  %v410 = vpop.f32.mrf.mxu0
  %v411 = vadd.f32 0.0, %v410
  %v412 = vpop.f32.mrf.mxu0
  %413 = vdwg.mxu0
  %v414 = vxor.u32 %v411, 2147483648
  %v415 = vmul.f32 %v414, 1.442695
  %v416 = vpow.pop %v415
  %v417 = vadd.f32 %v416, 1.0
  %v418 = vrcp.pop %v417
  %v419 = vmul.f32 1.0, %v418
  %v420 = vmul.f32 %v411, %v419
  %421 = vadd.xlane.f32.xlu0 %v420
  %v422 = vpop.xlane.xlu0 %421
  %v423 = vmul.f32 %v422, %v111
  %v424 = vsub.f32 %v420, %v423
  %v425 = vmul.f32 %v424, %v424
  %426 = vadd.xlane.f32.xlu0 %v425
  %v427 = vpop.xlane.xlu0 %426
  %v428 = vmul.f32 %v427, %v111
  %v429 = vadd.f32 %v428, 1e-05
  %v430 = vrsqrt.pop %v429
  %v431 = vmul.f32 %v424, %v430
  %v432 = vmul.f32 %v431, %v228
  %v433 = vadd.f32 %v330, %v432
  %v434 = vmul.f32 %v433, 0.5
  %s435 = scalar_lea.vmem %s3, 8
  %436 = vst [vmem:[%s435] sm:$0xff] %v434
  %s437 = scalar_lea.vmem %s2, 16
  %v438 = vld [vmem:[%s437] sm:$0xff]
  %s439 = scalar_lea.vmem %s0, 48
  %v440 = vld [vmem:[%s439] sm:$0xf]
  %v441 = vld [vmem:[%s439 + $0x4] sm:$0xf]
  %v442 = vld [vmem:[%s439 + $0x8] sm:$0xf]
  %v443 = vld [vmem:[%s439 + $0xc] sm:$0xf]
  %v444 = vld [vmem:[%s439 + $0x10] sm:$0xf]
  %v445 = vld [vmem:[%s439 + $0x14] sm:$0xf]
  %v446 = vunpack.c.l.bf16 %v440
  %v447 = vunpack.c.l.bf16 %v441
  %v448 = vunpack.c.l.bf16 %v442
  %v449 = vunpack.c.l.bf16 %v443
  %v450 = vunpack.c.l.bf16 %v444
  %v451 = vunpack.c.l.bf16 %v445
  %452 = vmatprep.subr.mxu0 0.0
  %453 = vmatpush1.msra.mxu0 0.0
  %454 = vmatprep.subr.mxu0 0.0
  %455 = vmatpush1.msra.mxu0 0.0
  %456 = vmatprep.subr.mxu0 0.0
  %457 = vmatpush1.msra.mxu0 0.0
  %458 = vmatprep.subr.mxu0 0.0
  %459 = vmatpush1.msra.mxu0 0.0
  %460 = vmatprep.subr.mxu0 0.0
  %461 = vmatpush1.msra.mxu0 0.0
  %462 = vmatprep.subr.mxu0 0.0
  %463 = vmatpush1.msra.mxu0 0.0
  %464 = vmatprep.subr.mxu0 0.0
  %465 = vmatpush1.msra.mxu0 0.0
  %466 = vmatprep.subr.mxu0 0.0
  %467 = vmatpush1.msra.mxu0 0.0
  %468 = vmatprep.subr.mxu0 0.0
  %469 = vmatpush1.msra.mxu0 0.0
  %470 = vmatprep.subr.mxu0 0.0
  %471 = vmatpush1.msra.mxu0 0.0
  %472 = vmatprep.subr.mxu0 0.0
  %473 = vmatpush1.msra.mxu0 %v451
  %474 = vmatprep.subr.mxu0 0.0
  %475 = vmatpush1.msra.mxu0 %v450
  %476 = vmatprep.subr.mxu0 0.0
  %477 = vmatpush1.msra.mxu0 %v449
  %478 = vmatprep.subr.mxu0 0.0
  %479 = vmatpush1.msra.mxu0 %v448
  %480 = vmatprep.subr.mxu0 0.0
  %481 = vmatpush1.msra.mxu0 %v447
  %482 = vmatprep.subr.mxu0 0.0
  %483 = vmatpush1.msra.mxu0 %v446
  %484 = vmatprep.subr.mxu0 0.0
  %485 = vmatpush2.msra.mxu0 0.0
  %486 = vmatprep.subr.mxu0 0.0
  %487 = vmatpush2.msra.mxu0 0.0
  %488 = vmatprep.subr.mxu0 0.0
  %489 = vmatpush2.msra.mxu0 0.0
  %490 = vmatprep.subr.mxu0 0.0
  %491 = vmatpush2.msra.mxu0 0.0
  %492 = vmatprep.subr.mxu0 0.0
  %493 = vmatpush2.msra.mxu0 0.0
  %494 = vmatprep.subr.mxu0 0.0
  %495 = vmatpush2.msra.mxu0 0.0
  %496 = vmatprep.subr.mxu0 0.0
  %497 = vmatpush2.msra.mxu0 0.0
  %498 = vmatprep.subr.mxu0 0.0
  %499 = vmatpush2.msra.mxu0 0.0
  %500 = vmatprep.subr.mxu0 0.0
  %501 = vmatpush2.msra.mxu0 0.0
  %502 = vmatprep.subr.mxu0 0.0
  %503 = vmatpush2.msra.mxu0 0.0
  %504 = vmatprep.subr.mxu0 0.0
  %505 = vmatpush2.msra.mxu0 0.0
  %506 = vmatprep.subr.mxu0 0.0
  %507 = vmatpush2.msra.mxu0 0.0
  %508 = vmatprep.subr.mxu0 0.0
  %509 = vmatpush2.msra.mxu0 0.0
  %510 = vmatprep.subr.mxu0 0.0
  %511 = vmatpush2.msra.mxu0 0.0
  %512 = vmatprep.subr.mxu0 0.0
  %513 = vmatpush2.msra.mxu0 0.0
  %514 = vmatprep.subr.mxu0 0.0
  %515 = vmatpush2.msra.mxu0 0.0
  %516 = vmatprep.mubr.f32.mxu0 0.0
  %517 = vmatmul.mubr.f32.gmra.mxu0 %v30
  %v518 = vpop.f32.mrf.mxu0
  %v519 = vadd.f32 0.0, %v518
  %v520 = vpop.f32.mrf.mxu0
  %521 = vdwg.mxu0
  %v522 = vxor.u32 %v519, 2147483648
  %v523 = vmul.f32 %v522, 1.442695
  %v524 = vpow.pop %v523
  %v525 = vadd.f32 %v524, 1.0
  %v526 = vrcp.pop %v525
  %v527 = vmul.f32 1.0, %v526
  %v528 = vmul.f32 %v519, %v527
  %529 = vadd.xlane.f32.xlu0 %v528
  %v530 = vpop.xlane.xlu0 %529
  %v531 = vmul.f32 %v530, %v111
  %v532 = vsub.f32 %v528, %v531
  %v533 = vmul.f32 %v532, %v532
  %534 = vadd.xlane.f32.xlu0 %v533
  %v535 = vpop.xlane.xlu0 %534
  %v536 = vmul.f32 %v535, %v111
  %v537 = vadd.f32 %v536, 1e-05
  %v538 = vrsqrt.pop %v537
  %v539 = vmul.f32 %v532, %v538
  %v540 = vmul.f32 %v539, %v438
  %s541 = scalar_lea.vmem %s0, 144
  %v542 = vld [vmem:[%s541] sm:$0xf]
  %v543 = vld [vmem:[%s541 + $0x4] sm:$0xf]
  %v544 = vld [vmem:[%s541 + $0x8] sm:$0xf]
  %v545 = vld [vmem:[%s541 + $0xc] sm:$0xf]
  %v546 = vld [vmem:[%s541 + $0x10] sm:$0xf]
  %v547 = vld [vmem:[%s541 + $0x14] sm:$0xf]
  %v548 = vunpack.c.l.bf16 %v542
  %v549 = vunpack.c.l.bf16 %v543
  %v550 = vunpack.c.l.bf16 %v544
  %v551 = vunpack.c.l.bf16 %v545
  %v552 = vunpack.c.l.bf16 %v546
  %v553 = vunpack.c.l.bf16 %v547
  %554 = vmatprep.subr.mxu0 0.0
  %555 = vmatpush1.msra.mxu0 0.0
  %556 = vmatprep.subr.mxu0 0.0
  %557 = vmatpush1.msra.mxu0 0.0
  %558 = vmatprep.subr.mxu0 0.0
  %559 = vmatpush1.msra.mxu0 0.0
  %560 = vmatprep.subr.mxu0 0.0
  %561 = vmatpush1.msra.mxu0 0.0
  %562 = vmatprep.subr.mxu0 0.0
  %563 = vmatpush1.msra.mxu0 0.0
  %564 = vmatprep.subr.mxu0 0.0
  %565 = vmatpush1.msra.mxu0 0.0
  %566 = vmatprep.subr.mxu0 0.0
  %567 = vmatpush1.msra.mxu0 0.0
  %568 = vmatprep.subr.mxu0 0.0
  %569 = vmatpush1.msra.mxu0 0.0
  %570 = vmatprep.subr.mxu0 0.0
  %571 = vmatpush1.msra.mxu0 0.0
  %572 = vmatprep.subr.mxu0 0.0
  %573 = vmatpush1.msra.mxu0 0.0
  %574 = vmatprep.subr.mxu0 0.0
  %575 = vmatpush1.msra.mxu0 %v553
  %576 = vmatprep.subr.mxu0 0.0
  %577 = vmatpush1.msra.mxu0 %v552
  %578 = vmatprep.subr.mxu0 0.0
  %579 = vmatpush1.msra.mxu0 %v551
  %580 = vmatprep.subr.mxu0 0.0
  %581 = vmatpush1.msra.mxu0 %v550
  %582 = vmatprep.subr.mxu0 0.0
  %583 = vmatpush1.msra.mxu0 %v549
  %584 = vmatprep.subr.mxu0 0.0
  %585 = vmatpush1.msra.mxu0 %v548
  %586 = vmatprep.subr.mxu0 0.0
  %587 = vmatpush2.msra.mxu0 0.0
  %588 = vmatprep.subr.mxu0 0.0
  %589 = vmatpush2.msra.mxu0 0.0
  %590 = vmatprep.subr.mxu0 0.0
  %591 = vmatpush2.msra.mxu0 0.0
  %592 = vmatprep.subr.mxu0 0.0
  %593 = vmatpush2.msra.mxu0 0.0
  %594 = vmatprep.subr.mxu0 0.0
  %595 = vmatpush2.msra.mxu0 0.0
  %596 = vmatprep.subr.mxu0 0.0
  %597 = vmatpush2.msra.mxu0 0.0
  %598 = vmatprep.subr.mxu0 0.0
  %599 = vmatpush2.msra.mxu0 0.0
  %600 = vmatprep.subr.mxu0 0.0
  %601 = vmatpush2.msra.mxu0 0.0
  %602 = vmatprep.subr.mxu0 0.0
  %603 = vmatpush2.msra.mxu0 0.0
  %604 = vmatprep.subr.mxu0 0.0
  %605 = vmatpush2.msra.mxu0 0.0
  %606 = vmatprep.subr.mxu0 0.0
  %607 = vmatpush2.msra.mxu0 0.0
  %608 = vmatprep.subr.mxu0 0.0
  %609 = vmatpush2.msra.mxu0 0.0
  %610 = vmatprep.subr.mxu0 0.0
  %611 = vmatpush2.msra.mxu0 0.0
  %612 = vmatprep.subr.mxu0 0.0
  %613 = vmatpush2.msra.mxu0 0.0
  %614 = vmatprep.subr.mxu0 0.0
  %615 = vmatpush2.msra.mxu0 0.0
  %616 = vmatprep.subr.mxu0 0.0
  %617 = vmatpush2.msra.mxu0 0.0
  %618 = vmatprep.mubr.f32.mxu0 0.0
  %619 = vmatmul.mubr.f32.gmra.mxu0 %v30
  %v620 = vpop.f32.mrf.mxu0
  %v621 = vadd.f32 0.0, %v620
  %v622 = vpop.f32.mrf.mxu0
  %623 = vdwg.mxu0
  %v624 = vxor.u32 %v621, 2147483648
  %v625 = vmul.f32 %v624, 1.442695
  %v626 = vpow.pop %v625
  %v627 = vadd.f32 %v626, 1.0
  %v628 = vrcp.pop %v627
  %v629 = vmul.f32 1.0, %v628
  %v630 = vmul.f32 %v621, %v629
  %631 = vadd.xlane.f32.xlu0 %v630
  %v632 = vpop.xlane.xlu0 %631
  %v633 = vmul.f32 %v632, %v111
  %v634 = vsub.f32 %v630, %v633
  %v635 = vmul.f32 %v634, %v634
  %636 = vadd.xlane.f32.xlu0 %v635
  %v637 = vpop.xlane.xlu0 %636
  %v638 = vmul.f32 %v637, %v111
  %v639 = vadd.f32 %v638, 1e-05
  %v640 = vrsqrt.pop %v639
  %v641 = vmul.f32 %v634, %v640
  %v642 = vmul.f32 %v641, %v438
  %v643 = vadd.f32 %v540, %v642
  %v644 = vmul.f32 %v643, 0.5
  %s645 = scalar_lea.vmem %s3, 16
  %646 = vst [vmem:[%s645] sm:$0xff] %v644
  %s647 = scalar_lea.vmem %s2, 24
  %v648 = vld [vmem:[%s647] sm:$0xff]
  %s649 = scalar_lea.vmem %s0, 72
  %v650 = vld [vmem:[%s649] sm:$0xf]
  %v651 = vld [vmem:[%s649 + $0x4] sm:$0xf]
  %v652 = vld [vmem:[%s649 + $0x8] sm:$0xf]
  %v653 = vld [vmem:[%s649 + $0xc] sm:$0xf]
  %v654 = vld [vmem:[%s649 + $0x10] sm:$0xf]
  %v655 = vld [vmem:[%s649 + $0x14] sm:$0xf]
  %v656 = vunpack.c.l.bf16 %v650
  %v657 = vunpack.c.l.bf16 %v651
  %v658 = vunpack.c.l.bf16 %v652
  %v659 = vunpack.c.l.bf16 %v653
  %v660 = vunpack.c.l.bf16 %v654
  %v661 = vunpack.c.l.bf16 %v655
  %662 = vmatprep.subr.mxu0 0.0
  %663 = vmatpush1.msra.mxu0 0.0
  %664 = vmatprep.subr.mxu0 0.0
  %665 = vmatpush1.msra.mxu0 0.0
  %666 = vmatprep.subr.mxu0 0.0
  %667 = vmatpush1.msra.mxu0 0.0
  %668 = vmatprep.subr.mxu0 0.0
  %669 = vmatpush1.msra.mxu0 0.0
  %670 = vmatprep.subr.mxu0 0.0
  %671 = vmatpush1.msra.mxu0 0.0
  %672 = vmatprep.subr.mxu0 0.0
  %673 = vmatpush1.msra.mxu0 0.0
  %674 = vmatprep.subr.mxu0 0.0
  %675 = vmatpush1.msra.mxu0 0.0
  %676 = vmatprep.subr.mxu0 0.0
  %677 = vmatpush1.msra.mxu0 0.0
  %678 = vmatprep.subr.mxu0 0.0
  %679 = vmatpush1.msra.mxu0 0.0
  %680 = vmatprep.subr.mxu0 0.0
  %681 = vmatpush1.msra.mxu0 0.0
  %682 = vmatprep.subr.mxu0 0.0
  %683 = vmatpush1.msra.mxu0 %v661
  %684 = vmatprep.subr.mxu0 0.0
  %685 = vmatpush1.msra.mxu0 %v660
  %686 = vmatprep.subr.mxu0 0.0
  %687 = vmatpush1.msra.mxu0 %v659
  %688 = vmatprep.subr.mxu0 0.0
  %689 = vmatpush1.msra.mxu0 %v658
  %690 = vmatprep.subr.mxu0 0.0
  %691 = vmatpush1.msra.mxu0 %v657
  %692 = vmatprep.subr.mxu0 0.0
  %693 = vmatpush1.msra.mxu0 %v656
  %694 = vmatprep.subr.mxu0 0.0
  %695 = vmatpush2.msra.mxu0 0.0
  %696 = vmatprep.subr.mxu0 0.0
  %697 = vmatpush2.msra.mxu0 0.0
  %698 = vmatprep.subr.mxu0 0.0
  %699 = vmatpush2.msra.mxu0 0.0
  %700 = vmatprep.subr.mxu0 0.0
  %701 = vmatpush2.msra.mxu0 0.0
  %702 = vmatprep.subr.mxu0 0.0
  %703 = vmatpush2.msra.mxu0 0.0
  %704 = vmatprep.subr.mxu0 0.0
  %705 = vmatpush2.msra.mxu0 0.0
  %706 = vmatprep.subr.mxu0 0.0
  %707 = vmatpush2.msra.mxu0 0.0
  %708 = vmatprep.subr.mxu0 0.0
  %709 = vmatpush2.msra.mxu0 0.0
  %710 = vmatprep.subr.mxu0 0.0
  %711 = vmatpush2.msra.mxu0 0.0
  %712 = vmatprep.subr.mxu0 0.0
  %713 = vmatpush2.msra.mxu0 0.0
  %714 = vmatprep.subr.mxu0 0.0
  %715 = vmatpush2.msra.mxu0 0.0
  %716 = vmatprep.subr.mxu0 0.0
  %717 = vmatpush2.msra.mxu0 0.0
  %718 = vmatprep.subr.mxu0 0.0
  %719 = vmatpush2.msra.mxu0 0.0
  %720 = vmatprep.subr.mxu0 0.0
  %721 = vmatpush2.msra.mxu0 0.0
  %722 = vmatprep.subr.mxu0 0.0
  %723 = vmatpush2.msra.mxu0 0.0
  %724 = vmatprep.subr.mxu0 0.0
  %725 = vmatpush2.msra.mxu0 0.0
  %726 = vmatprep.mubr.f32.mxu0 0.0
  %727 = vmatmul.mubr.f32.gmra.mxu0 %v30
  %v728 = vpop.f32.mrf.mxu0
  %v729 = vadd.f32 0.0, %v728
  %v730 = vpop.f32.mrf.mxu0
  %731 = vdwg.mxu0
  %v732 = vxor.u32 %v729, 2147483648
  %v733 = vmul.f32 %v732, 1.442695
  %v734 = vpow.pop %v733
  %v735 = vadd.f32 %v734, 1.0
  %v736 = vrcp.pop %v735
  %v737 = vmul.f32 1.0, %v736
  %v738 = vmul.f32 %v729, %v737
  %739 = vadd.xlane.f32.xlu0 %v738
  %v740 = vpop.xlane.xlu0 %739
  %v741 = vmul.f32 %v740, %v111
  %v742 = vsub.f32 %v738, %v741
  %v743 = vmul.f32 %v742, %v742
  %744 = vadd.xlane.f32.xlu0 %v743
  %v745 = vpop.xlane.xlu0 %744
  %v746 = vmul.f32 %v745, %v111
  %v747 = vadd.f32 %v746, 1e-05
  %v748 = vrsqrt.pop %v747
  %v749 = vmul.f32 %v742, %v748
  %v750 = vmul.f32 %v749, %v648
  %s751 = scalar_lea.vmem %s0, 168
  %v752 = vld [vmem:[%s751] sm:$0xf]
  %v753 = vld [vmem:[%s751 + $0x4] sm:$0xf]
  %v754 = vld [vmem:[%s751 + $0x8] sm:$0xf]
  %v755 = vld [vmem:[%s751 + $0xc] sm:$0xf]
  %v756 = vld [vmem:[%s751 + $0x10] sm:$0xf]
  %v757 = vld [vmem:[%s751 + $0x14] sm:$0xf]
  %v758 = vunpack.c.l.bf16 %v752
  %v759 = vunpack.c.l.bf16 %v753
  %v760 = vunpack.c.l.bf16 %v754
  %v761 = vunpack.c.l.bf16 %v755
  %v762 = vunpack.c.l.bf16 %v756
  %v763 = vunpack.c.l.bf16 %v757
  %764 = vmatprep.subr.mxu0 0.0
  %765 = vmatpush1.msra.mxu0 0.0
  %766 = vmatprep.subr.mxu0 0.0
  %767 = vmatpush1.msra.mxu0 0.0
  %768 = vmatprep.subr.mxu0 0.0
  %769 = vmatpush1.msra.mxu0 0.0
  %770 = vmatprep.subr.mxu0 0.0
  %771 = vmatpush1.msra.mxu0 0.0
  %772 = vmatprep.subr.mxu0 0.0
  %773 = vmatpush1.msra.mxu0 0.0
  %774 = vmatprep.subr.mxu0 0.0
  %775 = vmatpush1.msra.mxu0 0.0
  %776 = vmatprep.subr.mxu0 0.0
  %777 = vmatpush1.msra.mxu0 0.0
  %778 = vmatprep.subr.mxu0 0.0
  %779 = vmatpush1.msra.mxu0 0.0
  %780 = vmatprep.subr.mxu0 0.0
  %781 = vmatpush1.msra.mxu0 0.0
  %782 = vmatprep.subr.mxu0 0.0
  %783 = vmatpush1.msra.mxu0 0.0
  %784 = vmatprep.subr.mxu0 0.0
  %785 = vmatpush1.msra.mxu0 %v763
  %786 = vmatprep.subr.mxu0 0.0
  %787 = vmatpush1.msra.mxu0 %v762
  %788 = vmatprep.subr.mxu0 0.0
  %789 = vmatpush1.msra.mxu0 %v761
  %790 = vmatprep.subr.mxu0 0.0
  %791 = vmatpush1.msra.mxu0 %v760
  %792 = vmatprep.subr.mxu0 0.0
  %793 = vmatpush1.msra.mxu0 %v759
  %794 = vmatprep.subr.mxu0 0.0
  %795 = vmatpush1.msra.mxu0 %v758
  %796 = vmatprep.subr.mxu0 0.0
  %797 = vmatpush2.msra.mxu0 0.0
  %798 = vmatprep.subr.mxu0 0.0
  %799 = vmatpush2.msra.mxu0 0.0
  %800 = vmatprep.subr.mxu0 0.0
  %801 = vmatpush2.msra.mxu0 0.0
  %802 = vmatprep.subr.mxu0 0.0
  %803 = vmatpush2.msra.mxu0 0.0
  %804 = vmatprep.subr.mxu0 0.0
  %805 = vmatpush2.msra.mxu0 0.0
  %806 = vmatprep.subr.mxu0 0.0
  %807 = vmatpush2.msra.mxu0 0.0
  %808 = vmatprep.subr.mxu0 0.0
  %809 = vmatpush2.msra.mxu0 0.0
  %810 = vmatprep.subr.mxu0 0.0
  %811 = vmatpush2.msra.mxu0 0.0
  %812 = vmatprep.subr.mxu0 0.0
  %813 = vmatpush2.msra.mxu0 0.0
  %814 = vmatprep.subr.mxu0 0.0
  %815 = vmatpush2.msra.mxu0 0.0
  %816 = vmatprep.subr.mxu0 0.0
  %817 = vmatpush2.msra.mxu0 0.0
  %818 = vmatprep.subr.mxu0 0.0
  %819 = vmatpush2.msra.mxu0 0.0
  %820 = vmatprep.subr.mxu0 0.0
  %821 = vmatpush2.msra.mxu0 0.0
  %822 = vmatprep.subr.mxu0 0.0
  %823 = vmatpush2.msra.mxu0 0.0
  %824 = vmatprep.subr.mxu0 0.0
  %825 = vmatpush2.msra.mxu0 0.0
  %826 = vmatprep.subr.mxu0 0.0
  %827 = vmatpush2.msra.mxu0 0.0
  %828 = vmatprep.mubr.f32.mxu0 0.0
  %829 = vmatmul.mubr.f32.gmra.mxu0 %v30
  %v830 = vpop.f32.mrf.mxu0
  %v831 = vadd.f32 0.0, %v830
  %v832 = vpop.f32.mrf.mxu0
  %833 = vdwg.mxu0
  %v834 = vxor.u32 %v831, 2147483648
  %v835 = vmul.f32 %v834, 1.442695
  %v836 = vpow.pop %v835
  %v837 = vadd.f32 %v836, 1.0
  %v838 = vrcp.pop %v837
  %v839 = vmul.f32 1.0, %v838
  %v840 = vmul.f32 %v831, %v839
  %841 = vadd.xlane.f32.xlu0 %v840
  %v842 = vpop.xlane.xlu0 %841
  %v843 = vmul.f32 %v842, %v111
  %v844 = vsub.f32 %v840, %v843
  %v845 = vmul.f32 %v844, %v844
  %846 = vadd.xlane.f32.xlu0 %v845
  %v847 = vpop.xlane.xlu0 %846
  %v848 = vmul.f32 %v847, %v111
  %v849 = vadd.f32 %v848, 1e-05
  %v850 = vrsqrt.pop %v849
  %v851 = vmul.f32 %v844, %v850
  %v852 = vmul.f32 %v851, %v648
  %v853 = vadd.f32 %v750, %v852
  %v854 = vmul.f32 %v853, 0.5
  %s855 = scalar_lea.vmem %s3, 24
  %856 = vst [vmem:[%s855] sm:$0xff] %v854
  // Predicated region
  $region14: #{_lambda_.12} parent=0 // pred_check
    _
  $region15: #{_lambda_.12} parent=0 // pred_check_branch
    %858 = sbr.rel (0) target = $region17
  $region16: #{_lambda_.12} parent=0 // pred_region
    _
  $region17: #{_lambda_.12} parent=0 // pred_fallthru
    _
  // Predicated region
  $region18: #{_lambda_.12} parent=0 // pred_check
    _
  $region19: #{_lambda_.12} parent=0 // pred_check_branch
    %860 = sbr.rel (0) target = $region21
  $region20: #{_lambda_.12} parent=0 // pred_region
    _
  $region21: #{_lambda_.12} parent=0 // pred_fallthru
    _

// kernel: _lambda_.14
$region0: #{_lambda_.14}
  #allocation0 [shape = 'u32[]', space=smem, size = 0x4, offset = 0x4, fixed_abs, tag = 'smem constant byte address 0x4 - core index']
  #allocation1 [shape = 'u32[144,128]{1,0:T(1,128)}', space=vmem, size = 0x12000, scoped, tag = 'internal scratch']
  %s0 = inlined_call_operand.vmem [shape: f32[2], index: 0, kind: input, shape index: {}]
  %s1 = inlined_call_operand.vmem [shape: f32[4,8,128], index: 1, kind: input, shape index: {}]
  %s2 = inlined_call_operand.vmem [shape: bf16[2,4,8,128], index: 2, kind: output, shape index: {}]
  %s3 = sld [smem:[#allocation0]]
  $region45: #{_lambda_.14} parent=0
    _
  %s5 = ssub.s32 1, %s3
  %s6 = scalar_select 0, %s5, %s3
  $region1: #{_lambda_.14} parent=0
    #allocation2 [shape = 'u8[512]{0}', space=smem, size = 0x200, scoped, tag = 'input window, operand 0, single buffered']
    #allocation3 [shape = 's32[2]{0}', space=sflag, size = 0x8, scoped, tag = 'scoped memory for _lambda_.14']
    %7 = vsyncpa [#allocation3], 0
    loop: start=0, step=1, limit=4
    $region2: #{_lambda_.14} parent=1 // loop_pre_header
      _
    $region3: #{_lambda_.14} parent=1 // loop_header
      %s9 = sphi 0, %s13
      %p10 = scmp.ge.s32.totalorder %s9, 4
      %s17 = sphi 0, %s17
      %s19 = sphi 0, %s17
      %s20 = sphi 0, %s19
      %s34 = sphi 0, %s20
      %s38 = sphi 0, %s38
      %s40 = sphi 0, %s38
      %s41 = sphi 0, %s40
      %s55 = sphi 0, %s41
      %s61 = sphi 0, %s63
      %s64 = sphi 0, %s61
      %s65 = sphi 0, %s64
      %s81 = sphi 0, %s65
    $region4: #{_lambda_.14} parent=1 // loop_header_branch
      %12 = sbr.rel (%p10) target = $region8
    $region5: #{_lambda_.14} parent=1 // loop_body
      %s14 = ssub.s32 %s9, 1
      %s15 = ssub.s32 %s9, 2
      %s16 = sadd.s32 %s9, 1
      %s18 = sadd.s32 %s17, 1
      %p21 = scmp.eq.s32.totalorder %s9, 1
      %p22 = scmp.ne.s32.totalorder %s17, %s19
      %p23 = scmp.eq.s32.totalorder %s9, 0
      %p24 = por %p22, %p23
      %p25 = scmp.ne.s32.totalorder %s17, %s19
      %p26 = scmp.eq.s32.totalorder %s14, 1
      %p27 = por %p25, %p26
      %p28 = scmp.ne.s32.totalorder %s19, %s20
      %p29 = scmp.eq.s32.totalorder %s14, 0
      %p30 = por %p28, %p29
      %p31 = scmp.ne.s32.totalorder %s19, %s20
      %p32 = scmp.eq.s32.totalorder %s15, 1
      %p33 = por %p31, %p32
      %p35 = scmp.ne.s32.totalorder %s20, %s34
      %p36 = scmp.eq.s32.totalorder %s15, 0
      %p37 = por %p35, %p36
      %s39 = sadd.s32 %s38, 1
      %p42 = scmp.eq.s32.totalorder %s9, 1
      %p43 = scmp.ne.s32.totalorder %s38, %s40
      %p44 = scmp.eq.s32.totalorder %s9, 0
      %p45 = por %p43, %p44
      %p46 = scmp.ne.s32.totalorder %s38, %s40
      %p47 = scmp.eq.s32.totalorder %s14, 1
      %p48 = por %p46, %p47
      %p49 = scmp.ne.s32.totalorder %s40, %s41
      %p50 = scmp.eq.s32.totalorder %s14, 0
      %p51 = por %p49, %p50
      %p52 = scmp.ne.s32.totalorder %s40, %s41
      %p53 = scmp.eq.s32.totalorder %s15, 1
      %p54 = por %p52, %p53
      %p56 = scmp.ne.s32.totalorder %s41, %s55
      %p57 = scmp.eq.s32.totalorder %s15, 0
      %p58 = por %p56, %p57
      %s59 = ssub.s32 %s9, %s16
      %p60 = scmp.eq.s32.totalorder %s59, 0
      %s62 = sadd.s32 %s61, 1
      %s63 = scalar_select %p60, %s61, %s62
      %p66 = pneg %p60
      %p67 = scmp.eq.s32.totalorder %s9, 1
      %p68 = por %p66, %p67
      %p69 = scmp.ne.s32.totalorder %s61, %s64
      %p70 = scmp.eq.s32.totalorder %s9, 0
      %p71 = por %p69, %p70
      %p72 = scmp.ne.s32.totalorder %s61, %s64
      %p73 = scmp.eq.s32.totalorder %s14, 1
      %p74 = por %p72, %p73
      %p75 = scmp.ne.s32.totalorder %s64, %s65
      %p76 = scmp.eq.s32.totalorder %s14, 0
      %p77 = por %p75, %p76
      %p78 = scmp.ne.s32.totalorder %s64, %s65
      %p79 = scmp.eq.s32.totalorder %s15, 1
      %p80 = por %p78, %p79
      %p82 = scmp.ne.s32.totalorder %s65, %s81
      %p83 = scmp.eq.s32.totalorder %s15, 0
      %p84 = por %p82, %p83
      %p85 = scmp.le.s32.totalorder 1, %s9
      %p86 = scmp.lt.s32.totalorder %s9, 3
      %p87 = pnand %p85, %p86
      %p88 = pneg %p87
      // Predicated region
      $region9: #{_lambda_.14} parent=5 // pred_check
        _
      $region10: #{_lambda_.14} parent=5 // pred_check_branch
        %90 = sbr.rel (%p87) target = $region12
      $region11: #{_lambda_.14} parent=5 // pred_region
        %s91 = ssub.s32 %s9, 1
        // Predicated region
        $region13: #{_lambda_.14} parent=11 // pred_check
          %p92 = pneg %p30
        $region14: #{_lambda_.14} parent=11 // pred_check_branch
          %94 = sbr.rel (%p92) target = $region16
        $region15: #{_lambda_.14} parent=11 // pred_region
          %s96 = ssub.s32 16, 16
          %97 = vsyncadd [#allocation3], %s96
          %s99 = sshll.u32 %s0, 4
          %s100 = int_to_ptr.vmem [resolvable:$true] %s99
          %102 = dma.vmem_to_smem %s100, 16, [#allocation2], [#allocation3]
        $region16: #{_lambda_.14} parent=11 // pred_fallthru
          _
        // Predicated region
        $region17: #{_lambda_.14} parent=11 // pred_check
          %p103 = pneg %p51
        $region18: #{_lambda_.14} parent=11 // pred_check_branch
          %105 = sbr.rel (%p103) target = $region20
        $region19: #{_lambda_.14} parent=11 // pred_region
          _
        $region20: #{_lambda_.14} parent=11 // pred_fallthru
          _
      $region12: #{_lambda_.14} parent=5 // pred_fallthru
        _
      %p106 = scmp.lt.s32.totalorder %s9, 2
      // Predicated region
      $region21: #{_lambda_.14} parent=5 // pred_check
        %p107 = pneg %p106
      $region22: #{_lambda_.14} parent=5 // pred_check_branch
        %109 = sbr.rel (%p107) target = $region24
      $region23: #{_lambda_.14} parent=5 // pred_region
        _
      $region24: #{_lambda_.14} parent=5 // pred_fallthru
        _
      %p110 = scmp.le.s32.totalorder 1, %s9
      %p111 = scmp.lt.s32.totalorder %s9, 3
      %p112 = pnand %p110, %p111
      %p113 = pneg %p112
      // Predicated region
      $region25: #{_lambda_.14} parent=5 // pred_check
        _
      $region26: #{_lambda_.14} parent=5 // pred_check_branch
        %115 = sbr.rel (%p112) target = $region28
      $region27: #{_lambda_.14} parent=5 // pred_region
        %s116 = ssub.s32 %s9, 1
        // Predicated region
        $region29: #{_lambda_.14} parent=27 // pred_check
          %p117 = pneg %p30
        $region30: #{_lambda_.14} parent=27 // pred_check_branch
          %119 = sbr.rel (%p117) target = $region32
        $region31: #{_lambda_.14} parent=27 // pred_region
          %120 = dma.done [#allocation3], 16
        $region32: #{_lambda_.14} parent=27 // pred_fallthru
          _
        %121 = sfence
        %p122 = pneg %p30
        %p123 = pneg %p27
        %p124 = pneg %p51
        %p125 = pneg %p48
        %p126 = pneg %p77
        %p127 = pneg %p74
        %p128 = scmp.lt.s32.totalorder %s14, 1
        %s129 = scalar_select %p128, %s14, 1
        %s130 = smul.addr %s129, 4
        %s131 = smul.addr %s130, 4
        %s132 = scalar_lea.vmem %s2, %s131
        %p133 = scmp.lt.s32.totalorder %s14, 1
        %s134 = scalar_select %p133, %s14, 1
        %s135 = smul.addr %s134, 4
        %s136 = smul.addr %s135, 4
        %s137 = scalar_lea.vmem %s2, %s136
        %s138 = sld [smem:[#allocation2]]
        %s139 = sld [smem:[#allocation2 + $0x1]]
        %p140 = scmp.eq.s32.totalorder %s14, 0
        %s141 = scalar_select %p140, 0, 3
        %s142 = smul.u32 %s141, 8
        %s143 = scalar_lea.vmem %s1, %s142
        %v144 = vld [vmem:[%s143] sm:$0xff]
        %v145 = vstv %s139
        %vm146 = vcmp.gt.f32.partialorder 0.0, %v145
        %v147 = vsel %vm146, 1, 0
        %v148 = vcvt.s32.f32 %v147
        %v149 = vstv %s138
        %v150 = vmul.f32 %v149, 0.0
        %v151 = vadd.f32 %v150, %v144
        %v152 = vmul.f32 %v148, %v145
        %v153 = vsub.f32 %v151, %v152
        %vm154 = vcmp.gt.f32.partialorder %v153, %v145
        %v155 = vsel %vm154, 1, 0
        %v156 = vcvt.s32.f32 %v155
        %v157 = vpack.c.bf16 %v156, %v156
        %s158 = smul.addr %s141, 4
        %s159 = scalar_lea.vmem %s137, %s158
        %160 = vst [vmem:[%s159] sm:$0xf] %v157
        %s161 = scalar_select %p140, 1, 2
        %s162 = smul.u32 %s161, 8
        %s163 = scalar_lea.vmem %s1, %s162
        %v164 = vld [vmem:[%s163] sm:$0xff]
        %v165 = vmul.f32 %v149, %v153
        %v166 = vadd.f32 %v165, %v164
        %v167 = vmul.f32 %v156, %v145
        %v168 = vsub.f32 %v166, %v167
        %vm169 = vcmp.gt.f32.partialorder %v168, %v145
        %v170 = vsel %vm169, 1, 0
        %v171 = vcvt.s32.f32 %v170
        %v172 = vpack.c.bf16 %v171, %v171
        %s173 = smul.addr %s161, 4
        %s174 = scalar_lea.vmem %s137, %s173
        %175 = vst [vmem:[%s174] sm:$0xf] %v172
        %s176 = scalar_select %p140, 2, 1
        %s177 = smul.u32 %s176, 8
        %s178 = scalar_lea.vmem %s1, %s177
        %v179 = vld [vmem:[%s178] sm:$0xff]
        %v180 = vmul.f32 %v149, %v168
        %v181 = vadd.f32 %v180, %v179
        %v182 = vmul.f32 %v171, %v145
        %v183 = vsub.f32 %v181, %v182
        %vm184 = vcmp.gt.f32.partialorder %v183, %v145
        %v185 = vsel %vm184, 1, 0
        %v186 = vcvt.s32.f32 %v185
        %v187 = vpack.c.bf16 %v186, %v186
        %s188 = smul.addr %s176, 4
        %s189 = scalar_lea.vmem %s137, %s188
        %190 = vst [vmem:[%s189] sm:$0xf] %v187
        %s191 = scalar_select %p140, 3, 0
        %s192 = smul.u32 %s191, 8
        %s193 = scalar_lea.vmem %s1, %s192
        %v194 = vld [vmem:[%s193] sm:$0xff]
        %v195 = vmul.f32 %v149, %v183
        %v196 = vadd.f32 %v195, %v194
        %v197 = vmul.f32 %v186, %v145
        %v198 = vsub.f32 %v196, %v197
        %vm199 = vcmp.gt.f32.partialorder %v198, %v145
        %v200 = vsel %vm199, 1, 0
        %v201 = vcvt.s32.f32 %v200
        %v202 = vpack.c.bf16 %v201, %v201
        %s203 = smul.addr %s191, 4
        %s204 = scalar_lea.vmem %s137, %s203
        %205 = vst [vmem:[%s204] sm:$0xf] %v202
        %p206 = scmp.lt.s32.totalorder %s14, 1
        %s207 = scalar_select %p206, %s14, 1
        %s208 = smul.addr %s207, 4
        %s209 = smul.addr %s208, 4
        %s210 = scalar_lea.vmem %s2, %s209
        // Predicated region
        $region33: #{_lambda_.14} parent=27 // pred_check
          %p211 = pneg %p74
        $region34: #{_lambda_.14} parent=27 // pred_check_branch
          %213 = sbr.rel (%p211) target = $region36
        $region35: #{_lambda_.14} parent=27 // pred_region
          _
        $region36: #{_lambda_.14} parent=27 // pred_fallthru
          _
      $region28: #{_lambda_.14} parent=5 // pred_fallthru
        _
      %p214 = scmp.le.s32.totalorder 2, %s9
      // Predicated region
      $region37: #{_lambda_.14} parent=5 // pred_check
        %p215 = pneg %p214
      $region38: #{_lambda_.14} parent=5 // pred_check_branch
        %217 = sbr.rel (%p215) target = $region40
      $region39: #{_lambda_.14} parent=5 // pred_region
        %s218 = ssub.s32 %s9, 2
        // Predicated region
        $region41: #{_lambda_.14} parent=39 // pred_check
          %p219 = pneg %p80
        $region42: #{_lambda_.14} parent=39 // pred_check_branch
          %221 = sbr.rel (%p219) target = $region44
        $region43: #{_lambda_.14} parent=39 // pred_region
          %p222 = scmp.lt.s32.totalorder %s15, 1
          %s223 = scalar_select %p222, %s15, 1
          %s224 = smul.addr %s223, 4
          %s225 = smul.addr %s224, 4
          %s226 = scalar_lea.vmem %s2, %s225
        $region44: #{_lambda_.14} parent=39 // pred_fallthru
          _
      $region40: #{_lambda_.14} parent=5 // pred_fallthru
        _
    $region6: #{_lambda_.14} parent=1 // loop_footer
      %s13 = sadd.s32 1, %s9
    $region7: #{_lambda_.14} parent=1 // loop_footer_branch
      %8 = sbr.rel target = $region3
    $region8: #{_lambda_.14} parent=1 // loop_exit
      _
    %227 = vsyncpa [#allocation3], 1
    %s228 = scalar_lea.sflag [#allocation3], 1
    %229 = vsyncpa %s228, 1

// kernel: _lambda_.13
$region0: #{_lambda_.13}
  #allocation0 [shape = 'u32[]', space=smem, size = 0x4, offset = 0x4, fixed_abs, tag = 'smem constant byte address 0x4 - core index']
  #allocation1 [shape = 'u32[144,128]{1,0:T(1,128)}', space=vmem, size = 0x12000, scoped, tag = 'internal scratch']
  %s0 = inlined_call_operand.vmem [shape: f32[1,4,16,128], index: 0, kind: input, shape index: {}]
  %s1 = inlined_call_operand.vmem [shape: f32[8,16], index: 1, kind: input, shape index: {}]
  %s2 = inlined_call_operand.vmem [shape: f32[4,8,128], index: 2, kind: input, shape index: {}]
  %s3 = inlined_call_operand.vmem [shape: f32[4,8,128], index: 3, kind: output, shape index: {}]
  %s4 = sld [smem:[#allocation0]]
  $region22: #{_lambda_.13} parent=0
    _
  %s6 = ssub.s32 1, %s4
  %s7 = scalar_select 0, %s6, %s4
  // Predicated region
  $region2: #{_lambda_.13} parent=0 // pred_check
    _
  $region3: #{_lambda_.13} parent=0 // pred_check_branch
    %9 = sbr.rel (0) target = $region5
  $region4: #{_lambda_.13} parent=0 // pred_region
    _
  $region5: #{_lambda_.13} parent=0 // pred_fallthru
    _
  // Predicated region
  $region6: #{_lambda_.13} parent=0 // pred_check
    _
  $region7: #{_lambda_.13} parent=0 // pred_check_branch
    %11 = sbr.rel (0) target = $region9
  $region8: #{_lambda_.13} parent=0 // pred_region
    _
  $region9: #{_lambda_.13} parent=0 // pred_fallthru
    _
  // Predicated region
  $region10: #{_lambda_.13} parent=0 // pred_check
    _
  $region11: #{_lambda_.13} parent=0 // pred_check_branch
    %13 = sbr.rel (0) target = $region13
  $region12: #{_lambda_.13} parent=0 // pred_region
    _
  $region13: #{_lambda_.13} parent=0 // pred_fallthru
    _
  %v14 = vld [vmem:[%s1] sm:$0xff]
  %v15 = vld [vmem:[%s2] sm:$0xff]
  %v16 = vld [vmem:[%s0] sm:$0xff]
  %v17 = vld [vmem:[%s0 + $0x8] sm:$0xff]
  %vm18 = vcmask 130048
  %v20 = vsel %vm18, %v14, 0
  %22 = vmatprep.subr.mxu0 0.0
  %23 = vmatpush1.msra.mxu0 0.0
  %24 = vmatprep.subr.mxu0 0.0
  %25 = vmatpush1.msra.mxu0 0.0
  %26 = vmatprep.subr.mxu0 0.0
  %27 = vmatpush1.msra.mxu0 0.0
  %28 = vmatprep.subr.mxu0 0.0
  %29 = vmatpush1.msra.mxu0 0.0
  %30 = vmatprep.subr.mxu0 0.0
  %31 = vmatpush1.msra.mxu0 0.0
  %32 = vmatprep.subr.mxu0 0.0
  %33 = vmatpush1.msra.mxu0 0.0
  %34 = vmatprep.subr.mxu0 0.0
  %35 = vmatpush1.msra.mxu0 0.0
  %36 = vmatprep.subr.mxu0 0.0
  %37 = vmatpush1.msra.mxu0 0.0
  %38 = vmatprep.subr.mxu0 0.0
  %39 = vmatpush1.msra.mxu0 0.0
  %40 = vmatprep.subr.mxu0 0.0
  %41 = vmatpush1.msra.mxu0 0.0
  %42 = vmatprep.subr.mxu0 0.0
  %43 = vmatpush1.msra.mxu0 0.0
  %44 = vmatprep.subr.mxu0 0.0
  %45 = vmatpush1.msra.mxu0 0.0
  %46 = vmatprep.subr.mxu0 0.0
  %47 = vmatpush1.msra.mxu0 0.0
  %48 = vmatprep.subr.mxu0 0.0
  %49 = vmatpush1.msra.mxu0 0.0
  %50 = vmatprep.subr.mxu0 0.0
  %51 = vmatpush1.msra.mxu0 %v17
  %52 = vmatprep.subr.mxu0 0.0
  %53 = vmatpush1.msra.mxu0 %v16
  %54 = vmatprep.subr.mxu0 0.0
  %55 = vmatpush2.msra.mxu0 0.0
  %56 = vmatprep.subr.mxu0 0.0
  %57 = vmatpush2.msra.mxu0 0.0
  %58 = vmatprep.subr.mxu0 0.0
  %59 = vmatpush2.msra.mxu0 0.0
  %60 = vmatprep.subr.mxu0 0.0
  %61 = vmatpush2.msra.mxu0 0.0
  %62 = vmatprep.subr.mxu0 0.0
  %63 = vmatpush2.msra.mxu0 0.0
  %64 = vmatprep.subr.mxu0 0.0
  %65 = vmatpush2.msra.mxu0 0.0
  %66 = vmatprep.subr.mxu0 0.0
  %67 = vmatpush2.msra.mxu0 0.0
  %68 = vmatprep.subr.mxu0 0.0
  %69 = vmatpush2.msra.mxu0 0.0
  %70 = vmatprep.subr.mxu0 0.0
  %71 = vmatpush2.msra.mxu0 0.0
  %72 = vmatprep.subr.mxu0 0.0
  %73 = vmatpush2.msra.mxu0 0.0
  %74 = vmatprep.subr.mxu0 0.0
  %75 = vmatpush2.msra.mxu0 0.0
  %76 = vmatprep.subr.mxu0 0.0
  %77 = vmatpush2.msra.mxu0 0.0
  %78 = vmatprep.subr.mxu0 0.0
  %79 = vmatpush2.msra.mxu0 0.0
  %80 = vmatprep.subr.mxu0 0.0
  %81 = vmatpush2.msra.mxu0 0.0
  %82 = vmatprep.subr.mxu0 0.0
  %83 = vmatpush2.msra.mxu0 0.0
  %84 = vmatprep.subr.mxu0 0.0
  %85 = vmatpush2.msra.mxu0 0.0
  %86 = vmatprep.mubr.f32.mxu0 0.0
  %87 = vmatmul.mubr.f32.gmra.mxu0 %v20
  %v88 = vpop.f32.mrf.mxu0
  %v89 = vadd.f32 0.0, %v88
  %v90 = vpop.f32.mrf.mxu0
  %91 = vdwg.mxu0
  %92 = vadd.xlane.f32.xlu0 %v89
  %v93 = vpop.xlane.xlu0 %92
  %v94 = vrcp.pop 128.0
  %v95 = vmul.f32 %v93, %v94
  %v96 = vsub.f32 %v89, %v95
  %v97 = vmul.f32 %v96, %v96
  %98 = vadd.xlane.f32.xlu0 %v97
  %v99 = vpop.xlane.xlu0 %98
  %v100 = vmul.f32 %v99, %v94
  %v101 = vadd.f32 %v100, 1e-05
  %v102 = vrsqrt.pop %v101
  %v103 = vmul.f32 %v96, %v102
  %v104 = vmul.f32 %v103, %v15
  %v105 = vmax.f32 %v104, 0.0
  %v106 = vmin.f32 %v105, 6.0
  %107 = vst [vmem:[%s3] sm:$0xff] %v106
  %s108 = scalar_lea.vmem %s2, 8
  %v109 = vld [vmem:[%s108] sm:$0xff]
  %s110 = scalar_lea.vmem %s0, 16
  %v111 = vld [vmem:[%s110] sm:$0xff]
  %v112 = vld [vmem:[%s110 + $0x8] sm:$0xff]
  %113 = vmatprep.subr.mxu0 0.0
  %114 = vmatpush1.msra.mxu0 0.0
  %115 = vmatprep.subr.mxu0 0.0
  %116 = vmatpush1.msra.mxu0 0.0
  %117 = vmatprep.subr.mxu0 0.0
  %118 = vmatpush1.msra.mxu0 0.0
  %119 = vmatprep.subr.mxu0 0.0
  %120 = vmatpush1.msra.mxu0 0.0
  %121 = vmatprep.subr.mxu0 0.0
  %122 = vmatpush1.msra.mxu0 0.0
  %123 = vmatprep.subr.mxu0 0.0
  %124 = vmatpush1.msra.mxu0 0.0
  %125 = vmatprep.subr.mxu0 0.0
  %126 = vmatpush1.msra.mxu0 0.0
  %127 = vmatprep.subr.mxu0 0.0
  %128 = vmatpush1.msra.mxu0 0.0
  %129 = vmatprep.subr.mxu0 0.0
  %130 = vmatpush1.msra.mxu0 0.0
  %131 = vmatprep.subr.mxu0 0.0
  %132 = vmatpush1.msra.mxu0 0.0
  %133 = vmatprep.subr.mxu0 0.0
  %134 = vmatpush1.msra.mxu0 0.0
  %135 = vmatprep.subr.mxu0 0.0
  %136 = vmatpush1.msra.mxu0 0.0
  %137 = vmatprep.subr.mxu0 0.0
  %138 = vmatpush1.msra.mxu0 0.0
  %139 = vmatprep.subr.mxu0 0.0
  %140 = vmatpush1.msra.mxu0 0.0
  %141 = vmatprep.subr.mxu0 0.0
  %142 = vmatpush1.msra.mxu0 %v112
  %143 = vmatprep.subr.mxu0 0.0
  %144 = vmatpush1.msra.mxu0 %v111
  %145 = vmatprep.subr.mxu0 0.0
  %146 = vmatpush2.msra.mxu0 0.0
  %147 = vmatprep.subr.mxu0 0.0
  %148 = vmatpush2.msra.mxu0 0.0
  %149 = vmatprep.subr.mxu0 0.0
  %150 = vmatpush2.msra.mxu0 0.0
  %151 = vmatprep.subr.mxu0 0.0
  %152 = vmatpush2.msra.mxu0 0.0
  %153 = vmatprep.subr.mxu0 0.0
  %154 = vmatpush2.msra.mxu0 0.0
  %155 = vmatprep.subr.mxu0 0.0
  %156 = vmatpush2.msra.mxu0 0.0
  %157 = vmatprep.subr.mxu0 0.0
  %158 = vmatpush2.msra.mxu0 0.0
  %159 = vmatprep.subr.mxu0 0.0
  %160 = vmatpush2.msra.mxu0 0.0
  %161 = vmatprep.subr.mxu0 0.0
  %162 = vmatpush2.msra.mxu0 0.0
  %163 = vmatprep.subr.mxu0 0.0
  %164 = vmatpush2.msra.mxu0 0.0
  %165 = vmatprep.subr.mxu0 0.0
  %166 = vmatpush2.msra.mxu0 0.0
  %167 = vmatprep.subr.mxu0 0.0
  %168 = vmatpush2.msra.mxu0 0.0
  %169 = vmatprep.subr.mxu0 0.0
  %170 = vmatpush2.msra.mxu0 0.0
  %171 = vmatprep.subr.mxu0 0.0
  %172 = vmatpush2.msra.mxu0 0.0
  %173 = vmatprep.subr.mxu0 0.0
  %174 = vmatpush2.msra.mxu0 0.0
  %175 = vmatprep.subr.mxu0 0.0
  %176 = vmatpush2.msra.mxu0 0.0
  %177 = vmatprep.mubr.f32.mxu0 0.0
  %178 = vmatmul.mubr.f32.gmra.mxu0 %v20
  %v179 = vpop.f32.mrf.mxu0
  %v180 = vadd.f32 0.0, %v179
  %v181 = vpop.f32.mrf.mxu0
  %182 = vdwg.mxu0
  %183 = vadd.xlane.f32.xlu0 %v180
  %v184 = vpop.xlane.xlu0 %183
  %v185 = vmul.f32 %v184, %v94
  %v186 = vsub.f32 %v180, %v185
  %v187 = vmul.f32 %v186, %v186
  %188 = vadd.xlane.f32.xlu0 %v187
  %v189 = vpop.xlane.xlu0 %188
  %v190 = vmul.f32 %v189, %v94
  %v191 = vadd.f32 %v190, 1e-05
  %v192 = vrsqrt.pop %v191
  %v193 = vmul.f32 %v186, %v192
  %v194 = vmul.f32 %v193, %v109
  %v195 = vmax.f32 %v194, 0.0
  %v196 = vmin.f32 %v195, 6.0
  %s197 = scalar_lea.vmem %s3, 8
  %198 = vst [vmem:[%s197] sm:$0xff] %v196
  %s199 = scalar_lea.vmem %s2, 16
  %v200 = vld [vmem:[%s199] sm:$0xff]
  %s201 = scalar_lea.vmem %s0, 32
  %v202 = vld [vmem:[%s201] sm:$0xff]
  %v203 = vld [vmem:[%s201 + $0x8] sm:$0xff]
  %204 = vmatprep.subr.mxu0 0.0
  %205 = vmatpush1.msra.mxu0 0.0
  %206 = vmatprep.subr.mxu0 0.0
  %207 = vmatpush1.msra.mxu0 0.0
  %208 = vmatprep.subr.mxu0 0.0
  %209 = vmatpush1.msra.mxu0 0.0
  %210 = vmatprep.subr.mxu0 0.0
  %211 = vmatpush1.msra.mxu0 0.0
  %212 = vmatprep.subr.mxu0 0.0
  %213 = vmatpush1.msra.mxu0 0.0
  %214 = vmatprep.subr.mxu0 0.0
  %215 = vmatpush1.msra.mxu0 0.0
  %216 = vmatprep.subr.mxu0 0.0
  %217 = vmatpush1.msra.mxu0 0.0
  %218 = vmatprep.subr.mxu0 0.0
  %219 = vmatpush1.msra.mxu0 0.0
  %220 = vmatprep.subr.mxu0 0.0
  %221 = vmatpush1.msra.mxu0 0.0
  %222 = vmatprep.subr.mxu0 0.0
  %223 = vmatpush1.msra.mxu0 0.0
  %224 = vmatprep.subr.mxu0 0.0
  %225 = vmatpush1.msra.mxu0 0.0
  %226 = vmatprep.subr.mxu0 0.0
  %227 = vmatpush1.msra.mxu0 0.0
  %228 = vmatprep.subr.mxu0 0.0
  %229 = vmatpush1.msra.mxu0 0.0
  %230 = vmatprep.subr.mxu0 0.0
  %231 = vmatpush1.msra.mxu0 0.0
  %232 = vmatprep.subr.mxu0 0.0
  %233 = vmatpush1.msra.mxu0 %v203
  %234 = vmatprep.subr.mxu0 0.0
  %235 = vmatpush1.msra.mxu0 %v202
  %236 = vmatprep.subr.mxu0 0.0
  %237 = vmatpush2.msra.mxu0 0.0
  %238 = vmatprep.subr.mxu0 0.0
  %239 = vmatpush2.msra.mxu0 0.0
  %240 = vmatprep.subr.mxu0 0.0
  %241 = vmatpush2.msra.mxu0 0.0
  %242 = vmatprep.subr.mxu0 0.0
  %243 = vmatpush2.msra.mxu0 0.0
  %244 = vmatprep.subr.mxu0 0.0
  %245 = vmatpush2.msra.mxu0 0.0
  %246 = vmatprep.subr.mxu0 0.0
  %247 = vmatpush2.msra.mxu0 0.0
  %248 = vmatprep.subr.mxu0 0.0
  %249 = vmatpush2.msra.mxu0 0.0
  %250 = vmatprep.subr.mxu0 0.0
  %251 = vmatpush2.msra.mxu0 0.0
  %252 = vmatprep.subr.mxu0 0.0
  %253 = vmatpush2.msra.mxu0 0.0
  %254 = vmatprep.subr.mxu0 0.0
  %255 = vmatpush2.msra.mxu0 0.0
  %256 = vmatprep.subr.mxu0 0.0
  %257 = vmatpush2.msra.mxu0 0.0
  %258 = vmatprep.subr.mxu0 0.0
  %259 = vmatpush2.msra.mxu0 0.0
  %260 = vmatprep.subr.mxu0 0.0
  %261 = vmatpush2.msra.mxu0 0.0
  %262 = vmatprep.subr.mxu0 0.0
  %263 = vmatpush2.msra.mxu0 0.0
  %264 = vmatprep.subr.mxu0 0.0
  %265 = vmatpush2.msra.mxu0 0.0
  %266 = vmatprep.subr.mxu0 0.0
  %267 = vmatpush2.msra.mxu0 0.0
  %268 = vmatprep.mubr.f32.mxu0 0.0
  %269 = vmatmul.mubr.f32.gmra.mxu0 %v20
  %v270 = vpop.f32.mrf.mxu0
  %v271 = vadd.f32 0.0, %v270
  %v272 = vpop.f32.mrf.mxu0
  %273 = vdwg.mxu0
  %274 = vadd.xlane.f32.xlu0 %v271
  %v275 = vpop.xlane.xlu0 %274
  %v276 = vmul.f32 %v275, %v94
  %v277 = vsub.f32 %v271, %v276
  %v278 = vmul.f32 %v277, %v277
  %279 = vadd.xlane.f32.xlu0 %v278
  %v280 = vpop.xlane.xlu0 %279
  %v281 = vmul.f32 %v280, %v94
  %v282 = vadd.f32 %v281, 1e-05
  %v283 = vrsqrt.pop %v282
  %v284 = vmul.f32 %v277, %v283
  %v285 = vmul.f32 %v284, %v200
  %v286 = vmax.f32 %v285, 0.0
  %v287 = vmin.f32 %v286, 6.0
  %s288 = scalar_lea.vmem %s3, 16
  %289 = vst [vmem:[%s288] sm:$0xff] %v287
  %s290 = scalar_lea.vmem %s2, 24
  %v291 = vld [vmem:[%s290] sm:$0xff]
  %s292 = scalar_lea.vmem %s0, 48
  %v293 = vld [vmem:[%s292] sm:$0xff]
  %v294 = vld [vmem:[%s292 + $0x8] sm:$0xff]
  %295 = vmatprep.subr.mxu0 0.0
  %296 = vmatpush1.msra.mxu0 0.0
  %297 = vmatprep.subr.mxu0 0.0
  %298 = vmatpush1.msra.mxu0 0.0
  %299 = vmatprep.subr.mxu0 0.0
  %300 = vmatpush1.msra.mxu0 0.0
  %301 = vmatprep.subr.mxu0 0.0
  %302 = vmatpush1.msra.mxu0 0.0
  %303 = vmatprep.subr.mxu0 0.0
  %304 = vmatpush1.msra.mxu0 0.0
  %305 = vmatprep.subr.mxu0 0.0
  %306 = vmatpush1.msra.mxu0 0.0
  %307 = vmatprep.subr.mxu0 0.0
  %308 = vmatpush1.msra.mxu0 0.0
  %309 = vmatprep.subr.mxu0 0.0
  %310 = vmatpush1.msra.mxu0 0.0
  %311 = vmatprep.subr.mxu0 0.0
  %312 = vmatpush1.msra.mxu0 0.0
  %313 = vmatprep.subr.mxu0 0.0
  %314 = vmatpush1.msra.mxu0 0.0
  %315 = vmatprep.subr.mxu0 0.0
  %316 = vmatpush1.msra.mxu0 0.0
  %317 = vmatprep.subr.mxu0 0.0
  %318 = vmatpush1.msra.mxu0 0.0
  %319 = vmatprep.subr.mxu0 0.0
  %320 = vmatpush1.msra.mxu0 0.0
  %321 = vmatprep.subr.mxu0 0.0
  %322 = vmatpush1.msra.mxu0 0.0
  %323 = vmatprep.subr.mxu0 0.0
  %324 = vmatpush1.msra.mxu0 %v294
  %325 = vmatprep.subr.mxu0 0.0
  %326 = vmatpush1.msra.mxu0 %v293
  %327 = vmatprep.subr.mxu0 0.0
  %328 = vmatpush2.msra.mxu0 0.0
  %329 = vmatprep.subr.mxu0 0.0
  %330 = vmatpush2.msra.mxu0 0.0
  %331 = vmatprep.subr.mxu0 0.0
  %332 = vmatpush2.msra.mxu0 0.0
  %333 = vmatprep.subr.mxu0 0.0
  %334 = vmatpush2.msra.mxu0 0.0
  %335 = vmatprep.subr.mxu0 0.0
  %336 = vmatpush2.msra.mxu0 0.0
  %337 = vmatprep.subr.mxu0 0.0
  %338 = vmatpush2.msra.mxu0 0.0
  %339 = vmatprep.subr.mxu0 0.0
  %340 = vmatpush2.msra.mxu0 0.0
  %341 = vmatprep.subr.mxu0 0.0
  %342 = vmatpush2.msra.mxu0 0.0
  %343 = vmatprep.subr.mxu0 0.0
  %344 = vmatpush2.msra.mxu0 0.0
  %345 = vmatprep.subr.mxu0 0.0
  %346 = vmatpush2.msra.mxu0 0.0
  %347 = vmatprep.subr.mxu0 0.0
  %348 = vmatpush2.msra.mxu0 0.0
  %349 = vmatprep.subr.mxu0 0.0
  %350 = vmatpush2.msra.mxu0 0.0
  %351 = vmatprep.subr.mxu0 0.0
  %352 = vmatpush2.msra.mxu0 0.0
  %353 = vmatprep.subr.mxu0 0.0
  %354 = vmatpush2.msra.mxu0 0.0
  %355 = vmatprep.subr.mxu0 0.0
  %356 = vmatpush2.msra.mxu0 0.0
  %357 = vmatprep.subr.mxu0 0.0
  %358 = vmatpush2.msra.mxu0 0.0
  %359 = vmatprep.mubr.f32.mxu0 0.0
  %360 = vmatmul.mubr.f32.gmra.mxu0 %v20
  %v361 = vpop.f32.mrf.mxu0
  %v362 = vadd.f32 0.0, %v361
  %v363 = vpop.f32.mrf.mxu0
  %364 = vdwg.mxu0
  %365 = vadd.xlane.f32.xlu0 %v362
  %v366 = vpop.xlane.xlu0 %365
  %v367 = vmul.f32 %v366, %v94
  %v368 = vsub.f32 %v362, %v367
  %v369 = vmul.f32 %v368, %v368
  %370 = vadd.xlane.f32.xlu0 %v369
  %v371 = vpop.xlane.xlu0 %370
  %v372 = vmul.f32 %v371, %v94
  %v373 = vadd.f32 %v372, 1e-05
  %v374 = vrsqrt.pop %v373
  %v375 = vmul.f32 %v368, %v374
  %v376 = vmul.f32 %v375, %v291
  %v377 = vmax.f32 %v376, 0.0
  %v378 = vmin.f32 %v377, 6.0
  %s379 = scalar_lea.vmem %s3, 24
  %380 = vst [vmem:[%s379] sm:$0xff] %v378
  // Predicated region
  $region14: #{_lambda_.13} parent=0 // pred_check
    _
  $region15: #{_lambda_.13} parent=0 // pred_check_branch
    %382 = sbr.rel (0) target = $region17
  $region16: #{_lambda_.13} parent=0 // pred_region
    _
  $region17: #{_lambda_.13} parent=0 // pred_fallthru
    _
  // Predicated region
  $region18: #{_lambda_.13} parent=0 // pred_check
    _
  $region19: #{_lambda_.13} parent=0 // pred_check_branch
    %384 = sbr.rel (0) target = $region21
  $region20: #{_lambda_.13} parent=0 // pred_region
    _
  $region21: #{_lambda_.13} parent=0 // pred_fallthru
    _

// kernel: _lambda_.15
$region0: #{_lambda_.15}
  #allocation0 [shape = 'u32[]', space=smem, size = 0x4, offset = 0x4, fixed_abs, tag = 'smem constant byte address 0x4 - core index']
  #allocation1 [shape = 'u32[144,128]{1,0:T(1,128)}', space=vmem, size = 0x12000, scoped, tag = 'internal scratch']
  %s0 = inlined_call_operand.vmem [shape: bf16[2,4,80,128], index: 0, kind: input, shape index: {}]
  %s1 = inlined_call_operand.vmem [shape: f32[4,80], index: 1, kind: input, shape index: {}]
  %s2 = inlined_call_operand.vmem [shape: f32[4,4,128], index: 2, kind: input, shape index: {}]
  %s3 = inlined_call_operand.vmem [shape: f32[4,4,128], index: 3, kind: output, shape index: {}]
  %s4 = sld [smem:[#allocation0]]
  $region22: #{_lambda_.15} parent=0
    _
  %s6 = ssub.s32 1, %s4
  %s7 = scalar_select 0, %s6, %s4
  // Predicated region
  $region2: #{_lambda_.15} parent=0 // pred_check
    _
  $region3: #{_lambda_.15} parent=0 // pred_check_branch
    %9 = sbr.rel (0) target = $region5
  $region4: #{_lambda_.15} parent=0 // pred_region
    _
  $region5: #{_lambda_.15} parent=0 // pred_fallthru
    _
  // Predicated region
  $region6: #{_lambda_.15} parent=0 // pred_check
    _
  $region7: #{_lambda_.15} parent=0 // pred_check_branch
    %11 = sbr.rel (0) target = $region9
  $region8: #{_lambda_.15} parent=0 // pred_region
    _
  $region9: #{_lambda_.15} parent=0 // pred_fallthru
    _
  // Predicated region
  $region10: #{_lambda_.15} parent=0 // pred_check
    _
  $region11: #{_lambda_.15} parent=0 // pred_check_branch
    %13 = sbr.rel (0) target = $region13
  $region12: #{_lambda_.15} parent=0 // pred_region
    _
  $region13: #{_lambda_.15} parent=0 // pred_fallthru
    _
  %v14 = vld [vmem:[%s1] sm:$0xf]
  %v15 = vld [vmem:[%s2] sm:$0xf]
  %v16 = vld [vmem:[%s0] sm:$0xf]
  %v17 = vld [vmem:[%s0 + $0x4] sm:$0xf]
  %v18 = vld [vmem:[%s0 + $0x8] sm:$0xf]
  %v19 = vld [vmem:[%s0 + $0xc] sm:$0xf]
  %v20 = vld [vmem:[%s0 + $0x10] sm:$0xf]
  %v21 = vld [vmem:[%s0 + $0x14] sm:$0xf]
  %v22 = vld [vmem:[%s0 + $0x18] sm:$0xf]
  %v23 = vld [vmem:[%s0 + $0x1c] sm:$0xf]
  %v24 = vld [vmem:[%s0 + $0x20] sm:$0xf]
  %v25 = vld [vmem:[%s0 + $0x24] sm:$0xf]
  %v26 = vunpack.c.l.bf16 %v16
  %v27 = vunpack.c.l.bf16 %v17
  %v28 = vunpack.c.l.bf16 %v18
  %v29 = vunpack.c.l.bf16 %v19
  %v30 = vunpack.c.l.bf16 %v20
  %v31 = vunpack.c.l.bf16 %v21
  %v32 = vunpack.c.l.bf16 %v22
  %v33 = vunpack.c.l.bf16 %v23
  %v34 = vunpack.c.l.bf16 %v24
  %v35 = vunpack.c.l.bf16 %v25
  %vm36 = vcmask 654336
  %v38 = vsel %vm36, %v14, 0
  %40 = vmatprep.subr.mxu0 0.0
  %41 = vmatpush1.msra.mxu0 0.0
  %42 = vmatprep.subr.mxu0 0.0
  %43 = vmatpush1.msra.mxu0 0.0
  %44 = vmatprep.subr.mxu0 0.0
  %45 = vmatpush1.msra.mxu0 0.0
  %46 = vmatprep.subr.mxu0 0.0
  %47 = vmatpush1.msra.mxu0 0.0
  %48 = vmatprep.subr.mxu0 0.0
  %49 = vmatpush1.msra.mxu0 0.0
  %50 = vmatprep.subr.mxu0 0.0
  %51 = vmatpush1.msra.mxu0 0.0
  %52 = vmatprep.subr.mxu0 0.0
  %53 = vmatpush1.msra.mxu0 %v35
  %54 = vmatprep.subr.mxu0 0.0
  %55 = vmatpush1.msra.mxu0 %v34
  %56 = vmatprep.subr.mxu0 0.0
  %57 = vmatpush1.msra.mxu0 %v33
  %58 = vmatprep.subr.mxu0 0.0
  %59 = vmatpush1.msra.mxu0 %v32
  %60 = vmatprep.subr.mxu0 0.0
  %61 = vmatpush1.msra.mxu0 %v31
  %62 = vmatprep.subr.mxu0 0.0
  %63 = vmatpush1.msra.mxu0 %v30
  %64 = vmatprep.subr.mxu0 0.0
  %65 = vmatpush1.msra.mxu0 %v29
  %66 = vmatprep.subr.mxu0 0.0
  %67 = vmatpush1.msra.mxu0 %v28
  %68 = vmatprep.subr.mxu0 0.0
  %69 = vmatpush1.msra.mxu0 %v27
  %70 = vmatprep.subr.mxu0 0.0
  %71 = vmatpush1.msra.mxu0 %v26
  %72 = vmatprep.subr.mxu0 0.0
  %73 = vmatpush2.msra.mxu0 0.0
  %74 = vmatprep.subr.mxu0 0.0
  %75 = vmatpush2.msra.mxu0 0.0
  %76 = vmatprep.subr.mxu0 0.0
  %77 = vmatpush2.msra.mxu0 0.0
  %78 = vmatprep.subr.mxu0 0.0
  %79 = vmatpush2.msra.mxu0 0.0
  %80 = vmatprep.subr.mxu0 0.0
  %81 = vmatpush2.msra.mxu0 0.0
  %82 = vmatprep.subr.mxu0 0.0
  %83 = vmatpush2.msra.mxu0 0.0
  %84 = vmatprep.subr.mxu0 0.0
  %85 = vmatpush2.msra.mxu0 0.0
  %86 = vmatprep.subr.mxu0 0.0
  %87 = vmatpush2.msra.mxu0 0.0
  %88 = vmatprep.subr.mxu0 0.0
  %89 = vmatpush2.msra.mxu0 0.0
  %90 = vmatprep.subr.mxu0 0.0
  %91 = vmatpush2.msra.mxu0 0.0
  %92 = vmatprep.subr.mxu0 0.0
  %93 = vmatpush2.msra.mxu0 0.0
  %94 = vmatprep.subr.mxu0 0.0
  %95 = vmatpush2.msra.mxu0 0.0
  %96 = vmatprep.subr.mxu0 0.0
  %97 = vmatpush2.msra.mxu0 0.0
  %98 = vmatprep.subr.mxu0 0.0
  %99 = vmatpush2.msra.mxu0 0.0
  %100 = vmatprep.subr.mxu0 0.0
  %101 = vmatpush2.msra.mxu0 0.0
  %102 = vmatprep.subr.mxu0 0.0
  %103 = vmatpush2.msra.mxu0 0.0
  %104 = vmatprep.mubr.f32.mxu0 0.0
  %105 = vmatmul.mubr.f32.gmra.mxu0 %v38
  %v106 = vpop.f32.mrf.mxu0
  %v107 = vadd.f32 0.0, %v106
  %v108 = vpop.f32.mrf.mxu0
  %109 = vdwg.mxu0
  %v110 = vxor.u32 %v107, 2147483648
  %v111 = vmul.f32 %v110, 1.442695
  %v112 = vpow.pop %v111
  %v113 = vadd.f32 %v112, 1.0
  %v114 = vrcp.pop %v113
  %v115 = vmul.f32 1.0, %v114
  %v116 = vmul.f32 %v107, %v115
  %vm117 = vcmask 1043456
  %v118 = vsel %vm117, %v116, 0.0
  %119 = vadd.xlane.f32.xlu0 %v118
  %v120 = vpop.xlane.xlu0 %119
  %v121 = vrcp.pop 128.0
  %v122 = vmul.f32 %v120, %v121
  %v123 = vsub.f32 %v116, %v122
  %v124 = vmul.f32 %v123, %v123
  %v125 = vsel %vm117, %v124, 0.0
  %126 = vadd.xlane.f32.xlu0 %v125
  %v127 = vpop.xlane.xlu0 %126
  %v128 = vmul.f32 %v127, %v121
  %v129 = vadd.f32 %v128, 1e-05
  %v130 = vrsqrt.pop %v129
  %v131 = vmul.f32 %v123, %v130
  %v132 = vmul.f32 %v131, %v15
  %s133 = scalar_lea.vmem %s0, 160
  %v134 = vld [vmem:[%s133] sm:$0xf]
  %v135 = vld [vmem:[%s133 + $0x4] sm:$0xf]
  %v136 = vld [vmem:[%s133 + $0x8] sm:$0xf]
  %v137 = vld [vmem:[%s133 + $0xc] sm:$0xf]
  %v138 = vld [vmem:[%s133 + $0x10] sm:$0xf]
  %v139 = vld [vmem:[%s133 + $0x14] sm:$0xf]
  %v140 = vld [vmem:[%s133 + $0x18] sm:$0xf]
  %v141 = vld [vmem:[%s133 + $0x1c] sm:$0xf]
  %v142 = vld [vmem:[%s133 + $0x20] sm:$0xf]
  %v143 = vld [vmem:[%s133 + $0x24] sm:$0xf]
  %v144 = vunpack.c.l.bf16 %v134
  %v145 = vunpack.c.l.bf16 %v135
  %v146 = vunpack.c.l.bf16 %v136
  %v147 = vunpack.c.l.bf16 %v137
  %v148 = vunpack.c.l.bf16 %v138
  %v149 = vunpack.c.l.bf16 %v139
  %v150 = vunpack.c.l.bf16 %v140
  %v151 = vunpack.c.l.bf16 %v141
  %v152 = vunpack.c.l.bf16 %v142
  %v153 = vunpack.c.l.bf16 %v143
  %154 = vmatprep.subr.mxu0 0.0
  %155 = vmatpush1.msra.mxu0 0.0
  %156 = vmatprep.subr.mxu0 0.0
  %157 = vmatpush1.msra.mxu0 0.0
  %158 = vmatprep.subr.mxu0 0.0
  %159 = vmatpush1.msra.mxu0 0.0
  %160 = vmatprep.subr.mxu0 0.0
  %161 = vmatpush1.msra.mxu0 0.0
  %162 = vmatprep.subr.mxu0 0.0
  %163 = vmatpush1.msra.mxu0 0.0
  %164 = vmatprep.subr.mxu0 0.0
  %165 = vmatpush1.msra.mxu0 0.0
  %166 = vmatprep.subr.mxu0 0.0
  %167 = vmatpush1.msra.mxu0 %v153
  %168 = vmatprep.subr.mxu0 0.0
  %169 = vmatpush1.msra.mxu0 %v152
  %170 = vmatprep.subr.mxu0 0.0
  %171 = vmatpush1.msra.mxu0 %v151
  %172 = vmatprep.subr.mxu0 0.0
  %173 = vmatpush1.msra.mxu0 %v150
  %174 = vmatprep.subr.mxu0 0.0
  %175 = vmatpush1.msra.mxu0 %v149
  %176 = vmatprep.subr.mxu0 0.0
  %177 = vmatpush1.msra.mxu0 %v148
  %178 = vmatprep.subr.mxu0 0.0
  %179 = vmatpush1.msra.mxu0 %v147
  %180 = vmatprep.subr.mxu0 0.0
  %181 = vmatpush1.msra.mxu0 %v146
  %182 = vmatprep.subr.mxu0 0.0
  %183 = vmatpush1.msra.mxu0 %v145
  %184 = vmatprep.subr.mxu0 0.0
  %185 = vmatpush1.msra.mxu0 %v144
  %186 = vmatprep.subr.mxu0 0.0
  %187 = vmatpush2.msra.mxu0 0.0
  %188 = vmatprep.subr.mxu0 0.0
  %189 = vmatpush2.msra.mxu0 0.0
  %190 = vmatprep.subr.mxu0 0.0
  %191 = vmatpush2.msra.mxu0 0.0
  %192 = vmatprep.subr.mxu0 0.0
  %193 = vmatpush2.msra.mxu0 0.0
  %194 = vmatprep.subr.mxu0 0.0
  %195 = vmatpush2.msra.mxu0 0.0
  %196 = vmatprep.subr.mxu0 0.0
  %197 = vmatpush2.msra.mxu0 0.0
  %198 = vmatprep.subr.mxu0 0.0
  %199 = vmatpush2.msra.mxu0 0.0
  %200 = vmatprep.subr.mxu0 0.0
  %201 = vmatpush2.msra.mxu0 0.0
  %202 = vmatprep.subr.mxu0 0.0
  %203 = vmatpush2.msra.mxu0 0.0
  %204 = vmatprep.subr.mxu0 0.0
  %205 = vmatpush2.msra.mxu0 0.0
  %206 = vmatprep.subr.mxu0 0.0
  %207 = vmatpush2.msra.mxu0 0.0
  %208 = vmatprep.subr.mxu0 0.0
  %209 = vmatpush2.msra.mxu0 0.0
  %210 = vmatprep.subr.mxu0 0.0
  %211 = vmatpush2.msra.mxu0 0.0
  %212 = vmatprep.subr.mxu0 0.0
  %213 = vmatpush2.msra.mxu0 0.0
  %214 = vmatprep.subr.mxu0 0.0
  %215 = vmatpush2.msra.mxu0 0.0
  %216 = vmatprep.subr.mxu0 0.0
  %217 = vmatpush2.msra.mxu0 0.0
  %218 = vmatprep.mubr.f32.mxu0 0.0
  %219 = vmatmul.mubr.f32.gmra.mxu0 %v38
  %v220 = vpop.f32.mrf.mxu0
  %v221 = vadd.f32 0.0, %v220
  %v222 = vpop.f32.mrf.mxu0
  %223 = vdwg.mxu0
  %v224 = vxor.u32 %v221, 2147483648
  %v225 = vmul.f32 %v224, 1.442695
  %v226 = vpow.pop %v225
  %v227 = vadd.f32 %v226, 1.0
  %v228 = vrcp.pop %v227
  %v229 = vmul.f32 1.0, %v228
  %v230 = vmul.f32 %v221, %v229
  %v231 = vsel %vm117, %v230, 0.0
  %232 = vadd.xlane.f32.xlu0 %v231
  %v233 = vpop.xlane.xlu0 %232
  %v234 = vmul.f32 %v233, %v121
  %v235 = vsub.f32 %v230, %v234
  %v236 = vmul.f32 %v235, %v235
  %v237 = vsel %vm117, %v236, 0.0
  %238 = vadd.xlane.f32.xlu0 %v237
  %v239 = vpop.xlane.xlu0 %238
  %v240 = vmul.f32 %v239, %v121
  %v241 = vadd.f32 %v240, 1e-05
  %v242 = vrsqrt.pop %v241
  %v243 = vmul.f32 %v235, %v242
  %v244 = vmul.f32 %v243, %v15
  %v245 = vadd.f32 %v132, %v244
  %v246 = vmul.f32 %v245, 0.5
  %247 = vst [vmem:[%s3] sm:$0xf] %v246
  %s248 = scalar_lea.vmem %s2, 4
  %v249 = vld [vmem:[%s248] sm:$0xf]
  %s250 = scalar_lea.vmem %s0, 40
  %v251 = vld [vmem:[%s250] sm:$0xf]
  %v252 = vld [vmem:[%s250 + $0x4] sm:$0xf]
  %v253 = vld [vmem:[%s250 + $0x8] sm:$0xf]
  %v254 = vld [vmem:[%s250 + $0xc] sm:$0xf]
  %v255 = vld [vmem:[%s250 + $0x10] sm:$0xf]
  %v256 = vld [vmem:[%s250 + $0x14] sm:$0xf]
  %v257 = vld [vmem:[%s250 + $0x18] sm:$0xf]
  %v258 = vld [vmem:[%s250 + $0x1c] sm:$0xf]
  %v259 = vld [vmem:[%s250 + $0x20] sm:$0xf]
  %v260 = vld [vmem:[%s250 + $0x24] sm:$0xf]
  %v261 = vunpack.c.l.bf16 %v251
  %v262 = vunpack.c.l.bf16 %v252
  %v263 = vunpack.c.l.bf16 %v253
  %v264 = vunpack.c.l.bf16 %v254
  %v265 = vunpack.c.l.bf16 %v255
  %v266 = vunpack.c.l.bf16 %v256
  %v267 = vunpack.c.l.bf16 %v257
  %v268 = vunpack.c.l.bf16 %v258
  %v269 = vunpack.c.l.bf16 %v259
  %v270 = vunpack.c.l.bf16 %v260
  %271 = vmatprep.subr.mxu0 0.0
  %272 = vmatpush1.msra.mxu0 0.0
  %273 = vmatprep.subr.mxu0 0.0
  %274 = vmatpush1.msra.mxu0 0.0
  %275 = vmatprep.subr.mxu0 0.0
  %276 = vmatpush1.msra.mxu0 0.0
  %277 = vmatprep.subr.mxu0 0.0
  %278 = vmatpush1.msra.mxu0 0.0
  %279 = vmatprep.subr.mxu0 0.0
  %280 = vmatpush1.msra.mxu0 0.0
  %281 = vmatprep.subr.mxu0 0.0
  %282 = vmatpush1.msra.mxu0 0.0
  %283 = vmatprep.subr.mxu0 0.0
  %284 = vmatpush1.msra.mxu0 %v270
  %285 = vmatprep.subr.mxu0 0.0
  %286 = vmatpush1.msra.mxu0 %v269
  %287 = vmatprep.subr.mxu0 0.0
  %288 = vmatpush1.msra.mxu0 %v268
  %289 = vmatprep.subr.mxu0 0.0
  %290 = vmatpush1.msra.mxu0 %v267
  %291 = vmatprep.subr.mxu0 0.0
  %292 = vmatpush1.msra.mxu0 %v266
  %293 = vmatprep.subr.mxu0 0.0
  %294 = vmatpush1.msra.mxu0 %v265
  %295 = vmatprep.subr.mxu0 0.0
  %296 = vmatpush1.msra.mxu0 %v264
  %297 = vmatprep.subr.mxu0 0.0
  %298 = vmatpush1.msra.mxu0 %v263
  %299 = vmatprep.subr.mxu0 0.0
  %300 = vmatpush1.msra.mxu0 %v262
  %301 = vmatprep.subr.mxu0 0.0
  %302 = vmatpush1.msra.mxu0 %v261
  %303 = vmatprep.subr.mxu0 0.0
  %304 = vmatpush2.msra.mxu0 0.0
  %305 = vmatprep.subr.mxu0 0.0
  %306 = vmatpush2.msra.mxu0 0.0
  %307 = vmatprep.subr.mxu0 0.0
  %308 = vmatpush2.msra.mxu0 0.0
  %309 = vmatprep.subr.mxu0 0.0
  %310 = vmatpush2.msra.mxu0 0.0
  %311 = vmatprep.subr.mxu0 0.0
  %312 = vmatpush2.msra.mxu0 0.0
  %313 = vmatprep.subr.mxu0 0.0
  %314 = vmatpush2.msra.mxu0 0.0
  %315 = vmatprep.subr.mxu0 0.0
  %316 = vmatpush2.msra.mxu0 0.0
  %317 = vmatprep.subr.mxu0 0.0
  %318 = vmatpush2.msra.mxu0 0.0
  %319 = vmatprep.subr.mxu0 0.0
  %320 = vmatpush2.msra.mxu0 0.0
  %321 = vmatprep.subr.mxu0 0.0
  %322 = vmatpush2.msra.mxu0 0.0
  %323 = vmatprep.subr.mxu0 0.0
  %324 = vmatpush2.msra.mxu0 0.0
  %325 = vmatprep.subr.mxu0 0.0
  %326 = vmatpush2.msra.mxu0 0.0
  %327 = vmatprep.subr.mxu0 0.0
  %328 = vmatpush2.msra.mxu0 0.0
  %329 = vmatprep.subr.mxu0 0.0
  %330 = vmatpush2.msra.mxu0 0.0
  %331 = vmatprep.subr.mxu0 0.0
  %332 = vmatpush2.msra.mxu0 0.0
  %333 = vmatprep.subr.mxu0 0.0
  %334 = vmatpush2.msra.mxu0 0.0
  %335 = vmatprep.mubr.f32.mxu0 0.0
  %336 = vmatmul.mubr.f32.gmra.mxu0 %v38
  %v337 = vpop.f32.mrf.mxu0
  %v338 = vadd.f32 0.0, %v337
  %v339 = vpop.f32.mrf.mxu0
  %340 = vdwg.mxu0
  %v341 = vxor.u32 %v338, 2147483648
  %v342 = vmul.f32 %v341, 1.442695
  %v343 = vpow.pop %v342
  %v344 = vadd.f32 %v343, 1.0
  %v345 = vrcp.pop %v344
  %v346 = vmul.f32 1.0, %v345
  %v347 = vmul.f32 %v338, %v346
  %v348 = vsel %vm117, %v347, 0.0
  %349 = vadd.xlane.f32.xlu0 %v348
  %v350 = vpop.xlane.xlu0 %349
  %v351 = vmul.f32 %v350, %v121
  %v352 = vsub.f32 %v347, %v351
  %v353 = vmul.f32 %v352, %v352
  %v354 = vsel %vm117, %v353, 0.0
  %355 = vadd.xlane.f32.xlu0 %v354
  %v356 = vpop.xlane.xlu0 %355
  %v357 = vmul.f32 %v356, %v121
  %v358 = vadd.f32 %v357, 1e-05
  %v359 = vrsqrt.pop %v358
  %v360 = vmul.f32 %v352, %v359
  %v361 = vmul.f32 %v360, %v249
  %s362 = scalar_lea.vmem %s0, 200
  %v363 = vld [vmem:[%s362] sm:$0xf]
  %v364 = vld [vmem:[%s362 + $0x4] sm:$0xf]
  %v365 = vld [vmem:[%s362 + $0x8] sm:$0xf]
  %v366 = vld [vmem:[%s362 + $0xc] sm:$0xf]
  %v367 = vld [vmem:[%s362 + $0x10] sm:$0xf]
  %v368 = vld [vmem:[%s362 + $0x14] sm:$0xf]
  %v369 = vld [vmem:[%s362 + $0x18] sm:$0xf]
  %v370 = vld [vmem:[%s362 + $0x1c] sm:$0xf]
  %v371 = vld [vmem:[%s362 + $0x20] sm:$0xf]
  %v372 = vld [vmem:[%s362 + $0x24] sm:$0xf]
  %v373 = vunpack.c.l.bf16 %v363
  %v374 = vunpack.c.l.bf16 %v364
  %v375 = vunpack.c.l.bf16 %v365
  %v376 = vunpack.c.l.bf16 %v366
  %v377 = vunpack.c.l.bf16 %v367
  %v378 = vunpack.c.l.bf16 %v368
  %v379 = vunpack.c.l.bf16 %v369
  %v380 = vunpack.c.l.bf16 %v370
  %v381 = vunpack.c.l.bf16 %v371
  %v382 = vunpack.c.l.bf16 %v372
  %383 = vmatprep.subr.mxu0 0.0
  %384 = vmatpush1.msra.mxu0 0.0
  %385 = vmatprep.subr.mxu0 0.0
  %386 = vmatpush1.msra.mxu0 0.0
  %387 = vmatprep.subr.mxu0 0.0
  %388 = vmatpush1.msra.mxu0 0.0
  %389 = vmatprep.subr.mxu0 0.0
  %390 = vmatpush1.msra.mxu0 0.0
  %391 = vmatprep.subr.mxu0 0.0
  %392 = vmatpush1.msra.mxu0 0.0
  %393 = vmatprep.subr.mxu0 0.0
  %394 = vmatpush1.msra.mxu0 0.0
  %395 = vmatprep.subr.mxu0 0.0
  %396 = vmatpush1.msra.mxu0 %v382
  %397 = vmatprep.subr.mxu0 0.0
  %398 = vmatpush1.msra.mxu0 %v381
  %399 = vmatprep.subr.mxu0 0.0
  %400 = vmatpush1.msra.mxu0 %v380
  %401 = vmatprep.subr.mxu0 0.0
  %402 = vmatpush1.msra.mxu0 %v379
  %403 = vmatprep.subr.mxu0 0.0
  %404 = vmatpush1.msra.mxu0 %v378
  %405 = vmatprep.subr.mxu0 0.0
  %406 = vmatpush1.msra.mxu0 %v377
  %407 = vmatprep.subr.mxu0 0.0
  %408 = vmatpush1.msra.mxu0 %v376
  %409 = vmatprep.subr.mxu0 0.0
  %410 = vmatpush1.msra.mxu0 %v375
  %411 = vmatprep.subr.mxu0 0.0
  %412 = vmatpush1.msra.mxu0 %v374
  %413 = vmatprep.subr.mxu0 0.0
  %414 = vmatpush1.msra.mxu0 %v373
  %415 = vmatprep.subr.mxu0 0.0
  %416 = vmatpush2.msra.mxu0 0.0
  %417 = vmatprep.subr.mxu0 0.0
  %418 = vmatpush2.msra.mxu0 0.0
  %419 = vmatprep.subr.mxu0 0.0
  %420 = vmatpush2.msra.mxu0 0.0
  %421 = vmatprep.subr.mxu0 0.0
  %422 = vmatpush2.msra.mxu0 0.0
  %423 = vmatprep.subr.mxu0 0.0
  %424 = vmatpush2.msra.mxu0 0.0
  %425 = vmatprep.subr.mxu0 0.0
  %426 = vmatpush2.msra.mxu0 0.0
  %427 = vmatprep.subr.mxu0 0.0
  %428 = vmatpush2.msra.mxu0 0.0
  %429 = vmatprep.subr.mxu0 0.0
  %430 = vmatpush2.msra.mxu0 0.0
  %431 = vmatprep.subr.mxu0 0.0
  %432 = vmatpush2.msra.mxu0 0.0
  %433 = vmatprep.subr.mxu0 0.0
  %434 = vmatpush2.msra.mxu0 0.0
  %435 = vmatprep.subr.mxu0 0.0
  %436 = vmatpush2.msra.mxu0 0.0
  %437 = vmatprep.subr.mxu0 0.0
  %438 = vmatpush2.msra.mxu0 0.0
  %439 = vmatprep.subr.mxu0 0.0
  %440 = vmatpush2.msra.mxu0 0.0
  %441 = vmatprep.subr.mxu0 0.0
  %442 = vmatpush2.msra.mxu0 0.0
  %443 = vmatprep.subr.mxu0 0.0
  %444 = vmatpush2.msra.mxu0 0.0
  %445 = vmatprep.subr.mxu0 0.0
  %446 = vmatpush2.msra.mxu0 0.0
  %447 = vmatprep.mubr.f32.mxu0 0.0
  %448 = vmatmul.mubr.f32.gmra.mxu0 %v38
  %v449 = vpop.f32.mrf.mxu0
  %v450 = vadd.f32 0.0, %v449
  %v451 = vpop.f32.mrf.mxu0
  %452 = vdwg.mxu0
  %v453 = vxor.u32 %v450, 2147483648
  %v454 = vmul.f32 %v453, 1.442695
  %v455 = vpow.pop %v454
  %v456 = vadd.f32 %v455, 1.0
  %v457 = vrcp.pop %v456
  %v458 = vmul.f32 1.0, %v457
  %v459 = vmul.f32 %v450, %v458
  %v460 = vsel %vm117, %v459, 0.0
  %461 = vadd.xlane.f32.xlu0 %v460
  %v462 = vpop.xlane.xlu0 %461
  %v463 = vmul.f32 %v462, %v121
  %v464 = vsub.f32 %v459, %v463
  %v465 = vmul.f32 %v464, %v464
  %v466 = vsel %vm117, %v465, 0.0
  %467 = vadd.xlane.f32.xlu0 %v466
  %v468 = vpop.xlane.xlu0 %467
  %v469 = vmul.f32 %v468, %v121
  %v470 = vadd.f32 %v469, 1e-05
  %v471 = vrsqrt.pop %v470
  %v472 = vmul.f32 %v464, %v471
  %v473 = vmul.f32 %v472, %v249
  %v474 = vadd.f32 %v361, %v473
  %v475 = vmul.f32 %v474, 0.5
  %s476 = scalar_lea.vmem %s3, 4
  %477 = vst [vmem:[%s476] sm:$0xf] %v475
  %s478 = scalar_lea.vmem %s2, 8
  %v479 = vld [vmem:[%s478] sm:$0xf]
  %s480 = scalar_lea.vmem %s0, 80
  %v481 = vld [vmem:[%s480] sm:$0xf]
  %v482 = vld [vmem:[%s480 + $0x4] sm:$0xf]
  %v483 = vld [vmem:[%s480 + $0x8] sm:$0xf]
  %v484 = vld [vmem:[%s480 + $0xc] sm:$0xf]
  %v485 = vld [vmem:[%s480 + $0x10] sm:$0xf]
  %v486 = vld [vmem:[%s480 + $0x14] sm:$0xf]
  %v487 = vld [vmem:[%s480 + $0x18] sm:$0xf]
  %v488 = vld [vmem:[%s480 + $0x1c] sm:$0xf]
  %v489 = vld [vmem:[%s480 + $0x20] sm:$0xf]
  %v490 = vld [vmem:[%s480 + $0x24] sm:$0xf]
  %v491 = vunpack.c.l.bf16 %v481
  %v492 = vunpack.c.l.bf16 %v482
  %v493 = vunpack.c.l.bf16 %v483
  %v494 = vunpack.c.l.bf16 %v484
  %v495 = vunpack.c.l.bf16 %v485
  %v496 = vunpack.c.l.bf16 %v486
  %v497 = vunpack.c.l.bf16 %v487
  %v498 = vunpack.c.l.bf16 %v488
  %v499 = vunpack.c.l.bf16 %v489
  %v500 = vunpack.c.l.bf16 %v490
  %501 = vmatprep.subr.mxu0 0.0
  %502 = vmatpush1.msra.mxu0 0.0
  %503 = vmatprep.subr.mxu0 0.0
  %504 = vmatpush1.msra.mxu0 0.0
  %505 = vmatprep.subr.mxu0 0.0
  %506 = vmatpush1.msra.mxu0 0.0
  %507 = vmatprep.subr.mxu0 0.0
  %508 = vmatpush1.msra.mxu0 0.0
  %509 = vmatprep.subr.mxu0 0.0
  %510 = vmatpush1.msra.mxu0 0.0
  %511 = vmatprep.subr.mxu0 0.0
  %512 = vmatpush1.msra.mxu0 0.0
  %513 = vmatprep.subr.mxu0 0.0
  %514 = vmatpush1.msra.mxu0 %v500
  %515 = vmatprep.subr.mxu0 0.0
  %516 = vmatpush1.msra.mxu0 %v499
  %517 = vmatprep.subr.mxu0 0.0
  %518 = vmatpush1.msra.mxu0 %v498
  %519 = vmatprep.subr.mxu0 0.0
  %520 = vmatpush1.msra.mxu0 %v497
  %521 = vmatprep.subr.mxu0 0.0
  %522 = vmatpush1.msra.mxu0 %v496
  %523 = vmatprep.subr.mxu0 0.0
  %524 = vmatpush1.msra.mxu0 %v495
  %525 = vmatprep.subr.mxu0 0.0
  %526 = vmatpush1.msra.mxu0 %v494
  %527 = vmatprep.subr.mxu0 0.0
  %528 = vmatpush1.msra.mxu0 %v493
  %529 = vmatprep.subr.mxu0 0.0
  %530 = vmatpush1.msra.mxu0 %v492
  %531 = vmatprep.subr.mxu0 0.0
  %532 = vmatpush1.msra.mxu0 %v491
  %533 = vmatprep.subr.mxu0 0.0
  %534 = vmatpush2.msra.mxu0 0.0
  %535 = vmatprep.subr.mxu0 0.0
  %536 = vmatpush2.msra.mxu0 0.0
  %537 = vmatprep.subr.mxu0 0.0
  %538 = vmatpush2.msra.mxu0 0.0
  %539 = vmatprep.subr.mxu0 0.0
  %540 = vmatpush2.msra.mxu0 0.0
  %541 = vmatprep.subr.mxu0 0.0
  %542 = vmatpush2.msra.mxu0 0.0
  %543 = vmatprep.subr.mxu0 0.0
  %544 = vmatpush2.msra.mxu0 0.0
  %545 = vmatprep.subr.mxu0 0.0
  %546 = vmatpush2.msra.mxu0 0.0
  %547 = vmatprep.subr.mxu0 0.0
  %548 = vmatpush2.msra.mxu0 0.0
  %549 = vmatprep.subr.mxu0 0.0
  %550 = vmatpush2.msra.mxu0 0.0
  %551 = vmatprep.subr.mxu0 0.0
  %552 = vmatpush2.msra.mxu0 0.0
  %553 = vmatprep.subr.mxu0 0.0
  %554 = vmatpush2.msra.mxu0 0.0
  %555 = vmatprep.subr.mxu0 0.0
  %556 = vmatpush2.msra.mxu0 0.0
  %557 = vmatprep.subr.mxu0 0.0
  %558 = vmatpush2.msra.mxu0 0.0
  %559 = vmatprep.subr.mxu0 0.0
  %560 = vmatpush2.msra.mxu0 0.0
  %561 = vmatprep.subr.mxu0 0.0
  %562 = vmatpush2.msra.mxu0 0.0
  %563 = vmatprep.subr.mxu0 0.0
  %564 = vmatpush2.msra.mxu0 0.0
  %565 = vmatprep.mubr.f32.mxu0 0.0
  %566 = vmatmul.mubr.f32.gmra.mxu0 %v38
  %v567 = vpop.f32.mrf.mxu0
  %v568 = vadd.f32 0.0, %v567
  %v569 = vpop.f32.mrf.mxu0
  %570 = vdwg.mxu0
  %v571 = vxor.u32 %v568, 2147483648
  %v572 = vmul.f32 %v571, 1.442695
  %v573 = vpow.pop %v572
  %v574 = vadd.f32 %v573, 1.0
  %v575 = vrcp.pop %v574
  %v576 = vmul.f32 1.0, %v575
  %v577 = vmul.f32 %v568, %v576
  %v578 = vsel %vm117, %v577, 0.0
  %579 = vadd.xlane.f32.xlu0 %v578
  %v580 = vpop.xlane.xlu0 %579
  %v581 = vmul.f32 %v580, %v121
  %v582 = vsub.f32 %v577, %v581
  %v583 = vmul.f32 %v582, %v582
  %v584 = vsel %vm117, %v583, 0.0
  %585 = vadd.xlane.f32.xlu0 %v584
  %v586 = vpop.xlane.xlu0 %585
  %v587 = vmul.f32 %v586, %v121
  %v588 = vadd.f32 %v587, 1e-05
  %v589 = vrsqrt.pop %v588
  %v590 = vmul.f32 %v582, %v589
  %v591 = vmul.f32 %v590, %v479
  %s592 = scalar_lea.vmem %s0, 240
  %v593 = vld [vmem:[%s592] sm:$0xf]
  %v594 = vld [vmem:[%s592 + $0x4] sm:$0xf]
  %v595 = vld [vmem:[%s592 + $0x8] sm:$0xf]
  %v596 = vld [vmem:[%s592 + $0xc] sm:$0xf]
  %v597 = vld [vmem:[%s592 + $0x10] sm:$0xf]
  %v598 = vld [vmem:[%s592 + $0x14] sm:$0xf]
  %v599 = vld [vmem:[%s592 + $0x18] sm:$0xf]
  %v600 = vld [vmem:[%s592 + $0x1c] sm:$0xf]
  %v601 = vld [vmem:[%s592 + $0x20] sm:$0xf]
  %v602 = vld [vmem:[%s592 + $0x24] sm:$0xf]
  %v603 = vunpack.c.l.bf16 %v593
  %v604 = vunpack.c.l.bf16 %v594
  %v605 = vunpack.c.l.bf16 %v595
  %v606 = vunpack.c.l.bf16 %v596
  %v607 = vunpack.c.l.bf16 %v597
  %v608 = vunpack.c.l.bf16 %v598
  %v609 = vunpack.c.l.bf16 %v599
  %v610 = vunpack.c.l.bf16 %v600
  %v611 = vunpack.c.l.bf16 %v601
  %v612 = vunpack.c.l.bf16 %v602
  %613 = vmatprep.subr.mxu0 0.0
  %614 = vmatpush1.msra.mxu0 0.0
  %615 = vmatprep.subr.mxu0 0.0
  %616 = vmatpush1.msra.mxu0 0.0
  %617 = vmatprep.subr.mxu0 0.0
  %618 = vmatpush1.msra.mxu0 0.0
  %619 = vmatprep.subr.mxu0 0.0
  %620 = vmatpush1.msra.mxu0 0.0
  %621 = vmatprep.subr.mxu0 0.0
  %622 = vmatpush1.msra.mxu0 0.0
  %623 = vmatprep.subr.mxu0 0.0
  %624 = vmatpush1.msra.mxu0 0.0
  %625 = vmatprep.subr.mxu0 0.0
  %626 = vmatpush1.msra.mxu0 %v612
  %627 = vmatprep.subr.mxu0 0.0
  %628 = vmatpush1.msra.mxu0 %v611
  %629 = vmatprep.subr.mxu0 0.0
  %630 = vmatpush1.msra.mxu0 %v610
  %631 = vmatprep.subr.mxu0 0.0
  %632 = vmatpush1.msra.mxu0 %v609
  %633 = vmatprep.subr.mxu0 0.0
  %634 = vmatpush1.msra.mxu0 %v608
  %635 = vmatprep.subr.mxu0 0.0
  %636 = vmatpush1.msra.mxu0 %v607
  %637 = vmatprep.subr.mxu0 0.0
  %638 = vmatpush1.msra.mxu0 %v606
  %639 = vmatprep.subr.mxu0 0.0
  %640 = vmatpush1.msra.mxu0 %v605
  %641 = vmatprep.subr.mxu0 0.0
  %642 = vmatpush1.msra.mxu0 %v604
  %643 = vmatprep.subr.mxu0 0.0
  %644 = vmatpush1.msra.mxu0 %v603
  %645 = vmatprep.subr.mxu0 0.0
  %646 = vmatpush2.msra.mxu0 0.0
  %647 = vmatprep.subr.mxu0 0.0
  %648 = vmatpush2.msra.mxu0 0.0
  %649 = vmatprep.subr.mxu0 0.0
  %650 = vmatpush2.msra.mxu0 0.0
  %651 = vmatprep.subr.mxu0 0.0
  %652 = vmatpush2.msra.mxu0 0.0
  %653 = vmatprep.subr.mxu0 0.0
  %654 = vmatpush2.msra.mxu0 0.0
  %655 = vmatprep.subr.mxu0 0.0
  %656 = vmatpush2.msra.mxu0 0.0
  %657 = vmatprep.subr.mxu0 0.0
  %658 = vmatpush2.msra.mxu0 0.0
  %659 = vmatprep.subr.mxu0 0.0
  %660 = vmatpush2.msra.mxu0 0.0
  %661 = vmatprep.subr.mxu0 0.0
  %662 = vmatpush2.msra.mxu0 0.0
  %663 = vmatprep.subr.mxu0 0.0
  %664 = vmatpush2.msra.mxu0 0.0
  %665 = vmatprep.subr.mxu0 0.0
  %666 = vmatpush2.msra.mxu0 0.0
  %667 = vmatprep.subr.mxu0 0.0
  %668 = vmatpush2.msra.mxu0 0.0
  %669 = vmatprep.subr.mxu0 0.0
  %670 = vmatpush2.msra.mxu0 0.0
  %671 = vmatprep.subr.mxu0 0.0
  %672 = vmatpush2.msra.mxu0 0.0
  %673 = vmatprep.subr.mxu0 0.0
  %674 = vmatpush2.msra.mxu0 0.0
  %675 = vmatprep.subr.mxu0 0.0
  %676 = vmatpush2.msra.mxu0 0.0
  %677 = vmatprep.mubr.f32.mxu0 0.0
  %678 = vmatmul.mubr.f32.gmra.mxu0 %v38
  %v679 = vpop.f32.mrf.mxu0
  %v680 = vadd.f32 0.0, %v679
  %v681 = vpop.f32.mrf.mxu0
  %682 = vdwg.mxu0
  %v683 = vxor.u32 %v680, 2147483648
  %v684 = vmul.f32 %v683, 1.442695
  %v685 = vpow.pop %v684
  %v686 = vadd.f32 %v685, 1.0
  %v687 = vrcp.pop %v686
  %v688 = vmul.f32 1.0, %v687
  %v689 = vmul.f32 %v680, %v688
  %v690 = vsel %vm117, %v689, 0.0
  %691 = vadd.xlane.f32.xlu0 %v690
  %v692 = vpop.xlane.xlu0 %691
  %v693 = vmul.f32 %v692, %v121
  %v694 = vsub.f32 %v689, %v693
  %v695 = vmul.f32 %v694, %v694
  %v696 = vsel %vm117, %v695, 0.0
  %697 = vadd.xlane.f32.xlu0 %v696
  %v698 = vpop.xlane.xlu0 %697
  %v699 = vmul.f32 %v698, %v121
  %v700 = vadd.f32 %v699, 1e-05
  %v701 = vrsqrt.pop %v700
  %v702 = vmul.f32 %v694, %v701
  %v703 = vmul.f32 %v702, %v479
  %v704 = vadd.f32 %v591, %v703
  %v705 = vmul.f32 %v704, 0.5
  %s706 = scalar_lea.vmem %s3, 8
  %707 = vst [vmem:[%s706] sm:$0xf] %v705
  %s708 = scalar_lea.vmem %s2, 12
  %v709 = vld [vmem:[%s708] sm:$0xf]
  %s710 = scalar_lea.vmem %s0, 120
  %v711 = vld [vmem:[%s710] sm:$0xf]
  %v712 = vld [vmem:[%s710 + $0x4] sm:$0xf]
  %v713 = vld [vmem:[%s710 + $0x8] sm:$0xf]
  %v714 = vld [vmem:[%s710 + $0xc] sm:$0xf]
  %v715 = vld [vmem:[%s710 + $0x10] sm:$0xf]
  %v716 = vld [vmem:[%s710 + $0x14] sm:$0xf]
  %v717 = vld [vmem:[%s710 + $0x18] sm:$0xf]
  %v718 = vld [vmem:[%s710 + $0x1c] sm:$0xf]
  %v719 = vld [vmem:[%s710 + $0x20] sm:$0xf]
  %v720 = vld [vmem:[%s710 + $0x24] sm:$0xf]
  %v721 = vunpack.c.l.bf16 %v711
  %v722 = vunpack.c.l.bf16 %v712
  %v723 = vunpack.c.l.bf16 %v713
  %v724 = vunpack.c.l.bf16 %v714
  %v725 = vunpack.c.l.bf16 %v715
  %v726 = vunpack.c.l.bf16 %v716
  %v727 = vunpack.c.l.bf16 %v717
  %v728 = vunpack.c.l.bf16 %v718
  %v729 = vunpack.c.l.bf16 %v719
  %v730 = vunpack.c.l.bf16 %v720
  %731 = vmatprep.subr.mxu0 0.0
  %732 = vmatpush1.msra.mxu0 0.0
  %733 = vmatprep.subr.mxu0 0.0
  %734 = vmatpush1.msra.mxu0 0.0
  %735 = vmatprep.subr.mxu0 0.0
  %736 = vmatpush1.msra.mxu0 0.0
  %737 = vmatprep.subr.mxu0 0.0
  %738 = vmatpush1.msra.mxu0 0.0
  %739 = vmatprep.subr.mxu0 0.0
  %740 = vmatpush1.msra.mxu0 0.0
  %741 = vmatprep.subr.mxu0 0.0
  %742 = vmatpush1.msra.mxu0 0.0
  %743 = vmatprep.subr.mxu0 0.0
  %744 = vmatpush1.msra.mxu0 %v730
  %745 = vmatprep.subr.mxu0 0.0
  %746 = vmatpush1.msra.mxu0 %v729
  %747 = vmatprep.subr.mxu0 0.0
  %748 = vmatpush1.msra.mxu0 %v728
  %749 = vmatprep.subr.mxu0 0.0
  %750 = vmatpush1.msra.mxu0 %v727
  %751 = vmatprep.subr.mxu0 0.0
  %752 = vmatpush1.msra.mxu0 %v726
  %753 = vmatprep.subr.mxu0 0.0
  %754 = vmatpush1.msra.mxu0 %v725
  %755 = vmatprep.subr.mxu0 0.0
  %756 = vmatpush1.msra.mxu0 %v724
  %757 = vmatprep.subr.mxu0 0.0
  %758 = vmatpush1.msra.mxu0 %v723
  %759 = vmatprep.subr.mxu0 0.0
  %760 = vmatpush1.msra.mxu0 %v722
  %761 = vmatprep.subr.mxu0 0.0
  %762 = vmatpush1.msra.mxu0 %v721
  %763 = vmatprep.subr.mxu0 0.0
  %764 = vmatpush2.msra.mxu0 0.0
  %765 = vmatprep.subr.mxu0 0.0
  %766 = vmatpush2.msra.mxu0 0.0
  %767 = vmatprep.subr.mxu0 0.0
  %768 = vmatpush2.msra.mxu0 0.0
  %769 = vmatprep.subr.mxu0 0.0
  %770 = vmatpush2.msra.mxu0 0.0
  %771 = vmatprep.subr.mxu0 0.0
  %772 = vmatpush2.msra.mxu0 0.0
  %773 = vmatprep.subr.mxu0 0.0
  %774 = vmatpush2.msra.mxu0 0.0
  %775 = vmatprep.subr.mxu0 0.0
  %776 = vmatpush2.msra.mxu0 0.0
  %777 = vmatprep.subr.mxu0 0.0
  %778 = vmatpush2.msra.mxu0 0.0
  %779 = vmatprep.subr.mxu0 0.0
  %780 = vmatpush2.msra.mxu0 0.0
  %781 = vmatprep.subr.mxu0 0.0
  %782 = vmatpush2.msra.mxu0 0.0
  %783 = vmatprep.subr.mxu0 0.0
  %784 = vmatpush2.msra.mxu0 0.0
  %785 = vmatprep.subr.mxu0 0.0
  %786 = vmatpush2.msra.mxu0 0.0
  %787 = vmatprep.subr.mxu0 0.0
  %788 = vmatpush2.msra.mxu0 0.0
  %789 = vmatprep.subr.mxu0 0.0
  %790 = vmatpush2.msra.mxu0 0.0
  %791 = vmatprep.subr.mxu0 0.0
  %792 = vmatpush2.msra.mxu0 0.0
  %793 = vmatprep.subr.mxu0 0.0
  %794 = vmatpush2.msra.mxu0 0.0
  %795 = vmatprep.mubr.f32.mxu0 0.0
  %796 = vmatmul.mubr.f32.gmra.mxu0 %v38
  %v797 = vpop.f32.mrf.mxu0
  %v798 = vadd.f32 0.0, %v797
  %v799 = vpop.f32.mrf.mxu0
  %800 = vdwg.mxu0
  %v801 = vxor.u32 %v798, 2147483648
  %v802 = vmul.f32 %v801, 1.442695
  %v803 = vpow.pop %v802
  %v804 = vadd.f32 %v803, 1.0
  %v805 = vrcp.pop %v804
  %v806 = vmul.f32 1.0, %v805
  %v807 = vmul.f32 %v798, %v806
  %v808 = vsel %vm117, %v807, 0.0
  %809 = vadd.xlane.f32.xlu0 %v808
  %v810 = vpop.xlane.xlu0 %809
  %v811 = vmul.f32 %v810, %v121
  %v812 = vsub.f32 %v807, %v811
  %v813 = vmul.f32 %v812, %v812
  %v814 = vsel %vm117, %v813, 0.0
  %815 = vadd.xlane.f32.xlu0 %v814
  %v816 = vpop.xlane.xlu0 %815
  %v817 = vmul.f32 %v816, %v121
  %v818 = vadd.f32 %v817, 1e-05
  %v819 = vrsqrt.pop %v818
  %v820 = vmul.f32 %v812, %v819
  %v821 = vmul.f32 %v820, %v709
  %s822 = scalar_lea.vmem %s0, 280
  %v823 = vld [vmem:[%s822] sm:$0xf]
  %v824 = vld [vmem:[%s822 + $0x4] sm:$0xf]
  %v825 = vld [vmem:[%s822 + $0x8] sm:$0xf]
  %v826 = vld [vmem:[%s822 + $0xc] sm:$0xf]
  %v827 = vld [vmem:[%s822 + $0x10] sm:$0xf]
  %v828 = vld [vmem:[%s822 + $0x14] sm:$0xf]
  %v829 = vld [vmem:[%s822 + $0x18] sm:$0xf]
  %v830 = vld [vmem:[%s822 + $0x1c] sm:$0xf]
  %v831 = vld [vmem:[%s822 + $0x20] sm:$0xf]
  %v832 = vld [vmem:[%s822 + $0x24] sm:$0xf]
  %v833 = vunpack.c.l.bf16 %v823
  %v834 = vunpack.c.l.bf16 %v824
  %v835 = vunpack.c.l.bf16 %v825
  %v836 = vunpack.c.l.bf16 %v826
  %v837 = vunpack.c.l.bf16 %v827
  %v838 = vunpack.c.l.bf16 %v828
  %v839 = vunpack.c.l.bf16 %v829
  %v840 = vunpack.c.l.bf16 %v830
  %v841 = vunpack.c.l.bf16 %v831
  %v842 = vunpack.c.l.bf16 %v832
  %843 = vmatprep.subr.mxu0 0.0
  %844 = vmatpush1.msra.mxu0 0.0
  %845 = vmatprep.subr.mxu0 0.0
  %846 = vmatpush1.msra.mxu0 0.0
  %847 = vmatprep.subr.mxu0 0.0
  %848 = vmatpush1.msra.mxu0 0.0
  %849 = vmatprep.subr.mxu0 0.0
  %850 = vmatpush1.msra.mxu0 0.0
  %851 = vmatprep.subr.mxu0 0.0
  %852 = vmatpush1.msra.mxu0 0.0
  %853 = vmatprep.subr.mxu0 0.0
  %854 = vmatpush1.msra.mxu0 0.0
  %855 = vmatprep.subr.mxu0 0.0
  %856 = vmatpush1.msra.mxu0 %v842
  %857 = vmatprep.subr.mxu0 0.0
  %858 = vmatpush1.msra.mxu0 %v841
  %859 = vmatprep.subr.mxu0 0.0
  %860 = vmatpush1.msra.mxu0 %v840
  %861 = vmatprep.subr.mxu0 0.0
  %862 = vmatpush1.msra.mxu0 %v839
  %863 = vmatprep.subr.mxu0 0.0
  %864 = vmatpush1.msra.mxu0 %v838
  %865 = vmatprep.subr.mxu0 0.0
  %866 = vmatpush1.msra.mxu0 %v837
  %867 = vmatprep.subr.mxu0 0.0
  %868 = vmatpush1.msra.mxu0 %v836
  %869 = vmatprep.subr.mxu0 0.0
  %870 = vmatpush1.msra.mxu0 %v835
  %871 = vmatprep.subr.mxu0 0.0
  %872 = vmatpush1.msra.mxu0 %v834
  %873 = vmatprep.subr.mxu0 0.0
  %874 = vmatpush1.msra.mxu0 %v833
  %875 = vmatprep.subr.mxu0 0.0
  %876 = vmatpush2.msra.mxu0 0.0
  %877 = vmatprep.subr.mxu0 0.0
  %878 = vmatpush2.msra.mxu0 0.0
  %879 = vmatprep.subr.mxu0 0.0
  %880 = vmatpush2.msra.mxu0 0.0
  %881 = vmatprep.subr.mxu0 0.0
  %882 = vmatpush2.msra.mxu0 0.0
  %883 = vmatprep.subr.mxu0 0.0
  %884 = vmatpush2.msra.mxu0 0.0
  %885 = vmatprep.subr.mxu0 0.0
  %886 = vmatpush2.msra.mxu0 0.0
  %887 = vmatprep.subr.mxu0 0.0
  %888 = vmatpush2.msra.mxu0 0.0
  %889 = vmatprep.subr.mxu0 0.0
  %890 = vmatpush2.msra.mxu0 0.0
  %891 = vmatprep.subr.mxu0 0.0
  %892 = vmatpush2.msra.mxu0 0.0
  %893 = vmatprep.subr.mxu0 0.0
  %894 = vmatpush2.msra.mxu0 0.0
  %895 = vmatprep.subr.mxu0 0.0
  %896 = vmatpush2.msra.mxu0 0.0
  %897 = vmatprep.subr.mxu0 0.0
  %898 = vmatpush2.msra.mxu0 0.0
  %899 = vmatprep.subr.mxu0 0.0
  %900 = vmatpush2.msra.mxu0 0.0
  %901 = vmatprep.subr.mxu0 0.0
  %902 = vmatpush2.msra.mxu0 0.0
  %903 = vmatprep.subr.mxu0 0.0
  %904 = vmatpush2.msra.mxu0 0.0
  %905 = vmatprep.subr.mxu0 0.0
  %906 = vmatpush2.msra.mxu0 0.0
  %907 = vmatprep.mubr.f32.mxu0 0.0
  %908 = vmatmul.mubr.f32.gmra.mxu0 %v38
  %v909 = vpop.f32.mrf.mxu0
  %v910 = vadd.f32 0.0, %v909
  %v911 = vpop.f32.mrf.mxu0
  %912 = vdwg.mxu0
  %v913 = vxor.u32 %v910, 2147483648
  %v914 = vmul.f32 %v913, 1.442695
  %v915 = vpow.pop %v914
  %v916 = vadd.f32 %v915, 1.0
  %v917 = vrcp.pop %v916
  %v918 = vmul.f32 1.0, %v917
  %v919 = vmul.f32 %v910, %v918
  %v920 = vsel %vm117, %v919, 0.0
  %921 = vadd.xlane.f32.xlu0 %v920
  %v922 = vpop.xlane.xlu0 %921
  %v923 = vmul.f32 %v922, %v121
  %v924 = vsub.f32 %v919, %v923
  %v925 = vmul.f32 %v924, %v924
  %v926 = vsel %vm117, %v925, 0.0
  %927 = vadd.xlane.f32.xlu0 %v926
  %v928 = vpop.xlane.xlu0 %927
  %v929 = vmul.f32 %v928, %v121
  %v930 = vadd.f32 %v929, 1e-05
  %v931 = vrsqrt.pop %v930
  %v932 = vmul.f32 %v924, %v931
  %v933 = vmul.f32 %v932, %v709
  %v934 = vadd.f32 %v821, %v933
  %v935 = vmul.f32 %v934, 0.5
  %s936 = scalar_lea.vmem %s3, 12
  %937 = vst [vmem:[%s936] sm:$0xf] %v935
  // Predicated region
  $region14: #{_lambda_.15} parent=0 // pred_check
    _
  $region15: #{_lambda_.15} parent=0 // pred_check_branch
    %939 = sbr.rel (0) target = $region17
  $region16: #{_lambda_.15} parent=0 // pred_region
    _
  $region17: #{_lambda_.15} parent=0 // pred_fallthru
    _
  // Predicated region
  $region18: #{_lambda_.15} parent=0 // pred_check
    _
  $region19: #{_lambda_.15} parent=0 // pred_check_branch
    %941 = sbr.rel (0) target = $region21
  $region20: #{_lambda_.15} parent=0 // pred_region
    _
  $region21: #{_lambda_.15} parent=0 // pred_fallthru
    _

</llo_original>
